<compile_context>
chip_gen: v7x
topology: tpu7x:2x2x1
jax: 0.10.0
libtpu: 0.0.40
codegen_flags: <defaults>
</compile_context>

<pallas_src>
import functools

import jax
import jax.numpy as jnp
from jax import lax
from jax.experimental import pallas as pl
from jax.experimental.pallas import tpu as pltpu


# --------------------------------------------------------------------------
# Hardware / tiling helpers
# --------------------------------------------------------------------------
def _round_up(x, m):
    return (x + m - 1) // m * m


def _vmem_capacity_bytes():
    try:
        info = pltpu.get_tpu_info()
        for name in ("vmem_capacity_bytes", "vmem_size_bytes", "vmem_bytes"):
            val = getattr(info, name, None)
            if val:
                return int(val)
    except Exception:
        pass
    return 64 << 20          # conservative default: v7x per-TensorCore VMEM


def _est_vmem(th, w, cin, cout, act_b, out_b):
    """Honest per-step VMEM estimate: double-buffered pipeline blocks plus the
    in-kernel transients (prepped inputs, row window, dy slices, shifted copy,
    f32 accumulator, masks), with sublane/lane padding."""
    L = th * w
    Lp = _round_up(L, 128)
    Wp = _round_up(w, 128)
    cin_s = _round_up(cin, 8)
    cout_s = _round_up(cout, 8)
    cin_l = _round_up(cin, 128)
    bufs = 2 * (cin_s * Lp * act_b              # center activation block
                + 2 * cin_s * Wp * act_b        # top/bottom halo rows
                + cout_s * Lp * out_b           # y output block
                + 2 * cout_s * Wp * out_b       # halo-row output block
                + cout_s * 128 * 4              # stats block
                + 9 * cout_s * cin_l * act_b    # weight stack
                + 2 * cin_s * 128 * 4)          # scale / shift
    trans = (cin_s * (Lp + 2 * Wp) * act_b      # prepped top/mid/bot
             + cin_s * _round_up(L + 2 * w, 128) * act_b   # row window
             + 2 * cin_s * Lp * act_b           # dy = 0 / 2 slices
             + 2 * cin_s * Lp * act_b           # rolled + masked temporaries
             + cout_s * Lp * 4                  # f32 accumulator
             + 2 * Lp * 4)                      # iota / masks
    return bufs + trans


def _pick_block_h(n, hdim, w, cin, cout, act_b, budget):
    """Largest H-tile that divides H, keeps TH*W a multiple of 128 (lane-dense
    stores / MXU columns) unless the whole image is one tile, and fits the VMEM
    budget.  Prefers an even number of parallel grid steps (v7x megacore)."""
    cands = [t for t in range(1, hdim + 1)
             if hdim % t == 0 and (t == hdim or (t * w) % 128 == 0)]
    feasible = [t for t in cands
                if _est_vmem(t, w, cin, cout, act_b, act_b) <= budget]
    if not feasible:
        feasible = [min(cands, key=lambda t: _est_vmem(t, w, cin, cout,
                                                       act_b, act_b))]

    def score(t):
        steps = n * (hdim // t)
        return (steps % 2 == 0 or steps >= 4, t)

    return max(feasible, key=score)


# --------------------------------------------------------------------------
# Pallas kernel: [fused prev-layer BN/ReLU] -> 3x3 conv (9 accumulating
#                MXU matmuls, lane-dense) [-> BN partials, next-layer halos]
# --------------------------------------------------------------------------
def _conv3x3_kernel(*refs, th, wdim, cin, cout,
                    apply_input_act, compute_stats, emit_halos):
    idx = 0
    if apply_input_act:
        scale_ref, shift_ref = refs[0], refs[1]       # (Cin, 1) f32
        idx = 2
    mid_ref, top_ref, bot_ref, w_ref, y_ref = refs[idx:idx + 5]
    idx += 5
    halo_ref = None
    stats_ref = None
    if emit_halos:
        halo_ref = refs[idx]
        idx += 1
    if compute_stats:
        stats_ref = refs[idx]

    L = th * wdim
    h = pl.program_id(1)
    nt = pl.num_programs(1)
    conv_dtype = mid_ref.dtype

    if apply_input_act:
        sc = scale_ref[...].astype(jnp.float32)        # (Cin, 1)
        sh = shift_ref[...].astype(jnp.float32)        # (Cin, 1)

    def prep(v):
        # Previous layer's BatchNorm affine + ReLU, fused into this conv's
        # input read (f32 math, cast back to the matmul dtype).
        if apply_input_act:
            v = jnp.maximum(v.astype(jnp.float32) * sc + sh, 0.0)
        return v.astype(conv_dtype)

    mid = prep(mid_ref[0])                                           # (Cin, TH*W)
    # 1-row halos, zeroed at the image borders AFTER the activation (the conv's
    # pad=1 zero padding acts on the activation domain).
    top = prep(top_ref[0, 0]) * (h > 0).astype(conv_dtype)           # (Cin, W)
    bot = prep(bot_ref[0, 0]) * (h < nt - 1).astype(conv_dtype)      # (Cin, W)

    # (Cin, (TH+2)*W) row window; per-dy inputs are lane-offset slices of it.
    win = jnp.concatenate([top, mid, bot], axis=1)

    # Column-in-row index, to zero the left/right conv borders after a roll.
    col = lax.broadcasted_iota(jnp.int32, (1, L), 1) % wdim
    not_left = col != 0
    not_right = col != (wdim - 1)

    acc = None
    for dy in range(3):
        x_dy = mid if dy == 1 else win[:, dy * wdim:dy * wdim + L]
        for dx in range(3):
            if dx == 0:        # needs column x-1: shift right by one lane
                v = jnp.where(not_left, pltpu.roll(x_dy, shift=1, axis=1), 0.0)
            elif dx == 2:      # needs column x+1: shift left by one lane
                v = jnp.where(not_right,
                              pltpu.roll(x_dy, shift=L - 1, axis=1), 0.0)
            else:
                v = x_dy
            part = jnp.dot(w_ref[dy * 3 + dx], v.astype(conv_dtype),
                           preferred_element_type=jnp.float32)   # (Cout, TH*W)
            acc = part if acc is None else acc + part

    y_ref[...] = acc.reshape(1, cout, L).astype(y_ref.dtype)

    if emit_halos:
        # This tile's first/last output rows are the next layer's bottom/top
        # halo rows (tiny side-channel: avoids re-reading y in the wrapper).
        halo_ref[0, 0] = acc[:, :wdim].astype(halo_ref.dtype)
        halo_ref[0, 1] = acc[:, L - wdim:].astype(halo_ref.dtype)

    if compute_stats:
        s0 = jnp.sum(acc, axis=1, keepdims=True)                 # (Cout, 1)
        s1 = jnp.sum(acc * acc, axis=1, keepdims=True)           # (Cout, 1)
        stats_ref[...] = jnp.concatenate([s0, s1], axis=1).reshape(1, 1, cout, 2)


def conv3x3_layer(x, halos, wstack, *, block_h, vmem_limit,
                  scale=None, shift=None, compute_stats=False,
                  emit_halos=False, out_dtype=None):
    """x: (N, Cin, H*W) activations; halos: (N, 2*nt, Cin, W) boundary rows
    (row 2h = first row of tile h, row 2h+1 = last row); wstack: (9, Cout, Cin).

    Computes conv3x3(pad=1, no bias) of relu(x*scale + shift) (or of x itself
    when scale is None).  Returns (y, [next-layer halos], [BN partial stats]).
    """
    n, cin, hw = x.shape
    w = halos.shape[-1]
    hdim = hw // w
    cout = wstack.shape[1]
    th = block_h
    nt = hdim // th
    L = th * w
    out_dtype = x.dtype if out_dtype is None else out_dtype
    apply_act = scale is not None

    kernel = functools.partial(
        _conv3x3_kernel, th=th, wdim=w, cin=cin, cout=cout,
        apply_input_act=apply_act, compute_stats=compute_stats,
        emit_halos=emit_halos)

    operands = []
    in_specs = []
    if apply_act:
        operands += [scale.reshape(cin, 1).astype(jnp.float32),
                     shift.reshape(cin, 1).astype(jnp.float32)]
        in_specs += [pl.BlockSpec((cin, 1), lambda i, j: (0, 0)),
                     pl.BlockSpec((cin, 1), lambda i, j: (0, 0))]
    operands += [x, halos, halos, wstack]
    in_specs += [
        pl.BlockSpec((1, cin, L), lambda i, j: (i, 0, j)),                # center
        pl.BlockSpec((1, 1, cin, w),                                      # top halo
                     lambda i, j: (i, jnp.maximum(2 * j - 1, 0), 0, 0)),
        pl.BlockSpec((1, 1, cin, w),                                      # bottom halo
                     lambda i, j: (i, jnp.minimum(2 * j + 2, 2 * nt - 1), 0, 0)),
        pl.BlockSpec((9, cout, cin), lambda i, j: (0, 0, 0)),             # weights
    ]

    out_shape = [jax.ShapeDtypeStruct((n, cout, hw), out_dtype)]
    out_specs = [pl.BlockSpec((1, cout, L), lambda i, j: (i, 0, j))]
    if emit_halos:
        out_shape.append(jax.ShapeDtypeStruct((n, 2 * nt, cout, w), out_dtype))
        out_specs.append(pl.BlockSpec((1, 2, cout, w), lambda i, j: (i, j, 0, 0)))
    if compute_stats:
        out_shape.append(jax.ShapeDtypeStruct((n, nt, cout, 2), jnp.float32))
        out_specs.append(pl.BlockSpec((1, 1, cout, 2), lambda i, j: (i, j, 0, 0)))

    res = pl.pallas_call(
        kernel,
        grid=(n, nt),
        in_specs=in_specs,
        out_shape=tuple(out_shape),
        out_specs=tuple(out_specs),
        compiler_params=pltpu.CompilerParams(
            dimension_semantics=("parallel", "parallel"),
            vmem_limit_bytes=vmem_limit),
    )(*operands)
    if not isinstance(res, (tuple, list)):
        res = (res,)
    return tuple(res)


def _input_halo_rows(x4, th):
    """(N, C, H, W) -> (N, 2*nt, C, W): rows [h*th, h*th+th-1] per tile h."""
    n, c, hdim, w = x4.shape
    nt = hdim // th
    first = x4[:, :, ::th, :]                            # (N, C, nt, W)
    last = x4[:, :, th - 1::th, :]                       # (N, C, nt, W)
    stacked = jnp.stack([first, last], axis=3)           # (N, C, nt, 2, W)
    stacked = jnp.transpose(stacked, (0, 2, 3, 1, 4))    # (N, nt, 2, C, W)
    return stacked.reshape(n, 2 * nt, c, w)


# --------------------------------------------------------------------------
# DnCNN parameter init (deterministic, matching the module's shapes/init)
# --------------------------------------------------------------------------
def init_dncnn_params(key, in_channels, out_channels, num_of_layers,
                      features=64):
    def kaiming(k, cin, cout):
        fan_in = cin * 3 * 3
        std = (2.0 / fan_in) ** 0.5      # kaiming_normal_ (fan_in, gain sqrt(2))
        return jax.random.normal(k, (3, 3, cin, cout), jnp.float32) * std

    keys = jax.random.split(key, num_of_layers)
    ws, bns = [], []
    ws.append(kaiming(keys[0], in_channels, features))
    for i in range(1, num_of_layers - 1):
        ws.append(kaiming(keys[i], features, features))
        # BatchNorm2d: weight <- ones, bias <- zeros (per _initialize_weights)
        bns.append((jnp.ones((features,), jnp.float32),
                    jnp.zeros((features,), jnp.float32)))
    ws.append(kaiming(keys[-1], in_channels if False else features, out_channels)
              if False else kaiming(keys[-1], features, out_channels))
    return ws, bns


def dncnn_forward(x_nchw, params, *, block_h=None,
                  compute_dtype=jnp.bfloat16, eps=1e-5):
    """Forward pass: x is NCHW (PyTorch convention), returns the NCHW residual."""
    ws, bns = params
    n, c0, hdim, w = x_nchw.shape
    feat = ws[0].shape[-1]
    c_out = ws[-1].shape[-1]
    act_b = jnp.dtype(compute_dtype).itemsize

    cap = _vmem_capacity_bytes()
    budget = cap * 2 // 5
    th = _pick_block_h(n, hdim, w, feat, feat, act_b, budget) \
        if block_h is None else block_h
    assert hdim % th == 0, f"block_h={th} must divide H={hdim}"
    assert th == hdim or (th * w) % 128 == 0, \
        f"block_h*W={th * w} must be a multiple of 128 (or block_h == H)"
    # TODO(synk): support non-divisor H via a pl.cdiv grid + row masking.
    nt = hdim // th

    est = _est_vmem(th, w, feat, feat, act_b, act_b)
    vmem_limit = int(min(cap * 3 // 4, max(2 * est, 32 << 20)))

    nhw = float(n * hdim * w)

    def wstack(whwio):
        co = whwio.shape[-1]
        ci = whwio.shape[-2]
        # HWIO (dy, dx, ci, co) -> (9, co, ci), tap index k = dy*3 + dx.
        return jnp.transpose(whwio, (0, 1, 3, 2)).reshape(9, co, ci) \
                  .astype(compute_dtype)

    x4 = x_nchw.astype(compute_dtype)
    x = x4.reshape(n, c0, hdim * w)
    halos = _input_halo_rows(x4, th)

    # Layer 0: conv only (its ReLU is deferred into the next conv's input read).
    y, halos = conv3x3_layer(x, halos, wstack(ws[0]), block_h=th,
                             vmem_limit=vmem_limit, emit_halos=True,
                             out_dtype=compute_dtype)

    # Pending input-side activation for the next conv (starts as a plain ReLU).
    scale = jnp.ones((feat,), jnp.float32)
    shift = jnp.zeros((feat,), jnp.float32)

    for i in range(1, len(ws) - 1):
        y, halos, stats = conv3x3_layer(y, halos, wstack(ws[i]), block_h=th,
                                        vmem_limit=vmem_limit, scale=scale,
                                        shift=shift, compute_stats=True,
                                        emit_halos=True,
                                        out_dtype=compute_dtype)
        gamma, beta = bns[i - 1]
        tot = jnp.sum(stats, axis=(0, 1))            # (feat, 2): [sum, sum_sq]
        mean = tot[:, 0] / nhw
        var = tot[:, 1] / nhw - mean * mean          # biased var (training BN)
        inv = lax.rsqrt(var + eps)
        scale = gamma * inv                          # fused BN+ReLU applied at
        shift = beta - mean * scale                  # the next conv's input read

    (out,) = conv3x3_layer(y, halos, wstack(ws[-1]), block_h=th,
                           vmem_limit=vmem_limit, scale=scale, shift=shift,
                           out_dtype=jnp.float32)
    return out.reshape(n, c_out, hdim, w)


# --------------------------------------------------------------------------
# Pure-JAX reference (for correctness check)
# --------------------------------------------------------------------------
def dncnn_reference(x_nchw, params):
    ws, bns = params
    x = jnp.transpose(x_nchw, (0, 2, 3, 1))

    def conv(x, w):
        return lax.conv_general_dilated(
            x, w, window_strides=(1, 1), padding="SAME",
            dimension_numbers=("NHWC", "HWIO", "NHWC"))

    x = jax.nn.relu(conv(x, ws[0]))
    for i in range(1, len(ws) - 1):
        g, b = bns[i - 1]
        y = conv(x, ws[i])
        mean = jnp.mean(y, axis=(0, 1, 2), keepdims=True)
        var = jnp.mean((y - mean) ** 2, axis=(0, 1, 2), keepdims=True)
        y = (y - mean) * lax.rsqrt(var + 1e-5) * g + b
        x = jax.nn.relu(y)
    x = conv(x, ws[-1])
    return jnp.transpose(x, (0, 3, 1, 2))


if __name__ == "__main__":
    key = jax.random.PRNGKey(0)
    k_x, k_p = jax.random.split(key)

    # Small shapes consistent with the module: N=2, C_in=C_out=4, H=W=16.
    N, C_IN, C_OUT, H, W = 2, 4, 4, 16, 16
    NUM_LAYERS = 5                       # num_of_layers (small for test speed)

    x = jax.random.normal(k_x, (N, C_IN, H, W), jnp.float32)
    params = init_dncnn_params(k_p, C_IN, C_OUT, NUM_LAYERS)

    ref = jax.block_until_ready(dncnn_reference(x, params))

    # Tile-picker smoke test (pure Python, no extra compile).
    th_auto = _pick_block_h(N, H, W, 64, 64, 2, _vmem_capacity_bytes() * 2 // 5)
    assert H % th_auto == 0 and (th_auto == H or (th_auto * W) % 128 == 0)

    # Full-precision path (block_h=8 -> 2x2 grid, exercises halos/tiling):
    fwd_f32 = jax.jit(functools.partial(dncnn_forward, block_h=8,
                                        compute_dtype=jnp.float32))
    out_f32 = jax.block_until_ready(fwd_f32(x, params))
    assert out_f32.shape == (N, C_OUT, H, W)
    err_f32 = float(jnp.max(jnp.abs(out_f32 - ref)))
    assert jnp.allclose(out_f32, ref, atol=2e-3, rtol=2e-3), err_f32

    # Default bf16-matmul fast path: looser tolerance (bf16 operand rounding).
    fwd_bf16 = jax.jit(functools.partial(dncnn_forward, block_h=8))
    out_bf16 = jax.block_until_ready(fwd_bf16(x, params))
    err_bf16 = float(jnp.max(jnp.abs(out_bf16 - ref)))
    assert jnp.allclose(out_bf16, ref, atol=5e-2, rtol=5e-2), err_bf16

    print("KERNEL_OK")
</pallas_src>

<mosaic_0001>
module attributes {stable_mosaic.version = 11 : i64} {
  func.func @_conv3x3_kernel(%arg0: i32, %arg1: i32, %arg2: memref<1x4x128xf32, #tpu.memory_space<vmem>>, %arg3: memref<1x1x4x16xf32, #tpu.memory_space<vmem>>, %arg4: memref<1x1x4x16xf32, #tpu.memory_space<vmem>>, %arg5: memref<9x64x4xf32, #tpu.memory_space<vmem>>, %arg6: memref<1x64x128xf32, #tpu.memory_space<vmem>>, %arg7: memref<1x2x64x16xf32, #tpu.memory_space<vmem>>) attributes {dimension_semantics = [#tpu.dimension_semantics<parallel>, #tpu.dimension_semantics<parallel>], iteration_bounds = array<i64: 2, 2>, scalar_prefetch = 0 : i64, scratch_operands = 0 : i64, tpu.core_type = #tpu.core_type<tc>, window_params = [{transform_indices = @transform_0, window_bounds = array<i64: 1, 4, 128>}, {transform_indices = @transform_1, window_bounds = array<i64: 1, 1, 4, 16>}, {transform_indices = @transform_2, window_bounds = array<i64: 1, 1, 4, 16>}, {pipeline_mode = #tpu.pipeline_mode<synchronous>, transform_indices = @transform_3, window_bounds = array<i64: 9, 64, 4>}, {transform_indices = @transform_4, window_bounds = array<i64: 1, 64, 128>}, {transform_indices = @transform_5, window_bounds = array<i64: 1, 2, 64, 16>}]} {
    %c0 = arith.constant 0 : index
    %c0_0 = arith.constant 0 : index
    %c0_1 = arith.constant 0 : index
    %0 = vector.load %arg2[%c0, %c0_0, %c0_1] : memref<1x4x128xf32, #tpu.memory_space<vmem>>, vector<1x4x128xf32>
    %1 = vector.shape_cast %0 : vector<1x4x128xf32> to vector<4x128xf32>
    %c0_2 = arith.constant 0 : index
    %c0_3 = arith.constant 0 : index
    %c0_4 = arith.constant 0 : index
    %c0_5 = arith.constant 0 : index
    %2 = vector.load %arg3[%c0_2, %c0_3, %c0_4, %c0_5] : memref<1x1x4x16xf32, #tpu.memory_space<vmem>>, vector<1x1x4x16xf32>
    %3 = vector.shape_cast %2 : vector<1x1x4x16xf32> to vector<4x16xf32>
    %c0_i32 = arith.constant 0 : i32
    %4 = arith.cmpi sgt, %arg1, %c0_i32 : i32
    %5 = arith.extui %4 : i1 to i32
    %6 = arith.sitofp %5 : i32 to f32
    %7 = vector.broadcast %6 : f32 to vector<4x16xf32>
    %8 = arith.mulf %3, %7 : vector<4x16xf32>
    %c0_6 = arith.constant 0 : index
    %c0_7 = arith.constant 0 : index
    %c0_8 = arith.constant 0 : index
    %c0_9 = arith.constant 0 : index
    %9 = vector.load %arg4[%c0_6, %c0_7, %c0_8, %c0_9] : memref<1x1x4x16xf32, #tpu.memory_space<vmem>>, vector<1x1x4x16xf32>
    %10 = vector.shape_cast %9 : vector<1x1x4x16xf32> to vector<4x16xf32>
    %c1_i32 = arith.constant 1 : i32
    %11 = arith.cmpi slt, %arg1, %c1_i32 : i32
    %12 = arith.extui %11 : i1 to i32
    %13 = arith.sitofp %12 : i32 to f32
    %14 = vector.broadcast %13 : f32 to vector<4x16xf32>
    %15 = arith.mulf %10, %14 : vector<4x16xf32>
    %16 = tpu.concatenate %8, %1, %15 in 1 : vector<4x16xf32>, vector<4x128xf32>, vector<4x16xf32> -> vector<4x160xf32>
    %17 = tpu.iota {dimensions = array<i32: 1>} : vector<1x128xi32>
    %c16_i32 = arith.constant 16 : i32
    %c0_i32_10 = arith.constant 0 : i32
    %18 = arith.cmpi eq, %c16_i32, %c0_i32_10 : i32
    %c1_i32_11 = arith.constant 1 : i32
    %19 = arith.select %18, %c1_i32_11, %c16_i32 : i32
    %20 = vector.broadcast %19 : i32 to vector<1x128xi32>
    %21 = arith.remsi %17, %20 : vector<1x128xi32>
    %c0_i32_12 = arith.constant 0 : i32
    %22 = vector.broadcast %c0_i32_12 : i32 to vector<1x128xi32>
    %23 = arith.cmpi ne, %21, %22 : vector<1x128xi32>
    %c0_i32_13 = arith.constant 0 : i32
    %24 = vector.broadcast %c0_i32_13 : i32 to vector<1x128xi32>
    %25 = arith.cmpi slt, %21, %24 : vector<1x128xi32>
    %c0_i32_14 = arith.constant 0 : i32
    %26 = arith.cmpi slt, %19, %c0_i32_14 : i32
    %27 = vector.broadcast %26 : i1 to vector<1x128xi1>
    %28 = vector.broadcast %27 : vector<1x128xi1> to vector<1x128xi1>
    %29 = arith.xori %25, %28 : vector<1x128xi1>
    %30 = arith.andi %29, %23 : vector<1x128xi1>
    %31 = vector.broadcast %19 : i32 to vector<1x128xi32>
    %32 = arith.addi %21, %31 : vector<1x128xi32>
    %33 = arith.select %30, %32, %21 : vector<1x128xi1>, vector<1x128xi32>
    %c0_i32_15 = arith.constant 0 : i32
    %34 = vector.broadcast %c0_i32_15 : i32 to vector<1x128xi32>
    %35 = arith.cmpi ne, %33, %34 : vector<1x128xi32>
    %c15_i32 = arith.constant 15 : i32
    %36 = vector.broadcast %c15_i32 : i32 to vector<1x128xi32>
    %37 = arith.cmpi ne, %33, %36 : vector<1x128xi32>
    %38 = vector.extract_strided_slice %16 {offsets = [0, 0], sizes = [4, 128], strides = [1, 1]} : vector<4x160xf32> to vector<4x128xf32>
    %c1_i32_16 = arith.constant 1 : i32
    %39 = tpu.dynamic_rotate %38 by %c1_i32_16 dim 1 : vector<4x128xf32>, i32 -> vector<4x128xf32>
    %cst = arith.constant 0.000000e+00 : f32
    %40 = vector.shape_cast %35 : vector<1x128xi1> to vector<1x128xi1>
    %41 = vector.broadcast %40 : vector<1x128xi1> to vector<4x128xi1>
    %42 = vector.broadcast %cst : f32 to vector<4x128xf32>
    %43 = arith.select %41, %39, %42 : vector<4x128xi1>, vector<4x128xf32>
    %c0_17 = arith.constant 0 : index
    %c0_18 = arith.constant 0 : index
    %c0_19 = arith.constant 0 : index
    %44 = vector.load %arg5[%c0_17, %c0_18, %c0_19] : memref<9x64x4xf32, #tpu.memory_space<vmem>>, vector<1x64x4xf32>
    %45 = vector.shape_cast %44 : vector<1x64x4xf32> to vector<64x4xf32>
    %cst_20 = arith.constant dense<0.000000e+00> : vector<64x128xf32>
    %46 = tpu.matmul %45, %43, %cst_20 {dimension_numbers = #tpu.dot_dimension_numbers<[1], [0], [0], [1], [0, 0, 1, 1], [], []>} : vector<64x4xf32>, vector<4x128xf32>, vector<64x128xf32> -> vector<64x128xf32>
    %c1 = arith.constant 1 : index
    %c0_21 = arith.constant 0 : index
    %c0_22 = arith.constant 0 : index
    %47 = vector.load %arg5[%c1, %c0_21, %c0_22] : memref<9x64x4xf32, #tpu.memory_space<vmem>>, vector<1x64x4xf32>
    %48 = vector.shape_cast %47 : vector<1x64x4xf32> to vector<64x4xf32>
    %cst_23 = arith.constant dense<0.000000e+00> : vector<64x128xf32>
    %49 = tpu.matmul %48, %38, %cst_23 {dimension_numbers = #tpu.dot_dimension_numbers<[1], [0], [0], [1], [0, 0, 1, 1], [], []>} : vector<64x4xf32>, vector<4x128xf32>, vector<64x128xf32> -> vector<64x128xf32>
    %50 = arith.addf %46, %49 : vector<64x128xf32>
    %c127_i32 = arith.constant 127 : i32
    %51 = tpu.dynamic_rotate %38 by %c127_i32 dim 1 : vector<4x128xf32>, i32 -> vector<4x128xf32>
    %cst_24 = arith.constant 0.000000e+00 : f32
    %52 = vector.shape_cast %37 : vector<1x128xi1> to vector<1x128xi1>
    %53 = vector.broadcast %52 : vector<1x128xi1> to vector<4x128xi1>
    %54 = vector.broadcast %cst_24 : f32 to vector<4x128xf32>
    %55 = arith.select %53, %51, %54 : vector<4x128xi1>, vector<4x128xf32>
    %c2 = arith.constant 2 : index
    %c0_25 = arith.constant 0 : index
    %c0_26 = arith.constant 0 : index
    %56 = vector.load %arg5[%c2, %c0_25, %c0_26] : memref<9x64x4xf32, #tpu.memory_space<vmem>>, vector<1x64x4xf32>
    %57 = vector.shape_cast %56 : vector<1x64x4xf32> to vector<64x4xf32>
    %cst_27 = arith.constant dense<0.000000e+00> : vector<64x128xf32>
    %58 = tpu.matmul %57, %55, %cst_27 {dimension_numbers = #tpu.dot_dimension_numbers<[1], [0], [0], [1], [0, 0, 1, 1], [], []>} : vector<64x4xf32>, vector<4x128xf32>, vector<64x128xf32> -> vector<64x128xf32>
    %59 = arith.addf %50, %58 : vector<64x128xf32>
    %c1_i32_28 = arith.constant 1 : i32
    %60 = tpu.dynamic_rotate %1 by %c1_i32_28 dim 1 : vector<4x128xf32>, i32 -> vector<4x128xf32>
    %cst_29 = arith.constant 0.000000e+00 : f32
    %61 = vector.shape_cast %35 : vector<1x128xi1> to vector<1x128xi1>
    %62 = vector.broadcast %61 : vector<1x128xi1> to vector<4x128xi1>
    %63 = vector.broadcast %cst_29 : f32 to vector<4x128xf32>
    %64 = arith.select %62, %60, %63 : vector<4x128xi1>, vector<4x128xf32>
    %c3 = arith.constant 3 : index
    %c0_30 = arith.constant 0 : index
    %c0_31 = arith.constant 0 : index
    %65 = vector.load %arg5[%c3, %c0_30, %c0_31] : memref<9x64x4xf32, #tpu.memory_space<vmem>>, vector<1x64x4xf32>
    %66 = vector.shape_cast %65 : vector<1x64x4xf32> to vector<64x4xf32>
    %cst_32 = arith.constant dense<0.000000e+00> : vector<64x128xf32>
    %67 = tpu.matmul %66, %64, %cst_32 {dimension_numbers = #tpu.dot_dimension_numbers<[1], [0], [0], [1], [0, 0, 1, 1], [], []>} : vector<64x4xf32>, vector<4x128xf32>, vector<64x128xf32> -> vector<64x128xf32>
    %68 = arith.addf %59, %67 : vector<64x128xf32>
    %c4 = arith.constant 4 : index
    %c0_33 = arith.constant 0 : index
    %c0_34 = arith.constant 0 : index
    %69 = vector.load %arg5[%c4, %c0_33, %c0_34] : memref<9x64x4xf32, #tpu.memory_space<vmem>>, vector<1x64x4xf32>
    %70 = vector.shape_cast %69 : vector<1x64x4xf32> to vector<64x4xf32>
    %cst_35 = arith.constant dense<0.000000e+00> : vector<64x128xf32>
    %71 = tpu.matmul %70, %1, %cst_35 {dimension_numbers = #tpu.dot_dimension_numbers<[1], [0], [0], [1], [0, 0, 1, 1], [], []>} : vector<64x4xf32>, vector<4x128xf32>, vector<64x128xf32> -> vector<64x128xf32>
    %72 = arith.addf %68, %71 : vector<64x128xf32>
    %c127_i32_36 = arith.constant 127 : i32
    %73 = tpu.dynamic_rotate %1 by %c127_i32_36 dim 1 : vector<4x128xf32>, i32 -> vector<4x128xf32>
    %cst_37 = arith.constant 0.000000e+00 : f32
    %74 = vector.shape_cast %37 : vector<1x128xi1> to vector<1x128xi1>
    %75 = vector.broadcast %74 : vector<1x128xi1> to vector<4x128xi1>
    %76 = vector.broadcast %cst_37 : f32 to vector<4x128xf32>
    %77 = arith.select %75, %73, %76 : vector<4x128xi1>, vector<4x128xf32>
    %c5 = arith.constant 5 : index
    %c0_38 = arith.constant 0 : index
    %c0_39 = arith.constant 0 : index
    %78 = vector.load %arg5[%c5, %c0_38, %c0_39] : memref<9x64x4xf32, #tpu.memory_space<vmem>>, vector<1x64x4xf32>
    %79 = vector.shape_cast %78 : vector<1x64x4xf32> to vector<64x4xf32>
    %cst_40 = arith.constant dense<0.000000e+00> : vector<64x128xf32>
    %80 = tpu.matmul %79, %77, %cst_40 {dimension_numbers = #tpu.dot_dimension_numbers<[1], [0], [0], [1], [0, 0, 1, 1], [], []>} : vector<64x4xf32>, vector<4x128xf32>, vector<64x128xf32> -> vector<64x128xf32>
    %81 = arith.addf %72, %80 : vector<64x128xf32>
    %82 = vector.extract_strided_slice %16 {offsets = [0, 32], sizes = [4, 128], strides = [1, 1]} : vector<4x160xf32> to vector<4x128xf32>
    %c1_i32_41 = arith.constant 1 : i32
    %83 = tpu.dynamic_rotate %82 by %c1_i32_41 dim 1 : vector<4x128xf32>, i32 -> vector<4x128xf32>
    %cst_42 = arith.constant 0.000000e+00 : f32
    %84 = vector.shape_cast %35 : vector<1x128xi1> to vector<1x128xi1>
    %85 = vector.broadcast %84 : vector<1x128xi1> to vector<4x128xi1>
    %86 = vector.broadcast %cst_42 : f32 to vector<4x128xf32>
    %87 = arith.select %85, %83, %86 : vector<4x128xi1>, vector<4x128xf32>
    %c6 = arith.constant 6 : index
    %c0_43 = arith.constant 0 : index
    %c0_44 = arith.constant 0 : index
    %88 = vector.load %arg5[%c6, %c0_43, %c0_44] : memref<9x64x4xf32, #tpu.memory_space<vmem>>, vector<1x64x4xf32>
    %89 = vector.shape_cast %88 : vector<1x64x4xf32> to vector<64x4xf32>
    %cst_45 = arith.constant dense<0.000000e+00> : vector<64x128xf32>
    %90 = tpu.matmul %89, %87, %cst_45 {dimension_numbers = #tpu.dot_dimension_numbers<[1], [0], [0], [1], [0, 0, 1, 1], [], []>} : vector<64x4xf32>, vector<4x128xf32>, vector<64x128xf32> -> vector<64x128xf32>
    %91 = arith.addf %81, %90 : vector<64x128xf32>
    %c7 = arith.constant 7 : index
    %c0_46 = arith.constant 0 : index
    %c0_47 = arith.constant 0 : index
    %92 = vector.load %arg5[%c7, %c0_46, %c0_47] : memref<9x64x4xf32, #tpu.memory_space<vmem>>, vector<1x64x4xf32>
    %93 = vector.shape_cast %92 : vector<1x64x4xf32> to vector<64x4xf32>
    %cst_48 = arith.constant dense<0.000000e+00> : vector<64x128xf32>
    %94 = tpu.matmul %93, %82, %cst_48 {dimension_numbers = #tpu.dot_dimension_numbers<[1], [0], [0], [1], [0, 0, 1, 1], [], []>} : vector<64x4xf32>, vector<4x128xf32>, vector<64x128xf32> -> vector<64x128xf32>
    %95 = arith.addf %91, %94 : vector<64x128xf32>
    %c127_i32_49 = arith.constant 127 : i32
    %96 = tpu.dynamic_rotate %82 by %c127_i32_49 dim 1 : vector<4x128xf32>, i32 -> vector<4x128xf32>
    %cst_50 = arith.constant 0.000000e+00 : f32
    %97 = vector.shape_cast %37 : vector<1x128xi1> to vector<1x128xi1>
    %98 = vector.broadcast %97 : vector<1x128xi1> to vector<4x128xi1>
    %99 = vector.broadcast %cst_50 : f32 to vector<4x128xf32>
    %100 = arith.select %98, %96, %99 : vector<4x128xi1>, vector<4x128xf32>
    %c8 = arith.constant 8 : index
    %c0_51 = arith.constant 0 : index
    %c0_52 = arith.constant 0 : index
    %101 = vector.load %arg5[%c8, %c0_51, %c0_52] : memref<9x64x4xf32, #tpu.memory_space<vmem>>, vector<1x64x4xf32>
    %102 = vector.shape_cast %101 : vector<1x64x4xf32> to vector<64x4xf32>
    %cst_53 = arith.constant dense<0.000000e+00> : vector<64x128xf32>
    %103 = tpu.matmul %102, %100, %cst_53 {dimension_numbers = #tpu.dot_dimension_numbers<[1], [0], [0], [1], [0, 0, 1, 1], [], []>} : vector<64x4xf32>, vector<4x128xf32>, vector<64x128xf32> -> vector<64x128xf32>
    %104 = arith.addf %95, %103 : vector<64x128xf32>
    %105 = vector.shape_cast %104 : vector<64x128xf32> to vector<1x64x128xf32>
    %c0_54 = arith.constant 0 : index
    %c0_55 = arith.constant 0 : index
    %c0_56 = arith.constant 0 : index
    %106 = vector.load %arg6[%c0_54, %c0_55, %c0_56] : memref<1x64x128xf32, #tpu.memory_space<vmem>>, vector<1x64x128xf32>
    tpu.vector_store %arg6[%c0_54, %c0_55, %c0_56], %105 {strides = array<i32>} : memref<1x64x128xf32, #tpu.memory_space<vmem>>, vector<1x64x128xf32>,
    %107 = vector.extract_strided_slice %104 {offsets = [0, 0], sizes = [64, 16], strides = [1, 1]} : vector<64x128xf32> to vector<64x16xf32>
    %c0_57 = arith.constant 0 : index
    %c0_58 = arith.constant 0 : index
    %c0_59 = arith.constant 0 : index
    %c0_60 = arith.constant 0 : index
    %108 = vector.load %arg7[%c0_57, %c0_58, %c0_59, %c0_60] : memref<1x2x64x16xf32, #tpu.memory_space<vmem>>, vector<1x1x64x16xf32>
    %109 = vector.shape_cast %108 : vector<1x1x64x16xf32> to vector<64x16xf32>
    %110 = vector.shape_cast %107 : vector<64x16xf32> to vector<1x1x64x16xf32>
    tpu.vector_store %arg7[%c0_57, %c0_58, %c0_59, %c0_60], %110 {strides = array<i32>} : memref<1x2x64x16xf32, #tpu.memory_space<vmem>>, vector<1x1x64x16xf32>,
    %111 = vector.extract_strided_slice %104 {offsets = [0, 112], sizes = [64, 16], strides = [1, 1]} : vector<64x128xf32> to vector<64x16xf32>
    %c0_61 = arith.constant 0 : index
    %c1_62 = arith.constant 1 : index
    %c0_63 = arith.constant 0 : index
    %c0_64 = arith.constant 0 : index
    %112 = vector.load %arg7[%c0_61, %c1_62, %c0_63, %c0_64] : memref<1x2x64x16xf32, #tpu.memory_space<vmem>>, vector<1x1x64x16xf32>
    %113 = vector.shape_cast %112 : vector<1x1x64x16xf32> to vector<64x16xf32>
    %114 = vector.shape_cast %111 : vector<64x16xf32> to vector<1x1x64x16xf32>
    tpu.vector_store %arg7[%c0_61, %c1_62, %c0_63, %c0_64], %114 {strides = array<i32>} : memref<1x2x64x16xf32, #tpu.memory_space<vmem>>, vector<1x1x64x16xf32>,
    return
  }
  func.func @transform_0(%arg0: i32, %arg1: i32) -> (i32, i32, i32) {
    %c0_i32 = arith.constant 0 : i32
    %c0_i32_0 = arith.constant 0 : i32
    return %arg0, %c0_i32, %arg1 : i32, i32, i32
  }
  func.func @transform_1(%arg0: i32, %arg1: i32) -> (i32, i32, i32, i32) {
    %c2_i32 = arith.constant 2 : i32
    %0 = arith.muli %c2_i32, %arg1 : i32
    %c1_i32 = arith.constant 1 : i32
    %1 = arith.subi %0, %c1_i32 : i32
    %c0_i32 = arith.constant 0 : i32
    %2 = arith.maxsi %1, %c0_i32 : i32
    %c0_i32_0 = arith.constant 0 : i32
    %c0_i32_1 = arith.constant 0 : i32
    %c0_i32_2 = arith.constant 0 : i32
    return %arg0, %2, %c0_i32_0, %c0_i32_1 : i32, i32, i32, i32
  }
  func.func @transform_2(%arg0: i32, %arg1: i32) -> (i32, i32, i32, i32) {
    %c2_i32 = arith.constant 2 : i32
    %0 = arith.muli %c2_i32, %arg1 : i32
    %c2_i32_0 = arith.constant 2 : i32
    %1 = arith.addi %0, %c2_i32_0 : i32
    %c3_i32 = arith.constant 3 : i32
    %2 = arith.minsi %1, %c3_i32 : i32
    %c0_i32 = arith.constant 0 : i32
    %c0_i32_1 = arith.constant 0 : i32
    %c0_i32_2 = arith.constant 0 : i32
    return %arg0, %2, %c0_i32, %c0_i32_1 : i32, i32, i32, i32
  }
  func.func @transform_3(%arg0: i32, %arg1: i32) -> (i32, i32, i32) {
    %c0_i32 = arith.constant 0 : i32
    %c0_i32_0 = arith.constant 0 : i32
    %c0_i32_1 = arith.constant 0 : i32
    %c0_i32_2 = arith.constant 0 : i32
    return %c0_i32, %c0_i32_0, %c0_i32_1 : i32, i32, i32
  }
  func.func @transform_4(%arg0: i32, %arg1: i32) -> (i32, i32, i32) {
    %c0_i32 = arith.constant 0 : i32
    %c0_i32_0 = arith.constant 0 : i32
    return %arg0, %c0_i32, %arg1 : i32, i32, i32
  }
  func.func @transform_5(%arg0: i32, %arg1: i32) -> (i32, i32, i32, i32) {
    %c0_i32 = arith.constant 0 : i32
    %c0_i32_0 = arith.constant 0 : i32
    %c0_i32_1 = arith.constant 0 : i32
    return %arg0, %arg1, %c0_i32, %c0_i32_0 : i32, i32, i32, i32
  }
}

module attributes {stable_mosaic.version = 11 : i64} {
  func.func @_conv3x3_kernel(%arg0: i32, %arg1: i32, %arg2: memref<64x1xf32, #tpu.memory_space<vmem>>, %arg3: memref<64x1xf32, #tpu.memory_space<vmem>>, %arg4: memref<1x64x128xf32, #tpu.memory_space<vmem>>, %arg5: memref<1x1x64x16xf32, #tpu.memory_space<vmem>>, %arg6: memref<1x1x64x16xf32, #tpu.memory_space<vmem>>, %arg7: memref<9x64x64xf32, #tpu.memory_space<vmem>>, %arg8: memref<1x64x128xf32, #tpu.memory_space<vmem>>, %arg9: memref<1x2x64x16xf32, #tpu.memory_space<vmem>>, %arg10: memref<1x1x64x2xf32, #tpu.memory_space<vmem>>) attributes {dimension_semantics = [#tpu.dimension_semantics<parallel>, #tpu.dimension_semantics<parallel>], iteration_bounds = array<i64: 2, 2>, scalar_prefetch = 0 : i64, scratch_operands = 0 : i64, tpu.core_type = #tpu.core_type<tc>, window_params = [{pipeline_mode = #tpu.pipeline_mode<synchronous>, transform_indices = @transform_0, window_bounds = array<i64: 64, 1>}, {pipeline_mode = #tpu.pipeline_mode<synchronous>, transform_indices = @transform_1, window_bounds = array<i64: 64, 1>}, {transform_indices = @transform_2, window_bounds = array<i64: 1, 64, 128>}, {transform_indices = @transform_3, window_bounds = array<i64: 1, 1, 64, 16>}, {transform_indices = @transform_4, window_bounds = array<i64: 1, 1, 64, 16>}, {pipeline_mode = #tpu.pipeline_mode<synchronous>, transform_indices = @transform_5, window_bounds = array<i64: 9, 64, 64>}, {transform_indices = @transform_6, window_bounds = array<i64: 1, 64, 128>}, {transform_indices = @transform_7, window_bounds = array<i64: 1, 2, 64, 16>}, {transform_indices = @transform_8, window_bounds = array<i64: 1, 1, 64, 2>}]} {
    %c0 = arith.constant 0 : index
    %c0_0 = arith.constant 0 : index
    %0 = vector.load %arg2[%c0, %c0_0] : memref<64x1xf32, #tpu.memory_space<vmem>>, vector<64x1xf32>
    %c0_1 = arith.constant 0 : index
    %c0_2 = arith.constant 0 : index
    %1 = vector.load %arg3[%c0_1, %c0_2] : memref<64x1xf32, #tpu.memory_space<vmem>>, vector<64x1xf32>
    %c0_3 = arith.constant 0 : index
    %c0_4 = arith.constant 0 : index
    %c0_5 = arith.constant 0 : index
    %2 = vector.load %arg4[%c0_3, %c0_4, %c0_5] : memref<1x64x128xf32, #tpu.memory_space<vmem>>, vector<1x64x128xf32>
    %3 = vector.shape_cast %2 : vector<1x64x128xf32> to vector<64x128xf32>
    %4 = vector.broadcast %0 : vector<64x1xf32> to vector<64x128xf32>
    %5 = arith.mulf %3, %4 : vector<64x128xf32>
    %6 = vector.broadcast %1 : vector<64x1xf32> to vector<64x128xf32>
    %7 = arith.addf %5, %6 : vector<64x128xf32>
    %cst = arith.constant 0.000000e+00 : f32
    %8 = vector.broadcast %cst : f32 to vector<64x128xf32>
    %9 = arith.maximumf %7, %8 : vector<64x128xf32>
    %c0_6 = arith.constant 0 : index
    %c0_7 = arith.constant 0 : index
    %c0_8 = arith.constant 0 : index
    %c0_9 = arith.constant 0 : index
    %10 = vector.load %arg5[%c0_6, %c0_7, %c0_8, %c0_9] : memref<1x1x64x16xf32, #tpu.memory_space<vmem>>, vector<1x1x64x16xf32>
    %11 = vector.shape_cast %10 : vector<1x1x64x16xf32> to vector<64x16xf32>
    %12 = vector.broadcast %0 : vector<64x1xf32> to vector<64x16xf32>
    %13 = arith.mulf %11, %12 : vector<64x16xf32>
    %14 = vector.broadcast %1 : vector<64x1xf32> to vector<64x16xf32>
    %15 = arith.addf %13, %14 : vector<64x16xf32>
    %cst_10 = arith.constant 0.000000e+00 : f32
    %16 = vector.broadcast %cst_10 : f32 to vector<64x16xf32>
    %17 = arith.maximumf %15, %16 : vector<64x16xf32>
    %c0_i32 = arith.constant 0 : i32
    %18 = arith.cmpi sgt, %arg1, %c0_i32 : i32
    %19 = arith.extui %18 : i1 to i32
    %20 = arith.sitofp %19 : i32 to f32
    %21 = vector.broadcast %20 : f32 to vector<64x16xf32>
    %22 = arith.mulf %17, %21 : vector<64x16xf32>
    %c0_11 = arith.constant 0 : index
    %c0_12 = arith.constant 0 : index
    %c0_13 = arith.constant 0 : index
    %c0_14 = arith.constant 0 : index
    %23 = vector.load %arg6[%c0_11, %c0_12, %c0_13, %c0_14] : memref<1x1x64x16xf32, #tpu.memory_space<vmem>>, vector<1x1x64x16xf32>
    %24 = vector.shape_cast %23 : vector<1x1x64x16xf32> to vector<64x16xf32>
    %25 = vector.broadcast %0 : vector<64x1xf32> to vector<64x16xf32>
    %26 = arith.mulf %24, %25 : vector<64x16xf32>
    %27 = vector.broadcast %1 : vector<64x1xf32> to vector<64x16xf32>
    %28 = arith.addf %26, %27 : vector<64x16xf32>
    %cst_15 = arith.constant 0.000000e+00 : f32
    %29 = vector.broadcast %cst_15 : f32 to vector<64x16xf32>
    %30 = arith.maximumf %28, %29 : vector<64x16xf32>
    %c1_i32 = arith.constant 1 : i32
    %31 = arith.cmpi slt, %arg1, %c1_i32 : i32
    %32 = arith.extui %31 : i1 to i32
    %33 = arith.sitofp %32 : i32 to f32
    %34 = vector.broadcast %33 : f32 to vector<64x16xf32>
    %35 = arith.mulf %30, %34 : vector<64x16xf32>
    %36 = tpu.concatenate %22, %9, %35 in 1 : vector<64x16xf32>, vector<64x128xf32>, vector<64x16xf32> -> vector<64x160xf32>
    %37 = tpu.iota {dimensions = array<i32: 1>} : vector<1x128xi32>
    %c16_i32 = arith.constant 16 : i32
    %c0_i32_16 = arith.constant 0 : i32
    %38 = arith.cmpi eq, %c16_i32, %c0_i32_16 : i32
    %c1_i32_17 = arith.constant 1 : i32
    %39 = arith.select %38, %c1_i32_17, %c16_i32 : i32
    %40 = vector.broadcast %39 : i32 to vector<1x128xi32>
    %41 = arith.remsi %37, %40 : vector<1x128xi32>
    %c0_i32_18 = arith.constant 0 : i32
    %42 = vector.broadcast %c0_i32_18 : i32 to vector<1x128xi32>
    %43 = arith.cmpi ne, %41, %42 : vector<1x128xi32>
    %c0_i32_19 = arith.constant 0 : i32
    %44 = vector.broadcast %c0_i32_19 : i32 to vector<1x128xi32>
    %45 = arith.cmpi slt, %41, %44 : vector<1x128xi32>
    %c0_i32_20 = arith.constant 0 : i32
    %46 = arith.cmpi slt, %39, %c0_i32_20 : i32
    %47 = vector.broadcast %46 : i1 to vector<1x128xi1>
    %48 = vector.broadcast %47 : vector<1x128xi1> to vector<1x128xi1>
    %49 = arith.xori %45, %48 : vector<1x128xi1>
    %50 = arith.andi %49, %43 : vector<1x128xi1>
    %51 = vector.broadcast %39 : i32 to vector<1x128xi32>
    %52 = arith.addi %41, %51 : vector<1x128xi32>
    %53 = arith.select %50, %52, %41 : vector<1x128xi1>, vector<1x128xi32>
    %c0_i32_21 = arith.constant 0 : i32
    %54 = vector.broadcast %c0_i32_21 : i32 to vector<1x128xi32>
    %55 = arith.cmpi ne, %53, %54 : vector<1x128xi32>
    %c15_i32 = arith.constant 15 : i32
    %56 = vector.broadcast %c15_i32 : i32 to vector<1x128xi32>
    %57 = arith.cmpi ne, %53, %56 : vector<1x128xi32>
    %58 = vector.extract_strided_slice %36 {offsets = [0, 0], sizes = [64, 128], strides = [1, 1]} : vector<64x160xf32> to vector<64x128xf32>
    %c1_i32_22 = arith.constant 1 : i32
    %59 = tpu.dynamic_rotate %58 by %c1_i32_22 dim 1 : vector<64x128xf32>, i32 -> vector<64x128xf32>
    %cst_23 = arith.constant 0.000000e+00 : f32
    %60 = vector.shape_cast %55 : vector<1x128xi1> to vector<1x128xi1>
    %61 = vector.broadcast %60 : vector<1x128xi1> to vector<64x128xi1>
    %62 = vector.broadcast %cst_23 : f32 to vector<64x128xf32>
    %63 = arith.select %61, %59, %62 : vector<64x128xi1>, vector<64x128xf32>
    %c0_24 = arith.constant 0 : index
    %c0_25 = arith.constant 0 : index
    %c0_26 = arith.constant 0 : index
    %64 = vector.load %arg7[%c0_24, %c0_25, %c0_26] : memref<9x64x64xf32, #tpu.memory_space<vmem>>, vector<1x64x64xf32>
    %65 = vector.shape_cast %64 : vector<1x64x64xf32> to vector<64x64xf32>
    %cst_27 = arith.constant dense<0.000000e+00> : vector<64x128xf32>
    %66 = tpu.matmul %65, %63, %cst_27 {dimension_numbers = #tpu.dot_dimension_numbers<[1], [0], [0], [1], [0, 0, 1, 1], [], []>} : vector<64x64xf32>, vector<64x128xf32>, vector<64x128xf32> -> vector<64x128xf32>
    %c1 = arith.constant 1 : index
    %c0_28 = arith.constant 0 : index
    %c0_29 = arith.constant 0 : index
    %67 = vector.load %arg7[%c1, %c0_28, %c0_29] : memref<9x64x64xf32, #tpu.memory_space<vmem>>, vector<1x64x64xf32>
    %68 = vector.shape_cast %67 : vector<1x64x64xf32> to vector<64x64xf32>
    %cst_30 = arith.constant dense<0.000000e+00> : vector<64x128xf32>
    %69 = tpu.matmul %68, %58, %cst_30 {dimension_numbers = #tpu.dot_dimension_numbers<[1], [0], [0], [1], [0, 0, 1, 1], [], []>} : vector<64x64xf32>, vector<64x128xf32>, vector<64x128xf32> -> vector<64x128xf32>
    %70 = arith.addf %66, %69 : vector<64x128xf32>
    %c127_i32 = arith.constant 127 : i32
    %71 = tpu.dynamic_rotate %58 by %c127_i32 dim 1 : vector<64x128xf32>, i32 -> vector<64x128xf32>
    %cst_31 = arith.constant 0.000000e+00 : f32
    %72 = vector.shape_cast %57 : vector<1x128xi1> to vector<1x128xi1>
    %73 = vector.broadcast %72 : vector<1x128xi1> to vector<64x128xi1>
    %74 = vector.broadcast %cst_31 : f32 to vector<64x128xf32>
    %75 = arith.select %73, %71, %74 : vector<64x128xi1>, vector<64x128xf32>
    %c2 = arith.constant 2 : index
    %c0_32 = arith.constant 0 : index
    %c0_33 = arith.constant 0 : index
    %76 = vector.load %arg7[%c2, %c0_32, %c0_33] : memref<9x64x64xf32, #tpu.memory_space<vmem>>, vector<1x64x64xf32>
    %77 = vector.shape_cast %76 : vector<1x64x64xf32> to vector<64x64xf32>
    %cst_34 = arith.constant dense<0.000000e+00> : vector<64x128xf32>
    %78 = tpu.matmul %77, %75, %cst_34 {dimension_numbers = #tpu.dot_dimension_numbers<[1], [0], [0], [1], [0, 0, 1, 1], [], []>} : vector<64x64xf32>, vector<64x128xf32>, vector<64x128xf32> -> vector<64x128xf32>
    %79 = arith.addf %70, %78 : vector<64x128xf32>
    %c1_i32_35 = arith.constant 1 : i32
    %80 = tpu.dynamic_rotate %9 by %c1_i32_35 dim 1 : vector<64x128xf32>, i32 -> vector<64x128xf32>
    %cst_36 = arith.constant 0.000000e+00 : f32
    %81 = vector.shape_cast %55 : vector<1x128xi1> to vector<1x128xi1>
    %82 = vector.broadcast %81 : vector<1x128xi1> to vector<64x128xi1>
    %83 = vector.broadcast %cst_36 : f32 to vector<64x128xf32>
    %84 = arith.select %82, %80, %83 : vector<64x128xi1>, vector<64x128xf32>
    %c3 = arith.constant 3 : index
    %c0_37 = arith.constant 0 : index
    %c0_38 = arith.constant 0 : index
    %85 = vector.load %arg7[%c3, %c0_37, %c0_38] : memref<9x64x64xf32, #tpu.memory_space<vmem>>, vector<1x64x64xf32>
    %86 = vector.shape_cast %85 : vector<1x64x64xf32> to vector<64x64xf32>
    %cst_39 = arith.constant dense<0.000000e+00> : vector<64x128xf32>
    %87 = tpu.matmul %86, %84, %cst_39 {dimension_numbers = #tpu.dot_dimension_numbers<[1], [0], [0], [1], [0, 0, 1, 1], [], []>} : vector<64x64xf32>, vector<64x128xf32>, vector<64x128xf32> -> vector<64x128xf32>
    %88 = arith.addf %79, %87 : vector<64x128xf32>
    %c4 = arith.constant 4 : index
    %c0_40 = arith.constant 0 : index
    %c0_41 = arith.constant 0 : index
    %89 = vector.load %arg7[%c4, %c0_40, %c0_41] : memref<9x64x64xf32, #tpu.memory_space<vmem>>, vector<1x64x64xf32>
    %90 = vector.shape_cast %89 : vector<1x64x64xf32> to vector<64x64xf32>
    %cst_42 = arith.constant dense<0.000000e+00> : vector<64x128xf32>
    %91 = tpu.matmul %90, %9, %cst_42 {dimension_numbers = #tpu.dot_dimension_numbers<[1], [0], [0], [1], [0, 0, 1, 1], [], []>} : vector<64x64xf32>, vector<64x128xf32>, vector<64x128xf32> -> vector<64x128xf32>
    %92 = arith.addf %88, %91 : vector<64x128xf32>
    %c127_i32_43 = arith.constant 127 : i32
    %93 = tpu.dynamic_rotate %9 by %c127_i32_43 dim 1 : vector<64x128xf32>, i32 -> vector<64x128xf32>
    %cst_44 = arith.constant 0.000000e+00 : f32
    %94 = vector.shape_cast %57 : vector<1x128xi1> to vector<1x128xi1>
    %95 = vector.broadcast %94 : vector<1x128xi1> to vector<64x128xi1>
    %96 = vector.broadcast %cst_44 : f32 to vector<64x128xf32>
    %97 = arith.select %95, %93, %96 : vector<64x128xi1>, vector<64x128xf32>
    %c5 = arith.constant 5 : index
    %c0_45 = arith.constant 0 : index
    %c0_46 = arith.constant 0 : index
    %98 = vector.load %arg7[%c5, %c0_45, %c0_46] : memref<9x64x64xf32, #tpu.memory_space<vmem>>, vector<1x64x64xf32>
    %99 = vector.shape_cast %98 : vector<1x64x64xf32> to vector<64x64xf32>
    %cst_47 = arith.constant dense<0.000000e+00> : vector<64x128xf32>
    %100 = tpu.matmul %99, %97, %cst_47 {dimension_numbers = #tpu.dot_dimension_numbers<[1], [0], [0], [1], [0, 0, 1, 1], [], []>} : vector<64x64xf32>, vector<64x128xf32>, vector<64x128xf32> -> vector<64x128xf32>
    %101 = arith.addf %92, %100 : vector<64x128xf32>
    %102 = vector.extract_strided_slice %36 {offsets = [0, 32], sizes = [64, 128], strides = [1, 1]} : vector<64x160xf32> to vector<64x128xf32>
    %c1_i32_48 = arith.constant 1 : i32
    %103 = tpu.dynamic_rotate %102 by %c1_i32_48 dim 1 : vector<64x128xf32>, i32 -> vector<64x128xf32>
    %cst_49 = arith.constant 0.000000e+00 : f32
    %104 = vector.shape_cast %55 : vector<1x128xi1> to vector<1x128xi1>
    %105 = vector.broadcast %104 : vector<1x128xi1> to vector<64x128xi1>
    %106 = vector.broadcast %cst_49 : f32 to vector<64x128xf32>
    %107 = arith.select %105, %103, %106 : vector<64x128xi1>, vector<64x128xf32>
    %c6 = arith.constant 6 : index
    %c0_50 = arith.constant 0 : index
    %c0_51 = arith.constant 0 : index
    %108 = vector.load %arg7[%c6, %c0_50, %c0_51] : memref<9x64x64xf32, #tpu.memory_space<vmem>>, vector<1x64x64xf32>
    %109 = vector.shape_cast %108 : vector<1x64x64xf32> to vector<64x64xf32>
    %cst_52 = arith.constant dense<0.000000e+00> : vector<64x128xf32>
    %110 = tpu.matmul %109, %107, %cst_52 {dimension_numbers = #tpu.dot_dimension_numbers<[1], [0], [0], [1], [0, 0, 1, 1], [], []>} : vector<64x64xf32>, vector<64x128xf32>, vector<64x128xf32> -> vector<64x128xf32>
    %111 = arith.addf %101, %110 : vector<64x128xf32>
    %c7 = arith.constant 7 : index
    %c0_53 = arith.constant 0 : index
    %c0_54 = arith.constant 0 : index
    %112 = vector.load %arg7[%c7, %c0_53, %c0_54] : memref<9x64x64xf32, #tpu.memory_space<vmem>>, vector<1x64x64xf32>
    %113 = vector.shape_cast %112 : vector<1x64x64xf32> to vector<64x64xf32>
    %cst_55 = arith.constant dense<0.000000e+00> : vector<64x128xf32>
    %114 = tpu.matmul %113, %102, %cst_55 {dimension_numbers = #tpu.dot_dimension_numbers<[1], [0], [0], [1], [0, 0, 1, 1], [], []>} : vector<64x64xf32>, vector<64x128xf32>, vector<64x128xf32> -> vector<64x128xf32>
    %115 = arith.addf %111, %114 : vector<64x128xf32>
    %c127_i32_56 = arith.constant 127 : i32
    %116 = tpu.dynamic_rotate %102 by %c127_i32_56 dim 1 : vector<64x128xf32>, i32 -> vector<64x128xf32>
    %cst_57 = arith.constant 0.000000e+00 : f32
    %117 = vector.shape_cast %57 : vector<1x128xi1> to vector<1x128xi1>
    %118 = vector.broadcast %117 : vector<1x128xi1> to vector<64x128xi1>
    %119 = vector.broadcast %cst_57 : f32 to vector<64x128xf32>
    %120 = arith.select %118, %116, %119 : vector<64x128xi1>, vector<64x128xf32>
    %c8 = arith.constant 8 : index
    %c0_58 = arith.constant 0 : index
    %c0_59 = arith.constant 0 : index
    %121 = vector.load %arg7[%c8, %c0_58, %c0_59] : memref<9x64x64xf32, #tpu.memory_space<vmem>>, vector<1x64x64xf32>
    %122 = vector.shape_cast %121 : vector<1x64x64xf32> to vector<64x64xf32>
    %cst_60 = arith.constant dense<0.000000e+00> : vector<64x128xf32>
    %123 = tpu.matmul %122, %120, %cst_60 {dimension_numbers = #tpu.dot_dimension_numbers<[1], [0], [0], [1], [0, 0, 1, 1], [], []>} : vector<64x64xf32>, vector<64x128xf32>, vector<64x128xf32> -> vector<64x128xf32>
    %124 = arith.addf %115, %123 : vector<64x128xf32>
    %125 = vector.shape_cast %124 : vector<64x128xf32> to vector<1x64x128xf32>
    %c0_61 = arith.constant 0 : index
    %c0_62 = arith.constant 0 : index
    %c0_63 = arith.constant 0 : index
    %126 = vector.load %arg8[%c0_61, %c0_62, %c0_63] : memref<1x64x128xf32, #tpu.memory_space<vmem>>, vector<1x64x128xf32>
    tpu.vector_store %arg8[%c0_61, %c0_62, %c0_63], %125 {strides = array<i32>} : memref<1x64x128xf32, #tpu.memory_space<vmem>>, vector<1x64x128xf32>,
    %127 = vector.extract_strided_slice %124 {offsets = [0, 0], sizes = [64, 16], strides = [1, 1]} : vector<64x128xf32> to vector<64x16xf32>
    %c0_64 = arith.constant 0 : index
    %c0_65 = arith.constant 0 : index
    %c0_66 = arith.constant 0 : index
    %c0_67 = arith.constant 0 : index
    %128 = vector.load %arg9[%c0_64, %c0_65, %c0_66, %c0_67] : memref<1x2x64x16xf32, #tpu.memory_space<vmem>>, vector<1x1x64x16xf32>
    %129 = vector.shape_cast %128 : vector<1x1x64x16xf32> to vector<64x16xf32>
    %130 = vector.shape_cast %127 : vector<64x16xf32> to vector<1x1x64x16xf32>
    tpu.vector_store %arg9[%c0_64, %c0_65, %c0_66, %c0_67], %130 {strides = array<i32>} : memref<1x2x64x16xf32, #tpu.memory_space<vmem>>, vector<1x1x64x16xf32>,
    %131 = vector.extract_strided_slice %124 {offsets = [0, 112], sizes = [64, 16], strides = [1, 1]} : vector<64x128xf32> to vector<64x16xf32>
    %c0_68 = arith.constant 0 : index
    %c1_69 = arith.constant 1 : index
    %c0_70 = arith.constant 0 : index
    %c0_71 = arith.constant 0 : index
    %132 = vector.load %arg9[%c0_68, %c1_69, %c0_70, %c0_71] : memref<1x2x64x16xf32, #tpu.memory_space<vmem>>, vector<1x1x64x16xf32>
    %133 = vector.shape_cast %132 : vector<1x1x64x16xf32> to vector<64x16xf32>
    %134 = vector.shape_cast %131 : vector<64x16xf32> to vector<1x1x64x16xf32>
    tpu.vector_store %arg9[%c0_68, %c1_69, %c0_70, %c0_71], %134 {strides = array<i32>} : memref<1x2x64x16xf32, #tpu.memory_space<vmem>>, vector<1x1x64x16xf32>,
    %cst_72 = arith.constant dense<0.000000e+00> : vector<64xf32>
    %135 = vector.multi_reduction <add>, %124, %cst_72 [1] : vector<64x128xf32> to vector<64xf32>
    %136 = vector.shape_cast %135 : vector<64xf32> to vector<64x1xf32>
    %137 = arith.mulf %124, %124 : vector<64x128xf32>
    %cst_73 = arith.constant dense<0.000000e+00> : vector<64xf32>
    %138 = vector.multi_reduction <add>, %137, %cst_73 [1] : vector<64x128xf32> to vector<64xf32>
    %139 = vector.shape_cast %138 : vector<64xf32> to vector<64x1xf32>
    %140 = tpu.concatenate %136, %139 in 1 : vector<64x1xf32>, vector<64x1xf32> -> vector<64x2xf32>
    %141 = vector.shape_cast %140 : vector<64x2xf32> to vector<1x1x64x2xf32>
    %c0_74 = arith.constant 0 : index
    %c0_75 = arith.constant 0 : index
    %c0_76 = arith.constant 0 : index
    %c0_77 = arith.constant 0 : index
    %142 = vector.load %arg10[%c0_74, %c0_75, %c0_76, %c0_77] : memref<1x1x64x2xf32, #tpu.memory_space<vmem>>, vector<1x1x64x2xf32>
    tpu.vector_store %arg10[%c0_74, %c0_75, %c0_76, %c0_77], %141 {strides = array<i32>} : memref<1x1x64x2xf32, #tpu.memory_space<vmem>>, vector<1x1x64x2xf32>,
    return
  }
  func.func @transform_0(%arg0: i32, %arg1: i32) -> (i32, i32) {
    %c0_i32 = arith.constant 0 : i32
    %c0_i32_0 = arith.constant 0 : i32
    %c0_i32_1 = arith.constant 0 : i32
    return %c0_i32, %c0_i32_0 : i32, i32
  }
  func.func @transform_1(%arg0: i32, %arg1: i32) -> (i32, i32) {
    %c0_i32 = arith.constant 0 : i32
    %c0_i32_0 = arith.constant 0 : i32
    %c0_i32_1 = arith.constant 0 : i32
    return %c0_i32, %c0_i32_0 : i32, i32
  }
  func.func @transform_2(%arg0: i32, %arg1: i32) -> (i32, i32, i32) {
    %c0_i32 = arith.constant 0 : i32
    %c0_i32_0 = arith.constant 0 : i32
    return %arg0, %c0_i32, %arg1 : i32, i32, i32
  }
  func.func @transform_3(%arg0: i32, %arg1: i32) -> (i32, i32, i32, i32) {
    %c2_i32 = arith.constant 2 : i32
    %0 = arith.muli %c2_i32, %arg1 : i32
    %c1_i32 = arith.constant 1 : i32
    %1 = arith.subi %0, %c1_i32 : i32
    %c0_i32 = arith.constant 0 : i32
    %2 = arith.maxsi %1, %c0_i32 : i32
    %c0_i32_0 = arith.constant 0 : i32
    %c0_i32_1 = arith.constant 0 : i32
    %c0_i32_2 = arith.constant 0 : i32
    return %arg0, %2, %c0_i32_0, %c0_i32_1 : i32, i32, i32, i32
  }
  func.func @transform_4(%arg0: i32, %arg1: i32) -> (i32, i32, i32, i32) {
    %c2_i32 = arith.constant 2 : i32
    %0 = arith.muli %c2_i32, %arg1 : i32
    %c2_i32_0 = arith.constant 2 : i32
    %1 = arith.addi %0, %c2_i32_0 : i32
    %c3_i32 = arith.constant 3 : i32
    %2 = arith.minsi %1, %c3_i32 : i32
    %c0_i32 = arith.constant 0 : i32
    %c0_i32_1 = arith.constant 0 : i32
    %c0_i32_2 = arith.constant 0 : i32
    return %arg0, %2, %c0_i32, %c0_i32_1 : i32, i32, i32, i32
  }
  func.func @transform_5(%arg0: i32, %arg1: i32) -> (i32, i32, i32) {
    %c0_i32 = arith.constant 0 : i32
    %c0_i32_0 = arith.constant 0 : i32
    %c0_i32_1 = arith.constant 0 : i32
    %c0_i32_2 = arith.constant 0 : i32
    return %c0_i32, %c0_i32_0, %c0_i32_1 : i32, i32, i32
  }
  func.func @transform_6(%arg0: i32, %arg1: i32) -> (i32, i32, i32) {
    %c0_i32 = arith.constant 0 : i32
    %c0_i32_0 = arith.constant 0 : i32
    return %arg0, %c0_i32, %arg1 : i32, i32, i32
  }
  func.func @transform_7(%arg0: i32, %arg1: i32) -> (i32, i32, i32, i32) {
    %c0_i32 = arith.constant 0 : i32
    %c0_i32_0 = arith.constant 0 : i32
    %c0_i32_1 = arith.constant 0 : i32
    return %arg0, %arg1, %c0_i32, %c0_i32_0 : i32, i32, i32, i32
  }
  func.func @transform_8(%arg0: i32, %arg1: i32) -> (i32, i32, i32, i32) {
    %c0_i32 = arith.constant 0 : i32
    %c0_i32_0 = arith.constant 0 : i32
    %c0_i32_1 = arith.constant 0 : i32
    return %arg0, %arg1, %c0_i32, %c0_i32_0 : i32, i32, i32, i32
  }
}

module attributes {stable_mosaic.version = 11 : i64} {
  func.func @_conv3x3_kernel(%arg0: i32, %arg1: i32, %arg2: memref<64x1xf32, #tpu.memory_space<vmem>>, %arg3: memref<64x1xf32, #tpu.memory_space<vmem>>, %arg4: memref<1x64x128xf32, #tpu.memory_space<vmem>>, %arg5: memref<1x1x64x16xf32, #tpu.memory_space<vmem>>, %arg6: memref<1x1x64x16xf32, #tpu.memory_space<vmem>>, %arg7: memref<9x4x64xf32, #tpu.memory_space<vmem>>, %arg8: memref<1x4x128xf32, #tpu.memory_space<vmem>>) attributes {dimension_semantics = [#tpu.dimension_semantics<parallel>, #tpu.dimension_semantics<parallel>], iteration_bounds = array<i64: 2, 2>, scalar_prefetch = 0 : i64, scratch_operands = 0 : i64, tpu.core_type = #tpu.core_type<tc>, window_params = [{pipeline_mode = #tpu.pipeline_mode<synchronous>, transform_indices = @transform_0, window_bounds = array<i64: 64, 1>}, {pipeline_mode = #tpu.pipeline_mode<synchronous>, transform_indices = @transform_1, window_bounds = array<i64: 64, 1>}, {transform_indices = @transform_2, window_bounds = array<i64: 1, 64, 128>}, {transform_indices = @transform_3, window_bounds = array<i64: 1, 1, 64, 16>}, {transform_indices = @transform_4, window_bounds = array<i64: 1, 1, 64, 16>}, {pipeline_mode = #tpu.pipeline_mode<synchronous>, transform_indices = @transform_5, window_bounds = array<i64: 9, 4, 64>}, {transform_indices = @transform_6, window_bounds = array<i64: 1, 4, 128>}]} {
    %c0 = arith.constant 0 : index
    %c0_0 = arith.constant 0 : index
    %0 = vector.load %arg2[%c0, %c0_0] : memref<64x1xf32, #tpu.memory_space<vmem>>, vector<64x1xf32>
    %c0_1 = arith.constant 0 : index
    %c0_2 = arith.constant 0 : index
    %1 = vector.load %arg3[%c0_1, %c0_2] : memref<64x1xf32, #tpu.memory_space<vmem>>, vector<64x1xf32>
    %c0_3 = arith.constant 0 : index
    %c0_4 = arith.constant 0 : index
    %c0_5 = arith.constant 0 : index
    %2 = vector.load %arg4[%c0_3, %c0_4, %c0_5] : memref<1x64x128xf32, #tpu.memory_space<vmem>>, vector<1x64x128xf32>
    %3 = vector.shape_cast %2 : vector<1x64x128xf32> to vector<64x128xf32>
    %4 = vector.broadcast %0 : vector<64x1xf32> to vector<64x128xf32>
    %5 = arith.mulf %3, %4 : vector<64x128xf32>
    %6 = vector.broadcast %1 : vector<64x1xf32> to vector<64x128xf32>
    %7 = arith.addf %5, %6 : vector<64x128xf32>
    %cst = arith.constant 0.000000e+00 : f32
    %8 = vector.broadcast %cst : f32 to vector<64x128xf32>
    %9 = arith.maximumf %7, %8 : vector<64x128xf32>
    %c0_6 = arith.constant 0 : index
    %c0_7 = arith.constant 0 : index
    %c0_8 = arith.constant 0 : index
    %c0_9 = arith.constant 0 : index
    %10 = vector.load %arg5[%c0_6, %c0_7, %c0_8, %c0_9] : memref<1x1x64x16xf32, #tpu.memory_space<vmem>>, vector<1x1x64x16xf32>
    %11 = vector.shape_cast %10 : vector<1x1x64x16xf32> to vector<64x16xf32>
    %12 = vector.broadcast %0 : vector<64x1xf32> to vector<64x16xf32>
    %13 = arith.mulf %11, %12 : vector<64x16xf32>
    %14 = vector.broadcast %1 : vector<64x1xf32> to vector<64x16xf32>
    %15 = arith.addf %13, %14 : vector<64x16xf32>
    %cst_10 = arith.constant 0.000000e+00 : f32
    %16 = vector.broadcast %cst_10 : f32 to vector<64x16xf32>
    %17 = arith.maximumf %15, %16 : vector<64x16xf32>
    %c0_i32 = arith.constant 0 : i32
    %18 = arith.cmpi sgt, %arg1, %c0_i32 : i32
    %19 = arith.extui %18 : i1 to i32
    %20 = arith.sitofp %19 : i32 to f32
    %21 = vector.broadcast %20 : f32 to vector<64x16xf32>
    %22 = arith.mulf %17, %21 : vector<64x16xf32>
    %c0_11 = arith.constant 0 : index
    %c0_12 = arith.constant 0 : index
    %c0_13 = arith.constant 0 : index
    %c0_14 = arith.constant 0 : index
    %23 = vector.load %arg6[%c0_11, %c0_12, %c0_13, %c0_14] : memref<1x1x64x16xf32, #tpu.memory_space<vmem>>, vector<1x1x64x16xf32>
    %24 = vector.shape_cast %23 : vector<1x1x64x16xf32> to vector<64x16xf32>
    %25 = vector.broadcast %0 : vector<64x1xf32> to vector<64x16xf32>
    %26 = arith.mulf %24, %25 : vector<64x16xf32>
    %27 = vector.broadcast %1 : vector<64x1xf32> to vector<64x16xf32>
    %28 = arith.addf %26, %27 : vector<64x16xf32>
    %cst_15 = arith.constant 0.000000e+00 : f32
    %29 = vector.broadcast %cst_15 : f32 to vector<64x16xf32>
    %30 = arith.maximumf %28, %29 : vector<64x16xf32>
    %c1_i32 = arith.constant 1 : i32
    %31 = arith.cmpi slt, %arg1, %c1_i32 : i32
    %32 = arith.extui %31 : i1 to i32
    %33 = arith.sitofp %32 : i32 to f32
    %34 = vector.broadcast %33 : f32 to vector<64x16xf32>
    %35 = arith.mulf %30, %34 : vector<64x16xf32>
    %36 = tpu.concatenate %22, %9, %35 in 1 : vector<64x16xf32>, vector<64x128xf32>, vector<64x16xf32> -> vector<64x160xf32>
    %37 = tpu.iota {dimensions = array<i32: 1>} : vector<1x128xi32>
    %c16_i32 = arith.constant 16 : i32
    %c0_i32_16 = arith.constant 0 : i32
    %38 = arith.cmpi eq, %c16_i32, %c0_i32_16 : i32
    %c1_i32_17 = arith.constant 1 : i32
    %39 = arith.select %38, %c1_i32_17, %c16_i32 : i32
    %40 = vector.broadcast %39 : i32 to vector<1x128xi32>
    %41 = arith.remsi %37, %40 : vector<1x128xi32>
    %c0_i32_18 = arith.constant 0 : i32
    %42 = vector.broadcast %c0_i32_18 : i32 to vector<1x128xi32>
    %43 = arith.cmpi ne, %41, %42 : vector<1x128xi32>
    %c0_i32_19 = arith.constant 0 : i32
    %44 = vector.broadcast %c0_i32_19 : i32 to vector<1x128xi32>
    %45 = arith.cmpi slt, %41, %44 : vector<1x128xi32>
    %c0_i32_20 = arith.constant 0 : i32
    %46 = arith.cmpi slt, %39, %c0_i32_20 : i32
    %47 = vector.broadcast %46 : i1 to vector<1x128xi1>
    %48 = vector.broadcast %47 : vector<1x128xi1> to vector<1x128xi1>
    %49 = arith.xori %45, %48 : vector<1x128xi1>
    %50 = arith.andi %49, %43 : vector<1x128xi1>
    %51 = vector.broadcast %39 : i32 to vector<1x128xi32>
    %52 = arith.addi %41, %51 : vector<1x128xi32>
    %53 = arith.select %50, %52, %41 : vector<1x128xi1>, vector<1x128xi32>
    %c0_i32_21 = arith.constant 0 : i32
    %54 = vector.broadcast %c0_i32_21 : i32 to vector<1x128xi32>
    %55 = arith.cmpi ne, %53, %54 : vector<1x128xi32>
    %c15_i32 = arith.constant 15 : i32
    %56 = vector.broadcast %c15_i32 : i32 to vector<1x128xi32>
    %57 = arith.cmpi ne, %53, %56 : vector<1x128xi32>
    %58 = vector.extract_strided_slice %36 {offsets = [0, 0], sizes = [64, 128], strides = [1, 1]} : vector<64x160xf32> to vector<64x128xf32>
    %c1_i32_22 = arith.constant 1 : i32
    %59 = tpu.dynamic_rotate %58 by %c1_i32_22 dim 1 : vector<64x128xf32>, i32 -> vector<64x128xf32>
    %cst_23 = arith.constant 0.000000e+00 : f32
    %60 = vector.shape_cast %55 : vector<1x128xi1> to vector<1x128xi1>
    %61 = vector.broadcast %60 : vector<1x128xi1> to vector<64x128xi1>
    %62 = vector.broadcast %cst_23 : f32 to vector<64x128xf32>
    %63 = arith.select %61, %59, %62 : vector<64x128xi1>, vector<64x128xf32>
    %c0_24 = arith.constant 0 : index
    %c0_25 = arith.constant 0 : index
    %c0_26 = arith.constant 0 : index
    %64 = vector.load %arg7[%c0_24, %c0_25, %c0_26] : memref<9x4x64xf32, #tpu.memory_space<vmem>>, vector<1x4x64xf32>
    %65 = vector.shape_cast %64 : vector<1x4x64xf32> to vector<4x64xf32>
    %cst_27 = arith.constant dense<0.000000e+00> : vector<4x128xf32>
    %66 = tpu.matmul %65, %63, %cst_27 {dimension_numbers = #tpu.dot_dimension_numbers<[1], [0], [0], [1], [0, 0, 1, 1], [], []>} : vector<4x64xf32>, vector<64x128xf32>, vector<4x128xf32> -> vector<4x128xf32>
    %c1 = arith.constant 1 : index
    %c0_28 = arith.constant 0 : index
    %c0_29 = arith.constant 0 : index
    %67 = vector.load %arg7[%c1, %c0_28, %c0_29] : memref<9x4x64xf32, #tpu.memory_space<vmem>>, vector<1x4x64xf32>
    %68 = vector.shape_cast %67 : vector<1x4x64xf32> to vector<4x64xf32>
    %cst_30 = arith.constant dense<0.000000e+00> : vector<4x128xf32>
    %69 = tpu.matmul %68, %58, %cst_30 {dimension_numbers = #tpu.dot_dimension_numbers<[1], [0], [0], [1], [0, 0, 1, 1], [], []>} : vector<4x64xf32>, vector<64x128xf32>, vector<4x128xf32> -> vector<4x128xf32>
    %70 = arith.addf %66, %69 : vector<4x128xf32>
    %c127_i32 = arith.constant 127 : i32
    %71 = tpu.dynamic_rotate %58 by %c127_i32 dim 1 : vector<64x128xf32>, i32 -> vector<64x128xf32>
    %cst_31 = arith.constant 0.000000e+00 : f32
    %72 = vector.shape_cast %57 : vector<1x128xi1> to vector<1x128xi1>
    %73 = vector.broadcast %72 : vector<1x128xi1> to vector<64x128xi1>
    %74 = vector.broadcast %cst_31 : f32 to vector<64x128xf32>
    %75 = arith.select %73, %71, %74 : vector<64x128xi1>, vector<64x128xf32>
    %c2 = arith.constant 2 : index
    %c0_32 = arith.constant 0 : index
    %c0_33 = arith.constant 0 : index
    %76 = vector.load %arg7[%c2, %c0_32, %c0_33] : memref<9x4x64xf32, #tpu.memory_space<vmem>>, vector<1x4x64xf32>
    %77 = vector.shape_cast %76 : vector<1x4x64xf32> to vector<4x64xf32>
    %cst_34 = arith.constant dense<0.000000e+00> : vector<4x128xf32>
    %78 = tpu.matmul %77, %75, %cst_34 {dimension_numbers = #tpu.dot_dimension_numbers<[1], [0], [0], [1], [0, 0, 1, 1], [], []>} : vector<4x64xf32>, vector<64x128xf32>, vector<4x128xf32> -> vector<4x128xf32>
    %79 = arith.addf %70, %78 : vector<4x128xf32>
    %c1_i32_35 = arith.constant 1 : i32
    %80 = tpu.dynamic_rotate %9 by %c1_i32_35 dim 1 : vector<64x128xf32>, i32 -> vector<64x128xf32>
    %cst_36 = arith.constant 0.000000e+00 : f32
    %81 = vector.shape_cast %55 : vector<1x128xi1> to vector<1x128xi1>
    %82 = vector.broadcast %81 : vector<1x128xi1> to vector<64x128xi1>
    %83 = vector.broadcast %cst_36 : f32 to vector<64x128xf32>
    %84 = arith.select %82, %80, %83 : vector<64x128xi1>, vector<64x128xf32>
    %c3 = arith.constant 3 : index
    %c0_37 = arith.constant 0 : index
    %c0_38 = arith.constant 0 : index
    %85 = vector.load %arg7[%c3, %c0_37, %c0_38] : memref<9x4x64xf32, #tpu.memory_space<vmem>>, vector<1x4x64xf32>
    %86 = vector.shape_cast %85 : vector<1x4x64xf32> to vector<4x64xf32>
    %cst_39 = arith.constant dense<0.000000e+00> : vector<4x128xf32>
    %87 = tpu.matmul %86, %84, %cst_39 {dimension_numbers = #tpu.dot_dimension_numbers<[1], [0], [0], [1], [0, 0, 1, 1], [], []>} : vector<4x64xf32>, vector<64x128xf32>, vector<4x128xf32> -> vector<4x128xf32>
    %88 = arith.addf %79, %87 : vector<4x128xf32>
    %c4 = arith.constant 4 : index
    %c0_40 = arith.constant 0 : index
    %c0_41 = arith.constant 0 : index
    %89 = vector.load %arg7[%c4, %c0_40, %c0_41] : memref<9x4x64xf32, #tpu.memory_space<vmem>>, vector<1x4x64xf32>
    %90 = vector.shape_cast %89 : vector<1x4x64xf32> to vector<4x64xf32>
    %cst_42 = arith.constant dense<0.000000e+00> : vector<4x128xf32>
    %91 = tpu.matmul %90, %9, %cst_42 {dimension_numbers = #tpu.dot_dimension_numbers<[1], [0], [0], [1], [0, 0, 1, 1], [], []>} : vector<4x64xf32>, vector<64x128xf32>, vector<4x128xf32> -> vector<4x128xf32>
    %92 = arith.addf %88, %91 : vector<4x128xf32>
    %c127_i32_43 = arith.constant 127 : i32
    %93 = tpu.dynamic_rotate %9 by %c127_i32_43 dim 1 : vector<64x128xf32>, i32 -> vector<64x128xf32>
    %cst_44 = arith.constant 0.000000e+00 : f32
    %94 = vector.shape_cast %57 : vector<1x128xi1> to vector<1x128xi1>
    %95 = vector.broadcast %94 : vector<1x128xi1> to vector<64x128xi1>
    %96 = vector.broadcast %cst_44 : f32 to vector<64x128xf32>
    %97 = arith.select %95, %93, %96 : vector<64x128xi1>, vector<64x128xf32>
    %c5 = arith.constant 5 : index
    %c0_45 = arith.constant 0 : index
    %c0_46 = arith.constant 0 : index
    %98 = vector.load %arg7[%c5, %c0_45, %c0_46] : memref<9x4x64xf32, #tpu.memory_space<vmem>>, vector<1x4x64xf32>
    %99 = vector.shape_cast %98 : vector<1x4x64xf32> to vector<4x64xf32>
    %cst_47 = arith.constant dense<0.000000e+00> : vector<4x128xf32>
    %100 = tpu.matmul %99, %97, %cst_47 {dimension_numbers = #tpu.dot_dimension_numbers<[1], [0], [0], [1], [0, 0, 1, 1], [], []>} : vector<4x64xf32>, vector<64x128xf32>, vector<4x128xf32> -> vector<4x128xf32>
    %101 = arith.addf %92, %100 : vector<4x128xf32>
    %102 = vector.extract_strided_slice %36 {offsets = [0, 32], sizes = [64, 128], strides = [1, 1]} : vector<64x160xf32> to vector<64x128xf32>
    %c1_i32_48 = arith.constant 1 : i32
    %103 = tpu.dynamic_rotate %102 by %c1_i32_48 dim 1 : vector<64x128xf32>, i32 -> vector<64x128xf32>
    %cst_49 = arith.constant 0.000000e+00 : f32
    %104 = vector.shape_cast %55 : vector<1x128xi1> to vector<1x128xi1>
    %105 = vector.broadcast %104 : vector<1x128xi1> to vector<64x128xi1>
    %106 = vector.broadcast %cst_49 : f32 to vector<64x128xf32>
    %107 = arith.select %105, %103, %106 : vector<64x128xi1>, vector<64x128xf32>
    %c6 = arith.constant 6 : index
    %c0_50 = arith.constant 0 : index
    %c0_51 = arith.constant 0 : index
    %108 = vector.load %arg7[%c6, %c0_50, %c0_51] : memref<9x4x64xf32, #tpu.memory_space<vmem>>, vector<1x4x64xf32>
    %109 = vector.shape_cast %108 : vector<1x4x64xf32> to vector<4x64xf32>
    %cst_52 = arith.constant dense<0.000000e+00> : vector<4x128xf32>
    %110 = tpu.matmul %109, %107, %cst_52 {dimension_numbers = #tpu.dot_dimension_numbers<[1], [0], [0], [1], [0, 0, 1, 1], [], []>} : vector<4x64xf32>, vector<64x128xf32>, vector<4x128xf32> -> vector<4x128xf32>
    %111 = arith.addf %101, %110 : vector<4x128xf32>
    %c7 = arith.constant 7 : index
    %c0_53 = arith.constant 0 : index
    %c0_54 = arith.constant 0 : index
    %112 = vector.load %arg7[%c7, %c0_53, %c0_54] : memref<9x4x64xf32, #tpu.memory_space<vmem>>, vector<1x4x64xf32>
    %113 = vector.shape_cast %112 : vector<1x4x64xf32> to vector<4x64xf32>
    %cst_55 = arith.constant dense<0.000000e+00> : vector<4x128xf32>
    %114 = tpu.matmul %113, %102, %cst_55 {dimension_numbers = #tpu.dot_dimension_numbers<[1], [0], [0], [1], [0, 0, 1, 1], [], []>} : vector<4x64xf32>, vector<64x128xf32>, vector<4x128xf32> -> vector<4x128xf32>
    %115 = arith.addf %111, %114 : vector<4x128xf32>
    %c127_i32_56 = arith.constant 127 : i32
    %116 = tpu.dynamic_rotate %102 by %c127_i32_56 dim 1 : vector<64x128xf32>, i32 -> vector<64x128xf32>
    %cst_57 = arith.constant 0.000000e+00 : f32
    %117 = vector.shape_cast %57 : vector<1x128xi1> to vector<1x128xi1>
    %118 = vector.broadcast %117 : vector<1x128xi1> to vector<64x128xi1>
    %119 = vector.broadcast %cst_57 : f32 to vector<64x128xf32>
    %120 = arith.select %118, %116, %119 : vector<64x128xi1>, vector<64x128xf32>
    %c8 = arith.constant 8 : index
    %c0_58 = arith.constant 0 : index
    %c0_59 = arith.constant 0 : index
    %121 = vector.load %arg7[%c8, %c0_58, %c0_59] : memref<9x4x64xf32, #tpu.memory_space<vmem>>, vector<1x4x64xf32>
    %122 = vector.shape_cast %121 : vector<1x4x64xf32> to vector<4x64xf32>
    %cst_60 = arith.constant dense<0.000000e+00> : vector<4x128xf32>
    %123 = tpu.matmul %122, %120, %cst_60 {dimension_numbers = #tpu.dot_dimension_numbers<[1], [0], [0], [1], [0, 0, 1, 1], [], []>} : vector<4x64xf32>, vector<64x128xf32>, vector<4x128xf32> -> vector<4x128xf32>
    %124 = arith.addf %115, %123 : vector<4x128xf32>
    %125 = vector.shape_cast %124 : vector<4x128xf32> to vector<1x4x128xf32>
    %c0_61 = arith.constant 0 : index
    %c0_62 = arith.constant 0 : index
    %c0_63 = arith.constant 0 : index
    %126 = vector.load %arg8[%c0_61, %c0_62, %c0_63] : memref<1x4x128xf32, #tpu.memory_space<vmem>>, vector<1x4x128xf32>
    tpu.vector_store %arg8[%c0_61, %c0_62, %c0_63], %125 {strides = array<i32>} : memref<1x4x128xf32, #tpu.memory_space<vmem>>, vector<1x4x128xf32>,
    return
  }
  func.func @transform_0(%arg0: i32, %arg1: i32) -> (i32, i32) {
    %c0_i32 = arith.constant 0 : i32
    %c0_i32_0 = arith.constant 0 : i32
    %c0_i32_1 = arith.constant 0 : i32
    return %c0_i32, %c0_i32_0 : i32, i32
  }
  func.func @transform_1(%arg0: i32, %arg1: i32) -> (i32, i32) {
    %c0_i32 = arith.constant 0 : i32
    %c0_i32_0 = arith.constant 0 : i32
    %c0_i32_1 = arith.constant 0 : i32
    return %c0_i32, %c0_i32_0 : i32, i32
  }
  func.func @transform_2(%arg0: i32, %arg1: i32) -> (i32, i32, i32) {
    %c0_i32 = arith.constant 0 : i32
    %c0_i32_0 = arith.constant 0 : i32
    return %arg0, %c0_i32, %arg1 : i32, i32, i32
  }
  func.func @transform_3(%arg0: i32, %arg1: i32) -> (i32, i32, i32, i32) {
    %c2_i32 = arith.constant 2 : i32
    %0 = arith.muli %c2_i32, %arg1 : i32
    %c1_i32 = arith.constant 1 : i32
    %1 = arith.subi %0, %c1_i32 : i32
    %c0_i32 = arith.constant 0 : i32
    %2 = arith.maxsi %1, %c0_i32 : i32
    %c0_i32_0 = arith.constant 0 : i32
    %c0_i32_1 = arith.constant 0 : i32
    %c0_i32_2 = arith.constant 0 : i32
    return %arg0, %2, %c0_i32_0, %c0_i32_1 : i32, i32, i32, i32
  }
  func.func @transform_4(%arg0: i32, %arg1: i32) -> (i32, i32, i32, i32) {
    %c2_i32 = arith.constant 2 : i32
    %0 = arith.muli %c2_i32, %arg1 : i32
    %c2_i32_0 = arith.constant 2 : i32
    %1 = arith.addi %0, %c2_i32_0 : i32
    %c3_i32 = arith.constant 3 : i32
    %2 = arith.minsi %1, %c3_i32 : i32
    %c0_i32 = arith.constant 0 : i32
    %c0_i32_1 = arith.constant 0 : i32
    %c0_i32_2 = arith.constant 0 : i32
    return %arg0, %2, %c0_i32, %c0_i32_1 : i32, i32, i32, i32
  }
  func.func @transform_5(%arg0: i32, %arg1: i32) -> (i32, i32, i32) {
    %c0_i32 = arith.constant 0 : i32
    %c0_i32_0 = arith.constant 0 : i32
    %c0_i32_1 = arith.constant 0 : i32
    %c0_i32_2 = arith.constant 0 : i32
    return %c0_i32, %c0_i32_0, %c0_i32_1 : i32, i32, i32
  }
  func.func @transform_6(%arg0: i32, %arg1: i32) -> (i32, i32, i32) {
    %c0_i32 = arith.constant 0 : i32
    %c0_i32_0 = arith.constant 0 : i32
    return %arg0, %c0_i32, %arg1 : i32, i32, i32
  }
}

</mosaic_0001>

<llo_original>
// kernel: dncnn_forward.5
$region0: #{dncnn_forward.5}
  #allocation0 [shape = 'u32[]', space=smem, size = 0x4, offset = 0x4, fixed_abs, tag = 'smem constant byte address 0x4 - core index']
  #allocation1 [shape = 'u32[144,128]{1,0:T(1,128)}', space=vmem, size = 0x12000, scoped, tag = 'internal scratch']
  %s0 = inlined_call_operand.vmem [shape: f32[2,4,256], index: 0, kind: input, shape index: {}]
  %s1 = inlined_call_operand.vmem [shape: f32[2,4,4,16], index: 1, kind: input, shape index: {}, may-alias: {1,2}]
  %s2 = inlined_call_operand.vmem [shape: f32[2,4,4,16], index: 2, kind: input, shape index: {}, may-alias: {1,2}]
  %s3 = inlined_call_operand.vmem [shape: f32[9,64,4], index: 3, kind: input, shape index: {}]
  %s4 = inlined_call_operand.vmem [shape: f32[2,64,256], index: 4, kind: output, shape index: {0}]
  %s5 = inlined_call_operand.vmem [shape: f32[2,4,64,16], index: 5, kind: output, shape index: {1}]
  %6 = xla_tuple %s4, %s5
  %s7 = sld [smem:[#allocation0]]
  $region91: #{dncnn_forward.5} parent=0
    _
  %s9 = ssub.s32 1, %s7
  %s10 = scalar_select 0, %s9, %s7
  $region1: #{dncnn_forward.5} parent=0
    #allocation2 [shape = 'u8[65536]{0}', space=vmem, size = 0x10000, scoped, tag = 'output window, operand 0']
    loop: start=0, step=1, limit=6
    $region2: #{dncnn_forward.5} parent=1 // loop_pre_header
      _
    $region3: #{dncnn_forward.5} parent=1 // loop_header
      %s12 = sphi 0, %s16
      %p13 = scmp.ge.s32.totalorder %s12, 6
      %s19 = sphi 0, %s31
      %s20 = sphi 0, %s27
      %s21 = sphi 0, %s19
      %s22 = sphi 0, %s20
      %s23 = sphi 0, %s21
      %s24 = sphi 0, %s22
      %s36 = sphi 0, %s38
      %s39 = sphi 0, %s36
      %s40 = sphi 0, %s39
      %s56 = sphi 0, %s40
      %s72 = sphi 0, %s74
      %s75 = sphi 0, %s72
      %s76 = sphi 0, %s75
      %s92 = sphi 0, %s76
      %s108 = sphi 0, %s110
      %s111 = sphi 0, %s108
      %s112 = sphi 0, %s111
      %s128 = sphi 0, %s112
      %s132 = sphi 0, %s132
      %s134 = sphi 0, %s132
      %s135 = sphi 0, %s134
      %s149 = sphi 0, %s135
      %s157 = sphi 0, %s159
      %s160 = sphi 0, %s157
      %s161 = sphi 0, %s160
      %s177 = sphi 0, %s161
      %s185 = sphi 0, %s187
      %s188 = sphi 0, %s185
      %s189 = sphi 0, %s188
      %s205 = sphi 0, %s189
    $region4: #{dncnn_forward.5} parent=1 // loop_header_branch
      %15 = sbr.rel (%p13) target = $region8
    $region5: #{dncnn_forward.5} parent=1 // loop_body
      %s17 = ssub.s32 %s12, 1
      %s18 = ssub.s32 %s12, 2
      %s25 = sadd.s32 1, %s20
      %p26 = scmp.ge.s32.totalorder %s25, 2
      %s27 = scalar_select %p26, 0, %s25
      %s28 = sadd.s32 1, %s19
      %s29 = scalar_select %p26, %s28, %s19
      %p30 = scmp.ge.s32.totalorder %s29, 2
      %s31 = scalar_select %p30, 0, %s29
      %s32 = ssub.s32 %s19, %s31
      %s33 = ssub.s32 %s20, %s27
      %s34 = sor.u32 %s32, %s33
      %p35 = scmp.eq.s32.totalorder %s34, 0
      %s37 = sadd.s32 %s36, 1
      %s38 = scalar_select %p35, %s36, %s37
      %p41 = pneg %p35
      %p42 = scmp.eq.s32.totalorder %s12, 3
      %p43 = por %p41, %p42
      %p44 = scmp.ne.s32.totalorder %s36, %s39
      %p45 = scmp.eq.s32.totalorder %s12, 0
      %p46 = por %p44, %p45
      %p47 = scmp.ne.s32.totalorder %s36, %s39
      %p48 = scmp.eq.s32.totalorder %s17, 3
      %p49 = por %p47, %p48
      %p50 = scmp.ne.s32.totalorder %s39, %s40
      %p51 = scmp.eq.s32.totalorder %s17, 0
      %p52 = por %p50, %p51
      %p53 = scmp.ne.s32.totalorder %s39, %s40
      %p54 = scmp.eq.s32.totalorder %s18, 3
      %p55 = por %p53, %p54
      %p57 = scmp.ne.s32.totalorder %s40, %s56
      %p58 = scmp.eq.s32.totalorder %s18, 0
      %p59 = por %p57, %p58
      %s60 = smul.u32 %s20, 2
      %s61 = ssub.s32 %s60, 1
      %p62 = scmp.gt.s32.totalorder %s61, 0
      %s63 = scalar_select %p62, %s61, 0
      %s64 = smul.u32 %s27, 2
      %s65 = ssub.s32 %s64, 1
      %p66 = scmp.gt.s32.totalorder %s65, 0
      %s67 = scalar_select %p66, %s65, 0
      %s68 = ssub.s32 %s19, %s31
      %s69 = ssub.s32 %s63, %s67
      %s70 = sor.u32 %s68, %s69
      %p71 = scmp.eq.s32.totalorder %s70, 0
      %s73 = sadd.s32 %s72, 1
      %s74 = scalar_select %p71, %s72, %s73
      %p77 = pneg %p71
      %p78 = scmp.eq.s32.totalorder %s12, 3
      %p79 = por %p77, %p78
      %p80 = scmp.ne.s32.totalorder %s72, %s75
      %p81 = scmp.eq.s32.totalorder %s12, 0
      %p82 = por %p80, %p81
      %p83 = scmp.ne.s32.totalorder %s72, %s75
      %p84 = scmp.eq.s32.totalorder %s17, 3
      %p85 = por %p83, %p84
      %p86 = scmp.ne.s32.totalorder %s75, %s76
      %p87 = scmp.eq.s32.totalorder %s17, 0
      %p88 = por %p86, %p87
      %p89 = scmp.ne.s32.totalorder %s75, %s76
      %p90 = scmp.eq.s32.totalorder %s18, 3
      %p91 = por %p89, %p90
      %p93 = scmp.ne.s32.totalorder %s76, %s92
      %p94 = scmp.eq.s32.totalorder %s18, 0
      %p95 = por %p93, %p94
      %s96 = smul.u32 %s20, 2
      %s97 = sadd.s32 %s96, 2
      %p98 = scmp.lt.s32.totalorder %s97, 3
      %s99 = scalar_select %p98, %s97, 3
      %s100 = smul.u32 %s27, 2
      %s101 = sadd.s32 %s100, 2
      %p102 = scmp.lt.s32.totalorder %s101, 3
      %s103 = scalar_select %p102, %s101, 3
      %s104 = ssub.s32 %s19, %s31
      %s105 = ssub.s32 %s99, %s103
      %s106 = sor.u32 %s104, %s105
      %p107 = scmp.eq.s32.totalorder %s106, 0
      %s109 = sadd.s32 %s108, 1
      %s110 = scalar_select %p107, %s108, %s109
      %p113 = pneg %p107
      %p114 = scmp.eq.s32.totalorder %s12, 3
      %p115 = por %p113, %p114
      %p116 = scmp.ne.s32.totalorder %s108, %s111
      %p117 = scmp.eq.s32.totalorder %s12, 0
      %p118 = por %p116, %p117
      %p119 = scmp.ne.s32.totalorder %s108, %s111
      %p120 = scmp.eq.s32.totalorder %s17, 3
      %p121 = por %p119, %p120
      %p122 = scmp.ne.s32.totalorder %s111, %s112
      %p123 = scmp.eq.s32.totalorder %s17, 0
      %p124 = por %p122, %p123
      %p125 = scmp.ne.s32.totalorder %s111, %s112
      %p126 = scmp.eq.s32.totalorder %s18, 3
      %p127 = por %p125, %p126
      %p129 = scmp.ne.s32.totalorder %s112, %s128
      %p130 = scmp.eq.s32.totalorder %s18, 0
      %p131 = por %p129, %p130
      %s133 = sadd.s32 %s132, 1
      %p136 = scmp.eq.s32.totalorder %s12, 3
      %p137 = scmp.ne.s32.totalorder %s132, %s134
      %p138 = scmp.eq.s32.totalorder %s12, 0
      %p139 = por %p137, %p138
      %p140 = scmp.ne.s32.totalorder %s132, %s134
      %p141 = scmp.eq.s32.totalorder %s17, 3
      %p142 = por %p140, %p141
      %p143 = scmp.ne.s32.totalorder %s134, %s135
      %p144 = scmp.eq.s32.totalorder %s17, 0
      %p145 = por %p143, %p144
      %p146 = scmp.ne.s32.totalorder %s134, %s135
      %p147 = scmp.eq.s32.totalorder %s18, 3
      %p148 = por %p146, %p147
      %p150 = scmp.ne.s32.totalorder %s135, %s149
      %p151 = scmp.eq.s32.totalorder %s18, 0
      %p152 = por %p150, %p151
      %s153 = ssub.s32 %s19, %s31
      %s154 = ssub.s32 %s20, %s27
      %s155 = sor.u32 %s153, %s154
      %p156 = scmp.eq.s32.totalorder %s155, 0
      %s158 = sadd.s32 %s157, 1
      %s159 = scalar_select %p156, %s157, %s158
      %p162 = pneg %p156
      %p163 = scmp.eq.s32.totalorder %s12, 3
      %p164 = por %p162, %p163
      %p165 = scmp.ne.s32.totalorder %s157, %s160
      %p166 = scmp.eq.s32.totalorder %s12, 0
      %p167 = por %p165, %p166
      %p168 = scmp.ne.s32.totalorder %s157, %s160
      %p169 = scmp.eq.s32.totalorder %s17, 3
      %p170 = por %p168, %p169
      %p171 = scmp.ne.s32.totalorder %s160, %s161
      %p172 = scmp.eq.s32.totalorder %s17, 0
      %p173 = por %p171, %p172
      %p174 = scmp.ne.s32.totalorder %s160, %s161
      %p175 = scmp.eq.s32.totalorder %s18, 3
      %p176 = por %p174, %p175
      %p178 = scmp.ne.s32.totalorder %s161, %s177
      %p179 = scmp.eq.s32.totalorder %s18, 0
      %p180 = por %p178, %p179
      %s181 = ssub.s32 %s19, %s31
      %s182 = ssub.s32 %s20, %s27
      %s183 = sor.u32 %s181, %s182
      %p184 = scmp.eq.s32.totalorder %s183, 0
      %s186 = sadd.s32 %s185, 1
      %s187 = scalar_select %p184, %s185, %s186
      %p190 = pneg %p184
      %p191 = scmp.eq.s32.totalorder %s12, 3
      %p192 = por %p190, %p191
      %p193 = scmp.ne.s32.totalorder %s185, %s188
      %p194 = scmp.eq.s32.totalorder %s12, 0
      %p195 = por %p193, %p194
      %p196 = scmp.ne.s32.totalorder %s185, %s188
      %p197 = scmp.eq.s32.totalorder %s17, 3
      %p198 = por %p196, %p197
      %p199 = scmp.ne.s32.totalorder %s188, %s189
      %p200 = scmp.eq.s32.totalorder %s17, 0
      %p201 = por %p199, %p200
      %p202 = scmp.ne.s32.totalorder %s188, %s189
      %p203 = scmp.eq.s32.totalorder %s18, 3
      %p204 = por %p202, %p203
      %p206 = scmp.ne.s32.totalorder %s189, %s205
      %p207 = scmp.eq.s32.totalorder %s18, 0
      %p208 = por %p206, %p207
      %p209 = scmp.le.s32.totalorder 1, %s12
      %p210 = scmp.lt.s32.totalorder %s12, 5
      %p211 = pnand %p209, %p210
      %p212 = pneg %p211
      // Predicated region
      $region9: #{dncnn_forward.5} parent=5 // pred_check
        _
      $region10: #{dncnn_forward.5} parent=5 // pred_check_branch
        %214 = sbr.rel (%p211) target = $region12
      $region11: #{dncnn_forward.5} parent=5 // pred_region
        %s215 = ssub.s32 %s12, 1
        // Predicated region
        $region13: #{dncnn_forward.5} parent=11 // pred_check
          %p216 = pneg %p145
        $region14: #{dncnn_forward.5} parent=11 // pred_check_branch
          %218 = sbr.rel (%p216) target = $region16
        $region15: #{dncnn_forward.5} parent=11 // pred_region
          _
        $region16: #{dncnn_forward.5} parent=11 // pred_fallthru
          _
      $region12: #{dncnn_forward.5} parent=5 // pred_fallthru
        _
      %p219 = scmp.lt.s32.totalorder %s12, 4
      // Predicated region
      $region17: #{dncnn_forward.5} parent=5 // pred_check
        %p220 = pneg %p219
      $region18: #{dncnn_forward.5} parent=5 // pred_check_branch
        %222 = sbr.rel (%p220) target = $region20
      $region19: #{dncnn_forward.5} parent=5 // pred_region
        // Predicated region
        $region21: #{dncnn_forward.5} parent=19 // pred_check
          %p223 = pneg %p46
        $region22: #{dncnn_forward.5} parent=19 // pred_check_branch
          %225 = sbr.rel (%p223) target = $region24
        $region23: #{dncnn_forward.5} parent=19 // pred_region
          %p226 = scmp.lt.s32.totalorder %s19, 1
          %s227 = scalar_select %p226, %s19, 1
          %p228 = scmp.lt.s32.totalorder %s20, 1
          %s229 = scalar_select %p228, %s20, 1
          %s230 = smul.addr %s227, 2
          %s231 = sadd.s32 %s229, %s230
          %s232 = smul.addr %s231, 4
          %s233 = scalar_lea.vmem %s0, %s232
        $region24: #{dncnn_forward.5} parent=19 // pred_fallthru
          _
        // Predicated region
        $region25: #{dncnn_forward.5} parent=19 // pred_check
          %p234 = pneg %p82
        $region26: #{dncnn_forward.5} parent=19 // pred_check_branch
          %236 = sbr.rel (%p234) target = $region28
        $region27: #{dncnn_forward.5} parent=19 // pred_region
          %s237 = smul.u32 %s20, 2
          %s238 = ssub.s32 %s237, 1
          %p239 = scmp.gt.s32.totalorder %s238, 0
          %s240 = scalar_select %p239, %s238, 0
          %p241 = scmp.lt.s32.totalorder %s19, 1
          %s242 = scalar_select %p241, %s19, 1
          %p243 = scmp.lt.s32.totalorder %s240, 3
          %s244 = scalar_select %p243, %s240, 3
          %s245 = smul.addr %s242, 4
          %s246 = sadd.s32 %s244, %s245
          %s247 = smul.addr %s246, 4
          %s248 = scalar_lea.vmem %s1, %s247
          %s249 = smul.u32 %s20, 2
          %s250 = ssub.s32 %s249, 1
          %p251 = scmp.gt.s32.totalorder %s250, 0
          %s252 = scalar_select %p251, %s250, 0
        $region28: #{dncnn_forward.5} parent=19 // pred_fallthru
          _
        // Predicated region
        $region29: #{dncnn_forward.5} parent=19 // pred_check
          %p253 = pneg %p118
        $region30: #{dncnn_forward.5} parent=19 // pred_check_branch
          %255 = sbr.rel (%p253) target = $region32
        $region31: #{dncnn_forward.5} parent=19 // pred_region
          %s256 = smul.u32 %s20, 2
          %s257 = sadd.s32 %s256, 2
          %p258 = scmp.lt.s32.totalorder %s257, 3
          %s259 = scalar_select %p258, %s257, 3
          %p260 = scmp.lt.s32.totalorder %s19, 1
          %s261 = scalar_select %p260, %s19, 1
          %p262 = scmp.lt.s32.totalorder %s259, 3
          %s263 = scalar_select %p262, %s259, 3
          %s264 = smul.addr %s261, 4
          %s265 = sadd.s32 %s263, %s264
          %s266 = smul.addr %s265, 4
          %s267 = scalar_lea.vmem %s2, %s266
          %s268 = smul.u32 %s20, 2
          %s269 = sadd.s32 %s268, 2
          %p270 = scmp.lt.s32.totalorder %s269, 3
          %s271 = scalar_select %p270, %s269, 3
        $region32: #{dncnn_forward.5} parent=19 // pred_fallthru
          _
      $region20: #{dncnn_forward.5} parent=5 // pred_fallthru
        _
      %p272 = scmp.le.s32.totalorder 1, %s12
      %p273 = scmp.lt.s32.totalorder %s12, 5
      %p274 = pnand %p272, %p273
      %p275 = pneg %p274
      // Predicated region
      $region33: #{dncnn_forward.5} parent=5 // pred_check
        _
      $region34: #{dncnn_forward.5} parent=5 // pred_check_branch
        %277 = sbr.rel (%p274) target = $region36
      $region35: #{dncnn_forward.5} parent=5 // pred_region
        %s278 = ssub.s32 %s12, 1
        %p279 = scmp.lt.s32.totalorder %s21, 1
        %s280 = scalar_select %p279, %s21, 1
        %p281 = scmp.lt.s32.totalorder %s22, 1
        %s282 = scalar_select %p281, %s22, 1
        %s283 = smul.addr %s280, 2
        %s284 = sadd.s32 %s282, %s283
        %s285 = smul.addr %s284, 4
        %s286 = scalar_lea.vmem %s0, %s285
        %p287 = pneg %p52
        %p288 = pneg %p49
        %s289 = smul.u32 %s22, 2
        %s290 = ssub.s32 %s289, 1
        %p291 = scmp.gt.s32.totalorder %s290, 0
        %s292 = scalar_select %p291, %s290, 0
        %p293 = scmp.lt.s32.totalorder %s21, 1
        %s294 = scalar_select %p293, %s21, 1
        %p295 = scmp.lt.s32.totalorder %s292, 3
        %s296 = scalar_select %p295, %s292, 3
        %s297 = smul.addr %s294, 4
        %s298 = sadd.s32 %s296, %s297
        %s299 = smul.addr %s298, 4
        %s300 = scalar_lea.vmem %s1, %s299
        %p301 = pneg %p88
        %p302 = pneg %p85
        %s303 = smul.u32 %s22, 2
        %s304 = sadd.s32 %s303, 2
        %p305 = scmp.lt.s32.totalorder %s304, 3
        %s306 = scalar_select %p305, %s304, 3
        %p307 = scmp.lt.s32.totalorder %s21, 1
        %s308 = scalar_select %p307, %s21, 1
        %p309 = scmp.lt.s32.totalorder %s306, 3
        %s310 = scalar_select %p309, %s306, 3
        %s311 = smul.addr %s308, 4
        %s312 = sadd.s32 %s310, %s311
        %s313 = smul.addr %s312, 4
        %s314 = scalar_lea.vmem %s2, %s313
        %p315 = pneg %p124
        %p316 = pneg %p121
        %p317 = pneg %p145
        %p318 = pneg %p142
        %p319 = pneg %p173
        %p320 = pneg %p170
        %s321 = sand.u32 %s160, 1
        %s322 = sand.u32 %s160, 1
        %s323 = smul.addr %s322, 64
        %s324 = scalar_lea.vmem [#allocation2], %s323
        %p325 = pneg %p201
        %p326 = pneg %p198
        %s327 = smul.u32 2, %s22
        %p328 = scmp.lt.s32.totalorder %s21, 1
        %s329 = scalar_select %p328, %s21, 1
        %p330 = scmp.lt.s32.totalorder %s327, 3
        %s331 = scalar_select %p330, %s327, 3
        %s332 = smul.addr %s331, 8
        %s333 = smul.addr %s329, 32
        %s334 = sadd.s32 %s332, %s333
        %s335 = smul.addr %s334, 8
        %s336 = scalar_lea.vmem %s5, %s335
        %p337 = scmp.lt.s32.totalorder %s21, 1
        %s338 = scalar_select %p337, %s21, 1
        %p339 = scmp.lt.s32.totalorder %s22, 1
        %s340 = scalar_select %p339, %s22, 1
        %s341 = smul.addr %s338, 2
        %s342 = sadd.s32 %s340, %s341
        %s343 = smul.addr %s342, 4
        %s344 = scalar_lea.vmem %s0, %s343
        %s345 = smul.u32 %s22, 2
        %s346 = ssub.s32 %s345, 1
        %p347 = scmp.gt.s32.totalorder %s346, 0
        %s348 = scalar_select %p347, %s346, 0
        %p349 = scmp.lt.s32.totalorder %s21, 1
        %s350 = scalar_select %p349, %s21, 1
        %p351 = scmp.lt.s32.totalorder %s348, 3
        %s352 = scalar_select %p351, %s348, 3
        %s353 = smul.addr %s350, 4
        %s354 = sadd.s32 %s352, %s353
        %s355 = smul.addr %s354, 4
        %s356 = scalar_lea.vmem %s1, %s355
        %s357 = smul.u32 %s22, 2
        %s358 = ssub.s32 %s357, 1
        %p359 = scmp.gt.s32.totalorder %s358, 0
        %s360 = scalar_select %p359, %s358, 0
        %s361 = smul.u32 %s22, 2
        %s362 = sadd.s32 %s361, 2
        %p363 = scmp.lt.s32.totalorder %s362, 3
        %s364 = scalar_select %p363, %s362, 3
        %p365 = scmp.lt.s32.totalorder %s21, 1
        %s366 = scalar_select %p365, %s21, 1
        %p367 = scmp.lt.s32.totalorder %s364, 3
        %s368 = scalar_select %p367, %s364, 3
        %s369 = smul.addr %s366, 4
        %s370 = sadd.s32 %s368, %s369
        %s371 = smul.addr %s370, 4
        %s372 = scalar_lea.vmem %s2, %s371
        %s373 = smul.u32 %s22, 2
        %s374 = sadd.s32 %s373, 2
        %p375 = scmp.lt.s32.totalorder %s374, 3
        %s376 = scalar_select %p375, %s374, 3
        %s377 = smul.u32 2, %s22
        %p378 = scmp.lt.s32.totalorder %s21, 1
        %s379 = scalar_select %p378, %s21, 1
        %p380 = scmp.lt.s32.totalorder %s377, 3
        %s381 = scalar_select %p380, %s377, 3
        %s382 = smul.addr %s381, 8
        %s383 = smul.addr %s379, 32
        %s384 = sadd.s32 %s382, %s383
        %s385 = smul.addr %s384, 8
        %s386 = scalar_lea.vmem %s5, %s385
        %s387 = smul.u32 2, %s22
        %v388 = vld [vmem:[%s344] sm:$0xf]
        %v389 = vld [vmem:[%s356] sm:$0xf]
        %p390 = scmp.gt.s32.totalorder %s22, 0
        %s391 = scalar_select %p390, 1, 0
        %s392 = scvt.s32.f32 %s391
        %v393 = vstv %s392
        %v394 = vmul.f32 %v389, %v393
        %v395 = vld [vmem:[%s372] sm:$0xf]
        %p396 = scmp.lt.s32.totalorder %s22, 1
        %s397 = scalar_select %p396, 1, 0
        %s398 = scvt.s32.f32 %s397
        %v399 = vstv %s398
        %v400 = vmul.f32 %v395, %v399
        %402 = vrot.lane.b32.xlu0 %v388, 16
        %v403 = vpop.permute.xlu0 %402
        %406 = vrot.lane.b32.xlu0 %v400, 16
        %v407 = vpop.permute.xlu0 %406
        %vm409 = vcmask 130048
        %v410 = vsel %vm409, %v394, %v403
        %v411 = vsel %vm409, %v403, %v407
        %v412 = vlaneseq
        %v413 = vand.u32 %v412, 127
        %vm414 = vcmp.lt.s32.totalorder %v413, 0
        %v415 = vsub.s32 0, %v413
        %v416 = vsel %vm414, %v415, %v413
        %v417 = vshrl.u32 %v416, 4
        %v418 = vand.u32 %v416, 15
        %v419 = vsub.s32 0, %v418
        %v420 = vsel %vm414, %v419, %v418
        %vm421 = vcmp.ne.s32.totalorder %v420, 0
        %vm422 = vcmp.lt.s32.totalorder %v420, 0
        %vm423 = vmand %vm422, %vm421
        %v424 = vadd.s32 %v420, 16
        %v425 = vsel %vm423, %v424, %v420
        %vm426 = vcmp.ne.s32.totalorder %v425, 0
        %vm427 = vcmp.ne.s32.totalorder %v425, 15
        %428 = vrot.lane.b32.xlu0 %v410, 1
        %v429 = vpop.permute.xlu0 %428
        %v430 = vsel %vm426, 1, 0
        %vm431 = vcmp.eq.s32.totalorder %v430, 1
        %v432 = vsel %vm431, %v429, 0.0
        %v433 = vld [vmem:[%s3] sm:$0xff]
        %v434 = vld [vmem:[%s3 + $0x8] sm:$0xff]
        %v435 = vld [vmem:[%s3 + $0x10] sm:$0xff]
        %v436 = vld [vmem:[%s3 + $0x18] sm:$0xff]
        %v437 = vld [vmem:[%s3 + $0x20] sm:$0xff]
        %v438 = vld [vmem:[%s3 + $0x28] sm:$0xff]
        %v439 = vld [vmem:[%s3 + $0x30] sm:$0xff]
        %v440 = vld [vmem:[%s3 + $0x38] sm:$0xff]
        %s441 = scalar_lea.vmem %s3, 64
        %v442 = vld [vmem:[%s441] sm:$0xff]
        %v443 = vld [vmem:[%s441 + $0x8] sm:$0xff]
        %v444 = vld [vmem:[%s441 + $0x10] sm:$0xff]
        %v445 = vld [vmem:[%s441 + $0x18] sm:$0xff]
        %v446 = vld [vmem:[%s441 + $0x20] sm:$0xff]
        %v447 = vld [vmem:[%s441 + $0x28] sm:$0xff]
        %v448 = vld [vmem:[%s441 + $0x30] sm:$0xff]
        %v449 = vld [vmem:[%s441 + $0x38] sm:$0xff]
        %vm450 = vcmask 31744
        %v452 = vsel %vm450, %v442, 0
        %v455 = vsel %vm450, %v443, 0
        %v458 = vsel %vm450, %v444, 0
        %v461 = vsel %vm450, %v445, 0
        %v464 = vsel %vm450, %v446, 0
        %v467 = vsel %vm450, %v447, 0
        %v470 = vsel %vm450, %v448, 0
        %v473 = vsel %vm450, %v449, 0
        %vm475 = vcmask 1043456
        %v477 = vsel %vm475, %v410, 0
        %479 = vmatprep.subr.mxu0 0.0
        %480 = vmatpush1.msra.mxu0 %v477
        %481 = vmatprep.subr.mxu0 0.0
        %482 = vmatpush1.msra.mxu0 0.0
        %483 = vmatprep.subr.mxu0 0.0
        %484 = vmatpush1.msra.mxu0 0.0
        %485 = vmatprep.subr.mxu0 0.0
        %486 = vmatpush1.msra.mxu0 0.0
        %487 = vmatprep.subr.mxu0 0.0
        %488 = vmatpush1.msra.mxu0 0.0
        %489 = vmatprep.subr.mxu0 0.0
        %490 = vmatpush1.msra.mxu0 0.0
        %491 = vmatprep.subr.mxu0 0.0
        %492 = vmatpush1.msra.mxu0 0.0
        %493 = vmatprep.subr.mxu0 0.0
        %494 = vmatpush1.msra.mxu0 0.0
        %495 = vmatprep.subr.mxu0 0.0
        %496 = vmatpush1.msra.mxu0 0.0
        %497 = vmatprep.subr.mxu0 0.0
        %498 = vmatpush1.msra.mxu0 0.0
        %499 = vmatprep.subr.mxu0 0.0
        %500 = vmatpush1.msra.mxu0 0.0
        %501 = vmatprep.subr.mxu0 0.0
        %502 = vmatpush1.msra.mxu0 0.0
        %503 = vmatprep.subr.mxu0 0.0
        %504 = vmatpush1.msra.mxu0 0.0
        %505 = vmatprep.subr.mxu0 0.0
        %506 = vmatpush1.msra.mxu0 0.0
        %507 = vmatprep.subr.mxu0 0.0
        %508 = vmatpush1.msra.mxu0 0.0
        %509 = vmatprep.subr.mxu0 0.0
        %510 = vmatpush1.msra.mxu0 0.0
        %511 = vmatprep.subr.mxu0 0.0
        %512 = vmatpush1.msra.mxu0 0.0
        %513 = vmatprep.subr.mxu0 0.0
        %514 = vmatpush1.msra.mxu0 0.0
        %515 = vmatprep.subr.mxu0 0.0
        %516 = vmatpush1.msra.mxu0 0.0
        %517 = vmatprep.subr.mxu0 0.0
        %518 = vmatpush1.msra.mxu0 0.0
        %519 = vmatprep.subr.mxu0 0.0
        %520 = vmatpush1.msra.mxu0 0.0
        %521 = vmatprep.subr.mxu0 0.0
        %522 = vmatpush1.msra.mxu0 0.0
        %523 = vmatprep.subr.mxu0 0.0
        %524 = vmatpush1.msra.mxu0 0.0
        %525 = vmatprep.subr.mxu0 0.0
        %526 = vmatpush1.msra.mxu0 0.0
        %527 = vmatprep.subr.mxu0 0.0
        %528 = vmatpush1.msra.mxu0 0.0
        %529 = vmatprep.subr.mxu0 0.0
        %530 = vmatpush1.msra.mxu0 0.0
        %531 = vmatprep.subr.mxu0 0.0
        %532 = vmatpush1.msra.mxu0 0.0
        %533 = vmatprep.subr.mxu0 0.0
        %534 = vmatpush1.msra.mxu0 0.0
        %535 = vmatprep.subr.mxu0 0.0
        %536 = vmatpush1.msra.mxu0 0.0
        %537 = vmatprep.subr.mxu0 0.0
        %538 = vmatpush1.msra.mxu0 0.0
        %539 = vmatprep.subr.mxu0 0.0
        %540 = vmatpush1.msra.mxu0 0.0
        %541 = vmatprep.subr.mxu0 0.0
        %542 = vmatpush1.msra.mxu0 0.0
        %543 = vmatprep.mubr.f32.mxu0 0.0
        %544 = vmatmul.mubr.f32.gmra.mrb[0].mxu0 %v452
        %v545 = vpop.f32.mrb[0].mxu0
        %v546 = vadd.f32 0.0, %v545
        %v547 = vpop.f32.mrb[0].mxu0
        %548 = vmatprep.mubr.f32.mxu0 0.0
        %549 = vmatmul.mubr.f32.gmra.mrb[0].mxu0 %v455
        %v550 = vpop.f32.mrb[0].mxu0
        %v551 = vadd.f32 0.0, %v550
        %v552 = vpop.f32.mrb[0].mxu0
        %553 = vmatprep.mubr.f32.mxu0 0.0
        %554 = vmatmul.mubr.f32.gmra.mrb[0].mxu0 %v458
        %v555 = vpop.f32.mrb[0].mxu0
        %v556 = vadd.f32 0.0, %v555
        %v557 = vpop.f32.mrb[0].mxu0
        %558 = vmatprep.mubr.f32.mxu0 0.0
        %559 = vmatmul.mubr.f32.gmra.mrb[0].mxu0 %v461
        %v560 = vpop.f32.mrb[0].mxu0
        %v561 = vadd.f32 0.0, %v560
        %v562 = vpop.f32.mrb[0].mxu0
        %563 = vmatprep.mubr.f32.mxu0 0.0
        %564 = vmatmul.mubr.f32.gmra.mrb[0].mxu0 %v464
        %v565 = vpop.f32.mrb[0].mxu0
        %v566 = vadd.f32 0.0, %v565
        %v567 = vpop.f32.mrb[0].mxu0
        %568 = vmatprep.mubr.f32.mxu0 0.0
        %569 = vmatmul.mubr.f32.gmra.mrb[0].mxu0 %v467
        %v570 = vpop.f32.mrb[0].mxu0
        %v571 = vadd.f32 0.0, %v570
        %v572 = vpop.f32.mrb[0].mxu0
        %573 = vmatprep.mubr.f32.mxu0 0.0
        %574 = vmatmul.mubr.f32.gmra.mrb[0].mxu0 %v470
        %v575 = vpop.f32.mrb[0].mxu0
        %v576 = vadd.f32 0.0, %v575
        %v577 = vpop.f32.mrb[0].mxu0
        %578 = vmatprep.mubr.f32.mxu0 0.0
        %579 = vmatmul.mubr.f32.gmra.mrb[0].mxu0 %v473
        %v580 = vpop.f32.mrb[0].mxu0
        %v581 = vadd.f32 0.0, %v580
        %v582 = vpop.f32.mrb[0].mxu0
        %583 = vdwg.mxu0
        %v585 = vsel %vm450, %v433, 0
        %v588 = vsel %vm450, %v434, 0
        %v591 = vsel %vm450, %v435, 0
        %v594 = vsel %vm450, %v436, 0
        %v597 = vsel %vm450, %v437, 0
        %v600 = vsel %vm450, %v438, 0
        %v603 = vsel %vm450, %v439, 0
        %v606 = vsel %vm450, %v440, 0
        %v609 = vsel %vm475, %v432, 0
        %611 = vmatprep.subr.mxu0 0.0
        %612 = vmatpush1.msra.mxu0 %v609
        %613 = vmatprep.subr.mxu0 0.0
        %614 = vmatpush1.msra.mxu0 0.0
        %615 = vmatprep.subr.mxu0 0.0
        %616 = vmatpush1.msra.mxu0 0.0
        %617 = vmatprep.subr.mxu0 0.0
        %618 = vmatpush1.msra.mxu0 0.0
        %619 = vmatprep.subr.mxu0 0.0
        %620 = vmatpush1.msra.mxu0 0.0
        %621 = vmatprep.subr.mxu0 0.0
        %622 = vmatpush1.msra.mxu0 0.0
        %623 = vmatprep.subr.mxu0 0.0
        %624 = vmatpush1.msra.mxu0 0.0
        %625 = vmatprep.subr.mxu0 0.0
        %626 = vmatpush1.msra.mxu0 0.0
        %627 = vmatprep.subr.mxu0 0.0
        %628 = vmatpush1.msra.mxu0 0.0
        %629 = vmatprep.subr.mxu0 0.0
        %630 = vmatpush1.msra.mxu0 0.0
        %631 = vmatprep.subr.mxu0 0.0
        %632 = vmatpush1.msra.mxu0 0.0
        %633 = vmatprep.subr.mxu0 0.0
        %634 = vmatpush1.msra.mxu0 0.0
        %635 = vmatprep.subr.mxu0 0.0
        %636 = vmatpush1.msra.mxu0 0.0
        %637 = vmatprep.subr.mxu0 0.0
        %638 = vmatpush1.msra.mxu0 0.0
        %639 = vmatprep.subr.mxu0 0.0
        %640 = vmatpush1.msra.mxu0 0.0
        %641 = vmatprep.subr.mxu0 0.0
        %642 = vmatpush1.msra.mxu0 0.0
        %643 = vmatprep.subr.mxu0 0.0
        %644 = vmatpush1.msra.mxu0 0.0
        %645 = vmatprep.subr.mxu0 0.0
        %646 = vmatpush1.msra.mxu0 0.0
        %647 = vmatprep.subr.mxu0 0.0
        %648 = vmatpush1.msra.mxu0 0.0
        %649 = vmatprep.subr.mxu0 0.0
        %650 = vmatpush1.msra.mxu0 0.0
        %651 = vmatprep.subr.mxu0 0.0
        %652 = vmatpush1.msra.mxu0 0.0
        %653 = vmatprep.subr.mxu0 0.0
        %654 = vmatpush1.msra.mxu0 0.0
        %655 = vmatprep.subr.mxu0 0.0
        %656 = vmatpush1.msra.mxu0 0.0
        %657 = vmatprep.subr.mxu0 0.0
        %658 = vmatpush1.msra.mxu0 0.0
        %659 = vmatprep.subr.mxu0 0.0
        %660 = vmatpush1.msra.mxu0 0.0
        %661 = vmatprep.subr.mxu0 0.0
        %662 = vmatpush1.msra.mxu0 0.0
        %663 = vmatprep.subr.mxu0 0.0
        %664 = vmatpush1.msra.mxu0 0.0
        %665 = vmatprep.subr.mxu0 0.0
        %666 = vmatpush1.msra.mxu0 0.0
        %667 = vmatprep.subr.mxu0 0.0
        %668 = vmatpush1.msra.mxu0 0.0
        %669 = vmatprep.subr.mxu0 0.0
        %670 = vmatpush1.msra.mxu0 0.0
        %671 = vmatprep.subr.mxu0 0.0
        %672 = vmatpush1.msra.mxu0 0.0
        %673 = vmatprep.subr.mxu0 0.0
        %674 = vmatpush1.msra.mxu0 0.0
        %675 = vmatprep.mubr.f32.mxu0 0.0
        %676 = vmatmul.mubr.f32.gmra.mrb[0].mxu0 %v585
        %v677 = vpop.f32.mrb[0].mxu0
        %v678 = vadd.f32 %v546, %v677
        %v679 = vpop.f32.mrb[0].mxu0
        %680 = vmatprep.mubr.f32.mxu0 0.0
        %681 = vmatmul.mubr.f32.gmra.mrb[0].mxu0 %v588
        %v682 = vpop.f32.mrb[0].mxu0
        %v683 = vadd.f32 %v551, %v682
        %v684 = vpop.f32.mrb[0].mxu0
        %685 = vmatprep.mubr.f32.mxu0 0.0
        %686 = vmatmul.mubr.f32.gmra.mrb[0].mxu0 %v591
        %v687 = vpop.f32.mrb[0].mxu0
        %v688 = vadd.f32 %v556, %v687
        %v689 = vpop.f32.mrb[0].mxu0
        %690 = vmatprep.mubr.f32.mxu0 0.0
        %691 = vmatmul.mubr.f32.gmra.mrb[0].mxu0 %v594
        %v692 = vpop.f32.mrb[0].mxu0
        %v693 = vadd.f32 %v561, %v692
        %v694 = vpop.f32.mrb[0].mxu0
        %695 = vmatprep.mubr.f32.mxu0 0.0
        %696 = vmatmul.mubr.f32.gmra.mrb[0].mxu0 %v597
        %v697 = vpop.f32.mrb[0].mxu0
        %v698 = vadd.f32 %v566, %v697
        %v699 = vpop.f32.mrb[0].mxu0
        %700 = vmatprep.mubr.f32.mxu0 0.0
        %701 = vmatmul.mubr.f32.gmra.mrb[0].mxu0 %v600
        %v702 = vpop.f32.mrb[0].mxu0
        %v703 = vadd.f32 %v571, %v702
        %v704 = vpop.f32.mrb[0].mxu0
        %705 = vmatprep.mubr.f32.mxu0 0.0
        %706 = vmatmul.mubr.f32.gmra.mrb[0].mxu0 %v603
        %v707 = vpop.f32.mrb[0].mxu0
        %v708 = vadd.f32 %v576, %v707
        %v709 = vpop.f32.mrb[0].mxu0
        %710 = vmatprep.mubr.f32.mxu0 0.0
        %711 = vmatmul.mubr.f32.gmra.mrb[0].mxu0 %v606
        %v712 = vpop.f32.mrb[0].mxu0
        %v713 = vadd.f32 %v581, %v712
        %v714 = vpop.f32.mrb[0].mxu0
        %715 = vdwg.mxu0
        %716 = vrot.lane.b32.xlu0 %v410, 127
        %v717 = vpop.permute.xlu0 %716
        %v718 = vsel %vm427, 1, 0
        %vm719 = vcmp.eq.s32.totalorder %v718, 1
        %v720 = vsel %vm719, %v717, 0.0
        %s721 = scalar_lea.vmem %s3, 128
        %v722 = vld [vmem:[%s721] sm:$0xff]
        %v723 = vld [vmem:[%s721 + $0x8] sm:$0xff]
        %v724 = vld [vmem:[%s721 + $0x10] sm:$0xff]
        %v725 = vld [vmem:[%s721 + $0x18] sm:$0xff]
        %v726 = vld [vmem:[%s721 + $0x20] sm:$0xff]
        %v727 = vld [vmem:[%s721 + $0x28] sm:$0xff]
        %v728 = vld [vmem:[%s721 + $0x30] sm:$0xff]
        %v729 = vld [vmem:[%s721 + $0x38] sm:$0xff]
        %v731 = vsel %vm450, %v722, 0
        %v734 = vsel %vm450, %v723, 0
        %v737 = vsel %vm450, %v724, 0
        %v740 = vsel %vm450, %v725, 0
        %v743 = vsel %vm450, %v726, 0
        %v746 = vsel %vm450, %v727, 0
        %v749 = vsel %vm450, %v728, 0
        %v752 = vsel %vm450, %v729, 0
        %v755 = vsel %vm475, %v720, 0
        %757 = vmatprep.subr.mxu0 0.0
        %758 = vmatpush1.msra.mxu0 %v755
        %759 = vmatprep.subr.mxu0 0.0
        %760 = vmatpush1.msra.mxu0 0.0
        %761 = vmatprep.subr.mxu0 0.0
        %762 = vmatpush1.msra.mxu0 0.0
        %763 = vmatprep.subr.mxu0 0.0
        %764 = vmatpush1.msra.mxu0 0.0
        %765 = vmatprep.subr.mxu0 0.0
        %766 = vmatpush1.msra.mxu0 0.0
        %767 = vmatprep.subr.mxu0 0.0
        %768 = vmatpush1.msra.mxu0 0.0
        %769 = vmatprep.subr.mxu0 0.0
        %770 = vmatpush1.msra.mxu0 0.0
        %771 = vmatprep.subr.mxu0 0.0
        %772 = vmatpush1.msra.mxu0 0.0
        %773 = vmatprep.subr.mxu0 0.0
        %774 = vmatpush1.msra.mxu0 0.0
        %775 = vmatprep.subr.mxu0 0.0
        %776 = vmatpush1.msra.mxu0 0.0
        %777 = vmatprep.subr.mxu0 0.0
        %778 = vmatpush1.msra.mxu0 0.0
        %779 = vmatprep.subr.mxu0 0.0
        %780 = vmatpush1.msra.mxu0 0.0
        %781 = vmatprep.subr.mxu0 0.0
        %782 = vmatpush1.msra.mxu0 0.0
        %783 = vmatprep.subr.mxu0 0.0
        %784 = vmatpush1.msra.mxu0 0.0
        %785 = vmatprep.subr.mxu0 0.0
        %786 = vmatpush1.msra.mxu0 0.0
        %787 = vmatprep.subr.mxu0 0.0
        %788 = vmatpush1.msra.mxu0 0.0
        %789 = vmatprep.subr.mxu0 0.0
        %790 = vmatpush1.msra.mxu0 0.0
        %791 = vmatprep.subr.mxu0 0.0
        %792 = vmatpush1.msra.mxu0 0.0
        %793 = vmatprep.subr.mxu0 0.0
        %794 = vmatpush1.msra.mxu0 0.0
        %795 = vmatprep.subr.mxu0 0.0
        %796 = vmatpush1.msra.mxu0 0.0
        %797 = vmatprep.subr.mxu0 0.0
        %798 = vmatpush1.msra.mxu0 0.0
        %799 = vmatprep.subr.mxu0 0.0
        %800 = vmatpush1.msra.mxu0 0.0
        %801 = vmatprep.subr.mxu0 0.0
        %802 = vmatpush1.msra.mxu0 0.0
        %803 = vmatprep.subr.mxu0 0.0
        %804 = vmatpush1.msra.mxu0 0.0
        %805 = vmatprep.subr.mxu0 0.0
        %806 = vmatpush1.msra.mxu0 0.0
        %807 = vmatprep.subr.mxu0 0.0
        %808 = vmatpush1.msra.mxu0 0.0
        %809 = vmatprep.subr.mxu0 0.0
        %810 = vmatpush1.msra.mxu0 0.0
        %811 = vmatprep.subr.mxu0 0.0
        %812 = vmatpush1.msra.mxu0 0.0
        %813 = vmatprep.subr.mxu0 0.0
        %814 = vmatpush1.msra.mxu0 0.0
        %815 = vmatprep.subr.mxu0 0.0
        %816 = vmatpush1.msra.mxu0 0.0
        %817 = vmatprep.subr.mxu0 0.0
        %818 = vmatpush1.msra.mxu0 0.0
        %819 = vmatprep.subr.mxu0 0.0
        %820 = vmatpush1.msra.mxu0 0.0
        %821 = vmatprep.mubr.f32.mxu0 0.0
        %822 = vmatmul.mubr.f32.gmra.mrb[0].mxu0 %v731
        %v823 = vpop.f32.mrb[0].mxu0
        %v824 = vadd.f32 0.0, %v823
        %v825 = vpop.f32.mrb[0].mxu0
        %826 = vmatprep.mubr.f32.mxu0 0.0
        %827 = vmatmul.mubr.f32.gmra.mrb[0].mxu0 %v734
        %v828 = vpop.f32.mrb[0].mxu0
        %v829 = vadd.f32 0.0, %v828
        %v830 = vpop.f32.mrb[0].mxu0
        %831 = vmatprep.mubr.f32.mxu0 0.0
        %832 = vmatmul.mubr.f32.gmra.mrb[0].mxu0 %v737
        %v833 = vpop.f32.mrb[0].mxu0
        %v834 = vadd.f32 0.0, %v833
        %v835 = vpop.f32.mrb[0].mxu0
        %836 = vmatprep.mubr.f32.mxu0 0.0
        %837 = vmatmul.mubr.f32.gmra.mrb[0].mxu0 %v740
        %v838 = vpop.f32.mrb[0].mxu0
        %v839 = vadd.f32 0.0, %v838
        %v840 = vpop.f32.mrb[0].mxu0
        %841 = vmatprep.mubr.f32.mxu0 0.0
        %842 = vmatmul.mubr.f32.gmra.mrb[0].mxu0 %v743
        %v843 = vpop.f32.mrb[0].mxu0
        %v844 = vadd.f32 0.0, %v843
        %v845 = vpop.f32.mrb[0].mxu0
        %846 = vmatprep.mubr.f32.mxu0 0.0
        %847 = vmatmul.mubr.f32.gmra.mrb[0].mxu0 %v746
        %v848 = vpop.f32.mrb[0].mxu0
        %v849 = vadd.f32 0.0, %v848
        %v850 = vpop.f32.mrb[0].mxu0
        %851 = vmatprep.mubr.f32.mxu0 0.0
        %852 = vmatmul.mubr.f32.gmra.mrb[0].mxu0 %v749
        %v853 = vpop.f32.mrb[0].mxu0
        %v854 = vadd.f32 0.0, %v853
        %v855 = vpop.f32.mrb[0].mxu0
        %856 = vmatprep.mubr.f32.mxu0 0.0
        %857 = vmatmul.mubr.f32.gmra.mrb[0].mxu0 %v752
        %v858 = vpop.f32.mrb[0].mxu0
        %v859 = vadd.f32 0.0, %v858
        %v860 = vpop.f32.mrb[0].mxu0
        %861 = vdwg.mxu0
        %v862 = vadd.f32 %v678, %v824
        %v863 = vadd.f32 %v683, %v829
        %v864 = vadd.f32 %v688, %v834
        %v865 = vadd.f32 %v693, %v839
        %v866 = vadd.f32 %v698, %v844
        %v867 = vadd.f32 %v703, %v849
        %v868 = vadd.f32 %v708, %v854
        %v869 = vadd.f32 %v713, %v859
        %870 = vrot.lane.b32.xlu0 %v388, 1
        %v871 = vpop.permute.xlu0 %870
        %v872 = vsel %vm431, %v871, 0.0
        %s873 = scalar_lea.vmem %s3, 192
        %v874 = vld [vmem:[%s873] sm:$0xff]
        %v875 = vld [vmem:[%s873 + $0x8] sm:$0xff]
        %v876 = vld [vmem:[%s873 + $0x10] sm:$0xff]
        %v877 = vld [vmem:[%s873 + $0x18] sm:$0xff]
        %v878 = vld [vmem:[%s873 + $0x20] sm:$0xff]
        %v879 = vld [vmem:[%s873 + $0x28] sm:$0xff]
        %v880 = vld [vmem:[%s873 + $0x30] sm:$0xff]
        %v881 = vld [vmem:[%s873 + $0x38] sm:$0xff]
        %v883 = vsel %vm450, %v874, 0
        %v886 = vsel %vm450, %v875, 0
        %v889 = vsel %vm450, %v876, 0
        %v892 = vsel %vm450, %v877, 0
        %v895 = vsel %vm450, %v878, 0
        %v898 = vsel %vm450, %v879, 0
        %v901 = vsel %vm450, %v880, 0
        %v904 = vsel %vm450, %v881, 0
        %v907 = vsel %vm475, %v872, 0
        %909 = vmatprep.subr.mxu0 0.0
        %910 = vmatpush1.msra.mxu0 %v907
        %911 = vmatprep.subr.mxu0 0.0
        %912 = vmatpush1.msra.mxu0 0.0
        %913 = vmatprep.subr.mxu0 0.0
        %914 = vmatpush1.msra.mxu0 0.0
        %915 = vmatprep.subr.mxu0 0.0
        %916 = vmatpush1.msra.mxu0 0.0
        %917 = vmatprep.subr.mxu0 0.0
        %918 = vmatpush1.msra.mxu0 0.0
        %919 = vmatprep.subr.mxu0 0.0
        %920 = vmatpush1.msra.mxu0 0.0
        %921 = vmatprep.subr.mxu0 0.0
        %922 = vmatpush1.msra.mxu0 0.0
        %923 = vmatprep.subr.mxu0 0.0
        %924 = vmatpush1.msra.mxu0 0.0
        %925 = vmatprep.subr.mxu0 0.0
        %926 = vmatpush1.msra.mxu0 0.0
        %927 = vmatprep.subr.mxu0 0.0
        %928 = vmatpush1.msra.mxu0 0.0
        %929 = vmatprep.subr.mxu0 0.0
        %930 = vmatpush1.msra.mxu0 0.0
        %931 = vmatprep.subr.mxu0 0.0
        %932 = vmatpush1.msra.mxu0 0.0
        %933 = vmatprep.subr.mxu0 0.0
        %934 = vmatpush1.msra.mxu0 0.0
        %935 = vmatprep.subr.mxu0 0.0
        %936 = vmatpush1.msra.mxu0 0.0
        %937 = vmatprep.subr.mxu0 0.0
        %938 = vmatpush1.msra.mxu0 0.0
        %939 = vmatprep.subr.mxu0 0.0
        %940 = vmatpush1.msra.mxu0 0.0
        %941 = vmatprep.subr.mxu0 0.0
        %942 = vmatpush1.msra.mxu0 0.0
        %943 = vmatprep.subr.mxu0 0.0
        %944 = vmatpush1.msra.mxu0 0.0
        %945 = vmatprep.subr.mxu0 0.0
        %946 = vmatpush1.msra.mxu0 0.0
        %947 = vmatprep.subr.mxu0 0.0
        %948 = vmatpush1.msra.mxu0 0.0
        %949 = vmatprep.subr.mxu0 0.0
        %950 = vmatpush1.msra.mxu0 0.0
        %951 = vmatprep.subr.mxu0 0.0
        %952 = vmatpush1.msra.mxu0 0.0
        %953 = vmatprep.subr.mxu0 0.0
        %954 = vmatpush1.msra.mxu0 0.0
        %955 = vmatprep.subr.mxu0 0.0
        %956 = vmatpush1.msra.mxu0 0.0
        %957 = vmatprep.subr.mxu0 0.0
        %958 = vmatpush1.msra.mxu0 0.0
        %959 = vmatprep.subr.mxu0 0.0
        %960 = vmatpush1.msra.mxu0 0.0
        %961 = vmatprep.subr.mxu0 0.0
        %962 = vmatpush1.msra.mxu0 0.0
        %963 = vmatprep.subr.mxu0 0.0
        %964 = vmatpush1.msra.mxu0 0.0
        %965 = vmatprep.subr.mxu0 0.0
        %966 = vmatpush1.msra.mxu0 0.0
        %967 = vmatprep.subr.mxu0 0.0
        %968 = vmatpush1.msra.mxu0 0.0
        %969 = vmatprep.subr.mxu0 0.0
        %970 = vmatpush1.msra.mxu0 0.0
        %971 = vmatprep.subr.mxu0 0.0
        %972 = vmatpush1.msra.mxu0 0.0
        %973 = vmatprep.mubr.f32.mxu0 0.0
        %974 = vmatmul.mubr.f32.gmra.mrb[0].mxu0 %v883
        %v975 = vpop.f32.mrb[0].mxu0
        %v976 = vadd.f32 0.0, %v975
        %v977 = vpop.f32.mrb[0].mxu0
        %978 = vmatprep.mubr.f32.mxu0 0.0
        %979 = vmatmul.mubr.f32.gmra.mrb[0].mxu0 %v886
        %v980 = vpop.f32.mrb[0].mxu0
        %v981 = vadd.f32 0.0, %v980
        %v982 = vpop.f32.mrb[0].mxu0
        %983 = vmatprep.mubr.f32.mxu0 0.0
        %984 = vmatmul.mubr.f32.gmra.mrb[0].mxu0 %v889
        %v985 = vpop.f32.mrb[0].mxu0
        %v986 = vadd.f32 0.0, %v985
        %v987 = vpop.f32.mrb[0].mxu0
        %988 = vmatprep.mubr.f32.mxu0 0.0
        %989 = vmatmul.mubr.f32.gmra.mrb[0].mxu0 %v892
        %v990 = vpop.f32.mrb[0].mxu0
        %v991 = vadd.f32 0.0, %v990
        %v992 = vpop.f32.mrb[0].mxu0
        %993 = vmatprep.mubr.f32.mxu0 0.0
        %994 = vmatmul.mubr.f32.gmra.mrb[0].mxu0 %v895
        %v995 = vpop.f32.mrb[0].mxu0
        %v996 = vadd.f32 0.0, %v995
        %v997 = vpop.f32.mrb[0].mxu0
        %998 = vmatprep.mubr.f32.mxu0 0.0
        %999 = vmatmul.mubr.f32.gmra.mrb[0].mxu0 %v898
        %v1000 = vpop.f32.mrb[0].mxu0
        %v1001 = vadd.f32 0.0, %v1000
        %v1002 = vpop.f32.mrb[0].mxu0
        %1003 = vmatprep.mubr.f32.mxu0 0.0
        %1004 = vmatmul.mubr.f32.gmra.mrb[0].mxu0 %v901
        %v1005 = vpop.f32.mrb[0].mxu0
        %v1006 = vadd.f32 0.0, %v1005
        %v1007 = vpop.f32.mrb[0].mxu0
        %1008 = vmatprep.mubr.f32.mxu0 0.0
        %1009 = vmatmul.mubr.f32.gmra.mrb[0].mxu0 %v904
        %v1010 = vpop.f32.mrb[0].mxu0
        %v1011 = vadd.f32 0.0, %v1010
        %v1012 = vpop.f32.mrb[0].mxu0
        %1013 = vdwg.mxu0
        %v1014 = vadd.f32 %v862, %v976
        %v1015 = vadd.f32 %v863, %v981
        %v1016 = vadd.f32 %v864, %v986
        %v1017 = vadd.f32 %v865, %v991
        %v1018 = vadd.f32 %v866, %v996
        %v1019 = vadd.f32 %v867, %v1001
        %v1020 = vadd.f32 %v868, %v1006
        %v1021 = vadd.f32 %v869, %v1011
        %s1022 = scalar_lea.vmem %s3, 256
        %v1023 = vld [vmem:[%s1022] sm:$0xff]
        %v1024 = vld [vmem:[%s1022 + $0x8] sm:$0xff]
        %v1025 = vld [vmem:[%s1022 + $0x10] sm:$0xff]
        %v1026 = vld [vmem:[%s1022 + $0x18] sm:$0xff]
        %v1027 = vld [vmem:[%s1022 + $0x20] sm:$0xff]
        %v1028 = vld [vmem:[%s1022 + $0x28] sm:$0xff]
        %v1029 = vld [vmem:[%s1022 + $0x30] sm:$0xff]
        %v1030 = vld [vmem:[%s1022 + $0x38] sm:$0xff]
        %v1032 = vsel %vm450, %v1023, 0
        %v1035 = vsel %vm450, %v1024, 0
        %v1038 = vsel %vm450, %v1025, 0
        %v1041 = vsel %vm450, %v1026, 0
        %v1044 = vsel %vm450, %v1027, 0
        %v1047 = vsel %vm450, %v1028, 0
        %v1050 = vsel %vm450, %v1029, 0
        %v1053 = vsel %vm450, %v1030, 0
        %v1055 = vsel %vm475, %v388, 0
        %1057 = vmatprep.subr.mxu0 0.0
        %1058 = vmatpush1.msra.mxu0 %v1055
        %1059 = vmatprep.subr.mxu0 0.0
        %1060 = vmatpush1.msra.mxu0 0.0
        %1061 = vmatprep.subr.mxu0 0.0
        %1062 = vmatpush1.msra.mxu0 0.0
        %1063 = vmatprep.subr.mxu0 0.0
        %1064 = vmatpush1.msra.mxu0 0.0
        %1065 = vmatprep.subr.mxu0 0.0
        %1066 = vmatpush1.msra.mxu0 0.0
        %1067 = vmatprep.subr.mxu0 0.0
        %1068 = vmatpush1.msra.mxu0 0.0
        %1069 = vmatprep.subr.mxu0 0.0
        %1070 = vmatpush1.msra.mxu0 0.0
        %1071 = vmatprep.subr.mxu0 0.0
        %1072 = vmatpush1.msra.mxu0 0.0
        %1073 = vmatprep.subr.mxu0 0.0
        %1074 = vmatpush1.msra.mxu0 0.0
        %1075 = vmatprep.subr.mxu0 0.0
        %1076 = vmatpush1.msra.mxu0 0.0
        %1077 = vmatprep.subr.mxu0 0.0
        %1078 = vmatpush1.msra.mxu0 0.0
        %1079 = vmatprep.subr.mxu0 0.0
        %1080 = vmatpush1.msra.mxu0 0.0
        %1081 = vmatprep.subr.mxu0 0.0
        %1082 = vmatpush1.msra.mxu0 0.0
        %1083 = vmatprep.subr.mxu0 0.0
        %1084 = vmatpush1.msra.mxu0 0.0
        %1085 = vmatprep.subr.mxu0 0.0
        %1086 = vmatpush1.msra.mxu0 0.0
        %1087 = vmatprep.subr.mxu0 0.0
        %1088 = vmatpush1.msra.mxu0 0.0
        %1089 = vmatprep.subr.mxu0 0.0
        %1090 = vmatpush1.msra.mxu0 0.0
        %1091 = vmatprep.subr.mxu0 0.0
        %1092 = vmatpush1.msra.mxu0 0.0
        %1093 = vmatprep.subr.mxu0 0.0
        %1094 = vmatpush1.msra.mxu0 0.0
        %1095 = vmatprep.subr.mxu0 0.0
        %1096 = vmatpush1.msra.mxu0 0.0
        %1097 = vmatprep.subr.mxu0 0.0
        %1098 = vmatpush1.msra.mxu0 0.0
        %1099 = vmatprep.subr.mxu0 0.0
        %1100 = vmatpush1.msra.mxu0 0.0
        %1101 = vmatprep.subr.mxu0 0.0
        %1102 = vmatpush1.msra.mxu0 0.0
        %1103 = vmatprep.subr.mxu0 0.0
        %1104 = vmatpush1.msra.mxu0 0.0
        %1105 = vmatprep.subr.mxu0 0.0
        %1106 = vmatpush1.msra.mxu0 0.0
        %1107 = vmatprep.subr.mxu0 0.0
        %1108 = vmatpush1.msra.mxu0 0.0
        %1109 = vmatprep.subr.mxu0 0.0
        %1110 = vmatpush1.msra.mxu0 0.0
        %1111 = vmatprep.subr.mxu0 0.0
        %1112 = vmatpush1.msra.mxu0 0.0
        %1113 = vmatprep.subr.mxu0 0.0
        %1114 = vmatpush1.msra.mxu0 0.0
        %1115 = vmatprep.subr.mxu0 0.0
        %1116 = vmatpush1.msra.mxu0 0.0
        %1117 = vmatprep.subr.mxu0 0.0
        %1118 = vmatpush1.msra.mxu0 0.0
        %1119 = vmatprep.subr.mxu0 0.0
        %1120 = vmatpush1.msra.mxu0 0.0
        %1121 = vmatprep.mubr.f32.mxu0 0.0
        %1122 = vmatmul.mubr.f32.gmra.mrb[0].mxu0 %v1032
        %v1123 = vpop.f32.mrb[0].mxu0
        %v1124 = vadd.f32 0.0, %v1123
        %v1125 = vpop.f32.mrb[0].mxu0
        %1126 = vmatprep.mubr.f32.mxu0 0.0
        %1127 = vmatmul.mubr.f32.gmra.mrb[0].mxu0 %v1035
        %v1128 = vpop.f32.mrb[0].mxu0
        %v1129 = vadd.f32 0.0, %v1128
        %v1130 = vpop.f32.mrb[0].mxu0
        %1131 = vmatprep.mubr.f32.mxu0 0.0
        %1132 = vmatmul.mubr.f32.gmra.mrb[0].mxu0 %v1038
        %v1133 = vpop.f32.mrb[0].mxu0
        %v1134 = vadd.f32 0.0, %v1133
        %v1135 = vpop.f32.mrb[0].mxu0
        %1136 = vmatprep.mubr.f32.mxu0 0.0
        %1137 = vmatmul.mubr.f32.gmra.mrb[0].mxu0 %v1041
        %v1138 = vpop.f32.mrb[0].mxu0
        %v1139 = vadd.f32 0.0, %v1138
        %v1140 = vpop.f32.mrb[0].mxu0
        %1141 = vmatprep.mubr.f32.mxu0 0.0
        %1142 = vmatmul.mubr.f32.gmra.mrb[0].mxu0 %v1044
        %v1143 = vpop.f32.mrb[0].mxu0
        %v1144 = vadd.f32 0.0, %v1143
        %v1145 = vpop.f32.mrb[0].mxu0
        %1146 = vmatprep.mubr.f32.mxu0 0.0
        %1147 = vmatmul.mubr.f32.gmra.mrb[0].mxu0 %v1047
        %v1148 = vpop.f32.mrb[0].mxu0
        %v1149 = vadd.f32 0.0, %v1148
        %v1150 = vpop.f32.mrb[0].mxu0
        %1151 = vmatprep.mubr.f32.mxu0 0.0
        %1152 = vmatmul.mubr.f32.gmra.mrb[0].mxu0 %v1050
        %v1153 = vpop.f32.mrb[0].mxu0
        %v1154 = vadd.f32 0.0, %v1153
        %v1155 = vpop.f32.mrb[0].mxu0
        %1156 = vmatprep.mubr.f32.mxu0 0.0
        %1157 = vmatmul.mubr.f32.gmra.mrb[0].mxu0 %v1053
        %v1158 = vpop.f32.mrb[0].mxu0
        %v1159 = vadd.f32 0.0, %v1158
        %v1160 = vpop.f32.mrb[0].mxu0
        %1161 = vdwg.mxu0
        %v1162 = vadd.f32 %v1014, %v1124
        %v1163 = vadd.f32 %v1015, %v1129
        %v1164 = vadd.f32 %v1016, %v1134
        %v1165 = vadd.f32 %v1017, %v1139
        %v1166 = vadd.f32 %v1018, %v1144
        %v1167 = vadd.f32 %v1019, %v1149
        %v1168 = vadd.f32 %v1020, %v1154
        %v1169 = vadd.f32 %v1021, %v1159
        %1170 = vrot.lane.b32.xlu0 %v388, 127
        %v1171 = vpop.permute.xlu0 %1170
        %v1172 = vsel %vm719, %v1171, 0.0
        %s1173 = scalar_lea.vmem %s3, 320
        %v1174 = vld [vmem:[%s1173] sm:$0xff]
        %v1175 = vld [vmem:[%s1173 + $0x8] sm:$0xff]
        %v1176 = vld [vmem:[%s1173 + $0x10] sm:$0xff]
        %v1177 = vld [vmem:[%s1173 + $0x18] sm:$0xff]
        %v1178 = vld [vmem:[%s1173 + $0x20] sm:$0xff]
        %v1179 = vld [vmem:[%s1173 + $0x28] sm:$0xff]
        %v1180 = vld [vmem:[%s1173 + $0x30] sm:$0xff]
        %v1181 = vld [vmem:[%s1173 + $0x38] sm:$0xff]
        %v1183 = vsel %vm450, %v1174, 0
        %v1186 = vsel %vm450, %v1175, 0
        %v1189 = vsel %vm450, %v1176, 0
        %v1192 = vsel %vm450, %v1177, 0
        %v1195 = vsel %vm450, %v1178, 0
        %v1198 = vsel %vm450, %v1179, 0
        %v1201 = vsel %vm450, %v1180, 0
        %v1204 = vsel %vm450, %v1181, 0
        %v1207 = vsel %vm475, %v1172, 0
        %1209 = vmatprep.subr.mxu0 0.0
        %1210 = vmatpush1.msra.mxu0 %v1207
        %1211 = vmatprep.subr.mxu0 0.0
        %1212 = vmatpush1.msra.mxu0 0.0
        %1213 = vmatprep.subr.mxu0 0.0
        %1214 = vmatpush1.msra.mxu0 0.0
        %1215 = vmatprep.subr.mxu0 0.0
        %1216 = vmatpush1.msra.mxu0 0.0
        %1217 = vmatprep.subr.mxu0 0.0
        %1218 = vmatpush1.msra.mxu0 0.0
        %1219 = vmatprep.subr.mxu0 0.0
        %1220 = vmatpush1.msra.mxu0 0.0
        %1221 = vmatprep.subr.mxu0 0.0
        %1222 = vmatpush1.msra.mxu0 0.0
        %1223 = vmatprep.subr.mxu0 0.0
        %1224 = vmatpush1.msra.mxu0 0.0
        %1225 = vmatprep.subr.mxu0 0.0
        %1226 = vmatpush1.msra.mxu0 0.0
        %1227 = vmatprep.subr.mxu0 0.0
        %1228 = vmatpush1.msra.mxu0 0.0
        %1229 = vmatprep.subr.mxu0 0.0
        %1230 = vmatpush1.msra.mxu0 0.0
        %1231 = vmatprep.subr.mxu0 0.0
        %1232 = vmatpush1.msra.mxu0 0.0
        %1233 = vmatprep.subr.mxu0 0.0
        %1234 = vmatpush1.msra.mxu0 0.0
        %1235 = vmatprep.subr.mxu0 0.0
        %1236 = vmatpush1.msra.mxu0 0.0
        %1237 = vmatprep.subr.mxu0 0.0
        %1238 = vmatpush1.msra.mxu0 0.0
        %1239 = vmatprep.subr.mxu0 0.0
        %1240 = vmatpush1.msra.mxu0 0.0
        %1241 = vmatprep.subr.mxu0 0.0
        %1242 = vmatpush1.msra.mxu0 0.0
        %1243 = vmatprep.subr.mxu0 0.0
        %1244 = vmatpush1.msra.mxu0 0.0
        %1245 = vmatprep.subr.mxu0 0.0
        %1246 = vmatpush1.msra.mxu0 0.0
        %1247 = vmatprep.subr.mxu0 0.0
        %1248 = vmatpush1.msra.mxu0 0.0
        %1249 = vmatprep.subr.mxu0 0.0
        %1250 = vmatpush1.msra.mxu0 0.0
        %1251 = vmatprep.subr.mxu0 0.0
        %1252 = vmatpush1.msra.mxu0 0.0
        %1253 = vmatprep.subr.mxu0 0.0
        %1254 = vmatpush1.msra.mxu0 0.0
        %1255 = vmatprep.subr.mxu0 0.0
        %1256 = vmatpush1.msra.mxu0 0.0
        %1257 = vmatprep.subr.mxu0 0.0
        %1258 = vmatpush1.msra.mxu0 0.0
        %1259 = vmatprep.subr.mxu0 0.0
        %1260 = vmatpush1.msra.mxu0 0.0
        %1261 = vmatprep.subr.mxu0 0.0
        %1262 = vmatpush1.msra.mxu0 0.0
        %1263 = vmatprep.subr.mxu0 0.0
        %1264 = vmatpush1.msra.mxu0 0.0
        %1265 = vmatprep.subr.mxu0 0.0
        %1266 = vmatpush1.msra.mxu0 0.0
        %1267 = vmatprep.subr.mxu0 0.0
        %1268 = vmatpush1.msra.mxu0 0.0
        %1269 = vmatprep.subr.mxu0 0.0
        %1270 = vmatpush1.msra.mxu0 0.0
        %1271 = vmatprep.subr.mxu0 0.0
        %1272 = vmatpush1.msra.mxu0 0.0
        %1273 = vmatprep.mubr.f32.mxu0 0.0
        %1274 = vmatmul.mubr.f32.gmra.mrb[0].mxu0 %v1183
        %v1275 = vpop.f32.mrb[0].mxu0
        %v1276 = vadd.f32 0.0, %v1275
        %v1277 = vpop.f32.mrb[0].mxu0
        %1278 = vmatprep.mubr.f32.mxu0 0.0
        %1279 = vmatmul.mubr.f32.gmra.mrb[0].mxu0 %v1186
        %v1280 = vpop.f32.mrb[0].mxu0
        %v1281 = vadd.f32 0.0, %v1280
        %v1282 = vpop.f32.mrb[0].mxu0
        %1283 = vmatprep.mubr.f32.mxu0 0.0
        %1284 = vmatmul.mubr.f32.gmra.mrb[0].mxu0 %v1189
        %v1285 = vpop.f32.mrb[0].mxu0
        %v1286 = vadd.f32 0.0, %v1285
        %v1287 = vpop.f32.mrb[0].mxu0
        %1288 = vmatprep.mubr.f32.mxu0 0.0
        %1289 = vmatmul.mubr.f32.gmra.mrb[0].mxu0 %v1192
        %v1290 = vpop.f32.mrb[0].mxu0
        %v1291 = vadd.f32 0.0, %v1290
        %v1292 = vpop.f32.mrb[0].mxu0
        %1293 = vmatprep.mubr.f32.mxu0 0.0
        %1294 = vmatmul.mubr.f32.gmra.mrb[0].mxu0 %v1195
        %v1295 = vpop.f32.mrb[0].mxu0
        %v1296 = vadd.f32 0.0, %v1295
        %v1297 = vpop.f32.mrb[0].mxu0
        %1298 = vmatprep.mubr.f32.mxu0 0.0
        %1299 = vmatmul.mubr.f32.gmra.mrb[0].mxu0 %v1198
        %v1300 = vpop.f32.mrb[0].mxu0
        %v1301 = vadd.f32 0.0, %v1300
        %v1302 = vpop.f32.mrb[0].mxu0
        %1303 = vmatprep.mubr.f32.mxu0 0.0
        %1304 = vmatmul.mubr.f32.gmra.mrb[0].mxu0 %v1201
        %v1305 = vpop.f32.mrb[0].mxu0
        %v1306 = vadd.f32 0.0, %v1305
        %v1307 = vpop.f32.mrb[0].mxu0
        %1308 = vmatprep.mubr.f32.mxu0 0.0
        %1309 = vmatmul.mubr.f32.gmra.mrb[0].mxu0 %v1204
        %v1310 = vpop.f32.mrb[0].mxu0
        %v1311 = vadd.f32 0.0, %v1310
        %v1312 = vpop.f32.mrb[0].mxu0
        %1313 = vdwg.mxu0
        %v1314 = vadd.f32 %v1162, %v1276
        %v1315 = vadd.f32 %v1163, %v1281
        %v1316 = vadd.f32 %v1164, %v1286
        %v1317 = vadd.f32 %v1165, %v1291
        %v1318 = vadd.f32 %v1166, %v1296
        %v1319 = vadd.f32 %v1167, %v1301
        %v1320 = vadd.f32 %v1168, %v1306
        %v1321 = vadd.f32 %v1169, %v1311
        %1323 = vrot.lane.b32.xlu0 %v410, 96
        %v1324 = vpop.permute.xlu0 %1323
        %1325 = vrot.lane.b32.xlu0 %v411, 96
        %v1326 = vpop.permute.xlu0 %1325
        %vm1327 = vcmask 785408
        %v1328 = vsel %vm1327, %v1324, %v1326
        %1330 = vrot.lane.b32.xlu0 %v1328, 1
        %v1331 = vpop.permute.xlu0 %1330
        %v1332 = vsel %vm431, %v1331, 0.0
        %s1333 = scalar_lea.vmem %s3, 384
        %v1334 = vld [vmem:[%s1333] sm:$0xff]
        %v1335 = vld [vmem:[%s1333 + $0x8] sm:$0xff]
        %v1336 = vld [vmem:[%s1333 + $0x10] sm:$0xff]
        %v1337 = vld [vmem:[%s1333 + $0x18] sm:$0xff]
        %v1338 = vld [vmem:[%s1333 + $0x20] sm:$0xff]
        %v1339 = vld [vmem:[%s1333 + $0x28] sm:$0xff]
        %v1340 = vld [vmem:[%s1333 + $0x30] sm:$0xff]
        %v1341 = vld [vmem:[%s1333 + $0x38] sm:$0xff]
        %v1343 = vsel %vm450, %v1334, 0
        %v1346 = vsel %vm450, %v1335, 0
        %v1349 = vsel %vm450, %v1336, 0
        %v1352 = vsel %vm450, %v1337, 0
        %v1355 = vsel %vm450, %v1338, 0
        %v1358 = vsel %vm450, %v1339, 0
        %v1361 = vsel %vm450, %v1340, 0
        %v1364 = vsel %vm450, %v1341, 0
        %v1367 = vsel %vm475, %v1332, 0
        %1369 = vmatprep.subr.mxu0 0.0
        %1370 = vmatpush1.msra.mxu0 %v1367
        %1371 = vmatprep.subr.mxu0 0.0
        %1372 = vmatpush1.msra.mxu0 0.0
        %1373 = vmatprep.subr.mxu0 0.0
        %1374 = vmatpush1.msra.mxu0 0.0
        %1375 = vmatprep.subr.mxu0 0.0
        %1376 = vmatpush1.msra.mxu0 0.0
        %1377 = vmatprep.subr.mxu0 0.0
        %1378 = vmatpush1.msra.mxu0 0.0
        %1379 = vmatprep.subr.mxu0 0.0
        %1380 = vmatpush1.msra.mxu0 0.0
        %1381 = vmatprep.subr.mxu0 0.0
        %1382 = vmatpush1.msra.mxu0 0.0
        %1383 = vmatprep.subr.mxu0 0.0
        %1384 = vmatpush1.msra.mxu0 0.0
        %1385 = vmatprep.subr.mxu0 0.0
        %1386 = vmatpush1.msra.mxu0 0.0
        %1387 = vmatprep.subr.mxu0 0.0
        %1388 = vmatpush1.msra.mxu0 0.0
        %1389 = vmatprep.subr.mxu0 0.0
        %1390 = vmatpush1.msra.mxu0 0.0
        %1391 = vmatprep.subr.mxu0 0.0
        %1392 = vmatpush1.msra.mxu0 0.0
        %1393 = vmatprep.subr.mxu0 0.0
        %1394 = vmatpush1.msra.mxu0 0.0
        %1395 = vmatprep.subr.mxu0 0.0
        %1396 = vmatpush1.msra.mxu0 0.0
        %1397 = vmatprep.subr.mxu0 0.0
        %1398 = vmatpush1.msra.mxu0 0.0
        %1399 = vmatprep.subr.mxu0 0.0
        %1400 = vmatpush1.msra.mxu0 0.0
        %1401 = vmatprep.subr.mxu0 0.0
        %1402 = vmatpush1.msra.mxu0 0.0
        %1403 = vmatprep.subr.mxu0 0.0
        %1404 = vmatpush1.msra.mxu0 0.0
        %1405 = vmatprep.subr.mxu0 0.0
        %1406 = vmatpush1.msra.mxu0 0.0
        %1407 = vmatprep.subr.mxu0 0.0
        %1408 = vmatpush1.msra.mxu0 0.0
        %1409 = vmatprep.subr.mxu0 0.0
        %1410 = vmatpush1.msra.mxu0 0.0
        %1411 = vmatprep.subr.mxu0 0.0
        %1412 = vmatpush1.msra.mxu0 0.0
        %1413 = vmatprep.subr.mxu0 0.0
        %1414 = vmatpush1.msra.mxu0 0.0
        %1415 = vmatprep.subr.mxu0 0.0
        %1416 = vmatpush1.msra.mxu0 0.0
        %1417 = vmatprep.subr.mxu0 0.0
        %1418 = vmatpush1.msra.mxu0 0.0
        %1419 = vmatprep.subr.mxu0 0.0
        %1420 = vmatpush1.msra.mxu0 0.0
        %1421 = vmatprep.subr.mxu0 0.0
        %1422 = vmatpush1.msra.mxu0 0.0
        %1423 = vmatprep.subr.mxu0 0.0
        %1424 = vmatpush1.msra.mxu0 0.0
        %1425 = vmatprep.subr.mxu0 0.0
        %1426 = vmatpush1.msra.mxu0 0.0
        %1427 = vmatprep.subr.mxu0 0.0
        %1428 = vmatpush1.msra.mxu0 0.0
        %1429 = vmatprep.subr.mxu0 0.0
        %1430 = vmatpush1.msra.mxu0 0.0
        %1431 = vmatprep.subr.mxu0 0.0
        %1432 = vmatpush1.msra.mxu0 0.0
        %1433 = vmatprep.mubr.f32.mxu0 0.0
        %1434 = vmatmul.mubr.f32.gmra.mrb[0].mxu0 %v1343
        %v1435 = vpop.f32.mrb[0].mxu0
        %v1436 = vadd.f32 0.0, %v1435
        %v1437 = vpop.f32.mrb[0].mxu0
        %1438 = vmatprep.mubr.f32.mxu0 0.0
        %1439 = vmatmul.mubr.f32.gmra.mrb[0].mxu0 %v1346
        %v1440 = vpop.f32.mrb[0].mxu0
        %v1441 = vadd.f32 0.0, %v1440
        %v1442 = vpop.f32.mrb[0].mxu0
        %1443 = vmatprep.mubr.f32.mxu0 0.0
        %1444 = vmatmul.mubr.f32.gmra.mrb[0].mxu0 %v1349
        %v1445 = vpop.f32.mrb[0].mxu0
        %v1446 = vadd.f32 0.0, %v1445
        %v1447 = vpop.f32.mrb[0].mxu0
        %1448 = vmatprep.mubr.f32.mxu0 0.0
        %1449 = vmatmul.mubr.f32.gmra.mrb[0].mxu0 %v1352
        %v1450 = vpop.f32.mrb[0].mxu0
        %v1451 = vadd.f32 0.0, %v1450
        %v1452 = vpop.f32.mrb[0].mxu0
        %1453 = vmatprep.mubr.f32.mxu0 0.0
        %1454 = vmatmul.mubr.f32.gmra.mrb[0].mxu0 %v1355
        %v1455 = vpop.f32.mrb[0].mxu0
        %v1456 = vadd.f32 0.0, %v1455
        %v1457 = vpop.f32.mrb[0].mxu0
        %1458 = vmatprep.mubr.f32.mxu0 0.0
        %1459 = vmatmul.mubr.f32.gmra.mrb[0].mxu0 %v1358
        %v1460 = vpop.f32.mrb[0].mxu0
        %v1461 = vadd.f32 0.0, %v1460
        %v1462 = vpop.f32.mrb[0].mxu0
        %1463 = vmatprep.mubr.f32.mxu0 0.0
        %1464 = vmatmul.mubr.f32.gmra.mrb[0].mxu0 %v1361
        %v1465 = vpop.f32.mrb[0].mxu0
        %v1466 = vadd.f32 0.0, %v1465
        %v1467 = vpop.f32.mrb[0].mxu0
        %1468 = vmatprep.mubr.f32.mxu0 0.0
        %1469 = vmatmul.mubr.f32.gmra.mrb[0].mxu0 %v1364
        %v1470 = vpop.f32.mrb[0].mxu0
        %v1471 = vadd.f32 0.0, %v1470
        %v1472 = vpop.f32.mrb[0].mxu0
        %1473 = vdwg.mxu0
        %v1474 = vadd.f32 %v1314, %v1436
        %v1475 = vadd.f32 %v1315, %v1441
        %v1476 = vadd.f32 %v1316, %v1446
        %v1477 = vadd.f32 %v1317, %v1451
        %v1478 = vadd.f32 %v1318, %v1456
        %v1479 = vadd.f32 %v1319, %v1461
        %v1480 = vadd.f32 %v1320, %v1466
        %v1481 = vadd.f32 %v1321, %v1471
        %s1482 = scalar_lea.vmem %s3, 448
        %v1483 = vld [vmem:[%s1482] sm:$0xff]
        %v1484 = vld [vmem:[%s1482 + $0x8] sm:$0xff]
        %v1485 = vld [vmem:[%s1482 + $0x10] sm:$0xff]
        %v1486 = vld [vmem:[%s1482 + $0x18] sm:$0xff]
        %v1487 = vld [vmem:[%s1482 + $0x20] sm:$0xff]
        %v1488 = vld [vmem:[%s1482 + $0x28] sm:$0xff]
        %v1489 = vld [vmem:[%s1482 + $0x30] sm:$0xff]
        %v1490 = vld [vmem:[%s1482 + $0x38] sm:$0xff]
        %v1492 = vsel %vm450, %v1483, 0
        %v1495 = vsel %vm450, %v1484, 0
        %v1498 = vsel %vm450, %v1485, 0
        %v1501 = vsel %vm450, %v1486, 0
        %v1504 = vsel %vm450, %v1487, 0
        %v1507 = vsel %vm450, %v1488, 0
        %v1510 = vsel %vm450, %v1489, 0
        %v1513 = vsel %vm450, %v1490, 0
        %v1515 = vsel %vm475, %v1328, 0
        %1517 = vmatprep.subr.mxu0 0.0
        %1518 = vmatpush1.msra.mxu0 %v1515
        %1519 = vmatprep.subr.mxu0 0.0
        %1520 = vmatpush1.msra.mxu0 0.0
        %1521 = vmatprep.subr.mxu0 0.0
        %1522 = vmatpush1.msra.mxu0 0.0
        %1523 = vmatprep.subr.mxu0 0.0
        %1524 = vmatpush1.msra.mxu0 0.0
        %1525 = vmatprep.subr.mxu0 0.0
        %1526 = vmatpush1.msra.mxu0 0.0
        %1527 = vmatprep.subr.mxu0 0.0
        %1528 = vmatpush1.msra.mxu0 0.0
        %1529 = vmatprep.subr.mxu0 0.0
        %1530 = vmatpush1.msra.mxu0 0.0
        %1531 = vmatprep.subr.mxu0 0.0
        %1532 = vmatpush1.msra.mxu0 0.0
        %1533 = vmatprep.subr.mxu0 0.0
        %1534 = vmatpush1.msra.mxu0 0.0
        %1535 = vmatprep.subr.mxu0 0.0
        %1536 = vmatpush1.msra.mxu0 0.0
        %1537 = vmatprep.subr.mxu0 0.0
        %1538 = vmatpush1.msra.mxu0 0.0
        %1539 = vmatprep.subr.mxu0 0.0
        %1540 = vmatpush1.msra.mxu0 0.0
        %1541 = vmatprep.subr.mxu0 0.0
        %1542 = vmatpush1.msra.mxu0 0.0
        %1543 = vmatprep.subr.mxu0 0.0
        %1544 = vmatpush1.msra.mxu0 0.0
        %1545 = vmatprep.subr.mxu0 0.0
        %1546 = vmatpush1.msra.mxu0 0.0
        %1547 = vmatprep.subr.mxu0 0.0
        %1548 = vmatpush1.msra.mxu0 0.0
        %1549 = vmatprep.subr.mxu0 0.0
        %1550 = vmatpush1.msra.mxu0 0.0
        %1551 = vmatprep.subr.mxu0 0.0
        %1552 = vmatpush1.msra.mxu0 0.0
        %1553 = vmatprep.subr.mxu0 0.0
        %1554 = vmatpush1.msra.mxu0 0.0
        %1555 = vmatprep.subr.mxu0 0.0
        %1556 = vmatpush1.msra.mxu0 0.0
        %1557 = vmatprep.subr.mxu0 0.0
        %1558 = vmatpush1.msra.mxu0 0.0
        %1559 = vmatprep.subr.mxu0 0.0
        %1560 = vmatpush1.msra.mxu0 0.0
        %1561 = vmatprep.subr.mxu0 0.0
        %1562 = vmatpush1.msra.mxu0 0.0
        %1563 = vmatprep.subr.mxu0 0.0
        %1564 = vmatpush1.msra.mxu0 0.0
        %1565 = vmatprep.subr.mxu0 0.0
        %1566 = vmatpush1.msra.mxu0 0.0
        %1567 = vmatprep.subr.mxu0 0.0
        %1568 = vmatpush1.msra.mxu0 0.0
        %1569 = vmatprep.subr.mxu0 0.0
        %1570 = vmatpush1.msra.mxu0 0.0
        %1571 = vmatprep.subr.mxu0 0.0
        %1572 = vmatpush1.msra.mxu0 0.0
        %1573 = vmatprep.subr.mxu0 0.0
        %1574 = vmatpush1.msra.mxu0 0.0
        %1575 = vmatprep.subr.mxu0 0.0
        %1576 = vmatpush1.msra.mxu0 0.0
        %1577 = vmatprep.subr.mxu0 0.0
        %1578 = vmatpush1.msra.mxu0 0.0
        %1579 = vmatprep.subr.mxu0 0.0
        %1580 = vmatpush1.msra.mxu0 0.0
        %1581 = vmatprep.mubr.f32.mxu0 0.0
        %1582 = vmatmul.mubr.f32.gmra.mrb[0].mxu0 %v1492
        %v1583 = vpop.f32.mrb[0].mxu0
        %v1584 = vadd.f32 0.0, %v1583
        %v1585 = vpop.f32.mrb[0].mxu0
        %1586 = vmatprep.mubr.f32.mxu0 0.0
        %1587 = vmatmul.mubr.f32.gmra.mrb[0].mxu0 %v1495
        %v1588 = vpop.f32.mrb[0].mxu0
        %v1589 = vadd.f32 0.0, %v1588
        %v1590 = vpop.f32.mrb[0].mxu0
        %1591 = vmatprep.mubr.f32.mxu0 0.0
        %1592 = vmatmul.mubr.f32.gmra.mrb[0].mxu0 %v1498
        %v1593 = vpop.f32.mrb[0].mxu0
        %v1594 = vadd.f32 0.0, %v1593
        %v1595 = vpop.f32.mrb[0].mxu0
        %1596 = vmatprep.mubr.f32.mxu0 0.0
        %1597 = vmatmul.mubr.f32.gmra.mrb[0].mxu0 %v1501
        %v1598 = vpop.f32.mrb[0].mxu0
        %v1599 = vadd.f32 0.0, %v1598
        %v1600 = vpop.f32.mrb[0].mxu0
        %1601 = vmatprep.mubr.f32.mxu0 0.0
        %1602 = vmatmul.mubr.f32.gmra.mrb[0].mxu0 %v1504
        %v1603 = vpop.f32.mrb[0].mxu0
        %v1604 = vadd.f32 0.0, %v1603
        %v1605 = vpop.f32.mrb[0].mxu0
        %1606 = vmatprep.mubr.f32.mxu0 0.0
        %1607 = vmatmul.mubr.f32.gmra.mrb[0].mxu0 %v1507
        %v1608 = vpop.f32.mrb[0].mxu0
        %v1609 = vadd.f32 0.0, %v1608
        %v1610 = vpop.f32.mrb[0].mxu0
        %1611 = vmatprep.mubr.f32.mxu0 0.0
        %1612 = vmatmul.mubr.f32.gmra.mrb[0].mxu0 %v1510
        %v1613 = vpop.f32.mrb[0].mxu0
        %v1614 = vadd.f32 0.0, %v1613
        %v1615 = vpop.f32.mrb[0].mxu0
        %1616 = vmatprep.mubr.f32.mxu0 0.0
        %1617 = vmatmul.mubr.f32.gmra.mrb[0].mxu0 %v1513
        %v1618 = vpop.f32.mrb[0].mxu0
        %v1619 = vadd.f32 0.0, %v1618
        %v1620 = vpop.f32.mrb[0].mxu0
        %1621 = vdwg.mxu0
        %v1622 = vadd.f32 %v1474, %v1584
        %v1623 = vadd.f32 %v1475, %v1589
        %v1624 = vadd.f32 %v1476, %v1594
        %v1625 = vadd.f32 %v1477, %v1599
        %v1626 = vadd.f32 %v1478, %v1604
        %v1627 = vadd.f32 %v1479, %v1609
        %v1628 = vadd.f32 %v1480, %v1614
        %v1629 = vadd.f32 %v1481, %v1619
        %1630 = vrot.lane.b32.xlu0 %v1328, 127
        %v1631 = vpop.permute.xlu0 %1630
        %v1632 = vsel %vm719, %v1631, 0.0
        %s1633 = scalar_lea.vmem %s3, 512
        %v1634 = vld [vmem:[%s1633] sm:$0xff]
        %v1635 = vld [vmem:[%s1633 + $0x8] sm:$0xff]
        %v1636 = vld [vmem:[%s1633 + $0x10] sm:$0xff]
        %v1637 = vld [vmem:[%s1633 + $0x18] sm:$0xff]
        %v1638 = vld [vmem:[%s1633 + $0x20] sm:$0xff]
        %v1639 = vld [vmem:[%s1633 + $0x28] sm:$0xff]
        %v1640 = vld [vmem:[%s1633 + $0x30] sm:$0xff]
        %v1641 = vld [vmem:[%s1633 + $0x38] sm:$0xff]
        %v1643 = vsel %vm450, %v1634, 0
        %v1646 = vsel %vm450, %v1635, 0
        %v1649 = vsel %vm450, %v1636, 0
        %v1652 = vsel %vm450, %v1637, 0
        %v1655 = vsel %vm450, %v1638, 0
        %v1658 = vsel %vm450, %v1639, 0
        %v1661 = vsel %vm450, %v1640, 0
        %v1664 = vsel %vm450, %v1641, 0
        %v1667 = vsel %vm475, %v1632, 0
        %1669 = vmatprep.subr.mxu0 0.0
        %1670 = vmatpush1.msra.mxu0 %v1667
        %1671 = vmatprep.subr.mxu0 0.0
        %1672 = vmatpush1.msra.mxu0 0.0
        %1673 = vmatprep.subr.mxu0 0.0
        %1674 = vmatpush1.msra.mxu0 0.0
        %1675 = vmatprep.subr.mxu0 0.0
        %1676 = vmatpush1.msra.mxu0 0.0
        %1677 = vmatprep.subr.mxu0 0.0
        %1678 = vmatpush1.msra.mxu0 0.0
        %1679 = vmatprep.subr.mxu0 0.0
        %1680 = vmatpush1.msra.mxu0 0.0
        %1681 = vmatprep.subr.mxu0 0.0
        %1682 = vmatpush1.msra.mxu0 0.0
        %1683 = vmatprep.subr.mxu0 0.0
        %1684 = vmatpush1.msra.mxu0 0.0
        %1685 = vmatprep.subr.mxu0 0.0
        %1686 = vmatpush1.msra.mxu0 0.0
        %1687 = vmatprep.subr.mxu0 0.0
        %1688 = vmatpush1.msra.mxu0 0.0
        %1689 = vmatprep.subr.mxu0 0.0
        %1690 = vmatpush1.msra.mxu0 0.0
        %1691 = vmatprep.subr.mxu0 0.0
        %1692 = vmatpush1.msra.mxu0 0.0
        %1693 = vmatprep.subr.mxu0 0.0
        %1694 = vmatpush1.msra.mxu0 0.0
        %1695 = vmatprep.subr.mxu0 0.0
        %1696 = vmatpush1.msra.mxu0 0.0
        %1697 = vmatprep.subr.mxu0 0.0
        %1698 = vmatpush1.msra.mxu0 0.0
        %1699 = vmatprep.subr.mxu0 0.0
        %1700 = vmatpush1.msra.mxu0 0.0
        %1701 = vmatprep.subr.mxu0 0.0
        %1702 = vmatpush1.msra.mxu0 0.0
        %1703 = vmatprep.subr.mxu0 0.0
        %1704 = vmatpush1.msra.mxu0 0.0
        %1705 = vmatprep.subr.mxu0 0.0
        %1706 = vmatpush1.msra.mxu0 0.0
        %1707 = vmatprep.subr.mxu0 0.0
        %1708 = vmatpush1.msra.mxu0 0.0
        %1709 = vmatprep.subr.mxu0 0.0
        %1710 = vmatpush1.msra.mxu0 0.0
        %1711 = vmatprep.subr.mxu0 0.0
        %1712 = vmatpush1.msra.mxu0 0.0
        %1713 = vmatprep.subr.mxu0 0.0
        %1714 = vmatpush1.msra.mxu0 0.0
        %1715 = vmatprep.subr.mxu0 0.0
        %1716 = vmatpush1.msra.mxu0 0.0
        %1717 = vmatprep.subr.mxu0 0.0
        %1718 = vmatpush1.msra.mxu0 0.0
        %1719 = vmatprep.subr.mxu0 0.0
        %1720 = vmatpush1.msra.mxu0 0.0
        %1721 = vmatprep.subr.mxu0 0.0
        %1722 = vmatpush1.msra.mxu0 0.0
        %1723 = vmatprep.subr.mxu0 0.0
        %1724 = vmatpush1.msra.mxu0 0.0
        %1725 = vmatprep.subr.mxu0 0.0
        %1726 = vmatpush1.msra.mxu0 0.0
        %1727 = vmatprep.subr.mxu0 0.0
        %1728 = vmatpush1.msra.mxu0 0.0
        %1729 = vmatprep.subr.mxu0 0.0
        %1730 = vmatpush1.msra.mxu0 0.0
        %1731 = vmatprep.subr.mxu0 0.0
        %1732 = vmatpush1.msra.mxu0 0.0
        %1733 = vmatprep.mubr.f32.mxu0 0.0
        %1734 = vmatmul.mubr.f32.gmra.mrb[0].mxu0 %v1643
        %v1735 = vpop.f32.mrb[0].mxu0
        %v1736 = vadd.f32 0.0, %v1735
        %v1737 = vpop.f32.mrb[0].mxu0
        %1738 = vmatprep.mubr.f32.mxu0 0.0
        %1739 = vmatmul.mubr.f32.gmra.mrb[0].mxu0 %v1646
        %v1740 = vpop.f32.mrb[0].mxu0
        %v1741 = vadd.f32 0.0, %v1740
        %v1742 = vpop.f32.mrb[0].mxu0
        %1743 = vmatprep.mubr.f32.mxu0 0.0
        %1744 = vmatmul.mubr.f32.gmra.mrb[0].mxu0 %v1649
        %v1745 = vpop.f32.mrb[0].mxu0
        %v1746 = vadd.f32 0.0, %v1745
        %v1747 = vpop.f32.mrb[0].mxu0
        %1748 = vmatprep.mubr.f32.mxu0 0.0
        %1749 = vmatmul.mubr.f32.gmra.mrb[0].mxu0 %v1652
        %v1750 = vpop.f32.mrb[0].mxu0
        %v1751 = vadd.f32 0.0, %v1750
        %v1752 = vpop.f32.mrb[0].mxu0
        %1753 = vmatprep.mubr.f32.mxu0 0.0
        %1754 = vmatmul.mubr.f32.gmra.mrb[0].mxu0 %v1655
        %v1755 = vpop.f32.mrb[0].mxu0
        %v1756 = vadd.f32 0.0, %v1755
        %v1757 = vpop.f32.mrb[0].mxu0
        %1758 = vmatprep.mubr.f32.mxu0 0.0
        %1759 = vmatmul.mubr.f32.gmra.mrb[0].mxu0 %v1658
        %v1760 = vpop.f32.mrb[0].mxu0
        %v1761 = vadd.f32 0.0, %v1760
        %v1762 = vpop.f32.mrb[0].mxu0
        %1763 = vmatprep.mubr.f32.mxu0 0.0
        %1764 = vmatmul.mubr.f32.gmra.mrb[0].mxu0 %v1661
        %v1765 = vpop.f32.mrb[0].mxu0
        %v1766 = vadd.f32 0.0, %v1765
        %v1767 = vpop.f32.mrb[0].mxu0
        %1768 = vmatprep.mubr.f32.mxu0 0.0
        %1769 = vmatmul.mubr.f32.gmra.mrb[0].mxu0 %v1664
        %v1770 = vpop.f32.mrb[0].mxu0
        %v1771 = vadd.f32 0.0, %v1770
        %v1772 = vpop.f32.mrb[0].mxu0
        %1773 = vdwg.mxu0
        %v1774 = vadd.f32 %v1622, %v1736
        %v1775 = vadd.f32 %v1623, %v1741
        %v1776 = vadd.f32 %v1624, %v1746
        %v1777 = vadd.f32 %v1625, %v1751
        %v1778 = vadd.f32 %v1626, %v1756
        %v1779 = vadd.f32 %v1627, %v1761
        %v1780 = vadd.f32 %v1628, %v1766
        %v1781 = vadd.f32 %v1629, %v1771
        %1782 = vst [vmem:[%s324] sm:$0xff] %v1774
        %1783 = vst [vmem:[%s324 + $0x8] sm:$0xff] %v1775
        %1784 = vst [vmem:[%s324 + $0x10] sm:$0xff] %v1776
        %1785 = vst [vmem:[%s324 + $0x18] sm:$0xff] %v1777
        %1786 = vst [vmem:[%s324 + $0x20] sm:$0xff] %v1778
        %1787 = vst [vmem:[%s324 + $0x28] sm:$0xff] %v1779
        %1788 = vst [vmem:[%s324 + $0x30] sm:$0xff] %v1780
        %1789 = vst [vmem:[%s324 + $0x38] sm:$0xff] %v1781
        %1790 = vst.msk [vmem:[%s386] sm:$0xff] %vm409, %v1774
        %1791 = vst.msk [vmem:[%s386 + $0x8] sm:$0xff] %vm409, %v1775
        %1792 = vst.msk [vmem:[%s386 + $0x10] sm:$0xff] %vm409, %v1776
        %1793 = vst.msk [vmem:[%s386 + $0x18] sm:$0xff] %vm409, %v1777
        %1794 = vst.msk [vmem:[%s386 + $0x20] sm:$0xff] %vm409, %v1778
        %1795 = vst.msk [vmem:[%s386 + $0x28] sm:$0xff] %vm409, %v1779
        %1796 = vst.msk [vmem:[%s386 + $0x30] sm:$0xff] %vm409, %v1780
        %1797 = vst.msk [vmem:[%s386 + $0x38] sm:$0xff] %vm409, %v1781
        %1806 = vrot.lane.b32.xlu0 %v1774, 16
        %v1807 = vpop.permute.xlu0 %1806
        %1808 = vrot.lane.b32.xlu0 %v1775, 16
        %v1809 = vpop.permute.xlu0 %1808
        %1810 = vrot.lane.b32.xlu0 %v1776, 16
        %v1811 = vpop.permute.xlu0 %1810
        %1812 = vrot.lane.b32.xlu0 %v1777, 16
        %v1813 = vpop.permute.xlu0 %1812
        %1814 = vrot.lane.b32.xlu0 %v1778, 16
        %v1815 = vpop.permute.xlu0 %1814
        %1816 = vrot.lane.b32.xlu0 %v1779, 16
        %v1817 = vpop.permute.xlu0 %1816
        %1818 = vrot.lane.b32.xlu0 %v1780, 16
        %v1819 = vpop.permute.xlu0 %1818
        %1820 = vrot.lane.b32.xlu0 %v1781, 16
        %v1821 = vpop.permute.xlu0 %1820
        %s1830 = scalar_lea.vmem %s386, 64
        %1831 = vst.msk [vmem:[%s1830] sm:$0xff] %vm409, %v1807
        %1832 = vst.msk [vmem:[%s1830 + $0x8] sm:$0xff] %vm409, %v1809
        %1833 = vst.msk [vmem:[%s1830 + $0x10] sm:$0xff] %vm409, %v1811
        %1834 = vst.msk [vmem:[%s1830 + $0x18] sm:$0xff] %vm409, %v1813
        %1835 = vst.msk [vmem:[%s1830 + $0x20] sm:$0xff] %vm409, %v1815
        %1836 = vst.msk [vmem:[%s1830 + $0x28] sm:$0xff] %vm409, %v1817
        %1837 = vst.msk [vmem:[%s1830 + $0x30] sm:$0xff] %vm409, %v1819
        %1838 = vst.msk [vmem:[%s1830 + $0x38] sm:$0xff] %vm409, %v1821
        %s1839 = sand.u32 %s160, 1
        %s1840 = sand.u32 %s160, 1
        %s1841 = smul.addr %s1840, 64
        %s1842 = scalar_lea.vmem [#allocation2], %s1841
        %s1843 = smul.u32 2, %s22
        %p1844 = scmp.lt.s32.totalorder %s21, 1
        %s1845 = scalar_select %p1844, %s21, 1
        %p1846 = scmp.lt.s32.totalorder %s1843, 3
        %s1847 = scalar_select %p1846, %s1843, 3
        %s1848 = smul.addr %s1847, 8
        %s1849 = smul.addr %s1845, 32
        %s1850 = sadd.s32 %s1848, %s1849
        %s1851 = smul.addr %s1850, 8
        %s1852 = scalar_lea.vmem %s5, %s1851
        // Predicated region
        $region37: #{dncnn_forward.5} parent=35 // pred_check
          %p1853 = pneg %p170
        $region38: #{dncnn_forward.5} parent=35 // pred_check_branch
          %1855 = sbr.rel (%p1853) target = $region40
        $region39: #{dncnn_forward.5} parent=35 // pred_region
          %s1856 = smul.addr %s21, 16
          %s1857 = sadd.s32 %s22, %s1856
          %s1858 = smul.addr %s1857, 8
          %s1859 = scalar_lea.vmem %s4, %s1858
          // Predicated region
          $region41: #{dncnn_forward.5} parent=39 // pred_check
            _
          $region42: #{dncnn_forward.5} parent=39 // pred_check_branch
            %1861 = sbr.rel (0) target = $region44
          $region43: #{dncnn_forward.5} parent=39 // pred_region
            // Predicated region
            $region45: #{dncnn_forward.5} parent=43 // pred_check
              _
            $region46: #{dncnn_forward.5} parent=43 // pred_check_branch
              %1863 = sbr.rel (0) target = $region48
            $region47: #{dncnn_forward.5} parent=43 // pred_region
              // Predicated region
              $region60: #{dncnn_forward.5} parent=47 // pred_check
                _
              $region61: #{dncnn_forward.5} parent=47 // pred_check_branch
                %1892 = sbr.rel (0) target = $region63
              $region62: #{dncnn_forward.5} parent=47 // pred_region
                loop: start=0, step=1, limit=1
                $region64: #{dncnn_forward.5} parent=62 // loop_pre_header
                  _
                $region65: #{dncnn_forward.5} parent=62 // loop_header
                  %s1894 = sphi 0, %s1898
                  %p1895 = scmp.ge.s32.totalorder %s1894, 1
                  %s1899 = sphi %s1842, %s1842
                  %s1900 = sphi %s1859, %s1859
                $region66: #{dncnn_forward.5} parent=62 // loop_header_branch
                  %1897 = sbr.rel (%p1895) target = $region70
                $region67: #{dncnn_forward.5} parent=62 // loop_body
                  %v1901 = vld [vmem:[%s1899] sm:$0xff]
                  %1902 = vst [vmem:[%s1900] sm:$0xff] %v1901
                  %v1903 = vld [vmem:[%s1899 + $0x8] sm:$0xff]
                  %1904 = vst [vmem:[%s1900 + $0x10] sm:$0xff] %v1903
                  %v1905 = vld [vmem:[%s1899 + $0x10] sm:$0xff]
                  %1906 = vst [vmem:[%s1900 + $0x20] sm:$0xff] %v1905
                  %v1907 = vld [vmem:[%s1899 + $0x18] sm:$0xff]
                  %1908 = vst [vmem:[%s1900 + $0x30] sm:$0xff] %v1907
                  %v1909 = vld [vmem:[%s1899 + $0x20] sm:$0xff]
                  %1910 = vst [vmem:[%s1900 + $0x40] sm:$0xff] %v1909
                  %v1911 = vld [vmem:[%s1899 + $0x28] sm:$0xff]
                  %1912 = vst [vmem:[%s1900 + $0x50] sm:$0xff] %v1911
                  %v1913 = vld [vmem:[%s1899 + $0x30] sm:$0xff]
                  %1914 = vst [vmem:[%s1900 + $0x60] sm:$0xff] %v1913
                  %v1915 = vld [vmem:[%s1899 + $0x38] sm:$0xff]
                  %1916 = vst [vmem:[%s1900 + $0x70] sm:$0xff] %v1915
                $region68: #{dncnn_forward.5} parent=62 // loop_footer
                  %s1898 = sadd.s32 1, %s1894
                $region69: #{dncnn_forward.5} parent=62 // loop_footer_branch
                  %1893 = sbr.rel target = $region65
                $region70: #{dncnn_forward.5} parent=62 // loop_exit
                  _
              $region63: #{dncnn_forward.5} parent=47 // pred_fallthru
                _
              // Predicated region
              $region71: #{dncnn_forward.5} parent=47 // pred_check
                _
              $region72: #{dncnn_forward.5} parent=47 // pred_check_branch
                %1918 = sbr.rel target = $region74
              $region73: #{dncnn_forward.5} parent=47 // pred_region
                _
              $region74: #{dncnn_forward.5} parent=47 // pred_fallthru
                _
            $region48: #{dncnn_forward.5} parent=43 // pred_fallthru
              _
            // Predicated region
            $region49: #{dncnn_forward.5} parent=43 // pred_check
              _
            $region50: #{dncnn_forward.5} parent=43 // pred_check_branch
              %1865 = sbr.rel target = $region52
            $region51: #{dncnn_forward.5} parent=43 // pred_region
              loop: start=0, step=1, limit=1
              $region53: #{dncnn_forward.5} parent=51 // loop_pre_header
                _
              $region54: #{dncnn_forward.5} parent=51 // loop_header
                %s1868 = sphi 0, %s1872
                %p1869 = scmp.ge.s32.totalorder %s1868, 1
                %s1873 = sphi %s1842, %s1842
                %s1874 = sphi %s1859, %s1859
              $region55: #{dncnn_forward.5} parent=51 // loop_header_branch
                %1871 = sbr.rel (%p1869) target = $region59
              $region56: #{dncnn_forward.5} parent=51 // loop_body
                %v1875 = vld [vmem:[%s1873] sm:$0xff]
                %1876 = vst [vmem:[%s1874] sm:$0xff] %v1875
                %v1877 = vld [vmem:[%s1873 + $0x8] sm:$0xff]
                %1878 = vst [vmem:[%s1874 + $0x10] sm:$0xff] %v1877
                %v1879 = vld [vmem:[%s1873 + $0x10] sm:$0xff]
                %1880 = vst [vmem:[%s1874 + $0x20] sm:$0xff] %v1879
                %v1881 = vld [vmem:[%s1873 + $0x18] sm:$0xff]
                %1882 = vst [vmem:[%s1874 + $0x30] sm:$0xff] %v1881
                %v1883 = vld [vmem:[%s1873 + $0x20] sm:$0xff]
                %1884 = vst [vmem:[%s1874 + $0x40] sm:$0xff] %v1883
                %v1885 = vld [vmem:[%s1873 + $0x28] sm:$0xff]
                %1886 = vst [vmem:[%s1874 + $0x50] sm:$0xff] %v1885
                %v1887 = vld [vmem:[%s1873 + $0x30] sm:$0xff]
                %1888 = vst [vmem:[%s1874 + $0x60] sm:$0xff] %v1887
                %v1889 = vld [vmem:[%s1873 + $0x38] sm:$0xff]
                %1890 = vst [vmem:[%s1874 + $0x70] sm:$0xff] %v1889
              $region57: #{dncnn_forward.5} parent=51 // loop_footer
                %s1872 = sadd.s32 1, %s1868
              $region58: #{dncnn_forward.5} parent=51 // loop_footer_branch
                %1867 = sbr.rel target = $region54
              $region59: #{dncnn_forward.5} parent=51 // loop_exit
                _
            $region52: #{dncnn_forward.5} parent=43 // pred_fallthru
              _
          $region44: #{dncnn_forward.5} parent=39 // pred_fallthru
            _
          %1919 = vnop
        $region40: #{dncnn_forward.5} parent=35 // pred_fallthru
          _
        // Predicated region
        $region75: #{dncnn_forward.5} parent=35 // pred_check
          %p1920 = pneg %p198
        $region76: #{dncnn_forward.5} parent=35 // pred_check_branch
          %1922 = sbr.rel (%p1920) target = $region78
        $region77: #{dncnn_forward.5} parent=35 // pred_region
          %s1923 = smul.u32 2, %s22
        $region78: #{dncnn_forward.5} parent=35 // pred_fallthru
          _
      $region36: #{dncnn_forward.5} parent=5 // pred_fallthru
        _
      %p1924 = scmp.le.s32.totalorder 2, %s12
      // Predicated region
      $region79: #{dncnn_forward.5} parent=5 // pred_check
        %p1925 = pneg %p1924
      $region80: #{dncnn_forward.5} parent=5 // pred_check_branch
        %1927 = sbr.rel (%p1925) target = $region82
      $region81: #{dncnn_forward.5} parent=5 // pred_region
        %s1928 = ssub.s32 %s12, 2
        // Predicated region
        $region83: #{dncnn_forward.5} parent=81 // pred_check
          %p1929 = pneg %p176
        $region84: #{dncnn_forward.5} parent=81 // pred_check_branch
          %1931 = sbr.rel (%p1929) target = $region86
        $region85: #{dncnn_forward.5} parent=81 // pred_region
          %s1932 = sand.u32 %s161, 1
          %s1933 = sand.u32 %s161, 1
          %s1934 = smul.addr %s1933, 64
          %s1935 = scalar_lea.vmem [#allocation2], %s1934
        $region86: #{dncnn_forward.5} parent=81 // pred_fallthru
          _
        // Predicated region
        $region87: #{dncnn_forward.5} parent=81 // pred_check
          %p1936 = pneg %p204
        $region88: #{dncnn_forward.5} parent=81 // pred_check_branch
          %1938 = sbr.rel (%p1936) target = $region90
        $region89: #{dncnn_forward.5} parent=81 // pred_region
          %s1939 = smul.u32 2, %s24
          %p1940 = scmp.lt.s32.totalorder %s23, 1
          %s1941 = scalar_select %p1940, %s23, 1
          %p1942 = scmp.lt.s32.totalorder %s1939, 3
          %s1943 = scalar_select %p1942, %s1939, 3
          %s1944 = smul.addr %s1943, 8
          %s1945 = smul.addr %s1941, 32
          %s1946 = sadd.s32 %s1944, %s1945
          %s1947 = smul.addr %s1946, 8
          %s1948 = scalar_lea.vmem %s5, %s1947
        $region90: #{dncnn_forward.5} parent=81 // pred_fallthru
          _
      $region82: #{dncnn_forward.5} parent=5 // pred_fallthru
        _
    $region6: #{dncnn_forward.5} parent=1 // loop_footer
      %s16 = sadd.s32 1, %s12
    $region7: #{dncnn_forward.5} parent=1 // loop_footer_branch
      %11 = sbr.rel target = $region3
    $region8: #{dncnn_forward.5} parent=1 // loop_exit
      _

// kernel: dncnn_forward.9
$region0: #{dncnn_forward.9}
  #allocation0 [shape = 'u32[]', space=smem, size = 0x4, offset = 0x4, fixed_abs, tag = 'smem constant byte address 0x4 - core index']
  #allocation1 [shape = 'u32[144,128]{1,0:T(1,128)}', space=vmem, size = 0x12000, scoped, tag = 'internal scratch']
  %s0 = inlined_call_operand.vmem [shape: f32[64,1], index: 0, kind: input, shape index: {}]
  %s1 = inlined_call_operand.vmem [shape: f32[64,1], index: 1, kind: input, shape index: {}]
  %s2 = inlined_call_operand.vmem [shape: f32[2,64,256], index: 2, kind: input, shape index: {}]
  %s3 = inlined_call_operand.vmem [shape: f32[2,4,64,16], index: 3, kind: input, shape index: {}, may-alias: {3,4}]
  %s4 = inlined_call_operand.vmem [shape: f32[2,4,64,16], index: 4, kind: input, shape index: {}, may-alias: {3,4}]
  %s5 = inlined_call_operand.vmem [shape: f32[9,4,64], index: 5, kind: input, shape index: {}]
  %s6 = inlined_call_operand.vmem [shape: f32[2,4,256], index: 6, kind: output, shape index: {}]
  %s7 = sld [smem:[#allocation0]]
  $region95: #{dncnn_forward.9} parent=0
    _
  %s9 = ssub.s32 1, %s7
  %s10 = scalar_select 0, %s9, %s7
  $region1: #{dncnn_forward.9} parent=0
    #allocation2 [shape = 'u8[65536]{0}', space=vmem, size = 0x10000, scoped, tag = 'input window, operand 2']
    loop: start=0, step=1, limit=6
    $region2: #{dncnn_forward.9} parent=1 // loop_pre_header
      _
    $region3: #{dncnn_forward.9} parent=1 // loop_header
      %s12 = sphi 0, %s16
      %p13 = scmp.ge.s32.totalorder %s12, 6
      %s19 = sphi 0, %s31
      %s20 = sphi 0, %s27
      %s21 = sphi 0, %s19
      %s22 = sphi 0, %s20
      %s23 = sphi 0, %s21
      %s24 = sphi 0, %s22
      %s32 = sphi 0, %s32
      %s34 = sphi 0, %s32
      %s35 = sphi 0, %s34
      %s49 = sphi 0, %s35
      %s53 = sphi 0, %s53
      %s55 = sphi 0, %s53
      %s56 = sphi 0, %s55
      %s70 = sphi 0, %s56
      %s78 = sphi 0, %s80
      %s81 = sphi 0, %s78
      %s82 = sphi 0, %s81
      %s98 = sphi 0, %s82
      %s114 = sphi 0, %s116
      %s117 = sphi 0, %s114
      %s118 = sphi 0, %s117
      %s134 = sphi 0, %s118
      %s150 = sphi 0, %s152
      %s153 = sphi 0, %s150
      %s154 = sphi 0, %s153
      %s170 = sphi 0, %s154
      %s174 = sphi 0, %s174
      %s176 = sphi 0, %s174
      %s177 = sphi 0, %s176
      %s191 = sphi 0, %s177
      %s199 = sphi 0, %s201
      %s202 = sphi 0, %s199
      %s203 = sphi 0, %s202
      %s219 = sphi 0, %s203
    $region4: #{dncnn_forward.9} parent=1 // loop_header_branch
      %15 = sbr.rel (%p13) target = $region8
    $region5: #{dncnn_forward.9} parent=1 // loop_body
      %s17 = ssub.s32 %s12, 1
      %s18 = ssub.s32 %s12, 2
      %s25 = sadd.s32 1, %s20
      %p26 = scmp.ge.s32.totalorder %s25, 2
      %s27 = scalar_select %p26, 0, %s25
      %s28 = sadd.s32 1, %s19
      %s29 = scalar_select %p26, %s28, %s19
      %p30 = scmp.ge.s32.totalorder %s29, 2
      %s31 = scalar_select %p30, 0, %s29
      %s33 = sadd.s32 %s32, 1
      %p36 = scmp.eq.s32.totalorder %s12, 3
      %p37 = scmp.ne.s32.totalorder %s32, %s34
      %p38 = scmp.eq.s32.totalorder %s12, 0
      %p39 = por %p37, %p38
      %p40 = scmp.ne.s32.totalorder %s32, %s34
      %p41 = scmp.eq.s32.totalorder %s17, 3
      %p42 = por %p40, %p41
      %p43 = scmp.ne.s32.totalorder %s34, %s35
      %p44 = scmp.eq.s32.totalorder %s17, 0
      %p45 = por %p43, %p44
      %p46 = scmp.ne.s32.totalorder %s34, %s35
      %p47 = scmp.eq.s32.totalorder %s18, 3
      %p48 = por %p46, %p47
      %p50 = scmp.ne.s32.totalorder %s35, %s49
      %p51 = scmp.eq.s32.totalorder %s18, 0
      %p52 = por %p50, %p51
      %s54 = sadd.s32 %s53, 1
      %p57 = scmp.eq.s32.totalorder %s12, 3
      %p58 = scmp.ne.s32.totalorder %s53, %s55
      %p59 = scmp.eq.s32.totalorder %s12, 0
      %p60 = por %p58, %p59
      %p61 = scmp.ne.s32.totalorder %s53, %s55
      %p62 = scmp.eq.s32.totalorder %s17, 3
      %p63 = por %p61, %p62
      %p64 = scmp.ne.s32.totalorder %s55, %s56
      %p65 = scmp.eq.s32.totalorder %s17, 0
      %p66 = por %p64, %p65
      %p67 = scmp.ne.s32.totalorder %s55, %s56
      %p68 = scmp.eq.s32.totalorder %s18, 3
      %p69 = por %p67, %p68
      %p71 = scmp.ne.s32.totalorder %s56, %s70
      %p72 = scmp.eq.s32.totalorder %s18, 0
      %p73 = por %p71, %p72
      %s74 = ssub.s32 %s19, %s31
      %s75 = ssub.s32 %s20, %s27
      %s76 = sor.u32 %s74, %s75
      %p77 = scmp.eq.s32.totalorder %s76, 0
      %s79 = sadd.s32 %s78, 1
      %s80 = scalar_select %p77, %s78, %s79
      %p83 = pneg %p77
      %p84 = scmp.eq.s32.totalorder %s12, 3
      %p85 = por %p83, %p84
      %p86 = scmp.ne.s32.totalorder %s78, %s81
      %p87 = scmp.eq.s32.totalorder %s12, 0
      %p88 = por %p86, %p87
      %p89 = scmp.ne.s32.totalorder %s78, %s81
      %p90 = scmp.eq.s32.totalorder %s17, 3
      %p91 = por %p89, %p90
      %p92 = scmp.ne.s32.totalorder %s81, %s82
      %p93 = scmp.eq.s32.totalorder %s17, 0
      %p94 = por %p92, %p93
      %p95 = scmp.ne.s32.totalorder %s81, %s82
      %p96 = scmp.eq.s32.totalorder %s18, 3
      %p97 = por %p95, %p96
      %p99 = scmp.ne.s32.totalorder %s82, %s98
      %p100 = scmp.eq.s32.totalorder %s18, 0
      %p101 = por %p99, %p100
      %s102 = smul.u32 %s20, 2
      %s103 = ssub.s32 %s102, 1
      %p104 = scmp.gt.s32.totalorder %s103, 0
      %s105 = scalar_select %p104, %s103, 0
      %s106 = smul.u32 %s27, 2
      %s107 = ssub.s32 %s106, 1
      %p108 = scmp.gt.s32.totalorder %s107, 0
      %s109 = scalar_select %p108, %s107, 0
      %s110 = ssub.s32 %s19, %s31
      %s111 = ssub.s32 %s105, %s109
      %s112 = sor.u32 %s110, %s111
      %p113 = scmp.eq.s32.totalorder %s112, 0
      %s115 = sadd.s32 %s114, 1
      %s116 = scalar_select %p113, %s114, %s115
      %p119 = pneg %p113
      %p120 = scmp.eq.s32.totalorder %s12, 3
      %p121 = por %p119, %p120
      %p122 = scmp.ne.s32.totalorder %s114, %s117
      %p123 = scmp.eq.s32.totalorder %s12, 0
      %p124 = por %p122, %p123
      %p125 = scmp.ne.s32.totalorder %s114, %s117
      %p126 = scmp.eq.s32.totalorder %s17, 3
      %p127 = por %p125, %p126
      %p128 = scmp.ne.s32.totalorder %s117, %s118
      %p129 = scmp.eq.s32.totalorder %s17, 0
      %p130 = por %p128, %p129
      %p131 = scmp.ne.s32.totalorder %s117, %s118
      %p132 = scmp.eq.s32.totalorder %s18, 3
      %p133 = por %p131, %p132
      %p135 = scmp.ne.s32.totalorder %s118, %s134
      %p136 = scmp.eq.s32.totalorder %s18, 0
      %p137 = por %p135, %p136
      %s138 = smul.u32 %s20, 2
      %s139 = sadd.s32 %s138, 2
      %p140 = scmp.lt.s32.totalorder %s139, 3
      %s141 = scalar_select %p140, %s139, 3
      %s142 = smul.u32 %s27, 2
      %s143 = sadd.s32 %s142, 2
      %p144 = scmp.lt.s32.totalorder %s143, 3
      %s145 = scalar_select %p144, %s143, 3
      %s146 = ssub.s32 %s19, %s31
      %s147 = ssub.s32 %s141, %s145
      %s148 = sor.u32 %s146, %s147
      %p149 = scmp.eq.s32.totalorder %s148, 0
      %s151 = sadd.s32 %s150, 1
      %s152 = scalar_select %p149, %s150, %s151
      %p155 = pneg %p149
      %p156 = scmp.eq.s32.totalorder %s12, 3
      %p157 = por %p155, %p156
      %p158 = scmp.ne.s32.totalorder %s150, %s153
      %p159 = scmp.eq.s32.totalorder %s12, 0
      %p160 = por %p158, %p159
      %p161 = scmp.ne.s32.totalorder %s150, %s153
      %p162 = scmp.eq.s32.totalorder %s17, 3
      %p163 = por %p161, %p162
      %p164 = scmp.ne.s32.totalorder %s153, %s154
      %p165 = scmp.eq.s32.totalorder %s17, 0
      %p166 = por %p164, %p165
      %p167 = scmp.ne.s32.totalorder %s153, %s154
      %p168 = scmp.eq.s32.totalorder %s18, 3
      %p169 = por %p167, %p168
      %p171 = scmp.ne.s32.totalorder %s154, %s170
      %p172 = scmp.eq.s32.totalorder %s18, 0
      %p173 = por %p171, %p172
      %s175 = sadd.s32 %s174, 1
      %p178 = scmp.eq.s32.totalorder %s12, 3
      %p179 = scmp.ne.s32.totalorder %s174, %s176
      %p180 = scmp.eq.s32.totalorder %s12, 0
      %p181 = por %p179, %p180
      %p182 = scmp.ne.s32.totalorder %s174, %s176
      %p183 = scmp.eq.s32.totalorder %s17, 3
      %p184 = por %p182, %p183
      %p185 = scmp.ne.s32.totalorder %s176, %s177
      %p186 = scmp.eq.s32.totalorder %s17, 0
      %p187 = por %p185, %p186
      %p188 = scmp.ne.s32.totalorder %s176, %s177
      %p189 = scmp.eq.s32.totalorder %s18, 3
      %p190 = por %p188, %p189
      %p192 = scmp.ne.s32.totalorder %s177, %s191
      %p193 = scmp.eq.s32.totalorder %s18, 0
      %p194 = por %p192, %p193
      %s195 = ssub.s32 %s19, %s31
      %s196 = ssub.s32 %s20, %s27
      %s197 = sor.u32 %s195, %s196
      %p198 = scmp.eq.s32.totalorder %s197, 0
      %s200 = sadd.s32 %s199, 1
      %s201 = scalar_select %p198, %s199, %s200
      %p204 = pneg %p198
      %p205 = scmp.eq.s32.totalorder %s12, 3
      %p206 = por %p204, %p205
      %p207 = scmp.ne.s32.totalorder %s199, %s202
      %p208 = scmp.eq.s32.totalorder %s12, 0
      %p209 = por %p207, %p208
      %p210 = scmp.ne.s32.totalorder %s199, %s202
      %p211 = scmp.eq.s32.totalorder %s17, 3
      %p212 = por %p210, %p211
      %p213 = scmp.ne.s32.totalorder %s202, %s203
      %p214 = scmp.eq.s32.totalorder %s17, 0
      %p215 = por %p213, %p214
      %p216 = scmp.ne.s32.totalorder %s202, %s203
      %p217 = scmp.eq.s32.totalorder %s18, 3
      %p218 = por %p216, %p217
      %p220 = scmp.ne.s32.totalorder %s203, %s219
      %p221 = scmp.eq.s32.totalorder %s18, 0
      %p222 = por %p220, %p221
      %p223 = scmp.le.s32.totalorder 1, %s12
      %p224 = scmp.lt.s32.totalorder %s12, 5
      %p225 = pnand %p223, %p224
      %p226 = pneg %p225
      // Predicated region
      $region9: #{dncnn_forward.9} parent=5 // pred_check
        _
      $region10: #{dncnn_forward.9} parent=5 // pred_check_branch
        %228 = sbr.rel (%p225) target = $region12
      $region11: #{dncnn_forward.9} parent=5 // pred_region
        %s229 = ssub.s32 %s12, 1
        // Predicated region
        $region13: #{dncnn_forward.9} parent=11 // pred_check
          %p230 = pneg %p45
        $region14: #{dncnn_forward.9} parent=11 // pred_check_branch
          %232 = sbr.rel (%p230) target = $region16
        $region15: #{dncnn_forward.9} parent=11 // pred_region
          _
        $region16: #{dncnn_forward.9} parent=11 // pred_fallthru
          _
        // Predicated region
        $region17: #{dncnn_forward.9} parent=11 // pred_check
          %p233 = pneg %p66
        $region18: #{dncnn_forward.9} parent=11 // pred_check_branch
          %235 = sbr.rel (%p233) target = $region20
        $region19: #{dncnn_forward.9} parent=11 // pred_region
          _
        $region20: #{dncnn_forward.9} parent=11 // pred_fallthru
          _
        // Predicated region
        $region21: #{dncnn_forward.9} parent=11 // pred_check
          %p236 = pneg %p187
        $region22: #{dncnn_forward.9} parent=11 // pred_check_branch
          %238 = sbr.rel (%p236) target = $region24
        $region23: #{dncnn_forward.9} parent=11 // pred_region
          _
        $region24: #{dncnn_forward.9} parent=11 // pred_fallthru
          _
      $region12: #{dncnn_forward.9} parent=5 // pred_fallthru
        _
      %p239 = scmp.lt.s32.totalorder %s12, 4
      // Predicated region
      $region25: #{dncnn_forward.9} parent=5 // pred_check
        %p240 = pneg %p239
      $region26: #{dncnn_forward.9} parent=5 // pred_check_branch
        %242 = sbr.rel (%p240) target = $region28
      $region27: #{dncnn_forward.9} parent=5 // pred_region
        // Predicated region
        $region29: #{dncnn_forward.9} parent=27 // pred_check
          %p243 = pneg %p88
        $region30: #{dncnn_forward.9} parent=27 // pred_check_branch
          %245 = sbr.rel (%p243) target = $region32
        $region31: #{dncnn_forward.9} parent=27 // pred_region
          %s246 = sand.u32 %s78, 1
          %s247 = sand.u32 %s78, 1
          %s248 = smul.addr %s247, 64
          %s249 = scalar_lea.vmem [#allocation2], %s248
          %s250 = smul.addr %s19, 16
          %s251 = sadd.s32 %s20, %s250
          %s252 = smul.addr %s251, 8
          %s253 = scalar_lea.vmem %s2, %s252
          // Predicated region
          $region33: #{dncnn_forward.9} parent=31 // pred_check
            _
          $region34: #{dncnn_forward.9} parent=31 // pred_check_branch
            %255 = sbr.rel (0) target = $region36
          $region35: #{dncnn_forward.9} parent=31 // pred_region
            // Predicated region
            $region37: #{dncnn_forward.9} parent=35 // pred_check
              _
            $region38: #{dncnn_forward.9} parent=35 // pred_check_branch
              %257 = sbr.rel (0) target = $region40
            $region39: #{dncnn_forward.9} parent=35 // pred_region
              // Predicated region
              $region52: #{dncnn_forward.9} parent=39 // pred_check
                _
              $region53: #{dncnn_forward.9} parent=39 // pred_check_branch
                %286 = sbr.rel (0) target = $region55
              $region54: #{dncnn_forward.9} parent=39 // pred_region
                loop: start=0, step=1, limit=1
                $region56: #{dncnn_forward.9} parent=54 // loop_pre_header
                  _
                $region57: #{dncnn_forward.9} parent=54 // loop_header
                  %s288 = sphi 0, %s292
                  %p289 = scmp.ge.s32.totalorder %s288, 1
                  %s293 = sphi %s253, %s253
                  %s294 = sphi %s249, %s249
                $region58: #{dncnn_forward.9} parent=54 // loop_header_branch
                  %291 = sbr.rel (%p289) target = $region62
                $region59: #{dncnn_forward.9} parent=54 // loop_body
                  %v295 = vld [vmem:[%s293] sm:$0xff]
                  %296 = vst [vmem:[%s294] sm:$0xff] %v295
                  %v297 = vld [vmem:[%s293 + $0x10] sm:$0xff]
                  %298 = vst [vmem:[%s294 + $0x8] sm:$0xff] %v297
                  %v299 = vld [vmem:[%s293 + $0x20] sm:$0xff]
                  %300 = vst [vmem:[%s294 + $0x10] sm:$0xff] %v299
                  %v301 = vld [vmem:[%s293 + $0x30] sm:$0xff]
                  %302 = vst [vmem:[%s294 + $0x18] sm:$0xff] %v301
                  %v303 = vld [vmem:[%s293 + $0x40] sm:$0xff]
                  %304 = vst [vmem:[%s294 + $0x20] sm:$0xff] %v303
                  %v305 = vld [vmem:[%s293 + $0x50] sm:$0xff]
                  %306 = vst [vmem:[%s294 + $0x28] sm:$0xff] %v305
                  %v307 = vld [vmem:[%s293 + $0x60] sm:$0xff]
                  %308 = vst [vmem:[%s294 + $0x30] sm:$0xff] %v307
                  %v309 = vld [vmem:[%s293 + $0x70] sm:$0xff]
                  %310 = vst [vmem:[%s294 + $0x38] sm:$0xff] %v309
                $region60: #{dncnn_forward.9} parent=54 // loop_footer
                  %s292 = sadd.s32 1, %s288
                $region61: #{dncnn_forward.9} parent=54 // loop_footer_branch
                  %287 = sbr.rel target = $region57
                $region62: #{dncnn_forward.9} parent=54 // loop_exit
                  _
              $region55: #{dncnn_forward.9} parent=39 // pred_fallthru
                _
              // Predicated region
              $region63: #{dncnn_forward.9} parent=39 // pred_check
                _
              $region64: #{dncnn_forward.9} parent=39 // pred_check_branch
                %312 = sbr.rel target = $region66
              $region65: #{dncnn_forward.9} parent=39 // pred_region
                _
              $region66: #{dncnn_forward.9} parent=39 // pred_fallthru
                _
            $region40: #{dncnn_forward.9} parent=35 // pred_fallthru
              _
            // Predicated region
            $region41: #{dncnn_forward.9} parent=35 // pred_check
              _
            $region42: #{dncnn_forward.9} parent=35 // pred_check_branch
              %259 = sbr.rel target = $region44
            $region43: #{dncnn_forward.9} parent=35 // pred_region
              loop: start=0, step=1, limit=1
              $region45: #{dncnn_forward.9} parent=43 // loop_pre_header
                _
              $region46: #{dncnn_forward.9} parent=43 // loop_header
                %s262 = sphi 0, %s266
                %p263 = scmp.ge.s32.totalorder %s262, 1
                %s267 = sphi %s253, %s253
                %s268 = sphi %s249, %s249
              $region47: #{dncnn_forward.9} parent=43 // loop_header_branch
                %265 = sbr.rel (%p263) target = $region51
              $region48: #{dncnn_forward.9} parent=43 // loop_body
                %v269 = vld [vmem:[%s267] sm:$0xff]
                %270 = vst [vmem:[%s268] sm:$0xff] %v269
                %v271 = vld [vmem:[%s267 + $0x10] sm:$0xff]
                %272 = vst [vmem:[%s268 + $0x8] sm:$0xff] %v271
                %v273 = vld [vmem:[%s267 + $0x20] sm:$0xff]
                %274 = vst [vmem:[%s268 + $0x10] sm:$0xff] %v273
                %v275 = vld [vmem:[%s267 + $0x30] sm:$0xff]
                %276 = vst [vmem:[%s268 + $0x18] sm:$0xff] %v275
                %v277 = vld [vmem:[%s267 + $0x40] sm:$0xff]
                %278 = vst [vmem:[%s268 + $0x20] sm:$0xff] %v277
                %v279 = vld [vmem:[%s267 + $0x50] sm:$0xff]
                %280 = vst [vmem:[%s268 + $0x28] sm:$0xff] %v279
                %v281 = vld [vmem:[%s267 + $0x60] sm:$0xff]
                %282 = vst [vmem:[%s268 + $0x30] sm:$0xff] %v281
                %v283 = vld [vmem:[%s267 + $0x70] sm:$0xff]
                %284 = vst [vmem:[%s268 + $0x38] sm:$0xff] %v283
              $region49: #{dncnn_forward.9} parent=43 // loop_footer
                %s266 = sadd.s32 1, %s262
              $region50: #{dncnn_forward.9} parent=43 // loop_footer_branch
                %261 = sbr.rel target = $region46
              $region51: #{dncnn_forward.9} parent=43 // loop_exit
                _
            $region44: #{dncnn_forward.9} parent=35 // pred_fallthru
              _
          $region36: #{dncnn_forward.9} parent=31 // pred_fallthru
            _
          %313 = vnop
        $region32: #{dncnn_forward.9} parent=27 // pred_fallthru
          _
        // Predicated region
        $region67: #{dncnn_forward.9} parent=27 // pred_check
          %p314 = pneg %p124
        $region68: #{dncnn_forward.9} parent=27 // pred_check_branch
          %316 = sbr.rel (%p314) target = $region70
        $region69: #{dncnn_forward.9} parent=27 // pred_region
          %s317 = smul.u32 %s20, 2
          %s318 = ssub.s32 %s317, 1
          %p319 = scmp.gt.s32.totalorder %s318, 0
          %s320 = scalar_select %p319, %s318, 0
          %p321 = scmp.lt.s32.totalorder %s19, 1
          %s322 = scalar_select %p321, %s19, 1
          %p323 = scmp.lt.s32.totalorder %s320, 3
          %s324 = scalar_select %p323, %s320, 3
          %s325 = smul.addr %s324, 8
          %s326 = smul.addr %s322, 32
          %s327 = sadd.s32 %s325, %s326
          %s328 = smul.addr %s327, 8
          %s329 = scalar_lea.vmem %s3, %s328
          %s330 = smul.u32 %s20, 2
          %s331 = ssub.s32 %s330, 1
          %p332 = scmp.gt.s32.totalorder %s331, 0
          %s333 = scalar_select %p332, %s331, 0
        $region70: #{dncnn_forward.9} parent=27 // pred_fallthru
          _
        // Predicated region
        $region71: #{dncnn_forward.9} parent=27 // pred_check
          %p334 = pneg %p160
        $region72: #{dncnn_forward.9} parent=27 // pred_check_branch
          %336 = sbr.rel (%p334) target = $region74
        $region73: #{dncnn_forward.9} parent=27 // pred_region
          %s337 = smul.u32 %s20, 2
          %s338 = sadd.s32 %s337, 2
          %p339 = scmp.lt.s32.totalorder %s338, 3
          %s340 = scalar_select %p339, %s338, 3
          %p341 = scmp.lt.s32.totalorder %s19, 1
          %s342 = scalar_select %p341, %s19, 1
          %p343 = scmp.lt.s32.totalorder %s340, 3
          %s344 = scalar_select %p343, %s340, 3
          %s345 = smul.addr %s344, 8
          %s346 = smul.addr %s342, 32
          %s347 = sadd.s32 %s345, %s346
          %s348 = smul.addr %s347, 8
          %s349 = scalar_lea.vmem %s4, %s348
          %s350 = smul.u32 %s20, 2
          %s351 = sadd.s32 %s350, 2
          %p352 = scmp.lt.s32.totalorder %s351, 3
          %s353 = scalar_select %p352, %s351, 3
        $region74: #{dncnn_forward.9} parent=27 // pred_fallthru
          _
      $region28: #{dncnn_forward.9} parent=5 // pred_fallthru
        _
      %p354 = scmp.le.s32.totalorder 1, %s12
      %p355 = scmp.lt.s32.totalorder %s12, 5
      %p356 = pnand %p354, %p355
      %p357 = pneg %p356
      // Predicated region
      $region75: #{dncnn_forward.9} parent=5 // pred_check
        _
      $region76: #{dncnn_forward.9} parent=5 // pred_check_branch
        %359 = sbr.rel (%p356) target = $region78
      $region77: #{dncnn_forward.9} parent=5 // pred_region
        %s360 = ssub.s32 %s12, 1
        %s361 = sand.u32 %s81, 1
        %s362 = sand.u32 %s81, 1
        %s363 = smul.addr %s362, 64
        %s364 = scalar_lea.vmem [#allocation2], %s363
        // Predicated region
        $region79: #{dncnn_forward.9} parent=77 // pred_check
          %p365 = pneg %p94
        $region80: #{dncnn_forward.9} parent=77 // pred_check_branch
          %367 = sbr.rel (%p365) target = $region82
        $region81: #{dncnn_forward.9} parent=77 // pred_region
          _
        $region82: #{dncnn_forward.9} parent=77 // pred_fallthru
          _
        %p368 = pneg %p45
        %p369 = pneg %p42
        %p370 = pneg %p66
        %p371 = pneg %p63
        %s372 = sand.u32 %s81, 1
        %s373 = sand.u32 %s81, 1
        %s374 = smul.addr %s373, 64
        %s375 = scalar_lea.vmem [#allocation2], %s374
        %p376 = pneg %p94
        %p377 = pneg %p91
        %s378 = smul.u32 %s22, 2
        %s379 = ssub.s32 %s378, 1
        %p380 = scmp.gt.s32.totalorder %s379, 0
        %s381 = scalar_select %p380, %s379, 0
        %p382 = scmp.lt.s32.totalorder %s21, 1
        %s383 = scalar_select %p382, %s21, 1
        %p384 = scmp.lt.s32.totalorder %s381, 3
        %s385 = scalar_select %p384, %s381, 3
        %s386 = smul.addr %s385, 8
        %s387 = smul.addr %s383, 32
        %s388 = sadd.s32 %s386, %s387
        %s389 = smul.addr %s388, 8
        %s390 = scalar_lea.vmem %s3, %s389
        %p391 = pneg %p130
        %p392 = pneg %p127
        %s393 = smul.u32 %s22, 2
        %s394 = sadd.s32 %s393, 2
        %p395 = scmp.lt.s32.totalorder %s394, 3
        %s396 = scalar_select %p395, %s394, 3
        %p397 = scmp.lt.s32.totalorder %s21, 1
        %s398 = scalar_select %p397, %s21, 1
        %p399 = scmp.lt.s32.totalorder %s396, 3
        %s400 = scalar_select %p399, %s396, 3
        %s401 = smul.addr %s400, 8
        %s402 = smul.addr %s398, 32
        %s403 = sadd.s32 %s401, %s402
        %s404 = smul.addr %s403, 8
        %s405 = scalar_lea.vmem %s4, %s404
        %p406 = pneg %p166
        %p407 = pneg %p163
        %p408 = pneg %p187
        %p409 = pneg %p184
        %p410 = pneg %p215
        %p411 = pneg %p212
        %p412 = scmp.lt.s32.totalorder %s21, 1
        %s413 = scalar_select %p412, %s21, 1
        %p414 = scmp.lt.s32.totalorder %s22, 1
        %s415 = scalar_select %p414, %s22, 1
        %s416 = smul.addr %s413, 2
        %s417 = sadd.s32 %s415, %s416
        %s418 = smul.addr %s417, 4
        %s419 = scalar_lea.vmem %s6, %s418
        %s420 = smul.u32 %s22, 2
        %s421 = ssub.s32 %s420, 1
        %p422 = scmp.gt.s32.totalorder %s421, 0
        %s423 = scalar_select %p422, %s421, 0
        %p424 = scmp.lt.s32.totalorder %s21, 1
        %s425 = scalar_select %p424, %s21, 1
        %p426 = scmp.lt.s32.totalorder %s423, 3
        %s427 = scalar_select %p426, %s423, 3
        %s428 = smul.addr %s427, 8
        %s429 = smul.addr %s425, 32
        %s430 = sadd.s32 %s428, %s429
        %s431 = smul.addr %s430, 8
        %s432 = scalar_lea.vmem %s3, %s431
        %s433 = smul.u32 %s22, 2
        %s434 = ssub.s32 %s433, 1
        %p435 = scmp.gt.s32.totalorder %s434, 0
        %s436 = scalar_select %p435, %s434, 0
        %s437 = smul.u32 %s22, 2
        %s438 = sadd.s32 %s437, 2
        %p439 = scmp.lt.s32.totalorder %s438, 3
        %s440 = scalar_select %p439, %s438, 3
        %p441 = scmp.lt.s32.totalorder %s21, 1
        %s442 = scalar_select %p441, %s21, 1
        %p443 = scmp.lt.s32.totalorder %s440, 3
        %s444 = scalar_select %p443, %s440, 3
        %s445 = smul.addr %s444, 8
        %s446 = smul.addr %s442, 32
        %s447 = sadd.s32 %s445, %s446
        %s448 = smul.addr %s447, 8
        %s449 = scalar_lea.vmem %s4, %s448
        %s450 = smul.u32 %s22, 2
        %s451 = sadd.s32 %s450, 2
        %p452 = scmp.lt.s32.totalorder %s451, 3
        %s453 = scalar_select %p452, %s451, 3
        %p454 = scmp.lt.s32.totalorder %s21, 1
        %s455 = scalar_select %p454, %s21, 1
        %p456 = scmp.lt.s32.totalorder %s22, 1
        %s457 = scalar_select %p456, %s22, 1
        %s458 = smul.addr %s455, 2
        %s459 = sadd.s32 %s457, %s458
        %s460 = smul.addr %s459, 4
        %s461 = scalar_lea.vmem %s6, %s460
        %v462 = vld [vmem:[%s0] sm:$0xff]
        %v463 = vld [vmem:[%s0 + $0x8] sm:$0xff]
        %v464 = vld [vmem:[%s0 + $0x10] sm:$0xff]
        %v465 = vld [vmem:[%s0 + $0x18] sm:$0xff]
        %v466 = vld [vmem:[%s0 + $0x20] sm:$0xff]
        %v467 = vld [vmem:[%s0 + $0x28] sm:$0xff]
        %v468 = vld [vmem:[%s0 + $0x30] sm:$0xff]
        %v469 = vld [vmem:[%s0 + $0x38] sm:$0xff]
        %v470 = vld [vmem:[%s1] sm:$0xff]
        %v471 = vld [vmem:[%s1 + $0x8] sm:$0xff]
        %v472 = vld [vmem:[%s1 + $0x10] sm:$0xff]
        %v473 = vld [vmem:[%s1 + $0x18] sm:$0xff]
        %v474 = vld [vmem:[%s1 + $0x20] sm:$0xff]
        %v475 = vld [vmem:[%s1 + $0x28] sm:$0xff]
        %v476 = vld [vmem:[%s1 + $0x30] sm:$0xff]
        %v477 = vld [vmem:[%s1 + $0x38] sm:$0xff]
        %v478 = vld [vmem:[%s364] sm:$0xff]
        %v479 = vld [vmem:[%s364 + $0x8] sm:$0xff]
        %v480 = vld [vmem:[%s364 + $0x10] sm:$0xff]
        %v481 = vld [vmem:[%s364 + $0x18] sm:$0xff]
        %v482 = vld [vmem:[%s364 + $0x20] sm:$0xff]
        %v483 = vld [vmem:[%s364 + $0x28] sm:$0xff]
        %v484 = vld [vmem:[%s364 + $0x30] sm:$0xff]
        %v485 = vld [vmem:[%s364 + $0x38] sm:$0xff]
        %487 = vset.pattern.permute.xlu0 0
        %488 = vperm.xlu0 %487, %v462
        %v489 = vpop.permute.xlu0 %488
        %492 = vset.pattern.permute.xlu0 0
        %493 = vperm.xlu0 %492, %v463
        %v494 = vpop.permute.xlu0 %493
        %497 = vset.pattern.permute.xlu0 0
        %498 = vperm.xlu0 %497, %v464
        %v499 = vpop.permute.xlu0 %498
        %502 = vset.pattern.permute.xlu0 0
        %503 = vperm.xlu0 %502, %v465
        %v504 = vpop.permute.xlu0 %503
        %507 = vset.pattern.permute.xlu0 0
        %508 = vperm.xlu0 %507, %v466
        %v509 = vpop.permute.xlu0 %508
        %512 = vset.pattern.permute.xlu0 0
        %513 = vperm.xlu0 %512, %v467
        %v514 = vpop.permute.xlu0 %513
        %517 = vset.pattern.permute.xlu0 0
        %518 = vperm.xlu0 %517, %v468
        %v519 = vpop.permute.xlu0 %518
        %522 = vset.pattern.permute.xlu0 0
        %523 = vperm.xlu0 %522, %v469
        %v524 = vpop.permute.xlu0 %523
        %v526 = vmul.f32 %v478, %v489
        %v527 = vmul.f32 %v479, %v494
        %v528 = vmul.f32 %v480, %v499
        %v529 = vmul.f32 %v481, %v504
        %v530 = vmul.f32 %v482, %v509
        %v531 = vmul.f32 %v483, %v514
        %v532 = vmul.f32 %v484, %v519
        %v533 = vmul.f32 %v485, %v524
        %535 = vset.pattern.permute.xlu0 0
        %536 = vperm.xlu0 %535, %v470
        %v537 = vpop.permute.xlu0 %536
        %540 = vset.pattern.permute.xlu0 0
        %541 = vperm.xlu0 %540, %v471
        %v542 = vpop.permute.xlu0 %541
        %545 = vset.pattern.permute.xlu0 0
        %546 = vperm.xlu0 %545, %v472
        %v547 = vpop.permute.xlu0 %546
        %550 = vset.pattern.permute.xlu0 0
        %551 = vperm.xlu0 %550, %v473
        %v552 = vpop.permute.xlu0 %551
        %555 = vset.pattern.permute.xlu0 0
        %556 = vperm.xlu0 %555, %v474
        %v557 = vpop.permute.xlu0 %556
        %560 = vset.pattern.permute.xlu0 0
        %561 = vperm.xlu0 %560, %v475
        %v562 = vpop.permute.xlu0 %561
        %565 = vset.pattern.permute.xlu0 0
        %566 = vperm.xlu0 %565, %v476
        %v567 = vpop.permute.xlu0 %566
        %570 = vset.pattern.permute.xlu0 0
        %571 = vperm.xlu0 %570, %v477
        %v572 = vpop.permute.xlu0 %571
        %v574 = vadd.f32 %v526, %v537
        %v575 = vadd.f32 %v527, %v542
        %v576 = vadd.f32 %v528, %v547
        %v577 = vadd.f32 %v529, %v552
        %v578 = vadd.f32 %v530, %v557
        %v579 = vadd.f32 %v531, %v562
        %v580 = vadd.f32 %v532, %v567
        %v581 = vadd.f32 %v533, %v572
        %v582 = vmax.f32 %v574, 0.0
        %v583 = vmax.f32 %v575, 0.0
        %v584 = vmax.f32 %v576, 0.0
        %v585 = vmax.f32 %v577, 0.0
        %v586 = vmax.f32 %v578, 0.0
        %v587 = vmax.f32 %v579, 0.0
        %v588 = vmax.f32 %v580, 0.0
        %v589 = vmax.f32 %v581, 0.0
        %v590 = vld [vmem:[%s432] sm:$0xff]
        %v591 = vld [vmem:[%s432 + $0x8] sm:$0xff]
        %v592 = vld [vmem:[%s432 + $0x10] sm:$0xff]
        %v593 = vld [vmem:[%s432 + $0x18] sm:$0xff]
        %v594 = vld [vmem:[%s432 + $0x20] sm:$0xff]
        %v595 = vld [vmem:[%s432 + $0x28] sm:$0xff]
        %v596 = vld [vmem:[%s432 + $0x30] sm:$0xff]
        %v597 = vld [vmem:[%s432 + $0x38] sm:$0xff]
        %v598 = vmul.f32 %v590, %v489
        %v599 = vmul.f32 %v591, %v494
        %v600 = vmul.f32 %v592, %v499
        %v601 = vmul.f32 %v593, %v504
        %v602 = vmul.f32 %v594, %v509
        %v603 = vmul.f32 %v595, %v514
        %v604 = vmul.f32 %v596, %v519
        %v605 = vmul.f32 %v597, %v524
        %v606 = vadd.f32 %v598, %v537
        %v607 = vadd.f32 %v599, %v542
        %v608 = vadd.f32 %v600, %v547
        %v609 = vadd.f32 %v601, %v552
        %v610 = vadd.f32 %v602, %v557
        %v611 = vadd.f32 %v603, %v562
        %v612 = vadd.f32 %v604, %v567
        %v613 = vadd.f32 %v605, %v572
        %v614 = vmax.f32 %v606, 0.0
        %v615 = vmax.f32 %v607, 0.0
        %v616 = vmax.f32 %v608, 0.0
        %v617 = vmax.f32 %v609, 0.0
        %v618 = vmax.f32 %v610, 0.0
        %v619 = vmax.f32 %v611, 0.0
        %v620 = vmax.f32 %v612, 0.0
        %v621 = vmax.f32 %v613, 0.0
        %p622 = scmp.gt.s32.totalorder %s22, 0
        %s623 = scalar_select %p622, 1, 0
        %s624 = scvt.s32.f32 %s623
        %v625 = vstv %s624
        %v626 = vmul.f32 %v614, %v625
        %v627 = vmul.f32 %v615, %v625
        %v628 = vmul.f32 %v616, %v625
        %v629 = vmul.f32 %v617, %v625
        %v630 = vmul.f32 %v618, %v625
        %v631 = vmul.f32 %v619, %v625
        %v632 = vmul.f32 %v620, %v625
        %v633 = vmul.f32 %v621, %v625
        %v634 = vld [vmem:[%s449] sm:$0xff]
        %v635 = vld [vmem:[%s449 + $0x8] sm:$0xff]
        %v636 = vld [vmem:[%s449 + $0x10] sm:$0xff]
        %v637 = vld [vmem:[%s449 + $0x18] sm:$0xff]
        %v638 = vld [vmem:[%s449 + $0x20] sm:$0xff]
        %v639 = vld [vmem:[%s449 + $0x28] sm:$0xff]
        %v640 = vld [vmem:[%s449 + $0x30] sm:$0xff]
        %v641 = vld [vmem:[%s449 + $0x38] sm:$0xff]
        %v642 = vmul.f32 %v634, %v489
        %v643 = vmul.f32 %v635, %v494
        %v644 = vmul.f32 %v636, %v499
        %v645 = vmul.f32 %v637, %v504
        %v646 = vmul.f32 %v638, %v509
        %v647 = vmul.f32 %v639, %v514
        %v648 = vmul.f32 %v640, %v519
        %v649 = vmul.f32 %v641, %v524
        %v650 = vadd.f32 %v642, %v537
        %v651 = vadd.f32 %v643, %v542
        %v652 = vadd.f32 %v644, %v547
        %v653 = vadd.f32 %v645, %v552
        %v654 = vadd.f32 %v646, %v557
        %v655 = vadd.f32 %v647, %v562
        %v656 = vadd.f32 %v648, %v567
        %v657 = vadd.f32 %v649, %v572
        %v658 = vmax.f32 %v650, 0.0
        %v659 = vmax.f32 %v651, 0.0
        %v660 = vmax.f32 %v652, 0.0
        %v661 = vmax.f32 %v653, 0.0
        %v662 = vmax.f32 %v654, 0.0
        %v663 = vmax.f32 %v655, 0.0
        %v664 = vmax.f32 %v656, 0.0
        %v665 = vmax.f32 %v657, 0.0
        %p666 = scmp.lt.s32.totalorder %s22, 1
        %s667 = scalar_select %p666, 1, 0
        %s668 = scvt.s32.f32 %s667
        %v669 = vstv %s668
        %v670 = vmul.f32 %v658, %v669
        %v671 = vmul.f32 %v659, %v669
        %v672 = vmul.f32 %v660, %v669
        %v673 = vmul.f32 %v661, %v669
        %v674 = vmul.f32 %v662, %v669
        %v675 = vmul.f32 %v663, %v669
        %v676 = vmul.f32 %v664, %v669
        %v677 = vmul.f32 %v665, %v669
        %686 = vrot.lane.b32.xlu0 %v582, 16
        %v687 = vpop.permute.xlu0 %686
        %688 = vrot.lane.b32.xlu0 %v583, 16
        %v689 = vpop.permute.xlu0 %688
        %690 = vrot.lane.b32.xlu0 %v584, 16
        %v691 = vpop.permute.xlu0 %690
        %692 = vrot.lane.b32.xlu0 %v585, 16
        %v693 = vpop.permute.xlu0 %692
        %694 = vrot.lane.b32.xlu0 %v586, 16
        %v695 = vpop.permute.xlu0 %694
        %696 = vrot.lane.b32.xlu0 %v587, 16
        %v697 = vpop.permute.xlu0 %696
        %698 = vrot.lane.b32.xlu0 %v588, 16
        %v699 = vpop.permute.xlu0 %698
        %700 = vrot.lane.b32.xlu0 %v589, 16
        %v701 = vpop.permute.xlu0 %700
        %718 = vrot.lane.b32.xlu0 %v670, 16
        %v719 = vpop.permute.xlu0 %718
        %720 = vrot.lane.b32.xlu0 %v671, 16
        %v721 = vpop.permute.xlu0 %720
        %722 = vrot.lane.b32.xlu0 %v672, 16
        %v723 = vpop.permute.xlu0 %722
        %724 = vrot.lane.b32.xlu0 %v673, 16
        %v725 = vpop.permute.xlu0 %724
        %726 = vrot.lane.b32.xlu0 %v674, 16
        %v727 = vpop.permute.xlu0 %726
        %728 = vrot.lane.b32.xlu0 %v675, 16
        %v729 = vpop.permute.xlu0 %728
        %730 = vrot.lane.b32.xlu0 %v676, 16
        %v731 = vpop.permute.xlu0 %730
        %732 = vrot.lane.b32.xlu0 %v677, 16
        %v733 = vpop.permute.xlu0 %732
        %vm742 = vcmask 130048
        %v743 = vsel %vm742, %v626, %v687
        %v744 = vsel %vm742, %v627, %v689
        %v745 = vsel %vm742, %v628, %v691
        %v746 = vsel %vm742, %v629, %v693
        %v747 = vsel %vm742, %v630, %v695
        %v748 = vsel %vm742, %v631, %v697
        %v749 = vsel %vm742, %v632, %v699
        %v750 = vsel %vm742, %v633, %v701
        %v751 = vsel %vm742, %v687, %v719
        %v752 = vsel %vm742, %v689, %v721
        %v753 = vsel %vm742, %v691, %v723
        %v754 = vsel %vm742, %v693, %v725
        %v755 = vsel %vm742, %v695, %v727
        %v756 = vsel %vm742, %v697, %v729
        %v757 = vsel %vm742, %v699, %v731
        %v758 = vsel %vm742, %v701, %v733
        %v759 = vlaneseq
        %v760 = vand.u32 %v759, 127
        %vm761 = vcmp.lt.s32.totalorder %v760, 0
        %v762 = vsub.s32 0, %v760
        %v763 = vsel %vm761, %v762, %v760
        %v764 = vshrl.u32 %v763, 4
        %v765 = vand.u32 %v763, 15
        %v766 = vsub.s32 0, %v765
        %v767 = vsel %vm761, %v766, %v765
        %vm768 = vcmp.ne.s32.totalorder %v767, 0
        %vm769 = vcmp.lt.s32.totalorder %v767, 0
        %vm770 = vmand %vm769, %vm768
        %v771 = vadd.s32 %v767, 16
        %v772 = vsel %vm770, %v771, %v767
        %vm773 = vcmp.ne.s32.totalorder %v772, 0
        %vm774 = vcmp.ne.s32.totalorder %v772, 15
        %775 = vrot.lane.b32.xlu0 %v743, 1
        %v776 = vpop.permute.xlu0 %775
        %777 = vrot.lane.b32.xlu0 %v744, 1
        %v778 = vpop.permute.xlu0 %777
        %779 = vrot.lane.b32.xlu0 %v745, 1
        %v780 = vpop.permute.xlu0 %779
        %781 = vrot.lane.b32.xlu0 %v746, 1
        %v782 = vpop.permute.xlu0 %781
        %783 = vrot.lane.b32.xlu0 %v747, 1
        %v784 = vpop.permute.xlu0 %783
        %785 = vrot.lane.b32.xlu0 %v748, 1
        %v786 = vpop.permute.xlu0 %785
        %787 = vrot.lane.b32.xlu0 %v749, 1
        %v788 = vpop.permute.xlu0 %787
        %789 = vrot.lane.b32.xlu0 %v750, 1
        %v790 = vpop.permute.xlu0 %789
        %v791 = vsel %vm773, 1, 0
        %vm792 = vcmp.eq.s32.totalorder %v791, 1
        %v793 = vsel %vm792, %v776, 0.0
        %v794 = vsel %vm792, %v778, 0.0
        %v795 = vsel %vm792, %v780, 0.0
        %v796 = vsel %vm792, %v782, 0.0
        %v797 = vsel %vm792, %v784, 0.0
        %v798 = vsel %vm792, %v786, 0.0
        %v799 = vsel %vm792, %v788, 0.0
        %v800 = vsel %vm792, %v790, 0.0
        %v801 = vld [vmem:[%s5] sm:$0xf]
        %s802 = scalar_lea.vmem %s5, 4
        %v803 = vld [vmem:[%s802] sm:$0xf]
        %vm804 = vcmask 523264
        %v806 = vsel %vm804, %v803, 0
        %808 = vmatprep.subr.mxu0 0.0
        %809 = vmatpush1.msra.mxu0 %v743
        %810 = vmatprep.subr.mxu0 0.0
        %811 = vmatpush1.msra.mxu0 %v744
        %812 = vmatprep.subr.mxu0 0.0
        %813 = vmatpush1.msra.mxu0 %v745
        %814 = vmatprep.subr.mxu0 0.0
        %815 = vmatpush1.msra.mxu0 %v746
        %816 = vmatprep.subr.mxu0 0.0
        %817 = vmatpush1.msra.mxu0 %v747
        %818 = vmatprep.subr.mxu0 0.0
        %819 = vmatpush1.msra.mxu0 %v748
        %820 = vmatprep.subr.mxu0 0.0
        %821 = vmatpush1.msra.mxu0 %v749
        %822 = vmatprep.subr.mxu0 0.0
        %823 = vmatpush1.msra.mxu0 %v750
        %824 = vmatprep.subr.mxu0 0.0
        %825 = vmatpush1.msra.mxu0 0.0
        %826 = vmatprep.subr.mxu0 0.0
        %827 = vmatpush1.msra.mxu0 0.0
        %828 = vmatprep.subr.mxu0 0.0
        %829 = vmatpush1.msra.mxu0 0.0
        %830 = vmatprep.subr.mxu0 0.0
        %831 = vmatpush1.msra.mxu0 0.0
        %832 = vmatprep.subr.mxu0 0.0
        %833 = vmatpush1.msra.mxu0 0.0
        %834 = vmatprep.subr.mxu0 0.0
        %835 = vmatpush1.msra.mxu0 0.0
        %836 = vmatprep.subr.mxu0 0.0
        %837 = vmatpush1.msra.mxu0 0.0
        %838 = vmatprep.subr.mxu0 0.0
        %839 = vmatpush1.msra.mxu0 0.0
        %840 = vmatprep.subr.mxu0 0.0
        %841 = vmatpush1.msra.mxu0 0.0
        %842 = vmatprep.subr.mxu0 0.0
        %843 = vmatpush1.msra.mxu0 0.0
        %844 = vmatprep.subr.mxu0 0.0
        %845 = vmatpush1.msra.mxu0 0.0
        %846 = vmatprep.subr.mxu0 0.0
        %847 = vmatpush1.msra.mxu0 0.0
        %848 = vmatprep.subr.mxu0 0.0
        %849 = vmatpush1.msra.mxu0 0.0
        %850 = vmatprep.subr.mxu0 0.0
        %851 = vmatpush1.msra.mxu0 0.0
        %852 = vmatprep.subr.mxu0 0.0
        %853 = vmatpush1.msra.mxu0 0.0
        %854 = vmatprep.subr.mxu0 0.0
        %855 = vmatpush1.msra.mxu0 0.0
        %856 = vmatprep.subr.mxu0 0.0
        %857 = vmatpush1.msra.mxu0 0.0
        %858 = vmatprep.subr.mxu0 0.0
        %859 = vmatpush1.msra.mxu0 0.0
        %860 = vmatprep.subr.mxu0 0.0
        %861 = vmatpush1.msra.mxu0 0.0
        %862 = vmatprep.subr.mxu0 0.0
        %863 = vmatpush1.msra.mxu0 0.0
        %864 = vmatprep.subr.mxu0 0.0
        %865 = vmatpush1.msra.mxu0 0.0
        %866 = vmatprep.subr.mxu0 0.0
        %867 = vmatpush1.msra.mxu0 0.0
        %868 = vmatprep.subr.mxu0 0.0
        %869 = vmatpush1.msra.mxu0 0.0
        %870 = vmatprep.subr.mxu0 0.0
        %871 = vmatpush1.msra.mxu0 0.0
        %872 = vmatprep.mubr.f32.mxu0 0.0
        %873 = vmatmul.mubr.f32.gmra.mrb[0].mxu0 %v806
        %v874 = vpop.f32.mrb[0].mxu0
        %v875 = vadd.f32 0.0, %v874
        %v876 = vpop.f32.mrb[0].mxu0
        %877 = vdwg.mxu0
        %v879 = vsel %vm804, %v801, 0
        %881 = vmatprep.subr.mxu0 0.0
        %882 = vmatpush1.msra.mxu0 %v793
        %883 = vmatprep.subr.mxu0 0.0
        %884 = vmatpush1.msra.mxu0 %v794
        %885 = vmatprep.subr.mxu0 0.0
        %886 = vmatpush1.msra.mxu0 %v795
        %887 = vmatprep.subr.mxu0 0.0
        %888 = vmatpush1.msra.mxu0 %v796
        %889 = vmatprep.subr.mxu0 0.0
        %890 = vmatpush1.msra.mxu0 %v797
        %891 = vmatprep.subr.mxu0 0.0
        %892 = vmatpush1.msra.mxu0 %v798
        %893 = vmatprep.subr.mxu0 0.0
        %894 = vmatpush1.msra.mxu0 %v799
        %895 = vmatprep.subr.mxu0 0.0
        %896 = vmatpush1.msra.mxu0 %v800
        %897 = vmatprep.subr.mxu0 0.0
        %898 = vmatpush1.msra.mxu0 0.0
        %899 = vmatprep.subr.mxu0 0.0
        %900 = vmatpush1.msra.mxu0 0.0
        %901 = vmatprep.subr.mxu0 0.0
        %902 = vmatpush1.msra.mxu0 0.0
        %903 = vmatprep.subr.mxu0 0.0
        %904 = vmatpush1.msra.mxu0 0.0
        %905 = vmatprep.subr.mxu0 0.0
        %906 = vmatpush1.msra.mxu0 0.0
        %907 = vmatprep.subr.mxu0 0.0
        %908 = vmatpush1.msra.mxu0 0.0
        %909 = vmatprep.subr.mxu0 0.0
        %910 = vmatpush1.msra.mxu0 0.0
        %911 = vmatprep.subr.mxu0 0.0
        %912 = vmatpush1.msra.mxu0 0.0
        %913 = vmatprep.subr.mxu0 0.0
        %914 = vmatpush1.msra.mxu0 0.0
        %915 = vmatprep.subr.mxu0 0.0
        %916 = vmatpush1.msra.mxu0 0.0
        %917 = vmatprep.subr.mxu0 0.0
        %918 = vmatpush1.msra.mxu0 0.0
        %919 = vmatprep.subr.mxu0 0.0
        %920 = vmatpush1.msra.mxu0 0.0
        %921 = vmatprep.subr.mxu0 0.0
        %922 = vmatpush1.msra.mxu0 0.0
        %923 = vmatprep.subr.mxu0 0.0
        %924 = vmatpush1.msra.mxu0 0.0
        %925 = vmatprep.subr.mxu0 0.0
        %926 = vmatpush1.msra.mxu0 0.0
        %927 = vmatprep.subr.mxu0 0.0
        %928 = vmatpush1.msra.mxu0 0.0
        %929 = vmatprep.subr.mxu0 0.0
        %930 = vmatpush1.msra.mxu0 0.0
        %931 = vmatprep.subr.mxu0 0.0
        %932 = vmatpush1.msra.mxu0 0.0
        %933 = vmatprep.subr.mxu0 0.0
        %934 = vmatpush1.msra.mxu0 0.0
        %935 = vmatprep.subr.mxu0 0.0
        %936 = vmatpush1.msra.mxu0 0.0
        %937 = vmatprep.subr.mxu0 0.0
        %938 = vmatpush1.msra.mxu0 0.0
        %939 = vmatprep.subr.mxu0 0.0
        %940 = vmatpush1.msra.mxu0 0.0
        %941 = vmatprep.subr.mxu0 0.0
        %942 = vmatpush1.msra.mxu0 0.0
        %943 = vmatprep.subr.mxu0 0.0
        %944 = vmatpush1.msra.mxu0 0.0
        %945 = vmatprep.mubr.f32.mxu0 0.0
        %946 = vmatmul.mubr.f32.gmra.mrb[0].mxu0 %v879
        %v947 = vpop.f32.mrb[0].mxu0
        %v948 = vadd.f32 %v875, %v947
        %v949 = vpop.f32.mrb[0].mxu0
        %950 = vdwg.mxu0
        %951 = vrot.lane.b32.xlu0 %v743, 127
        %v952 = vpop.permute.xlu0 %951
        %953 = vrot.lane.b32.xlu0 %v744, 127
        %v954 = vpop.permute.xlu0 %953
        %955 = vrot.lane.b32.xlu0 %v745, 127
        %v956 = vpop.permute.xlu0 %955
        %957 = vrot.lane.b32.xlu0 %v746, 127
        %v958 = vpop.permute.xlu0 %957
        %959 = vrot.lane.b32.xlu0 %v747, 127
        %v960 = vpop.permute.xlu0 %959
        %961 = vrot.lane.b32.xlu0 %v748, 127
        %v962 = vpop.permute.xlu0 %961
        %963 = vrot.lane.b32.xlu0 %v749, 127
        %v964 = vpop.permute.xlu0 %963
        %965 = vrot.lane.b32.xlu0 %v750, 127
        %v966 = vpop.permute.xlu0 %965
        %v967 = vsel %vm774, 1, 0
        %vm968 = vcmp.eq.s32.totalorder %v967, 1
        %v969 = vsel %vm968, %v952, 0.0
        %v970 = vsel %vm968, %v954, 0.0
        %v971 = vsel %vm968, %v956, 0.0
        %v972 = vsel %vm968, %v958, 0.0
        %v973 = vsel %vm968, %v960, 0.0
        %v974 = vsel %vm968, %v962, 0.0
        %v975 = vsel %vm968, %v964, 0.0
        %v976 = vsel %vm968, %v966, 0.0
        %s977 = scalar_lea.vmem %s5, 8
        %v978 = vld [vmem:[%s977] sm:$0xf]
        %v980 = vsel %vm804, %v978, 0
        %982 = vmatprep.subr.mxu0 0.0
        %983 = vmatpush1.msra.mxu0 %v969
        %984 = vmatprep.subr.mxu0 0.0
        %985 = vmatpush1.msra.mxu0 %v970
        %986 = vmatprep.subr.mxu0 0.0
        %987 = vmatpush1.msra.mxu0 %v971
        %988 = vmatprep.subr.mxu0 0.0
        %989 = vmatpush1.msra.mxu0 %v972
        %990 = vmatprep.subr.mxu0 0.0
        %991 = vmatpush1.msra.mxu0 %v973
        %992 = vmatprep.subr.mxu0 0.0
        %993 = vmatpush1.msra.mxu0 %v974
        %994 = vmatprep.subr.mxu0 0.0
        %995 = vmatpush1.msra.mxu0 %v975
        %996 = vmatprep.subr.mxu0 0.0
        %997 = vmatpush1.msra.mxu0 %v976
        %998 = vmatprep.subr.mxu0 0.0
        %999 = vmatpush1.msra.mxu0 0.0
        %1000 = vmatprep.subr.mxu0 0.0
        %1001 = vmatpush1.msra.mxu0 0.0
        %1002 = vmatprep.subr.mxu0 0.0
        %1003 = vmatpush1.msra.mxu0 0.0
        %1004 = vmatprep.subr.mxu0 0.0
        %1005 = vmatpush1.msra.mxu0 0.0
        %1006 = vmatprep.subr.mxu0 0.0
        %1007 = vmatpush1.msra.mxu0 0.0
        %1008 = vmatprep.subr.mxu0 0.0
        %1009 = vmatpush1.msra.mxu0 0.0
        %1010 = vmatprep.subr.mxu0 0.0
        %1011 = vmatpush1.msra.mxu0 0.0
        %1012 = vmatprep.subr.mxu0 0.0
        %1013 = vmatpush1.msra.mxu0 0.0
        %1014 = vmatprep.subr.mxu0 0.0
        %1015 = vmatpush1.msra.mxu0 0.0
        %1016 = vmatprep.subr.mxu0 0.0
        %1017 = vmatpush1.msra.mxu0 0.0
        %1018 = vmatprep.subr.mxu0 0.0
        %1019 = vmatpush1.msra.mxu0 0.0
        %1020 = vmatprep.subr.mxu0 0.0
        %1021 = vmatpush1.msra.mxu0 0.0
        %1022 = vmatprep.subr.mxu0 0.0
        %1023 = vmatpush1.msra.mxu0 0.0
        %1024 = vmatprep.subr.mxu0 0.0
        %1025 = vmatpush1.msra.mxu0 0.0
        %1026 = vmatprep.subr.mxu0 0.0
        %1027 = vmatpush1.msra.mxu0 0.0
        %1028 = vmatprep.subr.mxu0 0.0
        %1029 = vmatpush1.msra.mxu0 0.0
        %1030 = vmatprep.subr.mxu0 0.0
        %1031 = vmatpush1.msra.mxu0 0.0
        %1032 = vmatprep.subr.mxu0 0.0
        %1033 = vmatpush1.msra.mxu0 0.0
        %1034 = vmatprep.subr.mxu0 0.0
        %1035 = vmatpush1.msra.mxu0 0.0
        %1036 = vmatprep.subr.mxu0 0.0
        %1037 = vmatpush1.msra.mxu0 0.0
        %1038 = vmatprep.subr.mxu0 0.0
        %1039 = vmatpush1.msra.mxu0 0.0
        %1040 = vmatprep.subr.mxu0 0.0
        %1041 = vmatpush1.msra.mxu0 0.0
        %1042 = vmatprep.subr.mxu0 0.0
        %1043 = vmatpush1.msra.mxu0 0.0
        %1044 = vmatprep.subr.mxu0 0.0
        %1045 = vmatpush1.msra.mxu0 0.0
        %1046 = vmatprep.mubr.f32.mxu0 0.0
        %1047 = vmatmul.mubr.f32.gmra.mrb[0].mxu0 %v980
        %v1048 = vpop.f32.mrb[0].mxu0
        %v1049 = vadd.f32 0.0, %v1048
        %v1050 = vpop.f32.mrb[0].mxu0
        %1051 = vdwg.mxu0
        %v1052 = vadd.f32 %v948, %v1049
        %1053 = vrot.lane.b32.xlu0 %v582, 1
        %v1054 = vpop.permute.xlu0 %1053
        %1055 = vrot.lane.b32.xlu0 %v583, 1
        %v1056 = vpop.permute.xlu0 %1055
        %1057 = vrot.lane.b32.xlu0 %v584, 1
        %v1058 = vpop.permute.xlu0 %1057
        %1059 = vrot.lane.b32.xlu0 %v585, 1
        %v1060 = vpop.permute.xlu0 %1059
        %1061 = vrot.lane.b32.xlu0 %v586, 1
        %v1062 = vpop.permute.xlu0 %1061
        %1063 = vrot.lane.b32.xlu0 %v587, 1
        %v1064 = vpop.permute.xlu0 %1063
        %1065 = vrot.lane.b32.xlu0 %v588, 1
        %v1066 = vpop.permute.xlu0 %1065
        %1067 = vrot.lane.b32.xlu0 %v589, 1
        %v1068 = vpop.permute.xlu0 %1067
        %v1069 = vsel %vm792, %v1054, 0.0
        %v1070 = vsel %vm792, %v1056, 0.0
        %v1071 = vsel %vm792, %v1058, 0.0
        %v1072 = vsel %vm792, %v1060, 0.0
        %v1073 = vsel %vm792, %v1062, 0.0
        %v1074 = vsel %vm792, %v1064, 0.0
        %v1075 = vsel %vm792, %v1066, 0.0
        %v1076 = vsel %vm792, %v1068, 0.0
        %s1077 = scalar_lea.vmem %s5, 12
        %v1078 = vld [vmem:[%s1077] sm:$0xf]
        %v1080 = vsel %vm804, %v1078, 0
        %1082 = vmatprep.subr.mxu0 0.0
        %1083 = vmatpush1.msra.mxu0 %v1069
        %1084 = vmatprep.subr.mxu0 0.0
        %1085 = vmatpush1.msra.mxu0 %v1070
        %1086 = vmatprep.subr.mxu0 0.0
        %1087 = vmatpush1.msra.mxu0 %v1071
        %1088 = vmatprep.subr.mxu0 0.0
        %1089 = vmatpush1.msra.mxu0 %v1072
        %1090 = vmatprep.subr.mxu0 0.0
        %1091 = vmatpush1.msra.mxu0 %v1073
        %1092 = vmatprep.subr.mxu0 0.0
        %1093 = vmatpush1.msra.mxu0 %v1074
        %1094 = vmatprep.subr.mxu0 0.0
        %1095 = vmatpush1.msra.mxu0 %v1075
        %1096 = vmatprep.subr.mxu0 0.0
        %1097 = vmatpush1.msra.mxu0 %v1076
        %1098 = vmatprep.subr.mxu0 0.0
        %1099 = vmatpush1.msra.mxu0 0.0
        %1100 = vmatprep.subr.mxu0 0.0
        %1101 = vmatpush1.msra.mxu0 0.0
        %1102 = vmatprep.subr.mxu0 0.0
        %1103 = vmatpush1.msra.mxu0 0.0
        %1104 = vmatprep.subr.mxu0 0.0
        %1105 = vmatpush1.msra.mxu0 0.0
        %1106 = vmatprep.subr.mxu0 0.0
        %1107 = vmatpush1.msra.mxu0 0.0
        %1108 = vmatprep.subr.mxu0 0.0
        %1109 = vmatpush1.msra.mxu0 0.0
        %1110 = vmatprep.subr.mxu0 0.0
        %1111 = vmatpush1.msra.mxu0 0.0
        %1112 = vmatprep.subr.mxu0 0.0
        %1113 = vmatpush1.msra.mxu0 0.0
        %1114 = vmatprep.subr.mxu0 0.0
        %1115 = vmatpush1.msra.mxu0 0.0
        %1116 = vmatprep.subr.mxu0 0.0
        %1117 = vmatpush1.msra.mxu0 0.0
        %1118 = vmatprep.subr.mxu0 0.0
        %1119 = vmatpush1.msra.mxu0 0.0
        %1120 = vmatprep.subr.mxu0 0.0
        %1121 = vmatpush1.msra.mxu0 0.0
        %1122 = vmatprep.subr.mxu0 0.0
        %1123 = vmatpush1.msra.mxu0 0.0
        %1124 = vmatprep.subr.mxu0 0.0
        %1125 = vmatpush1.msra.mxu0 0.0
        %1126 = vmatprep.subr.mxu0 0.0
        %1127 = vmatpush1.msra.mxu0 0.0
        %1128 = vmatprep.subr.mxu0 0.0
        %1129 = vmatpush1.msra.mxu0 0.0
        %1130 = vmatprep.subr.mxu0 0.0
        %1131 = vmatpush1.msra.mxu0 0.0
        %1132 = vmatprep.subr.mxu0 0.0
        %1133 = vmatpush1.msra.mxu0 0.0
        %1134 = vmatprep.subr.mxu0 0.0
        %1135 = vmatpush1.msra.mxu0 0.0
        %1136 = vmatprep.subr.mxu0 0.0
        %1137 = vmatpush1.msra.mxu0 0.0
        %1138 = vmatprep.subr.mxu0 0.0
        %1139 = vmatpush1.msra.mxu0 0.0
        %1140 = vmatprep.subr.mxu0 0.0
        %1141 = vmatpush1.msra.mxu0 0.0
        %1142 = vmatprep.subr.mxu0 0.0
        %1143 = vmatpush1.msra.mxu0 0.0
        %1144 = vmatprep.subr.mxu0 0.0
        %1145 = vmatpush1.msra.mxu0 0.0
        %1146 = vmatprep.mubr.f32.mxu0 0.0
        %1147 = vmatmul.mubr.f32.gmra.mrb[0].mxu0 %v1080
        %v1148 = vpop.f32.mrb[0].mxu0
        %v1149 = vadd.f32 0.0, %v1148
        %v1150 = vpop.f32.mrb[0].mxu0
        %1151 = vdwg.mxu0
        %v1152 = vadd.f32 %v1052, %v1149
        %s1153 = scalar_lea.vmem %s5, 16
        %v1154 = vld [vmem:[%s1153] sm:$0xf]
        %v1156 = vsel %vm804, %v1154, 0
        %1158 = vmatprep.subr.mxu0 0.0
        %1159 = vmatpush1.msra.mxu0 %v582
        %1160 = vmatprep.subr.mxu0 0.0
        %1161 = vmatpush1.msra.mxu0 %v583
        %1162 = vmatprep.subr.mxu0 0.0
        %1163 = vmatpush1.msra.mxu0 %v584
        %1164 = vmatprep.subr.mxu0 0.0
        %1165 = vmatpush1.msra.mxu0 %v585
        %1166 = vmatprep.subr.mxu0 0.0
        %1167 = vmatpush1.msra.mxu0 %v586
        %1168 = vmatprep.subr.mxu0 0.0
        %1169 = vmatpush1.msra.mxu0 %v587
        %1170 = vmatprep.subr.mxu0 0.0
        %1171 = vmatpush1.msra.mxu0 %v588
        %1172 = vmatprep.subr.mxu0 0.0
        %1173 = vmatpush1.msra.mxu0 %v589
        %1174 = vmatprep.subr.mxu0 0.0
        %1175 = vmatpush1.msra.mxu0 0.0
        %1176 = vmatprep.subr.mxu0 0.0
        %1177 = vmatpush1.msra.mxu0 0.0
        %1178 = vmatprep.subr.mxu0 0.0
        %1179 = vmatpush1.msra.mxu0 0.0
        %1180 = vmatprep.subr.mxu0 0.0
        %1181 = vmatpush1.msra.mxu0 0.0
        %1182 = vmatprep.subr.mxu0 0.0
        %1183 = vmatpush1.msra.mxu0 0.0
        %1184 = vmatprep.subr.mxu0 0.0
        %1185 = vmatpush1.msra.mxu0 0.0
        %1186 = vmatprep.subr.mxu0 0.0
        %1187 = vmatpush1.msra.mxu0 0.0
        %1188 = vmatprep.subr.mxu0 0.0
        %1189 = vmatpush1.msra.mxu0 0.0
        %1190 = vmatprep.subr.mxu0 0.0
        %1191 = vmatpush1.msra.mxu0 0.0
        %1192 = vmatprep.subr.mxu0 0.0
        %1193 = vmatpush1.msra.mxu0 0.0
        %1194 = vmatprep.subr.mxu0 0.0
        %1195 = vmatpush1.msra.mxu0 0.0
        %1196 = vmatprep.subr.mxu0 0.0
        %1197 = vmatpush1.msra.mxu0 0.0
        %1198 = vmatprep.subr.mxu0 0.0
        %1199 = vmatpush1.msra.mxu0 0.0
        %1200 = vmatprep.subr.mxu0 0.0
        %1201 = vmatpush1.msra.mxu0 0.0
        %1202 = vmatprep.subr.mxu0 0.0
        %1203 = vmatpush1.msra.mxu0 0.0
        %1204 = vmatprep.subr.mxu0 0.0
        %1205 = vmatpush1.msra.mxu0 0.0
        %1206 = vmatprep.subr.mxu0 0.0
        %1207 = vmatpush1.msra.mxu0 0.0
        %1208 = vmatprep.subr.mxu0 0.0
        %1209 = vmatpush1.msra.mxu0 0.0
        %1210 = vmatprep.subr.mxu0 0.0
        %1211 = vmatpush1.msra.mxu0 0.0
        %1212 = vmatprep.subr.mxu0 0.0
        %1213 = vmatpush1.msra.mxu0 0.0
        %1214 = vmatprep.subr.mxu0 0.0
        %1215 = vmatpush1.msra.mxu0 0.0
        %1216 = vmatprep.subr.mxu0 0.0
        %1217 = vmatpush1.msra.mxu0 0.0
        %1218 = vmatprep.subr.mxu0 0.0
        %1219 = vmatpush1.msra.mxu0 0.0
        %1220 = vmatprep.subr.mxu0 0.0
        %1221 = vmatpush1.msra.mxu0 0.0
        %1222 = vmatprep.mubr.f32.mxu0 0.0
        %1223 = vmatmul.mubr.f32.gmra.mrb[0].mxu0 %v1156
        %v1224 = vpop.f32.mrb[0].mxu0
        %v1225 = vadd.f32 0.0, %v1224
        %v1226 = vpop.f32.mrb[0].mxu0
        %1227 = vdwg.mxu0
        %v1228 = vadd.f32 %v1152, %v1225
        %1229 = vrot.lane.b32.xlu0 %v582, 127
        %v1230 = vpop.permute.xlu0 %1229
        %1231 = vrot.lane.b32.xlu0 %v583, 127
        %v1232 = vpop.permute.xlu0 %1231
        %1233 = vrot.lane.b32.xlu0 %v584, 127
        %v1234 = vpop.permute.xlu0 %1233
        %1235 = vrot.lane.b32.xlu0 %v585, 127
        %v1236 = vpop.permute.xlu0 %1235
        %1237 = vrot.lane.b32.xlu0 %v586, 127
        %v1238 = vpop.permute.xlu0 %1237
        %1239 = vrot.lane.b32.xlu0 %v587, 127
        %v1240 = vpop.permute.xlu0 %1239
        %1241 = vrot.lane.b32.xlu0 %v588, 127
        %v1242 = vpop.permute.xlu0 %1241
        %1243 = vrot.lane.b32.xlu0 %v589, 127
        %v1244 = vpop.permute.xlu0 %1243
        %v1245 = vsel %vm968, %v1230, 0.0
        %v1246 = vsel %vm968, %v1232, 0.0
        %v1247 = vsel %vm968, %v1234, 0.0
        %v1248 = vsel %vm968, %v1236, 0.0
        %v1249 = vsel %vm968, %v1238, 0.0
        %v1250 = vsel %vm968, %v1240, 0.0
        %v1251 = vsel %vm968, %v1242, 0.0
        %v1252 = vsel %vm968, %v1244, 0.0
        %s1253 = scalar_lea.vmem %s5, 20
        %v1254 = vld [vmem:[%s1253] sm:$0xf]
        %v1256 = vsel %vm804, %v1254, 0
        %1258 = vmatprep.subr.mxu0 0.0
        %1259 = vmatpush1.msra.mxu0 %v1245
        %1260 = vmatprep.subr.mxu0 0.0
        %1261 = vmatpush1.msra.mxu0 %v1246
        %1262 = vmatprep.subr.mxu0 0.0
        %1263 = vmatpush1.msra.mxu0 %v1247
        %1264 = vmatprep.subr.mxu0 0.0
        %1265 = vmatpush1.msra.mxu0 %v1248
        %1266 = vmatprep.subr.mxu0 0.0
        %1267 = vmatpush1.msra.mxu0 %v1249
        %1268 = vmatprep.subr.mxu0 0.0
        %1269 = vmatpush1.msra.mxu0 %v1250
        %1270 = vmatprep.subr.mxu0 0.0
        %1271 = vmatpush1.msra.mxu0 %v1251
        %1272 = vmatprep.subr.mxu0 0.0
        %1273 = vmatpush1.msra.mxu0 %v1252
        %1274 = vmatprep.subr.mxu0 0.0
        %1275 = vmatpush1.msra.mxu0 0.0
        %1276 = vmatprep.subr.mxu0 0.0
        %1277 = vmatpush1.msra.mxu0 0.0
        %1278 = vmatprep.subr.mxu0 0.0
        %1279 = vmatpush1.msra.mxu0 0.0
        %1280 = vmatprep.subr.mxu0 0.0
        %1281 = vmatpush1.msra.mxu0 0.0
        %1282 = vmatprep.subr.mxu0 0.0
        %1283 = vmatpush1.msra.mxu0 0.0
        %1284 = vmatprep.subr.mxu0 0.0
        %1285 = vmatpush1.msra.mxu0 0.0
        %1286 = vmatprep.subr.mxu0 0.0
        %1287 = vmatpush1.msra.mxu0 0.0
        %1288 = vmatprep.subr.mxu0 0.0
        %1289 = vmatpush1.msra.mxu0 0.0
        %1290 = vmatprep.subr.mxu0 0.0
        %1291 = vmatpush1.msra.mxu0 0.0
        %1292 = vmatprep.subr.mxu0 0.0
        %1293 = vmatpush1.msra.mxu0 0.0
        %1294 = vmatprep.subr.mxu0 0.0
        %1295 = vmatpush1.msra.mxu0 0.0
        %1296 = vmatprep.subr.mxu0 0.0
        %1297 = vmatpush1.msra.mxu0 0.0
        %1298 = vmatprep.subr.mxu0 0.0
        %1299 = vmatpush1.msra.mxu0 0.0
        %1300 = vmatprep.subr.mxu0 0.0
        %1301 = vmatpush1.msra.mxu0 0.0
        %1302 = vmatprep.subr.mxu0 0.0
        %1303 = vmatpush1.msra.mxu0 0.0
        %1304 = vmatprep.subr.mxu0 0.0
        %1305 = vmatpush1.msra.mxu0 0.0
        %1306 = vmatprep.subr.mxu0 0.0
        %1307 = vmatpush1.msra.mxu0 0.0
        %1308 = vmatprep.subr.mxu0 0.0
        %1309 = vmatpush1.msra.mxu0 0.0
        %1310 = vmatprep.subr.mxu0 0.0
        %1311 = vmatpush1.msra.mxu0 0.0
        %1312 = vmatprep.subr.mxu0 0.0
        %1313 = vmatpush1.msra.mxu0 0.0
        %1314 = vmatprep.subr.mxu0 0.0
        %1315 = vmatpush1.msra.mxu0 0.0
        %1316 = vmatprep.subr.mxu0 0.0
        %1317 = vmatpush1.msra.mxu0 0.0
        %1318 = vmatprep.subr.mxu0 0.0
        %1319 = vmatpush1.msra.mxu0 0.0
        %1320 = vmatprep.subr.mxu0 0.0
        %1321 = vmatpush1.msra.mxu0 0.0
        %1322 = vmatprep.mubr.f32.mxu0 0.0
        %1323 = vmatmul.mubr.f32.gmra.mrb[0].mxu0 %v1256
        %v1324 = vpop.f32.mrb[0].mxu0
        %v1325 = vadd.f32 0.0, %v1324
        %v1326 = vpop.f32.mrb[0].mxu0
        %1327 = vdwg.mxu0
        %v1328 = vadd.f32 %v1228, %v1325
        %1345 = vrot.lane.b32.xlu0 %v743, 96
        %v1346 = vpop.permute.xlu0 %1345
        %1347 = vrot.lane.b32.xlu0 %v751, 96
        %v1348 = vpop.permute.xlu0 %1347
        %1349 = vrot.lane.b32.xlu0 %v744, 96
        %v1350 = vpop.permute.xlu0 %1349
        %1351 = vrot.lane.b32.xlu0 %v752, 96
        %v1352 = vpop.permute.xlu0 %1351
        %1353 = vrot.lane.b32.xlu0 %v745, 96
        %v1354 = vpop.permute.xlu0 %1353
        %1355 = vrot.lane.b32.xlu0 %v753, 96
        %v1356 = vpop.permute.xlu0 %1355
        %1357 = vrot.lane.b32.xlu0 %v746, 96
        %v1358 = vpop.permute.xlu0 %1357
        %1359 = vrot.lane.b32.xlu0 %v754, 96
        %v1360 = vpop.permute.xlu0 %1359
        %1361 = vrot.lane.b32.xlu0 %v747, 96
        %v1362 = vpop.permute.xlu0 %1361
        %1363 = vrot.lane.b32.xlu0 %v755, 96
        %v1364 = vpop.permute.xlu0 %1363
        %1365 = vrot.lane.b32.xlu0 %v748, 96
        %v1366 = vpop.permute.xlu0 %1365
        %1367 = vrot.lane.b32.xlu0 %v756, 96
        %v1368 = vpop.permute.xlu0 %1367
        %1369 = vrot.lane.b32.xlu0 %v749, 96
        %v1370 = vpop.permute.xlu0 %1369
        %1371 = vrot.lane.b32.xlu0 %v757, 96
        %v1372 = vpop.permute.xlu0 %1371
        %1373 = vrot.lane.b32.xlu0 %v750, 96
        %v1374 = vpop.permute.xlu0 %1373
        %1375 = vrot.lane.b32.xlu0 %v758, 96
        %v1376 = vpop.permute.xlu0 %1375
        %vm1377 = vcmask 785408
        %v1378 = vsel %vm1377, %v1346, %v1348
        %v1379 = vsel %vm1377, %v1350, %v1352
        %v1380 = vsel %vm1377, %v1354, %v1356
        %v1381 = vsel %vm1377, %v1358, %v1360
        %v1382 = vsel %vm1377, %v1362, %v1364
        %v1383 = vsel %vm1377, %v1366, %v1368
        %v1384 = vsel %vm1377, %v1370, %v1372
        %v1385 = vsel %vm1377, %v1374, %v1376
        %1394 = vrot.lane.b32.xlu0 %v1378, 1
        %v1395 = vpop.permute.xlu0 %1394
        %1396 = vrot.lane.b32.xlu0 %v1379, 1
        %v1397 = vpop.permute.xlu0 %1396
        %1398 = vrot.lane.b32.xlu0 %v1380, 1
        %v1399 = vpop.permute.xlu0 %1398
        %1400 = vrot.lane.b32.xlu0 %v1381, 1
        %v1401 = vpop.permute.xlu0 %1400
        %1402 = vrot.lane.b32.xlu0 %v1382, 1
        %v1403 = vpop.permute.xlu0 %1402
        %1404 = vrot.lane.b32.xlu0 %v1383, 1
        %v1405 = vpop.permute.xlu0 %1404
        %1406 = vrot.lane.b32.xlu0 %v1384, 1
        %v1407 = vpop.permute.xlu0 %1406
        %1408 = vrot.lane.b32.xlu0 %v1385, 1
        %v1409 = vpop.permute.xlu0 %1408
        %v1410 = vsel %vm792, %v1395, 0.0
        %v1411 = vsel %vm792, %v1397, 0.0
        %v1412 = vsel %vm792, %v1399, 0.0
        %v1413 = vsel %vm792, %v1401, 0.0
        %v1414 = vsel %vm792, %v1403, 0.0
        %v1415 = vsel %vm792, %v1405, 0.0
        %v1416 = vsel %vm792, %v1407, 0.0
        %v1417 = vsel %vm792, %v1409, 0.0
        %s1418 = scalar_lea.vmem %s5, 24
        %v1419 = vld [vmem:[%s1418] sm:$0xf]
        %v1421 = vsel %vm804, %v1419, 0
        %1423 = vmatprep.subr.mxu0 0.0
        %1424 = vmatpush1.msra.mxu0 %v1410
        %1425 = vmatprep.subr.mxu0 0.0
        %1426 = vmatpush1.msra.mxu0 %v1411
        %1427 = vmatprep.subr.mxu0 0.0
        %1428 = vmatpush1.msra.mxu0 %v1412
        %1429 = vmatprep.subr.mxu0 0.0
        %1430 = vmatpush1.msra.mxu0 %v1413
        %1431 = vmatprep.subr.mxu0 0.0
        %1432 = vmatpush1.msra.mxu0 %v1414
        %1433 = vmatprep.subr.mxu0 0.0
        %1434 = vmatpush1.msra.mxu0 %v1415
        %1435 = vmatprep.subr.mxu0 0.0
        %1436 = vmatpush1.msra.mxu0 %v1416
        %1437 = vmatprep.subr.mxu0 0.0
        %1438 = vmatpush1.msra.mxu0 %v1417
        %1439 = vmatprep.subr.mxu0 0.0
        %1440 = vmatpush1.msra.mxu0 0.0
        %1441 = vmatprep.subr.mxu0 0.0
        %1442 = vmatpush1.msra.mxu0 0.0
        %1443 = vmatprep.subr.mxu0 0.0
        %1444 = vmatpush1.msra.mxu0 0.0
        %1445 = vmatprep.subr.mxu0 0.0
        %1446 = vmatpush1.msra.mxu0 0.0
        %1447 = vmatprep.subr.mxu0 0.0
        %1448 = vmatpush1.msra.mxu0 0.0
        %1449 = vmatprep.subr.mxu0 0.0
        %1450 = vmatpush1.msra.mxu0 0.0
        %1451 = vmatprep.subr.mxu0 0.0
        %1452 = vmatpush1.msra.mxu0 0.0
        %1453 = vmatprep.subr.mxu0 0.0
        %1454 = vmatpush1.msra.mxu0 0.0
        %1455 = vmatprep.subr.mxu0 0.0
        %1456 = vmatpush1.msra.mxu0 0.0
        %1457 = vmatprep.subr.mxu0 0.0
        %1458 = vmatpush1.msra.mxu0 0.0
        %1459 = vmatprep.subr.mxu0 0.0
        %1460 = vmatpush1.msra.mxu0 0.0
        %1461 = vmatprep.subr.mxu0 0.0
        %1462 = vmatpush1.msra.mxu0 0.0
        %1463 = vmatprep.subr.mxu0 0.0
        %1464 = vmatpush1.msra.mxu0 0.0
        %1465 = vmatprep.subr.mxu0 0.0
        %1466 = vmatpush1.msra.mxu0 0.0
        %1467 = vmatprep.subr.mxu0 0.0
        %1468 = vmatpush1.msra.mxu0 0.0
        %1469 = vmatprep.subr.mxu0 0.0
        %1470 = vmatpush1.msra.mxu0 0.0
        %1471 = vmatprep.subr.mxu0 0.0
        %1472 = vmatpush1.msra.mxu0 0.0
        %1473 = vmatprep.subr.mxu0 0.0
        %1474 = vmatpush1.msra.mxu0 0.0
        %1475 = vmatprep.subr.mxu0 0.0
        %1476 = vmatpush1.msra.mxu0 0.0
        %1477 = vmatprep.subr.mxu0 0.0
        %1478 = vmatpush1.msra.mxu0 0.0
        %1479 = vmatprep.subr.mxu0 0.0
        %1480 = vmatpush1.msra.mxu0 0.0
        %1481 = vmatprep.subr.mxu0 0.0
        %1482 = vmatpush1.msra.mxu0 0.0
        %1483 = vmatprep.subr.mxu0 0.0
        %1484 = vmatpush1.msra.mxu0 0.0
        %1485 = vmatprep.subr.mxu0 0.0
        %1486 = vmatpush1.msra.mxu0 0.0
        %1487 = vmatprep.mubr.f32.mxu0 0.0
        %1488 = vmatmul.mubr.f32.gmra.mrb[0].mxu0 %v1421
        %v1489 = vpop.f32.mrb[0].mxu0
        %v1490 = vadd.f32 0.0, %v1489
        %v1491 = vpop.f32.mrb[0].mxu0
        %1492 = vdwg.mxu0
        %v1493 = vadd.f32 %v1328, %v1490
        %s1494 = scalar_lea.vmem %s5, 28
        %v1495 = vld [vmem:[%s1494] sm:$0xf]
        %v1497 = vsel %vm804, %v1495, 0
        %1499 = vmatprep.subr.mxu0 0.0
        %1500 = vmatpush1.msra.mxu0 %v1378
        %1501 = vmatprep.subr.mxu0 0.0
        %1502 = vmatpush1.msra.mxu0 %v1379
        %1503 = vmatprep.subr.mxu0 0.0
        %1504 = vmatpush1.msra.mxu0 %v1380
        %1505 = vmatprep.subr.mxu0 0.0
        %1506 = vmatpush1.msra.mxu0 %v1381
        %1507 = vmatprep.subr.mxu0 0.0
        %1508 = vmatpush1.msra.mxu0 %v1382
        %1509 = vmatprep.subr.mxu0 0.0
        %1510 = vmatpush1.msra.mxu0 %v1383
        %1511 = vmatprep.subr.mxu0 0.0
        %1512 = vmatpush1.msra.mxu0 %v1384
        %1513 = vmatprep.subr.mxu0 0.0
        %1514 = vmatpush1.msra.mxu0 %v1385
        %1515 = vmatprep.subr.mxu0 0.0
        %1516 = vmatpush1.msra.mxu0 0.0
        %1517 = vmatprep.subr.mxu0 0.0
        %1518 = vmatpush1.msra.mxu0 0.0
        %1519 = vmatprep.subr.mxu0 0.0
        %1520 = vmatpush1.msra.mxu0 0.0
        %1521 = vmatprep.subr.mxu0 0.0
        %1522 = vmatpush1.msra.mxu0 0.0
        %1523 = vmatprep.subr.mxu0 0.0
        %1524 = vmatpush1.msra.mxu0 0.0
        %1525 = vmatprep.subr.mxu0 0.0
        %1526 = vmatpush1.msra.mxu0 0.0
        %1527 = vmatprep.subr.mxu0 0.0
        %1528 = vmatpush1.msra.mxu0 0.0
        %1529 = vmatprep.subr.mxu0 0.0
        %1530 = vmatpush1.msra.mxu0 0.0
        %1531 = vmatprep.subr.mxu0 0.0
        %1532 = vmatpush1.msra.mxu0 0.0
        %1533 = vmatprep.subr.mxu0 0.0
        %1534 = vmatpush1.msra.mxu0 0.0
        %1535 = vmatprep.subr.mxu0 0.0
        %1536 = vmatpush1.msra.mxu0 0.0
        %1537 = vmatprep.subr.mxu0 0.0
        %1538 = vmatpush1.msra.mxu0 0.0
        %1539 = vmatprep.subr.mxu0 0.0
        %1540 = vmatpush1.msra.mxu0 0.0
        %1541 = vmatprep.subr.mxu0 0.0
        %1542 = vmatpush1.msra.mxu0 0.0
        %1543 = vmatprep.subr.mxu0 0.0
        %1544 = vmatpush1.msra.mxu0 0.0
        %1545 = vmatprep.subr.mxu0 0.0
        %1546 = vmatpush1.msra.mxu0 0.0
        %1547 = vmatprep.subr.mxu0 0.0
        %1548 = vmatpush1.msra.mxu0 0.0
        %1549 = vmatprep.subr.mxu0 0.0
        %1550 = vmatpush1.msra.mxu0 0.0
        %1551 = vmatprep.subr.mxu0 0.0
        %1552 = vmatpush1.msra.mxu0 0.0
        %1553 = vmatprep.subr.mxu0 0.0
        %1554 = vmatpush1.msra.mxu0 0.0
        %1555 = vmatprep.subr.mxu0 0.0
        %1556 = vmatpush1.msra.mxu0 0.0
        %1557 = vmatprep.subr.mxu0 0.0
        %1558 = vmatpush1.msra.mxu0 0.0
        %1559 = vmatprep.subr.mxu0 0.0
        %1560 = vmatpush1.msra.mxu0 0.0
        %1561 = vmatprep.subr.mxu0 0.0
        %1562 = vmatpush1.msra.mxu0 0.0
        %1563 = vmatprep.mubr.f32.mxu0 0.0
        %1564 = vmatmul.mubr.f32.gmra.mrb[0].mxu0 %v1497
        %v1565 = vpop.f32.mrb[0].mxu0
        %v1566 = vadd.f32 0.0, %v1565
        %v1567 = vpop.f32.mrb[0].mxu0
        %1568 = vdwg.mxu0
        %v1569 = vadd.f32 %v1493, %v1566
        %1570 = vrot.lane.b32.xlu0 %v1378, 127
        %v1571 = vpop.permute.xlu0 %1570
        %1572 = vrot.lane.b32.xlu0 %v1379, 127
        %v1573 = vpop.permute.xlu0 %1572
        %1574 = vrot.lane.b32.xlu0 %v1380, 127
        %v1575 = vpop.permute.xlu0 %1574
        %1576 = vrot.lane.b32.xlu0 %v1381, 127
        %v1577 = vpop.permute.xlu0 %1576
        %1578 = vrot.lane.b32.xlu0 %v1382, 127
        %v1579 = vpop.permute.xlu0 %1578
        %1580 = vrot.lane.b32.xlu0 %v1383, 127
        %v1581 = vpop.permute.xlu0 %1580
        %1582 = vrot.lane.b32.xlu0 %v1384, 127
        %v1583 = vpop.permute.xlu0 %1582
        %1584 = vrot.lane.b32.xlu0 %v1385, 127
        %v1585 = vpop.permute.xlu0 %1584
        %v1586 = vsel %vm968, %v1571, 0.0
        %v1587 = vsel %vm968, %v1573, 0.0
        %v1588 = vsel %vm968, %v1575, 0.0
        %v1589 = vsel %vm968, %v1577, 0.0
        %v1590 = vsel %vm968, %v1579, 0.0
        %v1591 = vsel %vm968, %v1581, 0.0
        %v1592 = vsel %vm968, %v1583, 0.0
        %v1593 = vsel %vm968, %v1585, 0.0
        %s1594 = scalar_lea.vmem %s5, 32
        %v1595 = vld [vmem:[%s1594] sm:$0xf]
        %v1597 = vsel %vm804, %v1595, 0
        %1599 = vmatprep.subr.mxu0 0.0
        %1600 = vmatpush1.msra.mxu0 %v1586
        %1601 = vmatprep.subr.mxu0 0.0
        %1602 = vmatpush1.msra.mxu0 %v1587
        %1603 = vmatprep.subr.mxu0 0.0
        %1604 = vmatpush1.msra.mxu0 %v1588
        %1605 = vmatprep.subr.mxu0 0.0
        %1606 = vmatpush1.msra.mxu0 %v1589
        %1607 = vmatprep.subr.mxu0 0.0
        %1608 = vmatpush1.msra.mxu0 %v1590
        %1609 = vmatprep.subr.mxu0 0.0
        %1610 = vmatpush1.msra.mxu0 %v1591
        %1611 = vmatprep.subr.mxu0 0.0
        %1612 = vmatpush1.msra.mxu0 %v1592
        %1613 = vmatprep.subr.mxu0 0.0
        %1614 = vmatpush1.msra.mxu0 %v1593
        %1615 = vmatprep.subr.mxu0 0.0
        %1616 = vmatpush1.msra.mxu0 0.0
        %1617 = vmatprep.subr.mxu0 0.0
        %1618 = vmatpush1.msra.mxu0 0.0
        %1619 = vmatprep.subr.mxu0 0.0
        %1620 = vmatpush1.msra.mxu0 0.0
        %1621 = vmatprep.subr.mxu0 0.0
        %1622 = vmatpush1.msra.mxu0 0.0
        %1623 = vmatprep.subr.mxu0 0.0
        %1624 = vmatpush1.msra.mxu0 0.0
        %1625 = vmatprep.subr.mxu0 0.0
        %1626 = vmatpush1.msra.mxu0 0.0
        %1627 = vmatprep.subr.mxu0 0.0
        %1628 = vmatpush1.msra.mxu0 0.0
        %1629 = vmatprep.subr.mxu0 0.0
        %1630 = vmatpush1.msra.mxu0 0.0
        %1631 = vmatprep.subr.mxu0 0.0
        %1632 = vmatpush1.msra.mxu0 0.0
        %1633 = vmatprep.subr.mxu0 0.0
        %1634 = vmatpush1.msra.mxu0 0.0
        %1635 = vmatprep.subr.mxu0 0.0
        %1636 = vmatpush1.msra.mxu0 0.0
        %1637 = vmatprep.subr.mxu0 0.0
        %1638 = vmatpush1.msra.mxu0 0.0
        %1639 = vmatprep.subr.mxu0 0.0
        %1640 = vmatpush1.msra.mxu0 0.0
        %1641 = vmatprep.subr.mxu0 0.0
        %1642 = vmatpush1.msra.mxu0 0.0
        %1643 = vmatprep.subr.mxu0 0.0
        %1644 = vmatpush1.msra.mxu0 0.0
        %1645 = vmatprep.subr.mxu0 0.0
        %1646 = vmatpush1.msra.mxu0 0.0
        %1647 = vmatprep.subr.mxu0 0.0
        %1648 = vmatpush1.msra.mxu0 0.0
        %1649 = vmatprep.subr.mxu0 0.0
        %1650 = vmatpush1.msra.mxu0 0.0
        %1651 = vmatprep.subr.mxu0 0.0
        %1652 = vmatpush1.msra.mxu0 0.0
        %1653 = vmatprep.subr.mxu0 0.0
        %1654 = vmatpush1.msra.mxu0 0.0
        %1655 = vmatprep.subr.mxu0 0.0
        %1656 = vmatpush1.msra.mxu0 0.0
        %1657 = vmatprep.subr.mxu0 0.0
        %1658 = vmatpush1.msra.mxu0 0.0
        %1659 = vmatprep.subr.mxu0 0.0
        %1660 = vmatpush1.msra.mxu0 0.0
        %1661 = vmatprep.subr.mxu0 0.0
        %1662 = vmatpush1.msra.mxu0 0.0
        %1663 = vmatprep.mubr.f32.mxu0 0.0
        %1664 = vmatmul.mubr.f32.gmra.mrb[0].mxu0 %v1597
        %v1665 = vpop.f32.mrb[0].mxu0
        %v1666 = vadd.f32 0.0, %v1665
        %v1667 = vpop.f32.mrb[0].mxu0
        %1668 = vdwg.mxu0
        %v1669 = vadd.f32 %v1569, %v1666
        %1670 = vst [vmem:[%s461] sm:$0xf] %v1669
        %p1671 = scmp.lt.s32.totalorder %s21, 1
        %s1672 = scalar_select %p1671, %s21, 1
        %p1673 = scmp.lt.s32.totalorder %s22, 1
        %s1674 = scalar_select %p1673, %s22, 1
        %s1675 = smul.addr %s1672, 2
        %s1676 = sadd.s32 %s1674, %s1675
        %s1677 = smul.addr %s1676, 4
        %s1678 = scalar_lea.vmem %s6, %s1677
        // Predicated region
        $region83: #{dncnn_forward.9} parent=77 // pred_check
          %p1679 = pneg %p212
        $region84: #{dncnn_forward.9} parent=77 // pred_check_branch
          %1681 = sbr.rel (%p1679) target = $region86
        $region85: #{dncnn_forward.9} parent=77 // pred_region
          _
        $region86: #{dncnn_forward.9} parent=77 // pred_fallthru
          _
      $region78: #{dncnn_forward.9} parent=5 // pred_fallthru
        _
      %p1682 = scmp.le.s32.totalorder 2, %s12
      // Predicated region
      $region87: #{dncnn_forward.9} parent=5 // pred_check
        %p1683 = pneg %p1682
      $region88: #{dncnn_forward.9} parent=5 // pred_check_branch
        %1685 = sbr.rel (%p1683) target = $region90
      $region89: #{dncnn_forward.9} parent=5 // pred_region
        %s1686 = ssub.s32 %s12, 2
        // Predicated region
        $region91: #{dncnn_forward.9} parent=89 // pred_check
          %p1687 = pneg %p218
        $region92: #{dncnn_forward.9} parent=89 // pred_check_branch
          %1689 = sbr.rel (%p1687) target = $region94
        $region93: #{dncnn_forward.9} parent=89 // pred_region
          %p1690 = scmp.lt.s32.totalorder %s23, 1
          %s1691 = scalar_select %p1690, %s23, 1
          %p1692 = scmp.lt.s32.totalorder %s24, 1
          %s1693 = scalar_select %p1692, %s24, 1
          %s1694 = smul.addr %s1691, 2
          %s1695 = sadd.s32 %s1693, %s1694
          %s1696 = smul.addr %s1695, 4
          %s1697 = scalar_lea.vmem %s6, %s1696
        $region94: #{dncnn_forward.9} parent=89 // pred_fallthru
          _
      $region90: #{dncnn_forward.9} parent=5 // pred_fallthru
        _
    $region6: #{dncnn_forward.9} parent=1 // loop_footer
      %s16 = sadd.s32 1, %s12
    $region7: #{dncnn_forward.9} parent=1 // loop_footer_branch
      %11 = sbr.rel target = $region3
    $region8: #{dncnn_forward.9} parent=1 // loop_exit
      _

// kernel: dncnn_forward.6
$region0: #{dncnn_forward.6}
  #allocation0 [shape = 'u32[]', space=smem, size = 0x4, offset = 0x4, fixed_abs, tag = 'smem constant byte address 0x4 - core index']
  #allocation1 [shape = 'u32[144,128]{1,0:T(1,128)}', space=vmem, size = 0x12000, scoped, tag = 'internal scratch']
  %s0 = inlined_call_operand.vmem [shape: f32[64,1], index: 0, kind: input, shape index: {}]
  %s1 = inlined_call_operand.vmem [shape: f32[64,1], index: 1, kind: input, shape index: {}]
  %s2 = inlined_call_operand.vmem [shape: f32[2,64,256], index: 2, kind: input, shape index: {}]
  %s3 = inlined_call_operand.vmem [shape: f32[2,4,64,16], index: 3, kind: input, shape index: {}, may-alias: {3,4}]
  %s4 = inlined_call_operand.vmem [shape: f32[2,4,64,16], index: 4, kind: input, shape index: {}, may-alias: {3,4}]
  %s5 = inlined_call_operand.vmem [shape: f32[9,64,64], index: 5, kind: input, shape index: {}]
  %s6 = inlined_call_operand.vmem [shape: f32[2,64,256], index: 6, kind: output, shape index: {0}]
  %s7 = inlined_call_operand.vmem [shape: f32[2,4,64,16], index: 7, kind: output, shape index: {1}]
  %s8 = inlined_call_operand.vmem [shape: f32[2,2,64,2], index: 8, kind: output, shape index: {2}]
  %9 = xla_tuple %s6, %s7, %s8
  %s10 = sld [smem:[#allocation0]]
  $region145: #{dncnn_forward.6} parent=0
    _
  %s12 = ssub.s32 1, %s10
  %s13 = scalar_select 0, %s12, %s10
  $region1: #{dncnn_forward.6} parent=0
    #allocation2 [shape = 'u8[65536]{0}', space=vmem, size = 0x10000, scoped, tag = 'input window, operand 2']
    #allocation3 [shape = 'u8[65536]{0}', space=vmem, size = 0x10000, scoped, tag = 'output window, operand 0']
    loop: start=0, step=1, limit=6
    $region2: #{dncnn_forward.6} parent=1 // loop_pre_header
      _
    $region3: #{dncnn_forward.6} parent=1 // loop_header
      %s15 = sphi 0, %s19
      %p16 = scmp.ge.s32.totalorder %s15, 6
      %s22 = sphi 0, %s34
      %s23 = sphi 0, %s30
      %s24 = sphi 0, %s22
      %s25 = sphi 0, %s23
      %s26 = sphi 0, %s24
      %s27 = sphi 0, %s25
      %s35 = sphi 0, %s35
      %s37 = sphi 0, %s35
      %s38 = sphi 0, %s37
      %s52 = sphi 0, %s38
      %s56 = sphi 0, %s56
      %s58 = sphi 0, %s56
      %s59 = sphi 0, %s58
      %s73 = sphi 0, %s59
      %s81 = sphi 0, %s83
      %s84 = sphi 0, %s81
      %s85 = sphi 0, %s84
      %s101 = sphi 0, %s85
      %s117 = sphi 0, %s119
      %s120 = sphi 0, %s117
      %s121 = sphi 0, %s120
      %s137 = sphi 0, %s121
      %s153 = sphi 0, %s155
      %s156 = sphi 0, %s153
      %s157 = sphi 0, %s156
      %s173 = sphi 0, %s157
      %s177 = sphi 0, %s177
      %s179 = sphi 0, %s177
      %s180 = sphi 0, %s179
      %s194 = sphi 0, %s180
      %s202 = sphi 0, %s204
      %s205 = sphi 0, %s202
      %s206 = sphi 0, %s205
      %s222 = sphi 0, %s206
      %s230 = sphi 0, %s232
      %s233 = sphi 0, %s230
      %s234 = sphi 0, %s233
      %s250 = sphi 0, %s234
      %s258 = sphi 0, %s260
      %s261 = sphi 0, %s258
      %s262 = sphi 0, %s261
      %s278 = sphi 0, %s262
    $region4: #{dncnn_forward.6} parent=1 // loop_header_branch
      %18 = sbr.rel (%p16) target = $region8
    $region5: #{dncnn_forward.6} parent=1 // loop_body
      %s20 = ssub.s32 %s15, 1
      %s21 = ssub.s32 %s15, 2
      %s28 = sadd.s32 1, %s23
      %p29 = scmp.ge.s32.totalorder %s28, 2
      %s30 = scalar_select %p29, 0, %s28
      %s31 = sadd.s32 1, %s22
      %s32 = scalar_select %p29, %s31, %s22
      %p33 = scmp.ge.s32.totalorder %s32, 2
      %s34 = scalar_select %p33, 0, %s32
      %s36 = sadd.s32 %s35, 1
      %p39 = scmp.eq.s32.totalorder %s15, 3
      %p40 = scmp.ne.s32.totalorder %s35, %s37
      %p41 = scmp.eq.s32.totalorder %s15, 0
      %p42 = por %p40, %p41
      %p43 = scmp.ne.s32.totalorder %s35, %s37
      %p44 = scmp.eq.s32.totalorder %s20, 3
      %p45 = por %p43, %p44
      %p46 = scmp.ne.s32.totalorder %s37, %s38
      %p47 = scmp.eq.s32.totalorder %s20, 0
      %p48 = por %p46, %p47
      %p49 = scmp.ne.s32.totalorder %s37, %s38
      %p50 = scmp.eq.s32.totalorder %s21, 3
      %p51 = por %p49, %p50
      %p53 = scmp.ne.s32.totalorder %s38, %s52
      %p54 = scmp.eq.s32.totalorder %s21, 0
      %p55 = por %p53, %p54
      %s57 = sadd.s32 %s56, 1
      %p60 = scmp.eq.s32.totalorder %s15, 3
      %p61 = scmp.ne.s32.totalorder %s56, %s58
      %p62 = scmp.eq.s32.totalorder %s15, 0
      %p63 = por %p61, %p62
      %p64 = scmp.ne.s32.totalorder %s56, %s58
      %p65 = scmp.eq.s32.totalorder %s20, 3
      %p66 = por %p64, %p65
      %p67 = scmp.ne.s32.totalorder %s58, %s59
      %p68 = scmp.eq.s32.totalorder %s20, 0
      %p69 = por %p67, %p68
      %p70 = scmp.ne.s32.totalorder %s58, %s59
      %p71 = scmp.eq.s32.totalorder %s21, 3
      %p72 = por %p70, %p71
      %p74 = scmp.ne.s32.totalorder %s59, %s73
      %p75 = scmp.eq.s32.totalorder %s21, 0
      %p76 = por %p74, %p75
      %s77 = ssub.s32 %s22, %s34
      %s78 = ssub.s32 %s23, %s30
      %s79 = sor.u32 %s77, %s78
      %p80 = scmp.eq.s32.totalorder %s79, 0
      %s82 = sadd.s32 %s81, 1
      %s83 = scalar_select %p80, %s81, %s82
      %p86 = pneg %p80
      %p87 = scmp.eq.s32.totalorder %s15, 3
      %p88 = por %p86, %p87
      %p89 = scmp.ne.s32.totalorder %s81, %s84
      %p90 = scmp.eq.s32.totalorder %s15, 0
      %p91 = por %p89, %p90
      %p92 = scmp.ne.s32.totalorder %s81, %s84
      %p93 = scmp.eq.s32.totalorder %s20, 3
      %p94 = por %p92, %p93
      %p95 = scmp.ne.s32.totalorder %s84, %s85
      %p96 = scmp.eq.s32.totalorder %s20, 0
      %p97 = por %p95, %p96
      %p98 = scmp.ne.s32.totalorder %s84, %s85
      %p99 = scmp.eq.s32.totalorder %s21, 3
      %p100 = por %p98, %p99
      %p102 = scmp.ne.s32.totalorder %s85, %s101
      %p103 = scmp.eq.s32.totalorder %s21, 0
      %p104 = por %p102, %p103
      %s105 = smul.u32 %s23, 2
      %s106 = ssub.s32 %s105, 1
      %p107 = scmp.gt.s32.totalorder %s106, 0
      %s108 = scalar_select %p107, %s106, 0
      %s109 = smul.u32 %s30, 2
      %s110 = ssub.s32 %s109, 1
      %p111 = scmp.gt.s32.totalorder %s110, 0
      %s112 = scalar_select %p111, %s110, 0
      %s113 = ssub.s32 %s22, %s34
      %s114 = ssub.s32 %s108, %s112
      %s115 = sor.u32 %s113, %s114
      %p116 = scmp.eq.s32.totalorder %s115, 0
      %s118 = sadd.s32 %s117, 1
      %s119 = scalar_select %p116, %s117, %s118
      %p122 = pneg %p116
      %p123 = scmp.eq.s32.totalorder %s15, 3
      %p124 = por %p122, %p123
      %p125 = scmp.ne.s32.totalorder %s117, %s120
      %p126 = scmp.eq.s32.totalorder %s15, 0
      %p127 = por %p125, %p126
      %p128 = scmp.ne.s32.totalorder %s117, %s120
      %p129 = scmp.eq.s32.totalorder %s20, 3
      %p130 = por %p128, %p129
      %p131 = scmp.ne.s32.totalorder %s120, %s121
      %p132 = scmp.eq.s32.totalorder %s20, 0
      %p133 = por %p131, %p132
      %p134 = scmp.ne.s32.totalorder %s120, %s121
      %p135 = scmp.eq.s32.totalorder %s21, 3
      %p136 = por %p134, %p135
      %p138 = scmp.ne.s32.totalorder %s121, %s137
      %p139 = scmp.eq.s32.totalorder %s21, 0
      %p140 = por %p138, %p139
      %s141 = smul.u32 %s23, 2
      %s142 = sadd.s32 %s141, 2
      %p143 = scmp.lt.s32.totalorder %s142, 3
      %s144 = scalar_select %p143, %s142, 3
      %s145 = smul.u32 %s30, 2
      %s146 = sadd.s32 %s145, 2
      %p147 = scmp.lt.s32.totalorder %s146, 3
      %s148 = scalar_select %p147, %s146, 3
      %s149 = ssub.s32 %s22, %s34
      %s150 = ssub.s32 %s144, %s148
      %s151 = sor.u32 %s149, %s150
      %p152 = scmp.eq.s32.totalorder %s151, 0
      %s154 = sadd.s32 %s153, 1
      %s155 = scalar_select %p152, %s153, %s154
      %p158 = pneg %p152
      %p159 = scmp.eq.s32.totalorder %s15, 3
      %p160 = por %p158, %p159
      %p161 = scmp.ne.s32.totalorder %s153, %s156
      %p162 = scmp.eq.s32.totalorder %s15, 0
      %p163 = por %p161, %p162
      %p164 = scmp.ne.s32.totalorder %s153, %s156
      %p165 = scmp.eq.s32.totalorder %s20, 3
      %p166 = por %p164, %p165
      %p167 = scmp.ne.s32.totalorder %s156, %s157
      %p168 = scmp.eq.s32.totalorder %s20, 0
      %p169 = por %p167, %p168
      %p170 = scmp.ne.s32.totalorder %s156, %s157
      %p171 = scmp.eq.s32.totalorder %s21, 3
      %p172 = por %p170, %p171
      %p174 = scmp.ne.s32.totalorder %s157, %s173
      %p175 = scmp.eq.s32.totalorder %s21, 0
      %p176 = por %p174, %p175
      %s178 = sadd.s32 %s177, 1
      %p181 = scmp.eq.s32.totalorder %s15, 3
      %p182 = scmp.ne.s32.totalorder %s177, %s179
      %p183 = scmp.eq.s32.totalorder %s15, 0
      %p184 = por %p182, %p183
      %p185 = scmp.ne.s32.totalorder %s177, %s179
      %p186 = scmp.eq.s32.totalorder %s20, 3
      %p187 = por %p185, %p186
      %p188 = scmp.ne.s32.totalorder %s179, %s180
      %p189 = scmp.eq.s32.totalorder %s20, 0
      %p190 = por %p188, %p189
      %p191 = scmp.ne.s32.totalorder %s179, %s180
      %p192 = scmp.eq.s32.totalorder %s21, 3
      %p193 = por %p191, %p192
      %p195 = scmp.ne.s32.totalorder %s180, %s194
      %p196 = scmp.eq.s32.totalorder %s21, 0
      %p197 = por %p195, %p196
      %s198 = ssub.s32 %s22, %s34
      %s199 = ssub.s32 %s23, %s30
      %s200 = sor.u32 %s198, %s199
      %p201 = scmp.eq.s32.totalorder %s200, 0
      %s203 = sadd.s32 %s202, 1
      %s204 = scalar_select %p201, %s202, %s203
      %p207 = pneg %p201
      %p208 = scmp.eq.s32.totalorder %s15, 3
      %p209 = por %p207, %p208
      %p210 = scmp.ne.s32.totalorder %s202, %s205
      %p211 = scmp.eq.s32.totalorder %s15, 0
      %p212 = por %p210, %p211
      %p213 = scmp.ne.s32.totalorder %s202, %s205
      %p214 = scmp.eq.s32.totalorder %s20, 3
      %p215 = por %p213, %p214
      %p216 = scmp.ne.s32.totalorder %s205, %s206
      %p217 = scmp.eq.s32.totalorder %s20, 0
      %p218 = por %p216, %p217
      %p219 = scmp.ne.s32.totalorder %s205, %s206
      %p220 = scmp.eq.s32.totalorder %s21, 3
      %p221 = por %p219, %p220
      %p223 = scmp.ne.s32.totalorder %s206, %s222
      %p224 = scmp.eq.s32.totalorder %s21, 0
      %p225 = por %p223, %p224
      %s226 = ssub.s32 %s22, %s34
      %s227 = ssub.s32 %s23, %s30
      %s228 = sor.u32 %s226, %s227
      %p229 = scmp.eq.s32.totalorder %s228, 0
      %s231 = sadd.s32 %s230, 1
      %s232 = scalar_select %p229, %s230, %s231
      %p235 = pneg %p229
      %p236 = scmp.eq.s32.totalorder %s15, 3
      %p237 = por %p235, %p236
      %p238 = scmp.ne.s32.totalorder %s230, %s233
      %p239 = scmp.eq.s32.totalorder %s15, 0
      %p240 = por %p238, %p239
      %p241 = scmp.ne.s32.totalorder %s230, %s233
      %p242 = scmp.eq.s32.totalorder %s20, 3
      %p243 = por %p241, %p242
      %p244 = scmp.ne.s32.totalorder %s233, %s234
      %p245 = scmp.eq.s32.totalorder %s20, 0
      %p246 = por %p244, %p245
      %p247 = scmp.ne.s32.totalorder %s233, %s234
      %p248 = scmp.eq.s32.totalorder %s21, 3
      %p249 = por %p247, %p248
      %p251 = scmp.ne.s32.totalorder %s234, %s250
      %p252 = scmp.eq.s32.totalorder %s21, 0
      %p253 = por %p251, %p252
      %s254 = ssub.s32 %s22, %s34
      %s255 = ssub.s32 %s23, %s30
      %s256 = sor.u32 %s254, %s255
      %p257 = scmp.eq.s32.totalorder %s256, 0
      %s259 = sadd.s32 %s258, 1
      %s260 = scalar_select %p257, %s258, %s259
      %p263 = pneg %p257
      %p264 = scmp.eq.s32.totalorder %s15, 3
      %p265 = por %p263, %p264
      %p266 = scmp.ne.s32.totalorder %s258, %s261
      %p267 = scmp.eq.s32.totalorder %s15, 0
      %p268 = por %p266, %p267
      %p269 = scmp.ne.s32.totalorder %s258, %s261
      %p270 = scmp.eq.s32.totalorder %s20, 3
      %p271 = por %p269, %p270
      %p272 = scmp.ne.s32.totalorder %s261, %s262
      %p273 = scmp.eq.s32.totalorder %s20, 0
      %p274 = por %p272, %p273
      %p275 = scmp.ne.s32.totalorder %s261, %s262
      %p276 = scmp.eq.s32.totalorder %s21, 3
      %p277 = por %p275, %p276
      %p279 = scmp.ne.s32.totalorder %s262, %s278
      %p280 = scmp.eq.s32.totalorder %s21, 0
      %p281 = por %p279, %p280
      %p282 = scmp.le.s32.totalorder 1, %s15
      %p283 = scmp.lt.s32.totalorder %s15, 5
      %p284 = pnand %p282, %p283
      %p285 = pneg %p284
      // Predicated region
      $region9: #{dncnn_forward.6} parent=5 // pred_check
        _
      $region10: #{dncnn_forward.6} parent=5 // pred_check_branch
        %287 = sbr.rel (%p284) target = $region12
      $region11: #{dncnn_forward.6} parent=5 // pred_region
        %s288 = ssub.s32 %s15, 1
        // Predicated region
        $region13: #{dncnn_forward.6} parent=11 // pred_check
          %p289 = pneg %p48
        $region14: #{dncnn_forward.6} parent=11 // pred_check_branch
          %291 = sbr.rel (%p289) target = $region16
        $region15: #{dncnn_forward.6} parent=11 // pred_region
          _
        $region16: #{dncnn_forward.6} parent=11 // pred_fallthru
          _
        // Predicated region
        $region17: #{dncnn_forward.6} parent=11 // pred_check
          %p292 = pneg %p69
        $region18: #{dncnn_forward.6} parent=11 // pred_check_branch
          %294 = sbr.rel (%p292) target = $region20
        $region19: #{dncnn_forward.6} parent=11 // pred_region
          _
        $region20: #{dncnn_forward.6} parent=11 // pred_fallthru
          _
        // Predicated region
        $region21: #{dncnn_forward.6} parent=11 // pred_check
          %p295 = pneg %p190
        $region22: #{dncnn_forward.6} parent=11 // pred_check_branch
          %297 = sbr.rel (%p295) target = $region24
        $region23: #{dncnn_forward.6} parent=11 // pred_region
          _
        $region24: #{dncnn_forward.6} parent=11 // pred_fallthru
          _
      $region12: #{dncnn_forward.6} parent=5 // pred_fallthru
        _
      %p298 = scmp.lt.s32.totalorder %s15, 4
      // Predicated region
      $region25: #{dncnn_forward.6} parent=5 // pred_check
        %p299 = pneg %p298
      $region26: #{dncnn_forward.6} parent=5 // pred_check_branch
        %301 = sbr.rel (%p299) target = $region28
      $region27: #{dncnn_forward.6} parent=5 // pred_region
        // Predicated region
        $region29: #{dncnn_forward.6} parent=27 // pred_check
          %p302 = pneg %p91
        $region30: #{dncnn_forward.6} parent=27 // pred_check_branch
          %304 = sbr.rel (%p302) target = $region32
        $region31: #{dncnn_forward.6} parent=27 // pred_region
          %s305 = sand.u32 %s81, 1
          %s306 = sand.u32 %s81, 1
          %s307 = smul.addr %s306, 64
          %s308 = scalar_lea.vmem [#allocation2], %s307
          %s309 = smul.addr %s22, 16
          %s310 = sadd.s32 %s23, %s309
          %s311 = smul.addr %s310, 8
          %s312 = scalar_lea.vmem %s2, %s311
          // Predicated region
          $region33: #{dncnn_forward.6} parent=31 // pred_check
            _
          $region34: #{dncnn_forward.6} parent=31 // pred_check_branch
            %314 = sbr.rel (0) target = $region36
          $region35: #{dncnn_forward.6} parent=31 // pred_region
            // Predicated region
            $region37: #{dncnn_forward.6} parent=35 // pred_check
              _
            $region38: #{dncnn_forward.6} parent=35 // pred_check_branch
              %316 = sbr.rel (0) target = $region40
            $region39: #{dncnn_forward.6} parent=35 // pred_region
              // Predicated region
              $region52: #{dncnn_forward.6} parent=39 // pred_check
                _
              $region53: #{dncnn_forward.6} parent=39 // pred_check_branch
                %345 = sbr.rel (0) target = $region55
              $region54: #{dncnn_forward.6} parent=39 // pred_region
                loop: start=0, step=1, limit=1
                $region56: #{dncnn_forward.6} parent=54 // loop_pre_header
                  _
                $region57: #{dncnn_forward.6} parent=54 // loop_header
                  %s347 = sphi 0, %s351
                  %p348 = scmp.ge.s32.totalorder %s347, 1
                  %s352 = sphi %s312, %s312
                  %s353 = sphi %s308, %s308
                $region58: #{dncnn_forward.6} parent=54 // loop_header_branch
                  %350 = sbr.rel (%p348) target = $region62
                $region59: #{dncnn_forward.6} parent=54 // loop_body
                  %v354 = vld [vmem:[%s352] sm:$0xff]
                  %355 = vst [vmem:[%s353] sm:$0xff] %v354
                  %v356 = vld [vmem:[%s352 + $0x10] sm:$0xff]
                  %357 = vst [vmem:[%s353 + $0x8] sm:$0xff] %v356
                  %v358 = vld [vmem:[%s352 + $0x20] sm:$0xff]
                  %359 = vst [vmem:[%s353 + $0x10] sm:$0xff] %v358
                  %v360 = vld [vmem:[%s352 + $0x30] sm:$0xff]
                  %361 = vst [vmem:[%s353 + $0x18] sm:$0xff] %v360
                  %v362 = vld [vmem:[%s352 + $0x40] sm:$0xff]
                  %363 = vst [vmem:[%s353 + $0x20] sm:$0xff] %v362
                  %v364 = vld [vmem:[%s352 + $0x50] sm:$0xff]
                  %365 = vst [vmem:[%s353 + $0x28] sm:$0xff] %v364
                  %v366 = vld [vmem:[%s352 + $0x60] sm:$0xff]
                  %367 = vst [vmem:[%s353 + $0x30] sm:$0xff] %v366
                  %v368 = vld [vmem:[%s352 + $0x70] sm:$0xff]
                  %369 = vst [vmem:[%s353 + $0x38] sm:$0xff] %v368
                $region60: #{dncnn_forward.6} parent=54 // loop_footer
                  %s351 = sadd.s32 1, %s347
                $region61: #{dncnn_forward.6} parent=54 // loop_footer_branch
                  %346 = sbr.rel target = $region57
                $region62: #{dncnn_forward.6} parent=54 // loop_exit
                  _
              $region55: #{dncnn_forward.6} parent=39 // pred_fallthru
                _
              // Predicated region
              $region63: #{dncnn_forward.6} parent=39 // pred_check
                _
              $region64: #{dncnn_forward.6} parent=39 // pred_check_branch
                %371 = sbr.rel target = $region66
              $region65: #{dncnn_forward.6} parent=39 // pred_region
                _
              $region66: #{dncnn_forward.6} parent=39 // pred_fallthru
                _
            $region40: #{dncnn_forward.6} parent=35 // pred_fallthru
              _
            // Predicated region
            $region41: #{dncnn_forward.6} parent=35 // pred_check
              _
            $region42: #{dncnn_forward.6} parent=35 // pred_check_branch
              %318 = sbr.rel target = $region44
            $region43: #{dncnn_forward.6} parent=35 // pred_region
              loop: start=0, step=1, limit=1
              $region45: #{dncnn_forward.6} parent=43 // loop_pre_header
                _
              $region46: #{dncnn_forward.6} parent=43 // loop_header
                %s321 = sphi 0, %s325
                %p322 = scmp.ge.s32.totalorder %s321, 1
                %s326 = sphi %s312, %s312
                %s327 = sphi %s308, %s308
              $region47: #{dncnn_forward.6} parent=43 // loop_header_branch
                %324 = sbr.rel (%p322) target = $region51
              $region48: #{dncnn_forward.6} parent=43 // loop_body
                %v328 = vld [vmem:[%s326] sm:$0xff]
                %329 = vst [vmem:[%s327] sm:$0xff] %v328
                %v330 = vld [vmem:[%s326 + $0x10] sm:$0xff]
                %331 = vst [vmem:[%s327 + $0x8] sm:$0xff] %v330
                %v332 = vld [vmem:[%s326 + $0x20] sm:$0xff]
                %333 = vst [vmem:[%s327 + $0x10] sm:$0xff] %v332
                %v334 = vld [vmem:[%s326 + $0x30] sm:$0xff]
                %335 = vst [vmem:[%s327 + $0x18] sm:$0xff] %v334
                %v336 = vld [vmem:[%s326 + $0x40] sm:$0xff]
                %337 = vst [vmem:[%s327 + $0x20] sm:$0xff] %v336
                %v338 = vld [vmem:[%s326 + $0x50] sm:$0xff]
                %339 = vst [vmem:[%s327 + $0x28] sm:$0xff] %v338
                %v340 = vld [vmem:[%s326 + $0x60] sm:$0xff]
                %341 = vst [vmem:[%s327 + $0x30] sm:$0xff] %v340
                %v342 = vld [vmem:[%s326 + $0x70] sm:$0xff]
                %343 = vst [vmem:[%s327 + $0x38] sm:$0xff] %v342
              $region49: #{dncnn_forward.6} parent=43 // loop_footer
                %s325 = sadd.s32 1, %s321
              $region50: #{dncnn_forward.6} parent=43 // loop_footer_branch
                %320 = sbr.rel target = $region46
              $region51: #{dncnn_forward.6} parent=43 // loop_exit
                _
            $region44: #{dncnn_forward.6} parent=35 // pred_fallthru
              _
          $region36: #{dncnn_forward.6} parent=31 // pred_fallthru
            _
          %372 = vnop
        $region32: #{dncnn_forward.6} parent=27 // pred_fallthru
          _
        // Predicated region
        $region67: #{dncnn_forward.6} parent=27 // pred_check
          %p373 = pneg %p127
        $region68: #{dncnn_forward.6} parent=27 // pred_check_branch
          %375 = sbr.rel (%p373) target = $region70
        $region69: #{dncnn_forward.6} parent=27 // pred_region
          %s376 = smul.u32 %s23, 2
          %s377 = ssub.s32 %s376, 1
          %p378 = scmp.gt.s32.totalorder %s377, 0
          %s379 = scalar_select %p378, %s377, 0
          %p380 = scmp.lt.s32.totalorder %s22, 1
          %s381 = scalar_select %p380, %s22, 1
          %p382 = scmp.lt.s32.totalorder %s379, 3
          %s383 = scalar_select %p382, %s379, 3
          %s384 = smul.addr %s383, 8
          %s385 = smul.addr %s381, 32
          %s386 = sadd.s32 %s384, %s385
          %s387 = smul.addr %s386, 8
          %s388 = scalar_lea.vmem %s3, %s387
          %s389 = smul.u32 %s23, 2
          %s390 = ssub.s32 %s389, 1
          %p391 = scmp.gt.s32.totalorder %s390, 0
          %s392 = scalar_select %p391, %s390, 0
        $region70: #{dncnn_forward.6} parent=27 // pred_fallthru
          _
        // Predicated region
        $region71: #{dncnn_forward.6} parent=27 // pred_check
          %p393 = pneg %p163
        $region72: #{dncnn_forward.6} parent=27 // pred_check_branch
          %395 = sbr.rel (%p393) target = $region74
        $region73: #{dncnn_forward.6} parent=27 // pred_region
          %s396 = smul.u32 %s23, 2
          %s397 = sadd.s32 %s396, 2
          %p398 = scmp.lt.s32.totalorder %s397, 3
          %s399 = scalar_select %p398, %s397, 3
          %p400 = scmp.lt.s32.totalorder %s22, 1
          %s401 = scalar_select %p400, %s22, 1
          %p402 = scmp.lt.s32.totalorder %s399, 3
          %s403 = scalar_select %p402, %s399, 3
          %s404 = smul.addr %s403, 8
          %s405 = smul.addr %s401, 32
          %s406 = sadd.s32 %s404, %s405
          %s407 = smul.addr %s406, 8
          %s408 = scalar_lea.vmem %s4, %s407
          %s409 = smul.u32 %s23, 2
          %s410 = sadd.s32 %s409, 2
          %p411 = scmp.lt.s32.totalorder %s410, 3
          %s412 = scalar_select %p411, %s410, 3
        $region74: #{dncnn_forward.6} parent=27 // pred_fallthru
          _
      $region28: #{dncnn_forward.6} parent=5 // pred_fallthru
        _
      %p413 = scmp.le.s32.totalorder 1, %s15
      %p414 = scmp.lt.s32.totalorder %s15, 5
      %p415 = pnand %p413, %p414
      %p416 = pneg %p415
      // Predicated region
      $region75: #{dncnn_forward.6} parent=5 // pred_check
        _
      $region76: #{dncnn_forward.6} parent=5 // pred_check_branch
        %418 = sbr.rel (%p415) target = $region78
      $region77: #{dncnn_forward.6} parent=5 // pred_region
        %s419 = ssub.s32 %s15, 1
        %s420 = sand.u32 %s84, 1
        %s421 = sand.u32 %s84, 1
        %s422 = smul.addr %s421, 64
        %s423 = scalar_lea.vmem [#allocation2], %s422
        // Predicated region
        $region79: #{dncnn_forward.6} parent=77 // pred_check
          %p424 = pneg %p97
        $region80: #{dncnn_forward.6} parent=77 // pred_check_branch
          %426 = sbr.rel (%p424) target = $region82
        $region81: #{dncnn_forward.6} parent=77 // pred_region
          _
        $region82: #{dncnn_forward.6} parent=77 // pred_fallthru
          _
        %p427 = pneg %p48
        %p428 = pneg %p45
        %p429 = pneg %p69
        %p430 = pneg %p66
        %s431 = sand.u32 %s84, 1
        %s432 = sand.u32 %s84, 1
        %s433 = smul.addr %s432, 64
        %s434 = scalar_lea.vmem [#allocation2], %s433
        %p435 = pneg %p97
        %p436 = pneg %p94
        %s437 = smul.u32 %s25, 2
        %s438 = ssub.s32 %s437, 1
        %p439 = scmp.gt.s32.totalorder %s438, 0
        %s440 = scalar_select %p439, %s438, 0
        %p441 = scmp.lt.s32.totalorder %s24, 1
        %s442 = scalar_select %p441, %s24, 1
        %p443 = scmp.lt.s32.totalorder %s440, 3
        %s444 = scalar_select %p443, %s440, 3
        %s445 = smul.addr %s444, 8
        %s446 = smul.addr %s442, 32
        %s447 = sadd.s32 %s445, %s446
        %s448 = smul.addr %s447, 8
        %s449 = scalar_lea.vmem %s3, %s448
        %p450 = pneg %p133
        %p451 = pneg %p130
        %s452 = smul.u32 %s25, 2
        %s453 = sadd.s32 %s452, 2
        %p454 = scmp.lt.s32.totalorder %s453, 3
        %s455 = scalar_select %p454, %s453, 3
        %p456 = scmp.lt.s32.totalorder %s24, 1
        %s457 = scalar_select %p456, %s24, 1
        %p458 = scmp.lt.s32.totalorder %s455, 3
        %s459 = scalar_select %p458, %s455, 3
        %s460 = smul.addr %s459, 8
        %s461 = smul.addr %s457, 32
        %s462 = sadd.s32 %s460, %s461
        %s463 = smul.addr %s462, 8
        %s464 = scalar_lea.vmem %s4, %s463
        %p465 = pneg %p169
        %p466 = pneg %p166
        %p467 = pneg %p190
        %p468 = pneg %p187
        %p469 = pneg %p218
        %p470 = pneg %p215
        %s471 = sand.u32 %s205, 1
        %s472 = sand.u32 %s205, 1
        %s473 = smul.addr %s472, 64
        %s474 = scalar_lea.vmem [#allocation3], %s473
        %p475 = pneg %p246
        %p476 = pneg %p243
        %s477 = smul.u32 2, %s25
        %p478 = scmp.lt.s32.totalorder %s24, 1
        %s479 = scalar_select %p478, %s24, 1
        %p480 = scmp.lt.s32.totalorder %s477, 3
        %s481 = scalar_select %p480, %s477, 3
        %s482 = smul.addr %s481, 8
        %s483 = smul.addr %s479, 32
        %s484 = sadd.s32 %s482, %s483
        %s485 = smul.addr %s484, 8
        %s486 = scalar_lea.vmem %s7, %s485
        %p487 = pneg %p274
        %p488 = pneg %p271
        %p489 = scmp.lt.s32.totalorder %s24, 1
        %s490 = scalar_select %p489, %s24, 1
        %p491 = scmp.lt.s32.totalorder %s25, 1
        %s492 = scalar_select %p491, %s25, 1
        %s493 = smul.addr %s492, 8
        %s494 = smul.addr %s490, 16
        %s495 = sadd.s32 %s493, %s494
        %s496 = smul.addr %s495, 8
        %s497 = scalar_lea.vmem %s8, %s496
        %s498 = smul.u32 %s25, 2
        %s499 = ssub.s32 %s498, 1
        %p500 = scmp.gt.s32.totalorder %s499, 0
        %s501 = scalar_select %p500, %s499, 0
        %p502 = scmp.lt.s32.totalorder %s24, 1
        %s503 = scalar_select %p502, %s24, 1
        %p504 = scmp.lt.s32.totalorder %s501, 3
        %s505 = scalar_select %p504, %s501, 3
        %s506 = smul.addr %s505, 8
        %s507 = smul.addr %s503, 32
        %s508 = sadd.s32 %s506, %s507
        %s509 = smul.addr %s508, 8
        %s510 = scalar_lea.vmem %s3, %s509
        %s511 = smul.u32 %s25, 2
        %s512 = ssub.s32 %s511, 1
        %p513 = scmp.gt.s32.totalorder %s512, 0
        %s514 = scalar_select %p513, %s512, 0
        %s515 = smul.u32 %s25, 2
        %s516 = sadd.s32 %s515, 2
        %p517 = scmp.lt.s32.totalorder %s516, 3
        %s518 = scalar_select %p517, %s516, 3
        %p519 = scmp.lt.s32.totalorder %s24, 1
        %s520 = scalar_select %p519, %s24, 1
        %p521 = scmp.lt.s32.totalorder %s518, 3
        %s522 = scalar_select %p521, %s518, 3
        %s523 = smul.addr %s522, 8
        %s524 = smul.addr %s520, 32
        %s525 = sadd.s32 %s523, %s524
        %s526 = smul.addr %s525, 8
        %s527 = scalar_lea.vmem %s4, %s526
        %s528 = smul.u32 %s25, 2
        %s529 = sadd.s32 %s528, 2
        %p530 = scmp.lt.s32.totalorder %s529, 3
        %s531 = scalar_select %p530, %s529, 3
        %s532 = smul.u32 2, %s25
        %p533 = scmp.lt.s32.totalorder %s24, 1
        %s534 = scalar_select %p533, %s24, 1
        %p535 = scmp.lt.s32.totalorder %s532, 3
        %s536 = scalar_select %p535, %s532, 3
        %s537 = smul.addr %s536, 8
        %s538 = smul.addr %s534, 32
        %s539 = sadd.s32 %s537, %s538
        %s540 = smul.addr %s539, 8
        %s541 = scalar_lea.vmem %s7, %s540
        %s542 = smul.u32 2, %s25
        %p543 = scmp.lt.s32.totalorder %s24, 1
        %s544 = scalar_select %p543, %s24, 1
        %p545 = scmp.lt.s32.totalorder %s25, 1
        %s546 = scalar_select %p545, %s25, 1
        %s547 = smul.addr %s546, 8
        %s548 = smul.addr %s544, 16
        %s549 = sadd.s32 %s547, %s548
        %s550 = smul.addr %s549, 8
        %s551 = scalar_lea.vmem %s8, %s550
        %v552 = vld [vmem:[%s0] sm:$0xff]
        %v553 = vld [vmem:[%s0 + $0x8] sm:$0xff]
        %v554 = vld [vmem:[%s0 + $0x10] sm:$0xff]
        %v555 = vld [vmem:[%s0 + $0x18] sm:$0xff]
        %v556 = vld [vmem:[%s0 + $0x20] sm:$0xff]
        %v557 = vld [vmem:[%s0 + $0x28] sm:$0xff]
        %v558 = vld [vmem:[%s0 + $0x30] sm:$0xff]
        %v559 = vld [vmem:[%s0 + $0x38] sm:$0xff]
        %v560 = vld [vmem:[%s1] sm:$0xff]
        %v561 = vld [vmem:[%s1 + $0x8] sm:$0xff]
        %v562 = vld [vmem:[%s1 + $0x10] sm:$0xff]
        %v563 = vld [vmem:[%s1 + $0x18] sm:$0xff]
        %v564 = vld [vmem:[%s1 + $0x20] sm:$0xff]
        %v565 = vld [vmem:[%s1 + $0x28] sm:$0xff]
        %v566 = vld [vmem:[%s1 + $0x30] sm:$0xff]
        %v567 = vld [vmem:[%s1 + $0x38] sm:$0xff]
        %v568 = vld [vmem:[%s423] sm:$0xff]
        %v569 = vld [vmem:[%s423 + $0x8] sm:$0xff]
        %v570 = vld [vmem:[%s423 + $0x10] sm:$0xff]
        %v571 = vld [vmem:[%s423 + $0x18] sm:$0xff]
        %v572 = vld [vmem:[%s423 + $0x20] sm:$0xff]
        %v573 = vld [vmem:[%s423 + $0x28] sm:$0xff]
        %v574 = vld [vmem:[%s423 + $0x30] sm:$0xff]
        %v575 = vld [vmem:[%s423 + $0x38] sm:$0xff]
        %577 = vset.pattern.permute.xlu0 0
        %578 = vperm.xlu0 %577, %v552
        %v579 = vpop.permute.xlu0 %578
        %582 = vset.pattern.permute.xlu0 0
        %583 = vperm.xlu0 %582, %v553
        %v584 = vpop.permute.xlu0 %583
        %587 = vset.pattern.permute.xlu0 0
        %588 = vperm.xlu0 %587, %v554
        %v589 = vpop.permute.xlu0 %588
        %592 = vset.pattern.permute.xlu0 0
        %593 = vperm.xlu0 %592, %v555
        %v594 = vpop.permute.xlu0 %593
        %597 = vset.pattern.permute.xlu0 0
        %598 = vperm.xlu0 %597, %v556
        %v599 = vpop.permute.xlu0 %598
        %602 = vset.pattern.permute.xlu0 0
        %603 = vperm.xlu0 %602, %v557
        %v604 = vpop.permute.xlu0 %603
        %607 = vset.pattern.permute.xlu0 0
        %608 = vperm.xlu0 %607, %v558
        %v609 = vpop.permute.xlu0 %608
        %612 = vset.pattern.permute.xlu0 0
        %613 = vperm.xlu0 %612, %v559
        %v614 = vpop.permute.xlu0 %613
        %v616 = vmul.f32 %v568, %v579
        %v617 = vmul.f32 %v569, %v584
        %v618 = vmul.f32 %v570, %v589
        %v619 = vmul.f32 %v571, %v594
        %v620 = vmul.f32 %v572, %v599
        %v621 = vmul.f32 %v573, %v604
        %v622 = vmul.f32 %v574, %v609
        %v623 = vmul.f32 %v575, %v614
        %625 = vset.pattern.permute.xlu0 0
        %626 = vperm.xlu0 %625, %v560
        %v627 = vpop.permute.xlu0 %626
        %630 = vset.pattern.permute.xlu0 0
        %631 = vperm.xlu0 %630, %v561
        %v632 = vpop.permute.xlu0 %631
        %635 = vset.pattern.permute.xlu0 0
        %636 = vperm.xlu0 %635, %v562
        %v637 = vpop.permute.xlu0 %636
        %640 = vset.pattern.permute.xlu0 0
        %641 = vperm.xlu0 %640, %v563
        %v642 = vpop.permute.xlu0 %641
        %645 = vset.pattern.permute.xlu0 0
        %646 = vperm.xlu0 %645, %v564
        %v647 = vpop.permute.xlu0 %646
        %650 = vset.pattern.permute.xlu0 0
        %651 = vperm.xlu0 %650, %v565
        %v652 = vpop.permute.xlu0 %651
        %655 = vset.pattern.permute.xlu0 0
        %656 = vperm.xlu0 %655, %v566
        %v657 = vpop.permute.xlu0 %656
        %660 = vset.pattern.permute.xlu0 0
        %661 = vperm.xlu0 %660, %v567
        %v662 = vpop.permute.xlu0 %661
        %v664 = vadd.f32 %v616, %v627
        %v665 = vadd.f32 %v617, %v632
        %v666 = vadd.f32 %v618, %v637
        %v667 = vadd.f32 %v619, %v642
        %v668 = vadd.f32 %v620, %v647
        %v669 = vadd.f32 %v621, %v652
        %v670 = vadd.f32 %v622, %v657
        %v671 = vadd.f32 %v623, %v662
        %v672 = vmax.f32 %v664, 0.0
        %v673 = vmax.f32 %v665, 0.0
        %v674 = vmax.f32 %v666, 0.0
        %v675 = vmax.f32 %v667, 0.0
        %v676 = vmax.f32 %v668, 0.0
        %v677 = vmax.f32 %v669, 0.0
        %v678 = vmax.f32 %v670, 0.0
        %v679 = vmax.f32 %v671, 0.0
        %v680 = vld [vmem:[%s510] sm:$0xff]
        %v681 = vld [vmem:[%s510 + $0x8] sm:$0xff]
        %v682 = vld [vmem:[%s510 + $0x10] sm:$0xff]
        %v683 = vld [vmem:[%s510 + $0x18] sm:$0xff]
        %v684 = vld [vmem:[%s510 + $0x20] sm:$0xff]
        %v685 = vld [vmem:[%s510 + $0x28] sm:$0xff]
        %v686 = vld [vmem:[%s510 + $0x30] sm:$0xff]
        %v687 = vld [vmem:[%s510 + $0x38] sm:$0xff]
        %v688 = vmul.f32 %v680, %v579
        %v689 = vmul.f32 %v681, %v584
        %v690 = vmul.f32 %v682, %v589
        %v691 = vmul.f32 %v683, %v594
        %v692 = vmul.f32 %v684, %v599
        %v693 = vmul.f32 %v685, %v604
        %v694 = vmul.f32 %v686, %v609
        %v695 = vmul.f32 %v687, %v614
        %v696 = vadd.f32 %v688, %v627
        %v697 = vadd.f32 %v689, %v632
        %v698 = vadd.f32 %v690, %v637
        %v699 = vadd.f32 %v691, %v642
        %v700 = vadd.f32 %v692, %v647
        %v701 = vadd.f32 %v693, %v652
        %v702 = vadd.f32 %v694, %v657
        %v703 = vadd.f32 %v695, %v662
        %v704 = vmax.f32 %v696, 0.0
        %v705 = vmax.f32 %v697, 0.0
        %v706 = vmax.f32 %v698, 0.0
        %v707 = vmax.f32 %v699, 0.0
        %v708 = vmax.f32 %v700, 0.0
        %v709 = vmax.f32 %v701, 0.0
        %v710 = vmax.f32 %v702, 0.0
        %v711 = vmax.f32 %v703, 0.0
        %p712 = scmp.gt.s32.totalorder %s25, 0
        %s713 = scalar_select %p712, 1, 0
        %s714 = scvt.s32.f32 %s713
        %v715 = vstv %s714
        %v716 = vmul.f32 %v704, %v715
        %v717 = vmul.f32 %v705, %v715
        %v718 = vmul.f32 %v706, %v715
        %v719 = vmul.f32 %v707, %v715
        %v720 = vmul.f32 %v708, %v715
        %v721 = vmul.f32 %v709, %v715
        %v722 = vmul.f32 %v710, %v715
        %v723 = vmul.f32 %v711, %v715
        %v724 = vld [vmem:[%s527] sm:$0xff]
        %v725 = vld [vmem:[%s527 + $0x8] sm:$0xff]
        %v726 = vld [vmem:[%s527 + $0x10] sm:$0xff]
        %v727 = vld [vmem:[%s527 + $0x18] sm:$0xff]
        %v728 = vld [vmem:[%s527 + $0x20] sm:$0xff]
        %v729 = vld [vmem:[%s527 + $0x28] sm:$0xff]
        %v730 = vld [vmem:[%s527 + $0x30] sm:$0xff]
        %v731 = vld [vmem:[%s527 + $0x38] sm:$0xff]
        %v732 = vmul.f32 %v724, %v579
        %v733 = vmul.f32 %v725, %v584
        %v734 = vmul.f32 %v726, %v589
        %v735 = vmul.f32 %v727, %v594
        %v736 = vmul.f32 %v728, %v599
        %v737 = vmul.f32 %v729, %v604
        %v738 = vmul.f32 %v730, %v609
        %v739 = vmul.f32 %v731, %v614
        %v740 = vadd.f32 %v732, %v627
        %v741 = vadd.f32 %v733, %v632
        %v742 = vadd.f32 %v734, %v637
        %v743 = vadd.f32 %v735, %v642
        %v744 = vadd.f32 %v736, %v647
        %v745 = vadd.f32 %v737, %v652
        %v746 = vadd.f32 %v738, %v657
        %v747 = vadd.f32 %v739, %v662
        %v748 = vmax.f32 %v740, 0.0
        %v749 = vmax.f32 %v741, 0.0
        %v750 = vmax.f32 %v742, 0.0
        %v751 = vmax.f32 %v743, 0.0
        %v752 = vmax.f32 %v744, 0.0
        %v753 = vmax.f32 %v745, 0.0
        %v754 = vmax.f32 %v746, 0.0
        %v755 = vmax.f32 %v747, 0.0
        %p756 = scmp.lt.s32.totalorder %s25, 1
        %s757 = scalar_select %p756, 1, 0
        %s758 = scvt.s32.f32 %s757
        %v759 = vstv %s758
        %v760 = vmul.f32 %v748, %v759
        %v761 = vmul.f32 %v749, %v759
        %v762 = vmul.f32 %v750, %v759
        %v763 = vmul.f32 %v751, %v759
        %v764 = vmul.f32 %v752, %v759
        %v765 = vmul.f32 %v753, %v759
        %v766 = vmul.f32 %v754, %v759
        %v767 = vmul.f32 %v755, %v759
        %776 = vrot.lane.b32.xlu0 %v672, 16
        %v777 = vpop.permute.xlu0 %776
        %778 = vrot.lane.b32.xlu0 %v673, 16
        %v779 = vpop.permute.xlu0 %778
        %780 = vrot.lane.b32.xlu0 %v674, 16
        %v781 = vpop.permute.xlu0 %780
        %782 = vrot.lane.b32.xlu0 %v675, 16
        %v783 = vpop.permute.xlu0 %782
        %784 = vrot.lane.b32.xlu0 %v676, 16
        %v785 = vpop.permute.xlu0 %784
        %786 = vrot.lane.b32.xlu0 %v677, 16
        %v787 = vpop.permute.xlu0 %786
        %788 = vrot.lane.b32.xlu0 %v678, 16
        %v789 = vpop.permute.xlu0 %788
        %790 = vrot.lane.b32.xlu0 %v679, 16
        %v791 = vpop.permute.xlu0 %790
        %808 = vrot.lane.b32.xlu0 %v760, 16
        %v809 = vpop.permute.xlu0 %808
        %810 = vrot.lane.b32.xlu0 %v761, 16
        %v811 = vpop.permute.xlu0 %810
        %812 = vrot.lane.b32.xlu0 %v762, 16
        %v813 = vpop.permute.xlu0 %812
        %814 = vrot.lane.b32.xlu0 %v763, 16
        %v815 = vpop.permute.xlu0 %814
        %816 = vrot.lane.b32.xlu0 %v764, 16
        %v817 = vpop.permute.xlu0 %816
        %818 = vrot.lane.b32.xlu0 %v765, 16
        %v819 = vpop.permute.xlu0 %818
        %820 = vrot.lane.b32.xlu0 %v766, 16
        %v821 = vpop.permute.xlu0 %820
        %822 = vrot.lane.b32.xlu0 %v767, 16
        %v823 = vpop.permute.xlu0 %822
        %vm832 = vcmask 130048
        %v833 = vsel %vm832, %v716, %v777
        %v834 = vsel %vm832, %v717, %v779
        %v835 = vsel %vm832, %v718, %v781
        %v836 = vsel %vm832, %v719, %v783
        %v837 = vsel %vm832, %v720, %v785
        %v838 = vsel %vm832, %v721, %v787
        %v839 = vsel %vm832, %v722, %v789
        %v840 = vsel %vm832, %v723, %v791
        %v841 = vsel %vm832, %v777, %v809
        %v842 = vsel %vm832, %v779, %v811
        %v843 = vsel %vm832, %v781, %v813
        %v844 = vsel %vm832, %v783, %v815
        %v845 = vsel %vm832, %v785, %v817
        %v846 = vsel %vm832, %v787, %v819
        %v847 = vsel %vm832, %v789, %v821
        %v848 = vsel %vm832, %v791, %v823
        %v849 = vlaneseq
        %v850 = vand.u32 %v849, 127
        %vm851 = vcmp.lt.s32.totalorder %v850, 0
        %v852 = vsub.s32 0, %v850
        %v853 = vsel %vm851, %v852, %v850
        %v854 = vshrl.u32 %v853, 4
        %v855 = vand.u32 %v853, 15
        %v856 = vsub.s32 0, %v855
        %v857 = vsel %vm851, %v856, %v855
        %vm858 = vcmp.ne.s32.totalorder %v857, 0
        %vm859 = vcmp.lt.s32.totalorder %v857, 0
        %vm860 = vmand %vm859, %vm858
        %v861 = vadd.s32 %v857, 16
        %v862 = vsel %vm860, %v861, %v857
        %vm863 = vcmp.ne.s32.totalorder %v862, 0
        %vm864 = vcmp.ne.s32.totalorder %v862, 15
        %865 = vrot.lane.b32.xlu0 %v833, 1
        %v866 = vpop.permute.xlu0 %865
        %867 = vrot.lane.b32.xlu0 %v834, 1
        %v868 = vpop.permute.xlu0 %867
        %869 = vrot.lane.b32.xlu0 %v835, 1
        %v870 = vpop.permute.xlu0 %869
        %871 = vrot.lane.b32.xlu0 %v836, 1
        %v872 = vpop.permute.xlu0 %871
        %873 = vrot.lane.b32.xlu0 %v837, 1
        %v874 = vpop.permute.xlu0 %873
        %875 = vrot.lane.b32.xlu0 %v838, 1
        %v876 = vpop.permute.xlu0 %875
        %877 = vrot.lane.b32.xlu0 %v839, 1
        %v878 = vpop.permute.xlu0 %877
        %879 = vrot.lane.b32.xlu0 %v840, 1
        %v880 = vpop.permute.xlu0 %879
        %v881 = vsel %vm863, 1, 0
        %vm882 = vcmp.eq.s32.totalorder %v881, 1
        %v883 = vsel %vm882, %v866, 0.0
        %v884 = vsel %vm882, %v868, 0.0
        %v885 = vsel %vm882, %v870, 0.0
        %v886 = vsel %vm882, %v872, 0.0
        %v887 = vsel %vm882, %v874, 0.0
        %v888 = vsel %vm882, %v876, 0.0
        %v889 = vsel %vm882, %v878, 0.0
        %v890 = vsel %vm882, %v880, 0.0
        %v891 = vld [vmem:[%s5] sm:$0xff]
        %v892 = vld [vmem:[%s5 + $0x8] sm:$0xff]
        %v893 = vld [vmem:[%s5 + $0x10] sm:$0xff]
        %v894 = vld [vmem:[%s5 + $0x18] sm:$0xff]
        %v895 = vld [vmem:[%s5 + $0x20] sm:$0xff]
        %v896 = vld [vmem:[%s5 + $0x28] sm:$0xff]
        %v897 = vld [vmem:[%s5 + $0x30] sm:$0xff]
        %v898 = vld [vmem:[%s5 + $0x38] sm:$0xff]
        %s899 = scalar_lea.vmem %s5, 64
        %v900 = vld [vmem:[%s899] sm:$0xff]
        %v901 = vld [vmem:[%s899 + $0x8] sm:$0xff]
        %v902 = vld [vmem:[%s899 + $0x10] sm:$0xff]
        %v903 = vld [vmem:[%s899 + $0x18] sm:$0xff]
        %v904 = vld [vmem:[%s899 + $0x20] sm:$0xff]
        %v905 = vld [vmem:[%s899 + $0x28] sm:$0xff]
        %v906 = vld [vmem:[%s899 + $0x30] sm:$0xff]
        %v907 = vld [vmem:[%s899 + $0x38] sm:$0xff]
        %vm908 = vcmask 523264
        %v910 = vsel %vm908, %v900, 0
        %v913 = vsel %vm908, %v901, 0
        %v916 = vsel %vm908, %v902, 0
        %v919 = vsel %vm908, %v903, 0
        %v922 = vsel %vm908, %v904, 0
        %v925 = vsel %vm908, %v905, 0
        %v928 = vsel %vm908, %v906, 0
        %v931 = vsel %vm908, %v907, 0
        %933 = vmatprep.subr.mxu0 0.0
        %934 = vmatpush1.msra.mxu0 %v833
        %935 = vmatprep.subr.mxu0 0.0
        %936 = vmatpush1.msra.mxu0 %v834
        %937 = vmatprep.subr.mxu0 0.0
        %938 = vmatpush1.msra.mxu0 %v835
        %939 = vmatprep.subr.mxu0 0.0
        %940 = vmatpush1.msra.mxu0 %v836
        %941 = vmatprep.subr.mxu0 0.0
        %942 = vmatpush1.msra.mxu0 %v837
        %943 = vmatprep.subr.mxu0 0.0
        %944 = vmatpush1.msra.mxu0 %v838
        %945 = vmatprep.subr.mxu0 0.0
        %946 = vmatpush1.msra.mxu0 %v839
        %947 = vmatprep.subr.mxu0 0.0
        %948 = vmatpush1.msra.mxu0 %v840
        %949 = vmatprep.subr.mxu0 0.0
        %950 = vmatpush1.msra.mxu0 0.0
        %951 = vmatprep.subr.mxu0 0.0
        %952 = vmatpush1.msra.mxu0 0.0
        %953 = vmatprep.subr.mxu0 0.0
        %954 = vmatpush1.msra.mxu0 0.0
        %955 = vmatprep.subr.mxu0 0.0
        %956 = vmatpush1.msra.mxu0 0.0
        %957 = vmatprep.subr.mxu0 0.0
        %958 = vmatpush1.msra.mxu0 0.0
        %959 = vmatprep.subr.mxu0 0.0
        %960 = vmatpush1.msra.mxu0 0.0
        %961 = vmatprep.subr.mxu0 0.0
        %962 = vmatpush1.msra.mxu0 0.0
        %963 = vmatprep.subr.mxu0 0.0
        %964 = vmatpush1.msra.mxu0 0.0
        %965 = vmatprep.subr.mxu0 0.0
        %966 = vmatpush1.msra.mxu0 0.0
        %967 = vmatprep.subr.mxu0 0.0
        %968 = vmatpush1.msra.mxu0 0.0
        %969 = vmatprep.subr.mxu0 0.0
        %970 = vmatpush1.msra.mxu0 0.0
        %971 = vmatprep.subr.mxu0 0.0
        %972 = vmatpush1.msra.mxu0 0.0
        %973 = vmatprep.subr.mxu0 0.0
        %974 = vmatpush1.msra.mxu0 0.0
        %975 = vmatprep.subr.mxu0 0.0
        %976 = vmatpush1.msra.mxu0 0.0
        %977 = vmatprep.subr.mxu0 0.0
        %978 = vmatpush1.msra.mxu0 0.0
        %979 = vmatprep.subr.mxu0 0.0
        %980 = vmatpush1.msra.mxu0 0.0
        %981 = vmatprep.subr.mxu0 0.0
        %982 = vmatpush1.msra.mxu0 0.0
        %983 = vmatprep.subr.mxu0 0.0
        %984 = vmatpush1.msra.mxu0 0.0
        %985 = vmatprep.subr.mxu0 0.0
        %986 = vmatpush1.msra.mxu0 0.0
        %987 = vmatprep.subr.mxu0 0.0
        %988 = vmatpush1.msra.mxu0 0.0
        %989 = vmatprep.subr.mxu0 0.0
        %990 = vmatpush1.msra.mxu0 0.0
        %991 = vmatprep.subr.mxu0 0.0
        %992 = vmatpush1.msra.mxu0 0.0
        %993 = vmatprep.subr.mxu0 0.0
        %994 = vmatpush1.msra.mxu0 0.0
        %995 = vmatprep.subr.mxu0 0.0
        %996 = vmatpush1.msra.mxu0 0.0
        %997 = vmatprep.mubr.f32.mxu0 0.0
        %998 = vmatmul.mubr.f32.gmra.mrb[0].mxu0 %v910
        %v999 = vpop.f32.mrb[0].mxu0
        %v1000 = vadd.f32 0.0, %v999
        %v1001 = vpop.f32.mrb[0].mxu0
        %1002 = vmatprep.mubr.f32.mxu0 0.0
        %1003 = vmatmul.mubr.f32.gmra.mrb[0].mxu0 %v913
        %v1004 = vpop.f32.mrb[0].mxu0
        %v1005 = vadd.f32 0.0, %v1004
        %v1006 = vpop.f32.mrb[0].mxu0
        %1007 = vmatprep.mubr.f32.mxu0 0.0
        %1008 = vmatmul.mubr.f32.gmra.mrb[0].mxu0 %v916
        %v1009 = vpop.f32.mrb[0].mxu0
        %v1010 = vadd.f32 0.0, %v1009
        %v1011 = vpop.f32.mrb[0].mxu0
        %1012 = vmatprep.mubr.f32.mxu0 0.0
        %1013 = vmatmul.mubr.f32.gmra.mrb[0].mxu0 %v919
        %v1014 = vpop.f32.mrb[0].mxu0
        %v1015 = vadd.f32 0.0, %v1014
        %v1016 = vpop.f32.mrb[0].mxu0
        %1017 = vmatprep.mubr.f32.mxu0 0.0
        %1018 = vmatmul.mubr.f32.gmra.mrb[0].mxu0 %v922
        %v1019 = vpop.f32.mrb[0].mxu0
        %v1020 = vadd.f32 0.0, %v1019
        %v1021 = vpop.f32.mrb[0].mxu0
        %1022 = vmatprep.mubr.f32.mxu0 0.0
        %1023 = vmatmul.mubr.f32.gmra.mrb[0].mxu0 %v925
        %v1024 = vpop.f32.mrb[0].mxu0
        %v1025 = vadd.f32 0.0, %v1024
        %v1026 = vpop.f32.mrb[0].mxu0
        %1027 = vmatprep.mubr.f32.mxu0 0.0
        %1028 = vmatmul.mubr.f32.gmra.mrb[0].mxu0 %v928
        %v1029 = vpop.f32.mrb[0].mxu0
        %v1030 = vadd.f32 0.0, %v1029
        %v1031 = vpop.f32.mrb[0].mxu0
        %1032 = vmatprep.mubr.f32.mxu0 0.0
        %1033 = vmatmul.mubr.f32.gmra.mrb[0].mxu0 %v931
        %v1034 = vpop.f32.mrb[0].mxu0
        %v1035 = vadd.f32 0.0, %v1034
        %v1036 = vpop.f32.mrb[0].mxu0
        %1037 = vdwg.mxu0
        %v1039 = vsel %vm908, %v891, 0
        %v1042 = vsel %vm908, %v892, 0
        %v1045 = vsel %vm908, %v893, 0
        %v1048 = vsel %vm908, %v894, 0
        %v1051 = vsel %vm908, %v895, 0
        %v1054 = vsel %vm908, %v896, 0
        %v1057 = vsel %vm908, %v897, 0
        %v1060 = vsel %vm908, %v898, 0
        %1062 = vmatprep.subr.mxu0 0.0
        %1063 = vmatpush1.msra.mxu0 %v883
        %1064 = vmatprep.subr.mxu0 0.0
        %1065 = vmatpush1.msra.mxu0 %v884
        %1066 = vmatprep.subr.mxu0 0.0
        %1067 = vmatpush1.msra.mxu0 %v885
        %1068 = vmatprep.subr.mxu0 0.0
        %1069 = vmatpush1.msra.mxu0 %v886
        %1070 = vmatprep.subr.mxu0 0.0
        %1071 = vmatpush1.msra.mxu0 %v887
        %1072 = vmatprep.subr.mxu0 0.0
        %1073 = vmatpush1.msra.mxu0 %v888
        %1074 = vmatprep.subr.mxu0 0.0
        %1075 = vmatpush1.msra.mxu0 %v889
        %1076 = vmatprep.subr.mxu0 0.0
        %1077 = vmatpush1.msra.mxu0 %v890
        %1078 = vmatprep.subr.mxu0 0.0
        %1079 = vmatpush1.msra.mxu0 0.0
        %1080 = vmatprep.subr.mxu0 0.0
        %1081 = vmatpush1.msra.mxu0 0.0
        %1082 = vmatprep.subr.mxu0 0.0
        %1083 = vmatpush1.msra.mxu0 0.0
        %1084 = vmatprep.subr.mxu0 0.0
        %1085 = vmatpush1.msra.mxu0 0.0
        %1086 = vmatprep.subr.mxu0 0.0
        %1087 = vmatpush1.msra.mxu0 0.0
        %1088 = vmatprep.subr.mxu0 0.0
        %1089 = vmatpush1.msra.mxu0 0.0
        %1090 = vmatprep.subr.mxu0 0.0
        %1091 = vmatpush1.msra.mxu0 0.0
        %1092 = vmatprep.subr.mxu0 0.0
        %1093 = vmatpush1.msra.mxu0 0.0
        %1094 = vmatprep.subr.mxu0 0.0
        %1095 = vmatpush1.msra.mxu0 0.0
        %1096 = vmatprep.subr.mxu0 0.0
        %1097 = vmatpush1.msra.mxu0 0.0
        %1098 = vmatprep.subr.mxu0 0.0
        %1099 = vmatpush1.msra.mxu0 0.0
        %1100 = vmatprep.subr.mxu0 0.0
        %1101 = vmatpush1.msra.mxu0 0.0
        %1102 = vmatprep.subr.mxu0 0.0
        %1103 = vmatpush1.msra.mxu0 0.0
        %1104 = vmatprep.subr.mxu0 0.0
        %1105 = vmatpush1.msra.mxu0 0.0
        %1106 = vmatprep.subr.mxu0 0.0
        %1107 = vmatpush1.msra.mxu0 0.0
        %1108 = vmatprep.subr.mxu0 0.0
        %1109 = vmatpush1.msra.mxu0 0.0
        %1110 = vmatprep.subr.mxu0 0.0
        %1111 = vmatpush1.msra.mxu0 0.0
        %1112 = vmatprep.subr.mxu0 0.0
        %1113 = vmatpush1.msra.mxu0 0.0
        %1114 = vmatprep.subr.mxu0 0.0
        %1115 = vmatpush1.msra.mxu0 0.0
        %1116 = vmatprep.subr.mxu0 0.0
        %1117 = vmatpush1.msra.mxu0 0.0
        %1118 = vmatprep.subr.mxu0 0.0
        %1119 = vmatpush1.msra.mxu0 0.0
        %1120 = vmatprep.subr.mxu0 0.0
        %1121 = vmatpush1.msra.mxu0 0.0
        %1122 = vmatprep.subr.mxu0 0.0
        %1123 = vmatpush1.msra.mxu0 0.0
        %1124 = vmatprep.subr.mxu0 0.0
        %1125 = vmatpush1.msra.mxu0 0.0
        %1126 = vmatprep.mubr.f32.mxu0 0.0
        %1127 = vmatmul.mubr.f32.gmra.mrb[0].mxu0 %v1039
        %v1128 = vpop.f32.mrb[0].mxu0
        %v1129 = vadd.f32 %v1000, %v1128
        %v1130 = vpop.f32.mrb[0].mxu0
        %1131 = vmatprep.mubr.f32.mxu0 0.0
        %1132 = vmatmul.mubr.f32.gmra.mrb[0].mxu0 %v1042
        %v1133 = vpop.f32.mrb[0].mxu0
        %v1134 = vadd.f32 %v1005, %v1133
        %v1135 = vpop.f32.mrb[0].mxu0
        %1136 = vmatprep.mubr.f32.mxu0 0.0
        %1137 = vmatmul.mubr.f32.gmra.mrb[0].mxu0 %v1045
        %v1138 = vpop.f32.mrb[0].mxu0
        %v1139 = vadd.f32 %v1010, %v1138
        %v1140 = vpop.f32.mrb[0].mxu0
        %1141 = vmatprep.mubr.f32.mxu0 0.0
        %1142 = vmatmul.mubr.f32.gmra.mrb[0].mxu0 %v1048
        %v1143 = vpop.f32.mrb[0].mxu0
        %v1144 = vadd.f32 %v1015, %v1143
        %v1145 = vpop.f32.mrb[0].mxu0
        %1146 = vmatprep.mubr.f32.mxu0 0.0
        %1147 = vmatmul.mubr.f32.gmra.mrb[0].mxu0 %v1051
        %v1148 = vpop.f32.mrb[0].mxu0
        %v1149 = vadd.f32 %v1020, %v1148
        %v1150 = vpop.f32.mrb[0].mxu0
        %1151 = vmatprep.mubr.f32.mxu0 0.0
        %1152 = vmatmul.mubr.f32.gmra.mrb[0].mxu0 %v1054
        %v1153 = vpop.f32.mrb[0].mxu0
        %v1154 = vadd.f32 %v1025, %v1153
        %v1155 = vpop.f32.mrb[0].mxu0
        %1156 = vmatprep.mubr.f32.mxu0 0.0
        %1157 = vmatmul.mubr.f32.gmra.mrb[0].mxu0 %v1057
        %v1158 = vpop.f32.mrb[0].mxu0
        %v1159 = vadd.f32 %v1030, %v1158
        %v1160 = vpop.f32.mrb[0].mxu0
        %1161 = vmatprep.mubr.f32.mxu0 0.0
        %1162 = vmatmul.mubr.f32.gmra.mrb[0].mxu0 %v1060
        %v1163 = vpop.f32.mrb[0].mxu0
        %v1164 = vadd.f32 %v1035, %v1163
        %v1165 = vpop.f32.mrb[0].mxu0
        %1166 = vdwg.mxu0
        %1167 = vrot.lane.b32.xlu0 %v833, 127
        %v1168 = vpop.permute.xlu0 %1167
        %1169 = vrot.lane.b32.xlu0 %v834, 127
        %v1170 = vpop.permute.xlu0 %1169
        %1171 = vrot.lane.b32.xlu0 %v835, 127
        %v1172 = vpop.permute.xlu0 %1171
        %1173 = vrot.lane.b32.xlu0 %v836, 127
        %v1174 = vpop.permute.xlu0 %1173
        %1175 = vrot.lane.b32.xlu0 %v837, 127
        %v1176 = vpop.permute.xlu0 %1175
        %1177 = vrot.lane.b32.xlu0 %v838, 127
        %v1178 = vpop.permute.xlu0 %1177
        %1179 = vrot.lane.b32.xlu0 %v839, 127
        %v1180 = vpop.permute.xlu0 %1179
        %1181 = vrot.lane.b32.xlu0 %v840, 127
        %v1182 = vpop.permute.xlu0 %1181
        %v1183 = vsel %vm864, 1, 0
        %vm1184 = vcmp.eq.s32.totalorder %v1183, 1
        %v1185 = vsel %vm1184, %v1168, 0.0
        %v1186 = vsel %vm1184, %v1170, 0.0
        %v1187 = vsel %vm1184, %v1172, 0.0
        %v1188 = vsel %vm1184, %v1174, 0.0
        %v1189 = vsel %vm1184, %v1176, 0.0
        %v1190 = vsel %vm1184, %v1178, 0.0
        %v1191 = vsel %vm1184, %v1180, 0.0
        %v1192 = vsel %vm1184, %v1182, 0.0
        %s1193 = scalar_lea.vmem %s5, 128
        %v1194 = vld [vmem:[%s1193] sm:$0xff]
        %v1195 = vld [vmem:[%s1193 + $0x8] sm:$0xff]
        %v1196 = vld [vmem:[%s1193 + $0x10] sm:$0xff]
        %v1197 = vld [vmem:[%s1193 + $0x18] sm:$0xff]
        %v1198 = vld [vmem:[%s1193 + $0x20] sm:$0xff]
        %v1199 = vld [vmem:[%s1193 + $0x28] sm:$0xff]
        %v1200 = vld [vmem:[%s1193 + $0x30] sm:$0xff]
        %v1201 = vld [vmem:[%s1193 + $0x38] sm:$0xff]
        %v1203 = vsel %vm908, %v1194, 0
        %v1206 = vsel %vm908, %v1195, 0
        %v1209 = vsel %vm908, %v1196, 0
        %v1212 = vsel %vm908, %v1197, 0
        %v1215 = vsel %vm908, %v1198, 0
        %v1218 = vsel %vm908, %v1199, 0
        %v1221 = vsel %vm908, %v1200, 0
        %v1224 = vsel %vm908, %v1201, 0
        %1226 = vmatprep.subr.mxu0 0.0
        %1227 = vmatpush1.msra.mxu0 %v1185
        %1228 = vmatprep.subr.mxu0 0.0
        %1229 = vmatpush1.msra.mxu0 %v1186
        %1230 = vmatprep.subr.mxu0 0.0
        %1231 = vmatpush1.msra.mxu0 %v1187
        %1232 = vmatprep.subr.mxu0 0.0
        %1233 = vmatpush1.msra.mxu0 %v1188
        %1234 = vmatprep.subr.mxu0 0.0
        %1235 = vmatpush1.msra.mxu0 %v1189
        %1236 = vmatprep.subr.mxu0 0.0
        %1237 = vmatpush1.msra.mxu0 %v1190
        %1238 = vmatprep.subr.mxu0 0.0
        %1239 = vmatpush1.msra.mxu0 %v1191
        %1240 = vmatprep.subr.mxu0 0.0
        %1241 = vmatpush1.msra.mxu0 %v1192
        %1242 = vmatprep.subr.mxu0 0.0
        %1243 = vmatpush1.msra.mxu0 0.0
        %1244 = vmatprep.subr.mxu0 0.0
        %1245 = vmatpush1.msra.mxu0 0.0
        %1246 = vmatprep.subr.mxu0 0.0
        %1247 = vmatpush1.msra.mxu0 0.0
        %1248 = vmatprep.subr.mxu0 0.0
        %1249 = vmatpush1.msra.mxu0 0.0
        %1250 = vmatprep.subr.mxu0 0.0
        %1251 = vmatpush1.msra.mxu0 0.0
        %1252 = vmatprep.subr.mxu0 0.0
        %1253 = vmatpush1.msra.mxu0 0.0
        %1254 = vmatprep.subr.mxu0 0.0
        %1255 = vmatpush1.msra.mxu0 0.0
        %1256 = vmatprep.subr.mxu0 0.0
        %1257 = vmatpush1.msra.mxu0 0.0
        %1258 = vmatprep.subr.mxu0 0.0
        %1259 = vmatpush1.msra.mxu0 0.0
        %1260 = vmatprep.subr.mxu0 0.0
        %1261 = vmatpush1.msra.mxu0 0.0
        %1262 = vmatprep.subr.mxu0 0.0
        %1263 = vmatpush1.msra.mxu0 0.0
        %1264 = vmatprep.subr.mxu0 0.0
        %1265 = vmatpush1.msra.mxu0 0.0
        %1266 = vmatprep.subr.mxu0 0.0
        %1267 = vmatpush1.msra.mxu0 0.0
        %1268 = vmatprep.subr.mxu0 0.0
        %1269 = vmatpush1.msra.mxu0 0.0
        %1270 = vmatprep.subr.mxu0 0.0
        %1271 = vmatpush1.msra.mxu0 0.0
        %1272 = vmatprep.subr.mxu0 0.0
        %1273 = vmatpush1.msra.mxu0 0.0
        %1274 = vmatprep.subr.mxu0 0.0
        %1275 = vmatpush1.msra.mxu0 0.0
        %1276 = vmatprep.subr.mxu0 0.0
        %1277 = vmatpush1.msra.mxu0 0.0
        %1278 = vmatprep.subr.mxu0 0.0
        %1279 = vmatpush1.msra.mxu0 0.0
        %1280 = vmatprep.subr.mxu0 0.0
        %1281 = vmatpush1.msra.mxu0 0.0
        %1282 = vmatprep.subr.mxu0 0.0
        %1283 = vmatpush1.msra.mxu0 0.0
        %1284 = vmatprep.subr.mxu0 0.0
        %1285 = vmatpush1.msra.mxu0 0.0
        %1286 = vmatprep.subr.mxu0 0.0
        %1287 = vmatpush1.msra.mxu0 0.0
        %1288 = vmatprep.subr.mxu0 0.0
        %1289 = vmatpush1.msra.mxu0 0.0
        %1290 = vmatprep.mubr.f32.mxu0 0.0
        %1291 = vmatmul.mubr.f32.gmra.mrb[0].mxu0 %v1203
        %v1292 = vpop.f32.mrb[0].mxu0
        %v1293 = vadd.f32 0.0, %v1292
        %v1294 = vpop.f32.mrb[0].mxu0
        %1295 = vmatprep.mubr.f32.mxu0 0.0
        %1296 = vmatmul.mubr.f32.gmra.mrb[0].mxu0 %v1206
        %v1297 = vpop.f32.mrb[0].mxu0
        %v1298 = vadd.f32 0.0, %v1297
        %v1299 = vpop.f32.mrb[0].mxu0
        %1300 = vmatprep.mubr.f32.mxu0 0.0
        %1301 = vmatmul.mubr.f32.gmra.mrb[0].mxu0 %v1209
        %v1302 = vpop.f32.mrb[0].mxu0
        %v1303 = vadd.f32 0.0, %v1302
        %v1304 = vpop.f32.mrb[0].mxu0
        %1305 = vmatprep.mubr.f32.mxu0 0.0
        %1306 = vmatmul.mubr.f32.gmra.mrb[0].mxu0 %v1212
        %v1307 = vpop.f32.mrb[0].mxu0
        %v1308 = vadd.f32 0.0, %v1307
        %v1309 = vpop.f32.mrb[0].mxu0
        %1310 = vmatprep.mubr.f32.mxu0 0.0
        %1311 = vmatmul.mubr.f32.gmra.mrb[0].mxu0 %v1215
        %v1312 = vpop.f32.mrb[0].mxu0
        %v1313 = vadd.f32 0.0, %v1312
        %v1314 = vpop.f32.mrb[0].mxu0
        %1315 = vmatprep.mubr.f32.mxu0 0.0
        %1316 = vmatmul.mubr.f32.gmra.mrb[0].mxu0 %v1218
        %v1317 = vpop.f32.mrb[0].mxu0
        %v1318 = vadd.f32 0.0, %v1317
        %v1319 = vpop.f32.mrb[0].mxu0
        %1320 = vmatprep.mubr.f32.mxu0 0.0
        %1321 = vmatmul.mubr.f32.gmra.mrb[0].mxu0 %v1221
        %v1322 = vpop.f32.mrb[0].mxu0
        %v1323 = vadd.f32 0.0, %v1322
        %v1324 = vpop.f32.mrb[0].mxu0
        %1325 = vmatprep.mubr.f32.mxu0 0.0
        %1326 = vmatmul.mubr.f32.gmra.mrb[0].mxu0 %v1224
        %v1327 = vpop.f32.mrb[0].mxu0
        %v1328 = vadd.f32 0.0, %v1327
        %v1329 = vpop.f32.mrb[0].mxu0
        %1330 = vdwg.mxu0
        %v1331 = vadd.f32 %v1129, %v1293
        %v1332 = vadd.f32 %v1134, %v1298
        %v1333 = vadd.f32 %v1139, %v1303
        %v1334 = vadd.f32 %v1144, %v1308
        %v1335 = vadd.f32 %v1149, %v1313
        %v1336 = vadd.f32 %v1154, %v1318
        %v1337 = vadd.f32 %v1159, %v1323
        %v1338 = vadd.f32 %v1164, %v1328
        %1339 = vrot.lane.b32.xlu0 %v672, 1
        %v1340 = vpop.permute.xlu0 %1339
        %1341 = vrot.lane.b32.xlu0 %v673, 1
        %v1342 = vpop.permute.xlu0 %1341
        %1343 = vrot.lane.b32.xlu0 %v674, 1
        %v1344 = vpop.permute.xlu0 %1343
        %1345 = vrot.lane.b32.xlu0 %v675, 1
        %v1346 = vpop.permute.xlu0 %1345
        %1347 = vrot.lane.b32.xlu0 %v676, 1
        %v1348 = vpop.permute.xlu0 %1347
        %1349 = vrot.lane.b32.xlu0 %v677, 1
        %v1350 = vpop.permute.xlu0 %1349
        %1351 = vrot.lane.b32.xlu0 %v678, 1
        %v1352 = vpop.permute.xlu0 %1351
        %1353 = vrot.lane.b32.xlu0 %v679, 1
        %v1354 = vpop.permute.xlu0 %1353
        %v1355 = vsel %vm882, %v1340, 0.0
        %v1356 = vsel %vm882, %v1342, 0.0
        %v1357 = vsel %vm882, %v1344, 0.0
        %v1358 = vsel %vm882, %v1346, 0.0
        %v1359 = vsel %vm882, %v1348, 0.0
        %v1360 = vsel %vm882, %v1350, 0.0
        %v1361 = vsel %vm882, %v1352, 0.0
        %v1362 = vsel %vm882, %v1354, 0.0
        %s1363 = scalar_lea.vmem %s5, 192
        %v1364 = vld [vmem:[%s1363] sm:$0xff]
        %v1365 = vld [vmem:[%s1363 + $0x8] sm:$0xff]
        %v1366 = vld [vmem:[%s1363 + $0x10] sm:$0xff]
        %v1367 = vld [vmem:[%s1363 + $0x18] sm:$0xff]
        %v1368 = vld [vmem:[%s1363 + $0x20] sm:$0xff]
        %v1369 = vld [vmem:[%s1363 + $0x28] sm:$0xff]
        %v1370 = vld [vmem:[%s1363 + $0x30] sm:$0xff]
        %v1371 = vld [vmem:[%s1363 + $0x38] sm:$0xff]
        %v1373 = vsel %vm908, %v1364, 0
        %v1376 = vsel %vm908, %v1365, 0
        %v1379 = vsel %vm908, %v1366, 0
        %v1382 = vsel %vm908, %v1367, 0
        %v1385 = vsel %vm908, %v1368, 0
        %v1388 = vsel %vm908, %v1369, 0
        %v1391 = vsel %vm908, %v1370, 0
        %v1394 = vsel %vm908, %v1371, 0
        %1396 = vmatprep.subr.mxu0 0.0
        %1397 = vmatpush1.msra.mxu0 %v1355
        %1398 = vmatprep.subr.mxu0 0.0
        %1399 = vmatpush1.msra.mxu0 %v1356
        %1400 = vmatprep.subr.mxu0 0.0
        %1401 = vmatpush1.msra.mxu0 %v1357
        %1402 = vmatprep.subr.mxu0 0.0
        %1403 = vmatpush1.msra.mxu0 %v1358
        %1404 = vmatprep.subr.mxu0 0.0
        %1405 = vmatpush1.msra.mxu0 %v1359
        %1406 = vmatprep.subr.mxu0 0.0
        %1407 = vmatpush1.msra.mxu0 %v1360
        %1408 = vmatprep.subr.mxu0 0.0
        %1409 = vmatpush1.msra.mxu0 %v1361
        %1410 = vmatprep.subr.mxu0 0.0
        %1411 = vmatpush1.msra.mxu0 %v1362
        %1412 = vmatprep.subr.mxu0 0.0
        %1413 = vmatpush1.msra.mxu0 0.0
        %1414 = vmatprep.subr.mxu0 0.0
        %1415 = vmatpush1.msra.mxu0 0.0
        %1416 = vmatprep.subr.mxu0 0.0
        %1417 = vmatpush1.msra.mxu0 0.0
        %1418 = vmatprep.subr.mxu0 0.0
        %1419 = vmatpush1.msra.mxu0 0.0
        %1420 = vmatprep.subr.mxu0 0.0
        %1421 = vmatpush1.msra.mxu0 0.0
        %1422 = vmatprep.subr.mxu0 0.0
        %1423 = vmatpush1.msra.mxu0 0.0
        %1424 = vmatprep.subr.mxu0 0.0
        %1425 = vmatpush1.msra.mxu0 0.0
        %1426 = vmatprep.subr.mxu0 0.0
        %1427 = vmatpush1.msra.mxu0 0.0
        %1428 = vmatprep.subr.mxu0 0.0
        %1429 = vmatpush1.msra.mxu0 0.0
        %1430 = vmatprep.subr.mxu0 0.0
        %1431 = vmatpush1.msra.mxu0 0.0
        %1432 = vmatprep.subr.mxu0 0.0
        %1433 = vmatpush1.msra.mxu0 0.0
        %1434 = vmatprep.subr.mxu0 0.0
        %1435 = vmatpush1.msra.mxu0 0.0
        %1436 = vmatprep.subr.mxu0 0.0
        %1437 = vmatpush1.msra.mxu0 0.0
        %1438 = vmatprep.subr.mxu0 0.0
        %1439 = vmatpush1.msra.mxu0 0.0
        %1440 = vmatprep.subr.mxu0 0.0
        %1441 = vmatpush1.msra.mxu0 0.0
        %1442 = vmatprep.subr.mxu0 0.0
        %1443 = vmatpush1.msra.mxu0 0.0
        %1444 = vmatprep.subr.mxu0 0.0
        %1445 = vmatpush1.msra.mxu0 0.0
        %1446 = vmatprep.subr.mxu0 0.0
        %1447 = vmatpush1.msra.mxu0 0.0
        %1448 = vmatprep.subr.mxu0 0.0
        %1449 = vmatpush1.msra.mxu0 0.0
        %1450 = vmatprep.subr.mxu0 0.0
        %1451 = vmatpush1.msra.mxu0 0.0
        %1452 = vmatprep.subr.mxu0 0.0
        %1453 = vmatpush1.msra.mxu0 0.0
        %1454 = vmatprep.subr.mxu0 0.0
        %1455 = vmatpush1.msra.mxu0 0.0
        %1456 = vmatprep.subr.mxu0 0.0
        %1457 = vmatpush1.msra.mxu0 0.0
        %1458 = vmatprep.subr.mxu0 0.0
        %1459 = vmatpush1.msra.mxu0 0.0
        %1460 = vmatprep.mubr.f32.mxu0 0.0
        %1461 = vmatmul.mubr.f32.gmra.mrb[0].mxu0 %v1373
        %v1462 = vpop.f32.mrb[0].mxu0
        %v1463 = vadd.f32 0.0, %v1462
        %v1464 = vpop.f32.mrb[0].mxu0
        %1465 = vmatprep.mubr.f32.mxu0 0.0
        %1466 = vmatmul.mubr.f32.gmra.mrb[0].mxu0 %v1376
        %v1467 = vpop.f32.mrb[0].mxu0
        %v1468 = vadd.f32 0.0, %v1467
        %v1469 = vpop.f32.mrb[0].mxu0
        %1470 = vmatprep.mubr.f32.mxu0 0.0
        %1471 = vmatmul.mubr.f32.gmra.mrb[0].mxu0 %v1379
        %v1472 = vpop.f32.mrb[0].mxu0
        %v1473 = vadd.f32 0.0, %v1472
        %v1474 = vpop.f32.mrb[0].mxu0
        %1475 = vmatprep.mubr.f32.mxu0 0.0
        %1476 = vmatmul.mubr.f32.gmra.mrb[0].mxu0 %v1382
        %v1477 = vpop.f32.mrb[0].mxu0
        %v1478 = vadd.f32 0.0, %v1477
        %v1479 = vpop.f32.mrb[0].mxu0
        %1480 = vmatprep.mubr.f32.mxu0 0.0
        %1481 = vmatmul.mubr.f32.gmra.mrb[0].mxu0 %v1385
        %v1482 = vpop.f32.mrb[0].mxu0
        %v1483 = vadd.f32 0.0, %v1482
        %v1484 = vpop.f32.mrb[0].mxu0
        %1485 = vmatprep.mubr.f32.mxu0 0.0
        %1486 = vmatmul.mubr.f32.gmra.mrb[0].mxu0 %v1388
        %v1487 = vpop.f32.mrb[0].mxu0
        %v1488 = vadd.f32 0.0, %v1487
        %v1489 = vpop.f32.mrb[0].mxu0
        %1490 = vmatprep.mubr.f32.mxu0 0.0
        %1491 = vmatmul.mubr.f32.gmra.mrb[0].mxu0 %v1391
        %v1492 = vpop.f32.mrb[0].mxu0
        %v1493 = vadd.f32 0.0, %v1492
        %v1494 = vpop.f32.mrb[0].mxu0
        %1495 = vmatprep.mubr.f32.mxu0 0.0
        %1496 = vmatmul.mubr.f32.gmra.mrb[0].mxu0 %v1394
        %v1497 = vpop.f32.mrb[0].mxu0
        %v1498 = vadd.f32 0.0, %v1497
        %v1499 = vpop.f32.mrb[0].mxu0
        %1500 = vdwg.mxu0
        %v1501 = vadd.f32 %v1331, %v1463
        %v1502 = vadd.f32 %v1332, %v1468
        %v1503 = vadd.f32 %v1333, %v1473
        %v1504 = vadd.f32 %v1334, %v1478
        %v1505 = vadd.f32 %v1335, %v1483
        %v1506 = vadd.f32 %v1336, %v1488
        %v1507 = vadd.f32 %v1337, %v1493
        %v1508 = vadd.f32 %v1338, %v1498
        %s1509 = scalar_lea.vmem %s5, 256
        %v1510 = vld [vmem:[%s1509] sm:$0xff]
        %v1511 = vld [vmem:[%s1509 + $0x8] sm:$0xff]
        %v1512 = vld [vmem:[%s1509 + $0x10] sm:$0xff]
        %v1513 = vld [vmem:[%s1509 + $0x18] sm:$0xff]
        %v1514 = vld [vmem:[%s1509 + $0x20] sm:$0xff]
        %v1515 = vld [vmem:[%s1509 + $0x28] sm:$0xff]
        %v1516 = vld [vmem:[%s1509 + $0x30] sm:$0xff]
        %v1517 = vld [vmem:[%s1509 + $0x38] sm:$0xff]
        %v1519 = vsel %vm908, %v1510, 0
        %v1522 = vsel %vm908, %v1511, 0
        %v1525 = vsel %vm908, %v1512, 0
        %v1528 = vsel %vm908, %v1513, 0
        %v1531 = vsel %vm908, %v1514, 0
        %v1534 = vsel %vm908, %v1515, 0
        %v1537 = vsel %vm908, %v1516, 0
        %v1540 = vsel %vm908, %v1517, 0
        %1542 = vmatprep.subr.mxu0 0.0
        %1543 = vmatpush1.msra.mxu0 %v672
        %1544 = vmatprep.subr.mxu0 0.0
        %1545 = vmatpush1.msra.mxu0 %v673
        %1546 = vmatprep.subr.mxu0 0.0
        %1547 = vmatpush1.msra.mxu0 %v674
        %1548 = vmatprep.subr.mxu0 0.0
        %1549 = vmatpush1.msra.mxu0 %v675
        %1550 = vmatprep.subr.mxu0 0.0
        %1551 = vmatpush1.msra.mxu0 %v676
        %1552 = vmatprep.subr.mxu0 0.0
        %1553 = vmatpush1.msra.mxu0 %v677
        %1554 = vmatprep.subr.mxu0 0.0
        %1555 = vmatpush1.msra.mxu0 %v678
        %1556 = vmatprep.subr.mxu0 0.0
        %1557 = vmatpush1.msra.mxu0 %v679
        %1558 = vmatprep.subr.mxu0 0.0
        %1559 = vmatpush1.msra.mxu0 0.0
        %1560 = vmatprep.subr.mxu0 0.0
        %1561 = vmatpush1.msra.mxu0 0.0
        %1562 = vmatprep.subr.mxu0 0.0
        %1563 = vmatpush1.msra.mxu0 0.0
        %1564 = vmatprep.subr.mxu0 0.0
        %1565 = vmatpush1.msra.mxu0 0.0
        %1566 = vmatprep.subr.mxu0 0.0
        %1567 = vmatpush1.msra.mxu0 0.0
        %1568 = vmatprep.subr.mxu0 0.0
        %1569 = vmatpush1.msra.mxu0 0.0
        %1570 = vmatprep.subr.mxu0 0.0
        %1571 = vmatpush1.msra.mxu0 0.0
        %1572 = vmatprep.subr.mxu0 0.0
        %1573 = vmatpush1.msra.mxu0 0.0
        %1574 = vmatprep.subr.mxu0 0.0
        %1575 = vmatpush1.msra.mxu0 0.0
        %1576 = vmatprep.subr.mxu0 0.0
        %1577 = vmatpush1.msra.mxu0 0.0
        %1578 = vmatprep.subr.mxu0 0.0
        %1579 = vmatpush1.msra.mxu0 0.0
        %1580 = vmatprep.subr.mxu0 0.0
        %1581 = vmatpush1.msra.mxu0 0.0
        %1582 = vmatprep.subr.mxu0 0.0
        %1583 = vmatpush1.msra.mxu0 0.0
        %1584 = vmatprep.subr.mxu0 0.0
        %1585 = vmatpush1.msra.mxu0 0.0
        %1586 = vmatprep.subr.mxu0 0.0
        %1587 = vmatpush1.msra.mxu0 0.0
        %1588 = vmatprep.subr.mxu0 0.0
        %1589 = vmatpush1.msra.mxu0 0.0
        %1590 = vmatprep.subr.mxu0 0.0
        %1591 = vmatpush1.msra.mxu0 0.0
        %1592 = vmatprep.subr.mxu0 0.0
        %1593 = vmatpush1.msra.mxu0 0.0
        %1594 = vmatprep.subr.mxu0 0.0
        %1595 = vmatpush1.msra.mxu0 0.0
        %1596 = vmatprep.subr.mxu0 0.0
        %1597 = vmatpush1.msra.mxu0 0.0
        %1598 = vmatprep.subr.mxu0 0.0
        %1599 = vmatpush1.msra.mxu0 0.0
        %1600 = vmatprep.subr.mxu0 0.0
        %1601 = vmatpush1.msra.mxu0 0.0
        %1602 = vmatprep.subr.mxu0 0.0
        %1603 = vmatpush1.msra.mxu0 0.0
        %1604 = vmatprep.subr.mxu0 0.0
        %1605 = vmatpush1.msra.mxu0 0.0
        %1606 = vmatprep.mubr.f32.mxu0 0.0
        %1607 = vmatmul.mubr.f32.gmra.mrb[0].mxu0 %v1519
        %v1608 = vpop.f32.mrb[0].mxu0
        %v1609 = vadd.f32 0.0, %v1608
        %v1610 = vpop.f32.mrb[0].mxu0
        %1611 = vmatprep.mubr.f32.mxu0 0.0
        %1612 = vmatmul.mubr.f32.gmra.mrb[0].mxu0 %v1522
        %v1613 = vpop.f32.mrb[0].mxu0
        %v1614 = vadd.f32 0.0, %v1613
        %v1615 = vpop.f32.mrb[0].mxu0
        %1616 = vmatprep.mubr.f32.mxu0 0.0
        %1617 = vmatmul.mubr.f32.gmra.mrb[0].mxu0 %v1525
        %v1618 = vpop.f32.mrb[0].mxu0
        %v1619 = vadd.f32 0.0, %v1618
        %v1620 = vpop.f32.mrb[0].mxu0
        %1621 = vmatprep.mubr.f32.mxu0 0.0
        %1622 = vmatmul.mubr.f32.gmra.mrb[0].mxu0 %v1528
        %v1623 = vpop.f32.mrb[0].mxu0
        %v1624 = vadd.f32 0.0, %v1623
        %v1625 = vpop.f32.mrb[0].mxu0
        %1626 = vmatprep.mubr.f32.mxu0 0.0
        %1627 = vmatmul.mubr.f32.gmra.mrb[0].mxu0 %v1531
        %v1628 = vpop.f32.mrb[0].mxu0
        %v1629 = vadd.f32 0.0, %v1628
        %v1630 = vpop.f32.mrb[0].mxu0
        %1631 = vmatprep.mubr.f32.mxu0 0.0
        %1632 = vmatmul.mubr.f32.gmra.mrb[0].mxu0 %v1534
        %v1633 = vpop.f32.mrb[0].mxu0
        %v1634 = vadd.f32 0.0, %v1633
        %v1635 = vpop.f32.mrb[0].mxu0
        %1636 = vmatprep.mubr.f32.mxu0 0.0
        %1637 = vmatmul.mubr.f32.gmra.mrb[0].mxu0 %v1537
        %v1638 = vpop.f32.mrb[0].mxu0
        %v1639 = vadd.f32 0.0, %v1638
        %v1640 = vpop.f32.mrb[0].mxu0
        %1641 = vmatprep.mubr.f32.mxu0 0.0
        %1642 = vmatmul.mubr.f32.gmra.mrb[0].mxu0 %v1540
        %v1643 = vpop.f32.mrb[0].mxu0
        %v1644 = vadd.f32 0.0, %v1643
        %v1645 = vpop.f32.mrb[0].mxu0
        %1646 = vdwg.mxu0
        %v1647 = vadd.f32 %v1501, %v1609
        %v1648 = vadd.f32 %v1502, %v1614
        %v1649 = vadd.f32 %v1503, %v1619
        %v1650 = vadd.f32 %v1504, %v1624
        %v1651 = vadd.f32 %v1505, %v1629
        %v1652 = vadd.f32 %v1506, %v1634
        %v1653 = vadd.f32 %v1507, %v1639
        %v1654 = vadd.f32 %v1508, %v1644
        %1655 = vrot.lane.b32.xlu0 %v672, 127
        %v1656 = vpop.permute.xlu0 %1655
        %1657 = vrot.lane.b32.xlu0 %v673, 127
        %v1658 = vpop.permute.xlu0 %1657
        %1659 = vrot.lane.b32.xlu0 %v674, 127
        %v1660 = vpop.permute.xlu0 %1659
        %1661 = vrot.lane.b32.xlu0 %v675, 127
        %v1662 = vpop.permute.xlu0 %1661
        %1663 = vrot.lane.b32.xlu0 %v676, 127
        %v1664 = vpop.permute.xlu0 %1663
        %1665 = vrot.lane.b32.xlu0 %v677, 127
        %v1666 = vpop.permute.xlu0 %1665
        %1667 = vrot.lane.b32.xlu0 %v678, 127
        %v1668 = vpop.permute.xlu0 %1667
        %1669 = vrot.lane.b32.xlu0 %v679, 127
        %v1670 = vpop.permute.xlu0 %1669
        %v1671 = vsel %vm1184, %v1656, 0.0
        %v1672 = vsel %vm1184, %v1658, 0.0
        %v1673 = vsel %vm1184, %v1660, 0.0
        %v1674 = vsel %vm1184, %v1662, 0.0
        %v1675 = vsel %vm1184, %v1664, 0.0
        %v1676 = vsel %vm1184, %v1666, 0.0
        %v1677 = vsel %vm1184, %v1668, 0.0
        %v1678 = vsel %vm1184, %v1670, 0.0
        %s1679 = scalar_lea.vmem %s5, 320
        %v1680 = vld [vmem:[%s1679] sm:$0xff]
        %v1681 = vld [vmem:[%s1679 + $0x8] sm:$0xff]
        %v1682 = vld [vmem:[%s1679 + $0x10] sm:$0xff]
        %v1683 = vld [vmem:[%s1679 + $0x18] sm:$0xff]
        %v1684 = vld [vmem:[%s1679 + $0x20] sm:$0xff]
        %v1685 = vld [vmem:[%s1679 + $0x28] sm:$0xff]
        %v1686 = vld [vmem:[%s1679 + $0x30] sm:$0xff]
        %v1687 = vld [vmem:[%s1679 + $0x38] sm:$0xff]
        %v1689 = vsel %vm908, %v1680, 0
        %v1692 = vsel %vm908, %v1681, 0
        %v1695 = vsel %vm908, %v1682, 0
        %v1698 = vsel %vm908, %v1683, 0
        %v1701 = vsel %vm908, %v1684, 0
        %v1704 = vsel %vm908, %v1685, 0
        %v1707 = vsel %vm908, %v1686, 0
        %v1710 = vsel %vm908, %v1687, 0
        %1712 = vmatprep.subr.mxu0 0.0
        %1713 = vmatpush1.msra.mxu0 %v1671
        %1714 = vmatprep.subr.mxu0 0.0
        %1715 = vmatpush1.msra.mxu0 %v1672
        %1716 = vmatprep.subr.mxu0 0.0
        %1717 = vmatpush1.msra.mxu0 %v1673
        %1718 = vmatprep.subr.mxu0 0.0
        %1719 = vmatpush1.msra.mxu0 %v1674
        %1720 = vmatprep.subr.mxu0 0.0
        %1721 = vmatpush1.msra.mxu0 %v1675
        %1722 = vmatprep.subr.mxu0 0.0
        %1723 = vmatpush1.msra.mxu0 %v1676
        %1724 = vmatprep.subr.mxu0 0.0
        %1725 = vmatpush1.msra.mxu0 %v1677
        %1726 = vmatprep.subr.mxu0 0.0
        %1727 = vmatpush1.msra.mxu0 %v1678
        %1728 = vmatprep.subr.mxu0 0.0
        %1729 = vmatpush1.msra.mxu0 0.0
        %1730 = vmatprep.subr.mxu0 0.0
        %1731 = vmatpush1.msra.mxu0 0.0
        %1732 = vmatprep.subr.mxu0 0.0
        %1733 = vmatpush1.msra.mxu0 0.0
        %1734 = vmatprep.subr.mxu0 0.0
        %1735 = vmatpush1.msra.mxu0 0.0
        %1736 = vmatprep.subr.mxu0 0.0
        %1737 = vmatpush1.msra.mxu0 0.0
        %1738 = vmatprep.subr.mxu0 0.0
        %1739 = vmatpush1.msra.mxu0 0.0
        %1740 = vmatprep.subr.mxu0 0.0
        %1741 = vmatpush1.msra.mxu0 0.0
        %1742 = vmatprep.subr.mxu0 0.0
        %1743 = vmatpush1.msra.mxu0 0.0
        %1744 = vmatprep.subr.mxu0 0.0
        %1745 = vmatpush1.msra.mxu0 0.0
        %1746 = vmatprep.subr.mxu0 0.0
        %1747 = vmatpush1.msra.mxu0 0.0
        %1748 = vmatprep.subr.mxu0 0.0
        %1749 = vmatpush1.msra.mxu0 0.0
        %1750 = vmatprep.subr.mxu0 0.0
        %1751 = vmatpush1.msra.mxu0 0.0
        %1752 = vmatprep.subr.mxu0 0.0
        %1753 = vmatpush1.msra.mxu0 0.0
        %1754 = vmatprep.subr.mxu0 0.0
        %1755 = vmatpush1.msra.mxu0 0.0
        %1756 = vmatprep.subr.mxu0 0.0
        %1757 = vmatpush1.msra.mxu0 0.0
        %1758 = vmatprep.subr.mxu0 0.0
        %1759 = vmatpush1.msra.mxu0 0.0
        %1760 = vmatprep.subr.mxu0 0.0
        %1761 = vmatpush1.msra.mxu0 0.0
        %1762 = vmatprep.subr.mxu0 0.0
        %1763 = vmatpush1.msra.mxu0 0.0
        %1764 = vmatprep.subr.mxu0 0.0
        %1765 = vmatpush1.msra.mxu0 0.0
        %1766 = vmatprep.subr.mxu0 0.0
        %1767 = vmatpush1.msra.mxu0 0.0
        %1768 = vmatprep.subr.mxu0 0.0
        %1769 = vmatpush1.msra.mxu0 0.0
        %1770 = vmatprep.subr.mxu0 0.0
        %1771 = vmatpush1.msra.mxu0 0.0
        %1772 = vmatprep.subr.mxu0 0.0
        %1773 = vmatpush1.msra.mxu0 0.0
        %1774 = vmatprep.subr.mxu0 0.0
        %1775 = vmatpush1.msra.mxu0 0.0
        %1776 = vmatprep.mubr.f32.mxu0 0.0
        %1777 = vmatmul.mubr.f32.gmra.mrb[0].mxu0 %v1689
        %v1778 = vpop.f32.mrb[0].mxu0
        %v1779 = vadd.f32 0.0, %v1778
        %v1780 = vpop.f32.mrb[0].mxu0
        %1781 = vmatprep.mubr.f32.mxu0 0.0
        %1782 = vmatmul.mubr.f32.gmra.mrb[0].mxu0 %v1692
        %v1783 = vpop.f32.mrb[0].mxu0
        %v1784 = vadd.f32 0.0, %v1783
        %v1785 = vpop.f32.mrb[0].mxu0
        %1786 = vmatprep.mubr.f32.mxu0 0.0
        %1787 = vmatmul.mubr.f32.gmra.mrb[0].mxu0 %v1695
        %v1788 = vpop.f32.mrb[0].mxu0
        %v1789 = vadd.f32 0.0, %v1788
        %v1790 = vpop.f32.mrb[0].mxu0
        %1791 = vmatprep.mubr.f32.mxu0 0.0
        %1792 = vmatmul.mubr.f32.gmra.mrb[0].mxu0 %v1698
        %v1793 = vpop.f32.mrb[0].mxu0
        %v1794 = vadd.f32 0.0, %v1793
        %v1795 = vpop.f32.mrb[0].mxu0
        %1796 = vmatprep.mubr.f32.mxu0 0.0
        %1797 = vmatmul.mubr.f32.gmra.mrb[0].mxu0 %v1701
        %v1798 = vpop.f32.mrb[0].mxu0
        %v1799 = vadd.f32 0.0, %v1798
        %v1800 = vpop.f32.mrb[0].mxu0
        %1801 = vmatprep.mubr.f32.mxu0 0.0
        %1802 = vmatmul.mubr.f32.gmra.mrb[0].mxu0 %v1704
        %v1803 = vpop.f32.mrb[0].mxu0
        %v1804 = vadd.f32 0.0, %v1803
        %v1805 = vpop.f32.mrb[0].mxu0
        %1806 = vmatprep.mubr.f32.mxu0 0.0
        %1807 = vmatmul.mubr.f32.gmra.mrb[0].mxu0 %v1707
        %v1808 = vpop.f32.mrb[0].mxu0
        %v1809 = vadd.f32 0.0, %v1808
        %v1810 = vpop.f32.mrb[0].mxu0
        %1811 = vmatprep.mubr.f32.mxu0 0.0
        %1812 = vmatmul.mubr.f32.gmra.mrb[0].mxu0 %v1710
        %v1813 = vpop.f32.mrb[0].mxu0
        %v1814 = vadd.f32 0.0, %v1813
        %v1815 = vpop.f32.mrb[0].mxu0
        %1816 = vdwg.mxu0
        %v1817 = vadd.f32 %v1647, %v1779
        %v1818 = vadd.f32 %v1648, %v1784
        %v1819 = vadd.f32 %v1649, %v1789
        %v1820 = vadd.f32 %v1650, %v1794
        %v1821 = vadd.f32 %v1651, %v1799
        %v1822 = vadd.f32 %v1652, %v1804
        %v1823 = vadd.f32 %v1653, %v1809
        %v1824 = vadd.f32 %v1654, %v1814
        %1841 = vrot.lane.b32.xlu0 %v833, 96
        %v1842 = vpop.permute.xlu0 %1841
        %1843 = vrot.lane.b32.xlu0 %v841, 96
        %v1844 = vpop.permute.xlu0 %1843
        %1845 = vrot.lane.b32.xlu0 %v834, 96
        %v1846 = vpop.permute.xlu0 %1845
        %1847 = vrot.lane.b32.xlu0 %v842, 96
        %v1848 = vpop.permute.xlu0 %1847
        %1849 = vrot.lane.b32.xlu0 %v835, 96
        %v1850 = vpop.permute.xlu0 %1849
        %1851 = vrot.lane.b32.xlu0 %v843, 96
        %v1852 = vpop.permute.xlu0 %1851
        %1853 = vrot.lane.b32.xlu0 %v836, 96
        %v1854 = vpop.permute.xlu0 %1853
        %1855 = vrot.lane.b32.xlu0 %v844, 96
        %v1856 = vpop.permute.xlu0 %1855
        %1857 = vrot.lane.b32.xlu0 %v837, 96
        %v1858 = vpop.permute.xlu0 %1857
        %1859 = vrot.lane.b32.xlu0 %v845, 96
        %v1860 = vpop.permute.xlu0 %1859
        %1861 = vrot.lane.b32.xlu0 %v838, 96
        %v1862 = vpop.permute.xlu0 %1861
        %1863 = vrot.lane.b32.xlu0 %v846, 96
        %v1864 = vpop.permute.xlu0 %1863
        %1865 = vrot.lane.b32.xlu0 %v839, 96
        %v1866 = vpop.permute.xlu0 %1865
        %1867 = vrot.lane.b32.xlu0 %v847, 96
        %v1868 = vpop.permute.xlu0 %1867
        %1869 = vrot.lane.b32.xlu0 %v840, 96
        %v1870 = vpop.permute.xlu0 %1869
        %1871 = vrot.lane.b32.xlu0 %v848, 96
        %v1872 = vpop.permute.xlu0 %1871
        %vm1873 = vcmask 785408
        %v1874 = vsel %vm1873, %v1842, %v1844
        %v1875 = vsel %vm1873, %v1846, %v1848
        %v1876 = vsel %vm1873, %v1850, %v1852
        %v1877 = vsel %vm1873, %v1854, %v1856
        %v1878 = vsel %vm1873, %v1858, %v1860
        %v1879 = vsel %vm1873, %v1862, %v1864
        %v1880 = vsel %vm1873, %v1866, %v1868
        %v1881 = vsel %vm1873, %v1870, %v1872
        %1890 = vrot.lane.b32.xlu0 %v1874, 1
        %v1891 = vpop.permute.xlu0 %1890
        %1892 = vrot.lane.b32.xlu0 %v1875, 1
        %v1893 = vpop.permute.xlu0 %1892
        %1894 = vrot.lane.b32.xlu0 %v1876, 1
        %v1895 = vpop.permute.xlu0 %1894
        %1896 = vrot.lane.b32.xlu0 %v1877, 1
        %v1897 = vpop.permute.xlu0 %1896
        %1898 = vrot.lane.b32.xlu0 %v1878, 1
        %v1899 = vpop.permute.xlu0 %1898
        %1900 = vrot.lane.b32.xlu0 %v1879, 1
        %v1901 = vpop.permute.xlu0 %1900
        %1902 = vrot.lane.b32.xlu0 %v1880, 1
        %v1903 = vpop.permute.xlu0 %1902
        %1904 = vrot.lane.b32.xlu0 %v1881, 1
        %v1905 = vpop.permute.xlu0 %1904
        %v1906 = vsel %vm882, %v1891, 0.0
        %v1907 = vsel %vm882, %v1893, 0.0
        %v1908 = vsel %vm882, %v1895, 0.0
        %v1909 = vsel %vm882, %v1897, 0.0
        %v1910 = vsel %vm882, %v1899, 0.0
        %v1911 = vsel %vm882, %v1901, 0.0
        %v1912 = vsel %vm882, %v1903, 0.0
        %v1913 = vsel %vm882, %v1905, 0.0
        %s1914 = scalar_lea.vmem %s5, 384
        %v1915 = vld [vmem:[%s1914] sm:$0xff]
        %v1916 = vld [vmem:[%s1914 + $0x8] sm:$0xff]
        %v1917 = vld [vmem:[%s1914 + $0x10] sm:$0xff]
        %v1918 = vld [vmem:[%s1914 + $0x18] sm:$0xff]
        %v1919 = vld [vmem:[%s1914 + $0x20] sm:$0xff]
        %v1920 = vld [vmem:[%s1914 + $0x28] sm:$0xff]
        %v1921 = vld [vmem:[%s1914 + $0x30] sm:$0xff]
        %v1922 = vld [vmem:[%s1914 + $0x38] sm:$0xff]
        %v1924 = vsel %vm908, %v1915, 0
        %v1927 = vsel %vm908, %v1916, 0
        %v1930 = vsel %vm908, %v1917, 0
        %v1933 = vsel %vm908, %v1918, 0
        %v1936 = vsel %vm908, %v1919, 0
        %v1939 = vsel %vm908, %v1920, 0
        %v1942 = vsel %vm908, %v1921, 0
        %v1945 = vsel %vm908, %v1922, 0
        %1947 = vmatprep.subr.mxu0 0.0
        %1948 = vmatpush1.msra.mxu0 %v1906
        %1949 = vmatprep.subr.mxu0 0.0
        %1950 = vmatpush1.msra.mxu0 %v1907
        %1951 = vmatprep.subr.mxu0 0.0
        %1952 = vmatpush1.msra.mxu0 %v1908
        %1953 = vmatprep.subr.mxu0 0.0
        %1954 = vmatpush1.msra.mxu0 %v1909
        %1955 = vmatprep.subr.mxu0 0.0
        %1956 = vmatpush1.msra.mxu0 %v1910
        %1957 = vmatprep.subr.mxu0 0.0
        %1958 = vmatpush1.msra.mxu0 %v1911
        %1959 = vmatprep.subr.mxu0 0.0
        %1960 = vmatpush1.msra.mxu0 %v1912
        %1961 = vmatprep.subr.mxu0 0.0
        %1962 = vmatpush1.msra.mxu0 %v1913
        %1963 = vmatprep.subr.mxu0 0.0
        %1964 = vmatpush1.msra.mxu0 0.0
        %1965 = vmatprep.subr.mxu0 0.0
        %1966 = vmatpush1.msra.mxu0 0.0
        %1967 = vmatprep.subr.mxu0 0.0
        %1968 = vmatpush1.msra.mxu0 0.0
        %1969 = vmatprep.subr.mxu0 0.0
        %1970 = vmatpush1.msra.mxu0 0.0
        %1971 = vmatprep.subr.mxu0 0.0
        %1972 = vmatpush1.msra.mxu0 0.0
        %1973 = vmatprep.subr.mxu0 0.0
        %1974 = vmatpush1.msra.mxu0 0.0
        %1975 = vmatprep.subr.mxu0 0.0
        %1976 = vmatpush1.msra.mxu0 0.0
        %1977 = vmatprep.subr.mxu0 0.0
        %1978 = vmatpush1.msra.mxu0 0.0
        %1979 = vmatprep.subr.mxu0 0.0
        %1980 = vmatpush1.msra.mxu0 0.0
        %1981 = vmatprep.subr.mxu0 0.0
        %1982 = vmatpush1.msra.mxu0 0.0
        %1983 = vmatprep.subr.mxu0 0.0
        %1984 = vmatpush1.msra.mxu0 0.0
        %1985 = vmatprep.subr.mxu0 0.0
        %1986 = vmatpush1.msra.mxu0 0.0
        %1987 = vmatprep.subr.mxu0 0.0
        %1988 = vmatpush1.msra.mxu0 0.0
        %1989 = vmatprep.subr.mxu0 0.0
        %1990 = vmatpush1.msra.mxu0 0.0
        %1991 = vmatprep.subr.mxu0 0.0
        %1992 = vmatpush1.msra.mxu0 0.0
        %1993 = vmatprep.subr.mxu0 0.0
        %1994 = vmatpush1.msra.mxu0 0.0
        %1995 = vmatprep.subr.mxu0 0.0
        %1996 = vmatpush1.msra.mxu0 0.0
        %1997 = vmatprep.subr.mxu0 0.0
        %1998 = vmatpush1.msra.mxu0 0.0
        %1999 = vmatprep.subr.mxu0 0.0
        %2000 = vmatpush1.msra.mxu0 0.0
        %2001 = vmatprep.subr.mxu0 0.0
        %2002 = vmatpush1.msra.mxu0 0.0
        %2003 = vmatprep.subr.mxu0 0.0
        %2004 = vmatpush1.msra.mxu0 0.0
        %2005 = vmatprep.subr.mxu0 0.0
        %2006 = vmatpush1.msra.mxu0 0.0
        %2007 = vmatprep.subr.mxu0 0.0
        %2008 = vmatpush1.msra.mxu0 0.0
        %2009 = vmatprep.subr.mxu0 0.0
        %2010 = vmatpush1.msra.mxu0 0.0
        %2011 = vmatprep.mubr.f32.mxu0 0.0
        %2012 = vmatmul.mubr.f32.gmra.mrb[0].mxu0 %v1924
        %v2013 = vpop.f32.mrb[0].mxu0
        %v2014 = vadd.f32 0.0, %v2013
        %v2015 = vpop.f32.mrb[0].mxu0
        %2016 = vmatprep.mubr.f32.mxu0 0.0
        %2017 = vmatmul.mubr.f32.gmra.mrb[0].mxu0 %v1927
        %v2018 = vpop.f32.mrb[0].mxu0
        %v2019 = vadd.f32 0.0, %v2018
        %v2020 = vpop.f32.mrb[0].mxu0
        %2021 = vmatprep.mubr.f32.mxu0 0.0
        %2022 = vmatmul.mubr.f32.gmra.mrb[0].mxu0 %v1930
        %v2023 = vpop.f32.mrb[0].mxu0
        %v2024 = vadd.f32 0.0, %v2023
        %v2025 = vpop.f32.mrb[0].mxu0
        %2026 = vmatprep.mubr.f32.mxu0 0.0
        %2027 = vmatmul.mubr.f32.gmra.mrb[0].mxu0 %v1933
        %v2028 = vpop.f32.mrb[0].mxu0
        %v2029 = vadd.f32 0.0, %v2028
        %v2030 = vpop.f32.mrb[0].mxu0
        %2031 = vmatprep.mubr.f32.mxu0 0.0
        %2032 = vmatmul.mubr.f32.gmra.mrb[0].mxu0 %v1936
        %v2033 = vpop.f32.mrb[0].mxu0
        %v2034 = vadd.f32 0.0, %v2033
        %v2035 = vpop.f32.mrb[0].mxu0
        %2036 = vmatprep.mubr.f32.mxu0 0.0
        %2037 = vmatmul.mubr.f32.gmra.mrb[0].mxu0 %v1939
        %v2038 = vpop.f32.mrb[0].mxu0
        %v2039 = vadd.f32 0.0, %v2038
        %v2040 = vpop.f32.mrb[0].mxu0
        %2041 = vmatprep.mubr.f32.mxu0 0.0
        %2042 = vmatmul.mubr.f32.gmra.mrb[0].mxu0 %v1942
        %v2043 = vpop.f32.mrb[0].mxu0
        %v2044 = vadd.f32 0.0, %v2043
        %v2045 = vpop.f32.mrb[0].mxu0
        %2046 = vmatprep.mubr.f32.mxu0 0.0
        %2047 = vmatmul.mubr.f32.gmra.mrb[0].mxu0 %v1945
        %v2048 = vpop.f32.mrb[0].mxu0
        %v2049 = vadd.f32 0.0, %v2048
        %v2050 = vpop.f32.mrb[0].mxu0
        %2051 = vdwg.mxu0
        %v2052 = vadd.f32 %v1817, %v2014
        %v2053 = vadd.f32 %v1818, %v2019
        %v2054 = vadd.f32 %v1819, %v2024
        %v2055 = vadd.f32 %v1820, %v2029
        %v2056 = vadd.f32 %v1821, %v2034
        %v2057 = vadd.f32 %v1822, %v2039
        %v2058 = vadd.f32 %v1823, %v2044
        %v2059 = vadd.f32 %v1824, %v2049
        %s2060 = scalar_lea.vmem %s5, 448
        %v2061 = vld [vmem:[%s2060] sm:$0xff]
        %v2062 = vld [vmem:[%s2060 + $0x8] sm:$0xff]
        %v2063 = vld [vmem:[%s2060 + $0x10] sm:$0xff]
        %v2064 = vld [vmem:[%s2060 + $0x18] sm:$0xff]
        %v2065 = vld [vmem:[%s2060 + $0x20] sm:$0xff]
        %v2066 = vld [vmem:[%s2060 + $0x28] sm:$0xff]
        %v2067 = vld [vmem:[%s2060 + $0x30] sm:$0xff]
        %v2068 = vld [vmem:[%s2060 + $0x38] sm:$0xff]
        %v2070 = vsel %vm908, %v2061, 0
        %v2073 = vsel %vm908, %v2062, 0
        %v2076 = vsel %vm908, %v2063, 0
        %v2079 = vsel %vm908, %v2064, 0
        %v2082 = vsel %vm908, %v2065, 0
        %v2085 = vsel %vm908, %v2066, 0
        %v2088 = vsel %vm908, %v2067, 0
        %v2091 = vsel %vm908, %v2068, 0
        %2093 = vmatprep.subr.mxu0 0.0
        %2094 = vmatpush1.msra.mxu0 %v1874
        %2095 = vmatprep.subr.mxu0 0.0
        %2096 = vmatpush1.msra.mxu0 %v1875
        %2097 = vmatprep.subr.mxu0 0.0
        %2098 = vmatpush1.msra.mxu0 %v1876
        %2099 = vmatprep.subr.mxu0 0.0
        %2100 = vmatpush1.msra.mxu0 %v1877
        %2101 = vmatprep.subr.mxu0 0.0
        %2102 = vmatpush1.msra.mxu0 %v1878
        %2103 = vmatprep.subr.mxu0 0.0
        %2104 = vmatpush1.msra.mxu0 %v1879
        %2105 = vmatprep.subr.mxu0 0.0
        %2106 = vmatpush1.msra.mxu0 %v1880
        %2107 = vmatprep.subr.mxu0 0.0
        %2108 = vmatpush1.msra.mxu0 %v1881
        %2109 = vmatprep.subr.mxu0 0.0
        %2110 = vmatpush1.msra.mxu0 0.0
        %2111 = vmatprep.subr.mxu0 0.0
        %2112 = vmatpush1.msra.mxu0 0.0
        %2113 = vmatprep.subr.mxu0 0.0
        %2114 = vmatpush1.msra.mxu0 0.0
        %2115 = vmatprep.subr.mxu0 0.0
        %2116 = vmatpush1.msra.mxu0 0.0
        %2117 = vmatprep.subr.mxu0 0.0
        %2118 = vmatpush1.msra.mxu0 0.0
        %2119 = vmatprep.subr.mxu0 0.0
        %2120 = vmatpush1.msra.mxu0 0.0
        %2121 = vmatprep.subr.mxu0 0.0
        %2122 = vmatpush1.msra.mxu0 0.0
        %2123 = vmatprep.subr.mxu0 0.0
        %2124 = vmatpush1.msra.mxu0 0.0
        %2125 = vmatprep.subr.mxu0 0.0
        %2126 = vmatpush1.msra.mxu0 0.0
        %2127 = vmatprep.subr.mxu0 0.0
        %2128 = vmatpush1.msra.mxu0 0.0
        %2129 = vmatprep.subr.mxu0 0.0
        %2130 = vmatpush1.msra.mxu0 0.0
        %2131 = vmatprep.subr.mxu0 0.0
        %2132 = vmatpush1.msra.mxu0 0.0
        %2133 = vmatprep.subr.mxu0 0.0
        %2134 = vmatpush1.msra.mxu0 0.0
        %2135 = vmatprep.subr.mxu0 0.0
        %2136 = vmatpush1.msra.mxu0 0.0
        %2137 = vmatprep.subr.mxu0 0.0
        %2138 = vmatpush1.msra.mxu0 0.0
        %2139 = vmatprep.subr.mxu0 0.0
        %2140 = vmatpush1.msra.mxu0 0.0
        %2141 = vmatprep.subr.mxu0 0.0
        %2142 = vmatpush1.msra.mxu0 0.0
        %2143 = vmatprep.subr.mxu0 0.0
        %2144 = vmatpush1.msra.mxu0 0.0
        %2145 = vmatprep.subr.mxu0 0.0
        %2146 = vmatpush1.msra.mxu0 0.0
        %2147 = vmatprep.subr.mxu0 0.0
        %2148 = vmatpush1.msra.mxu0 0.0
        %2149 = vmatprep.subr.mxu0 0.0
        %2150 = vmatpush1.msra.mxu0 0.0
        %2151 = vmatprep.subr.mxu0 0.0
        %2152 = vmatpush1.msra.mxu0 0.0
        %2153 = vmatprep.subr.mxu0 0.0
        %2154 = vmatpush1.msra.mxu0 0.0
        %2155 = vmatprep.subr.mxu0 0.0
        %2156 = vmatpush1.msra.mxu0 0.0
        %2157 = vmatprep.mubr.f32.mxu0 0.0
        %2158 = vmatmul.mubr.f32.gmra.mrb[0].mxu0 %v2070
        %v2159 = vpop.f32.mrb[0].mxu0
        %v2160 = vadd.f32 0.0, %v2159
        %v2161 = vpop.f32.mrb[0].mxu0
        %2162 = vmatprep.mubr.f32.mxu0 0.0
        %2163 = vmatmul.mubr.f32.gmra.mrb[0].mxu0 %v2073
        %v2164 = vpop.f32.mrb[0].mxu0
        %v2165 = vadd.f32 0.0, %v2164
        %v2166 = vpop.f32.mrb[0].mxu0
        %2167 = vmatprep.mubr.f32.mxu0 0.0
        %2168 = vmatmul.mubr.f32.gmra.mrb[0].mxu0 %v2076
        %v2169 = vpop.f32.mrb[0].mxu0
        %v2170 = vadd.f32 0.0, %v2169
        %v2171 = vpop.f32.mrb[0].mxu0
        %2172 = vmatprep.mubr.f32.mxu0 0.0
        %2173 = vmatmul.mubr.f32.gmra.mrb[0].mxu0 %v2079
        %v2174 = vpop.f32.mrb[0].mxu0
        %v2175 = vadd.f32 0.0, %v2174
        %v2176 = vpop.f32.mrb[0].mxu0
        %2177 = vmatprep.mubr.f32.mxu0 0.0
        %2178 = vmatmul.mubr.f32.gmra.mrb[0].mxu0 %v2082
        %v2179 = vpop.f32.mrb[0].mxu0
        %v2180 = vadd.f32 0.0, %v2179
        %v2181 = vpop.f32.mrb[0].mxu0
        %2182 = vmatprep.mubr.f32.mxu0 0.0
        %2183 = vmatmul.mubr.f32.gmra.mrb[0].mxu0 %v2085
        %v2184 = vpop.f32.mrb[0].mxu0
        %v2185 = vadd.f32 0.0, %v2184
        %v2186 = vpop.f32.mrb[0].mxu0
        %2187 = vmatprep.mubr.f32.mxu0 0.0
        %2188 = vmatmul.mubr.f32.gmra.mrb[0].mxu0 %v2088
        %v2189 = vpop.f32.mrb[0].mxu0
        %v2190 = vadd.f32 0.0, %v2189
        %v2191 = vpop.f32.mrb[0].mxu0
        %2192 = vmatprep.mubr.f32.mxu0 0.0
        %2193 = vmatmul.mubr.f32.gmra.mrb[0].mxu0 %v2091
        %v2194 = vpop.f32.mrb[0].mxu0
        %v2195 = vadd.f32 0.0, %v2194
        %v2196 = vpop.f32.mrb[0].mxu0
        %2197 = vdwg.mxu0
        %v2198 = vadd.f32 %v2052, %v2160
        %v2199 = vadd.f32 %v2053, %v2165
        %v2200 = vadd.f32 %v2054, %v2170
        %v2201 = vadd.f32 %v2055, %v2175
        %v2202 = vadd.f32 %v2056, %v2180
        %v2203 = vadd.f32 %v2057, %v2185
        %v2204 = vadd.f32 %v2058, %v2190
        %v2205 = vadd.f32 %v2059, %v2195
        %2206 = vrot.lane.b32.xlu0 %v1874, 127
        %v2207 = vpop.permute.xlu0 %2206
        %2208 = vrot.lane.b32.xlu0 %v1875, 127
        %v2209 = vpop.permute.xlu0 %2208
        %2210 = vrot.lane.b32.xlu0 %v1876, 127
        %v2211 = vpop.permute.xlu0 %2210
        %2212 = vrot.lane.b32.xlu0 %v1877, 127
        %v2213 = vpop.permute.xlu0 %2212
        %2214 = vrot.lane.b32.xlu0 %v1878, 127
        %v2215 = vpop.permute.xlu0 %2214
        %2216 = vrot.lane.b32.xlu0 %v1879, 127
        %v2217 = vpop.permute.xlu0 %2216
        %2218 = vrot.lane.b32.xlu0 %v1880, 127
        %v2219 = vpop.permute.xlu0 %2218
        %2220 = vrot.lane.b32.xlu0 %v1881, 127
        %v2221 = vpop.permute.xlu0 %2220
        %v2222 = vsel %vm1184, %v2207, 0.0
        %v2223 = vsel %vm1184, %v2209, 0.0
        %v2224 = vsel %vm1184, %v2211, 0.0
        %v2225 = vsel %vm1184, %v2213, 0.0
        %v2226 = vsel %vm1184, %v2215, 0.0
        %v2227 = vsel %vm1184, %v2217, 0.0
        %v2228 = vsel %vm1184, %v2219, 0.0
        %v2229 = vsel %vm1184, %v2221, 0.0
        %s2230 = scalar_lea.vmem %s5, 512
        %v2231 = vld [vmem:[%s2230] sm:$0xff]
        %v2232 = vld [vmem:[%s2230 + $0x8] sm:$0xff]
        %v2233 = vld [vmem:[%s2230 + $0x10] sm:$0xff]
        %v2234 = vld [vmem:[%s2230 + $0x18] sm:$0xff]
        %v2235 = vld [vmem:[%s2230 + $0x20] sm:$0xff]
        %v2236 = vld [vmem:[%s2230 + $0x28] sm:$0xff]
        %v2237 = vld [vmem:[%s2230 + $0x30] sm:$0xff]
        %v2238 = vld [vmem:[%s2230 + $0x38] sm:$0xff]
        %v2240 = vsel %vm908, %v2231, 0
        %v2243 = vsel %vm908, %v2232, 0
        %v2246 = vsel %vm908, %v2233, 0
        %v2249 = vsel %vm908, %v2234, 0
        %v2252 = vsel %vm908, %v2235, 0
        %v2255 = vsel %vm908, %v2236, 0
        %v2258 = vsel %vm908, %v2237, 0
        %v2261 = vsel %vm908, %v2238, 0
        %2263 = vmatprep.subr.mxu0 0.0
        %2264 = vmatpush1.msra.mxu0 %v2222
        %2265 = vmatprep.subr.mxu0 0.0
        %2266 = vmatpush1.msra.mxu0 %v2223
        %2267 = vmatprep.subr.mxu0 0.0
        %2268 = vmatpush1.msra.mxu0 %v2224
        %2269 = vmatprep.subr.mxu0 0.0
        %2270 = vmatpush1.msra.mxu0 %v2225
        %2271 = vmatprep.subr.mxu0 0.0
        %2272 = vmatpush1.msra.mxu0 %v2226
        %2273 = vmatprep.subr.mxu0 0.0
        %2274 = vmatpush1.msra.mxu0 %v2227
        %2275 = vmatprep.subr.mxu0 0.0
        %2276 = vmatpush1.msra.mxu0 %v2228
        %2277 = vmatprep.subr.mxu0 0.0
        %2278 = vmatpush1.msra.mxu0 %v2229
        %2279 = vmatprep.subr.mxu0 0.0
        %2280 = vmatpush1.msra.mxu0 0.0
        %2281 = vmatprep.subr.mxu0 0.0
        %2282 = vmatpush1.msra.mxu0 0.0
        %2283 = vmatprep.subr.mxu0 0.0
        %2284 = vmatpush1.msra.mxu0 0.0
        %2285 = vmatprep.subr.mxu0 0.0
        %2286 = vmatpush1.msra.mxu0 0.0
        %2287 = vmatprep.subr.mxu0 0.0
        %2288 = vmatpush1.msra.mxu0 0.0
        %2289 = vmatprep.subr.mxu0 0.0
        %2290 = vmatpush1.msra.mxu0 0.0
        %2291 = vmatprep.subr.mxu0 0.0
        %2292 = vmatpush1.msra.mxu0 0.0
        %2293 = vmatprep.subr.mxu0 0.0
        %2294 = vmatpush1.msra.mxu0 0.0
        %2295 = vmatprep.subr.mxu0 0.0
        %2296 = vmatpush1.msra.mxu0 0.0
        %2297 = vmatprep.subr.mxu0 0.0
        %2298 = vmatpush1.msra.mxu0 0.0
        %2299 = vmatprep.subr.mxu0 0.0
        %2300 = vmatpush1.msra.mxu0 0.0
        %2301 = vmatprep.subr.mxu0 0.0
        %2302 = vmatpush1.msra.mxu0 0.0
        %2303 = vmatprep.subr.mxu0 0.0
        %2304 = vmatpush1.msra.mxu0 0.0
        %2305 = vmatprep.subr.mxu0 0.0
        %2306 = vmatpush1.msra.mxu0 0.0
        %2307 = vmatprep.subr.mxu0 0.0
        %2308 = vmatpush1.msra.mxu0 0.0
        %2309 = vmatprep.subr.mxu0 0.0
        %2310 = vmatpush1.msra.mxu0 0.0
        %2311 = vmatprep.subr.mxu0 0.0
        %2312 = vmatpush1.msra.mxu0 0.0
        %2313 = vmatprep.subr.mxu0 0.0
        %2314 = vmatpush1.msra.mxu0 0.0
        %2315 = vmatprep.subr.mxu0 0.0
        %2316 = vmatpush1.msra.mxu0 0.0
        %2317 = vmatprep.subr.mxu0 0.0
        %2318 = vmatpush1.msra.mxu0 0.0
        %2319 = vmatprep.subr.mxu0 0.0
        %2320 = vmatpush1.msra.mxu0 0.0
        %2321 = vmatprep.subr.mxu0 0.0
        %2322 = vmatpush1.msra.mxu0 0.0
        %2323 = vmatprep.subr.mxu0 0.0
        %2324 = vmatpush1.msra.mxu0 0.0
        %2325 = vmatprep.subr.mxu0 0.0
        %2326 = vmatpush1.msra.mxu0 0.0
        %2327 = vmatprep.mubr.f32.mxu0 0.0
        %2328 = vmatmul.mubr.f32.gmra.mrb[0].mxu0 %v2240
        %v2329 = vpop.f32.mrb[0].mxu0
        %v2330 = vadd.f32 0.0, %v2329
        %v2331 = vpop.f32.mrb[0].mxu0
        %2332 = vmatprep.mubr.f32.mxu0 0.0
        %2333 = vmatmul.mubr.f32.gmra.mrb[0].mxu0 %v2243
        %v2334 = vpop.f32.mrb[0].mxu0
        %v2335 = vadd.f32 0.0, %v2334
        %v2336 = vpop.f32.mrb[0].mxu0
        %2337 = vmatprep.mubr.f32.mxu0 0.0
        %2338 = vmatmul.mubr.f32.gmra.mrb[0].mxu0 %v2246
        %v2339 = vpop.f32.mrb[0].mxu0
        %v2340 = vadd.f32 0.0, %v2339
        %v2341 = vpop.f32.mrb[0].mxu0
        %2342 = vmatprep.mubr.f32.mxu0 0.0
        %2343 = vmatmul.mubr.f32.gmra.mrb[0].mxu0 %v2249
        %v2344 = vpop.f32.mrb[0].mxu0
        %v2345 = vadd.f32 0.0, %v2344
        %v2346 = vpop.f32.mrb[0].mxu0
        %2347 = vmatprep.mubr.f32.mxu0 0.0
        %2348 = vmatmul.mubr.f32.gmra.mrb[0].mxu0 %v2252
        %v2349 = vpop.f32.mrb[0].mxu0
        %v2350 = vadd.f32 0.0, %v2349
        %v2351 = vpop.f32.mrb[0].mxu0
        %2352 = vmatprep.mubr.f32.mxu0 0.0
        %2353 = vmatmul.mubr.f32.gmra.mrb[0].mxu0 %v2255
        %v2354 = vpop.f32.mrb[0].mxu0
        %v2355 = vadd.f32 0.0, %v2354
        %v2356 = vpop.f32.mrb[0].mxu0
        %2357 = vmatprep.mubr.f32.mxu0 0.0
        %2358 = vmatmul.mubr.f32.gmra.mrb[0].mxu0 %v2258
        %v2359 = vpop.f32.mrb[0].mxu0
        %v2360 = vadd.f32 0.0, %v2359
        %v2361 = vpop.f32.mrb[0].mxu0
        %2362 = vmatprep.mubr.f32.mxu0 0.0
        %2363 = vmatmul.mubr.f32.gmra.mrb[0].mxu0 %v2261
        %v2364 = vpop.f32.mrb[0].mxu0
        %v2365 = vadd.f32 0.0, %v2364
        %v2366 = vpop.f32.mrb[0].mxu0
        %2367 = vdwg.mxu0
        %v2368 = vadd.f32 %v2198, %v2330
        %v2369 = vadd.f32 %v2199, %v2335
        %v2370 = vadd.f32 %v2200, %v2340
        %v2371 = vadd.f32 %v2201, %v2345
        %v2372 = vadd.f32 %v2202, %v2350
        %v2373 = vadd.f32 %v2203, %v2355
        %v2374 = vadd.f32 %v2204, %v2360
        %v2375 = vadd.f32 %v2205, %v2365
        %2376 = vst [vmem:[%s474] sm:$0xff] %v2368
        %2377 = vst [vmem:[%s474 + $0x8] sm:$0xff] %v2369
        %2378 = vst [vmem:[%s474 + $0x10] sm:$0xff] %v2370
        %2379 = vst [vmem:[%s474 + $0x18] sm:$0xff] %v2371
        %2380 = vst [vmem:[%s474 + $0x20] sm:$0xff] %v2372
        %2381 = vst [vmem:[%s474 + $0x28] sm:$0xff] %v2373
        %2382 = vst [vmem:[%s474 + $0x30] sm:$0xff] %v2374
        %2383 = vst [vmem:[%s474 + $0x38] sm:$0xff] %v2375
        %2384 = vst.msk [vmem:[%s541] sm:$0xff] %vm832, %v2368
        %2385 = vst.msk [vmem:[%s541 + $0x8] sm:$0xff] %vm832, %v2369
        %2386 = vst.msk [vmem:[%s541 + $0x10] sm:$0xff] %vm832, %v2370
        %2387 = vst.msk [vmem:[%s541 + $0x18] sm:$0xff] %vm832, %v2371
        %2388 = vst.msk [vmem:[%s541 + $0x20] sm:$0xff] %vm832, %v2372
        %2389 = vst.msk [vmem:[%s541 + $0x28] sm:$0xff] %vm832, %v2373
        %2390 = vst.msk [vmem:[%s541 + $0x30] sm:$0xff] %vm832, %v2374
        %2391 = vst.msk [vmem:[%s541 + $0x38] sm:$0xff] %vm832, %v2375
        %2400 = vrot.lane.b32.xlu0 %v2368, 16
        %v2401 = vpop.permute.xlu0 %2400
        %2402 = vrot.lane.b32.xlu0 %v2369, 16
        %v2403 = vpop.permute.xlu0 %2402
        %2404 = vrot.lane.b32.xlu0 %v2370, 16
        %v2405 = vpop.permute.xlu0 %2404
        %2406 = vrot.lane.b32.xlu0 %v2371, 16
        %v2407 = vpop.permute.xlu0 %2406
        %2408 = vrot.lane.b32.xlu0 %v2372, 16
        %v2409 = vpop.permute.xlu0 %2408
        %2410 = vrot.lane.b32.xlu0 %v2373, 16
        %v2411 = vpop.permute.xlu0 %2410
        %2412 = vrot.lane.b32.xlu0 %v2374, 16
        %v2413 = vpop.permute.xlu0 %2412
        %2414 = vrot.lane.b32.xlu0 %v2375, 16
        %v2415 = vpop.permute.xlu0 %2414
        %s2424 = scalar_lea.vmem %s541, 64
        %2425 = vst.msk [vmem:[%s2424] sm:$0xff] %vm832, %v2401
        %2426 = vst.msk [vmem:[%s2424 + $0x8] sm:$0xff] %vm832, %v2403
        %2427 = vst.msk [vmem:[%s2424 + $0x10] sm:$0xff] %vm832, %v2405
        %2428 = vst.msk [vmem:[%s2424 + $0x18] sm:$0xff] %vm832, %v2407
        %2429 = vst.msk [vmem:[%s2424 + $0x20] sm:$0xff] %vm832, %v2409
        %2430 = vst.msk [vmem:[%s2424 + $0x28] sm:$0xff] %vm832, %v2411
        %2431 = vst.msk [vmem:[%s2424 + $0x30] sm:$0xff] %vm832, %v2413
        %2432 = vst.msk [vmem:[%s2424 + $0x38] sm:$0xff] %vm832, %v2415
        %2433 = vadd.xlane.f32.xlu0 %v2368
        %v2434 = vpop.xlane.xlu0 %2433
        %2435 = vadd.xlane.f32.xlu0 %v2369
        %v2436 = vpop.xlane.xlu0 %2435
        %2437 = vadd.xlane.f32.xlu0 %v2370
        %v2438 = vpop.xlane.xlu0 %2437
        %2439 = vadd.xlane.f32.xlu0 %v2371
        %v2440 = vpop.xlane.xlu0 %2439
        %2441 = vadd.xlane.f32.xlu0 %v2372
        %v2442 = vpop.xlane.xlu0 %2441
        %2443 = vadd.xlane.f32.xlu0 %v2373
        %v2444 = vpop.xlane.xlu0 %2443
        %2445 = vadd.xlane.f32.xlu0 %v2374
        %v2446 = vpop.xlane.xlu0 %2445
        %2447 = vadd.xlane.f32.xlu0 %v2375
        %v2448 = vpop.xlane.xlu0 %2447
        %v2449 = vmul.f32 %v2368, %v2368
        %v2450 = vmul.f32 %v2369, %v2369
        %v2451 = vmul.f32 %v2370, %v2370
        %v2452 = vmul.f32 %v2371, %v2371
        %v2453 = vmul.f32 %v2372, %v2372
        %v2454 = vmul.f32 %v2373, %v2373
        %v2455 = vmul.f32 %v2374, %v2374
        %v2456 = vmul.f32 %v2375, %v2375
        %2457 = vadd.xlane.f32.xlu0 %v2449
        %v2458 = vpop.xlane.xlu0 %2457
        %2459 = vadd.xlane.f32.xlu0 %v2450
        %v2460 = vpop.xlane.xlu0 %2459
        %2461 = vadd.xlane.f32.xlu0 %v2451
        %v2462 = vpop.xlane.xlu0 %2461
        %2463 = vadd.xlane.f32.xlu0 %v2452
        %v2464 = vpop.xlane.xlu0 %2463
        %2465 = vadd.xlane.f32.xlu0 %v2453
        %v2466 = vpop.xlane.xlu0 %2465
        %2467 = vadd.xlane.f32.xlu0 %v2454
        %v2468 = vpop.xlane.xlu0 %2467
        %2469 = vadd.xlane.f32.xlu0 %v2455
        %v2470 = vpop.xlane.xlu0 %2469
        %2471 = vadd.xlane.f32.xlu0 %v2456
        %v2472 = vpop.xlane.xlu0 %2471
        %vm2473 = vcmask 7168
        %v2474 = vsel %vm2473, %v2434, %v2458
        %v2475 = vsel %vm2473, %v2436, %v2460
        %v2476 = vsel %vm2473, %v2438, %v2462
        %v2477 = vsel %vm2473, %v2440, %v2464
        %v2478 = vsel %vm2473, %v2442, %v2466
        %v2479 = vsel %vm2473, %v2444, %v2468
        %v2480 = vsel %vm2473, %v2446, %v2470
        %v2481 = vsel %vm2473, %v2448, %v2472
        %vm2482 = vcmask 15360
        %2483 = vst.msk [vmem:[%s551] sm:$0xff] %vm2482, %v2474
        %2484 = vst.msk [vmem:[%s551 + $0x8] sm:$0xff] %vm2482, %v2475
        %2485 = vst.msk [vmem:[%s551 + $0x10] sm:$0xff] %vm2482, %v2476
        %2486 = vst.msk [vmem:[%s551 + $0x18] sm:$0xff] %vm2482, %v2477
        %2487 = vst.msk [vmem:[%s551 + $0x20] sm:$0xff] %vm2482, %v2478
        %2488 = vst.msk [vmem:[%s551 + $0x28] sm:$0xff] %vm2482, %v2479
        %2489 = vst.msk [vmem:[%s551 + $0x30] sm:$0xff] %vm2482, %v2480
        %2490 = vst.msk [vmem:[%s551 + $0x38] sm:$0xff] %vm2482, %v2481
        %s2491 = sand.u32 %s205, 1
        %s2492 = sand.u32 %s205, 1
        %s2493 = smul.addr %s2492, 64
        %s2494 = scalar_lea.vmem [#allocation3], %s2493
        %s2495 = smul.u32 2, %s25
        %p2496 = scmp.lt.s32.totalorder %s24, 1
        %s2497 = scalar_select %p2496, %s24, 1
        %p2498 = scmp.lt.s32.totalorder %s2495, 3
        %s2499 = scalar_select %p2498, %s2495, 3
        %s2500 = smul.addr %s2499, 8
        %s2501 = smul.addr %s2497, 32
        %s2502 = sadd.s32 %s2500, %s2501
        %s2503 = smul.addr %s2502, 8
        %s2504 = scalar_lea.vmem %s7, %s2503
        %p2505 = scmp.lt.s32.totalorder %s24, 1
        %s2506 = scalar_select %p2505, %s24, 1
        %p2507 = scmp.lt.s32.totalorder %s25, 1
        %s2508 = scalar_select %p2507, %s25, 1
        %s2509 = smul.addr %s2508, 8
        %s2510 = smul.addr %s2506, 16
        %s2511 = sadd.s32 %s2509, %s2510
        %s2512 = smul.addr %s2511, 8
        %s2513 = scalar_lea.vmem %s8, %s2512
        // Predicated region
        $region83: #{dncnn_forward.6} parent=77 // pred_check
          %p2514 = pneg %p215
        $region84: #{dncnn_forward.6} parent=77 // pred_check_branch
          %2516 = sbr.rel (%p2514) target = $region86
        $region85: #{dncnn_forward.6} parent=77 // pred_region
          %s2517 = smul.addr %s24, 16
          %s2518 = sadd.s32 %s25, %s2517
          %s2519 = smul.addr %s2518, 8
          %s2520 = scalar_lea.vmem %s6, %s2519
          // Predicated region
          $region87: #{dncnn_forward.6} parent=85 // pred_check
            _
          $region88: #{dncnn_forward.6} parent=85 // pred_check_branch
            %2522 = sbr.rel (0) target = $region90
          $region89: #{dncnn_forward.6} parent=85 // pred_region
            // Predicated region
            $region91: #{dncnn_forward.6} parent=89 // pred_check
              _
            $region92: #{dncnn_forward.6} parent=89 // pred_check_branch
              %2524 = sbr.rel (0) target = $region94
            $region93: #{dncnn_forward.6} parent=89 // pred_region
              // Predicated region
              $region106: #{dncnn_forward.6} parent=93 // pred_check
                _
              $region107: #{dncnn_forward.6} parent=93 // pred_check_branch
                %2553 = sbr.rel (0) target = $region109
              $region108: #{dncnn_forward.6} parent=93 // pred_region
                loop: start=0, step=1, limit=1
                $region110: #{dncnn_forward.6} parent=108 // loop_pre_header
                  _
                $region111: #{dncnn_forward.6} parent=108 // loop_header
                  %s2555 = sphi 0, %s2559
                  %p2556 = scmp.ge.s32.totalorder %s2555, 1
                  %s2560 = sphi %s2494, %s2494
                  %s2561 = sphi %s2520, %s2520
                $region112: #{dncnn_forward.6} parent=108 // loop_header_branch
                  %2558 = sbr.rel (%p2556) target = $region116
                $region113: #{dncnn_forward.6} parent=108 // loop_body
                  %v2562 = vld [vmem:[%s2560] sm:$0xff]
                  %2563 = vst [vmem:[%s2561] sm:$0xff] %v2562
                  %v2564 = vld [vmem:[%s2560 + $0x8] sm:$0xff]
                  %2565 = vst [vmem:[%s2561 + $0x10] sm:$0xff] %v2564
                  %v2566 = vld [vmem:[%s2560 + $0x10] sm:$0xff]
                  %2567 = vst [vmem:[%s2561 + $0x20] sm:$0xff] %v2566
                  %v2568 = vld [vmem:[%s2560 + $0x18] sm:$0xff]
                  %2569 = vst [vmem:[%s2561 + $0x30] sm:$0xff] %v2568
                  %v2570 = vld [vmem:[%s2560 + $0x20] sm:$0xff]
                  %2571 = vst [vmem:[%s2561 + $0x40] sm:$0xff] %v2570
                  %v2572 = vld [vmem:[%s2560 + $0x28] sm:$0xff]
                  %2573 = vst [vmem:[%s2561 + $0x50] sm:$0xff] %v2572
                  %v2574 = vld [vmem:[%s2560 + $0x30] sm:$0xff]
                  %2575 = vst [vmem:[%s2561 + $0x60] sm:$0xff] %v2574
                  %v2576 = vld [vmem:[%s2560 + $0x38] sm:$0xff]
                  %2577 = vst [vmem:[%s2561 + $0x70] sm:$0xff] %v2576
                $region114: #{dncnn_forward.6} parent=108 // loop_footer
                  %s2559 = sadd.s32 1, %s2555
                $region115: #{dncnn_forward.6} parent=108 // loop_footer_branch
                  %2554 = sbr.rel target = $region111
                $region116: #{dncnn_forward.6} parent=108 // loop_exit
                  _
              $region109: #{dncnn_forward.6} parent=93 // pred_fallthru
                _
              // Predicated region
              $region117: #{dncnn_forward.6} parent=93 // pred_check
                _
              $region118: #{dncnn_forward.6} parent=93 // pred_check_branch
                %2579 = sbr.rel target = $region120
              $region119: #{dncnn_forward.6} parent=93 // pred_region
                _
              $region120: #{dncnn_forward.6} parent=93 // pred_fallthru
                _
            $region94: #{dncnn_forward.6} parent=89 // pred_fallthru
              _
            // Predicated region
            $region95: #{dncnn_forward.6} parent=89 // pred_check
              _
            $region96: #{dncnn_forward.6} parent=89 // pred_check_branch
              %2526 = sbr.rel target = $region98
            $region97: #{dncnn_forward.6} parent=89 // pred_region
              loop: start=0, step=1, limit=1
              $region99: #{dncnn_forward.6} parent=97 // loop_pre_header
                _
              $region100: #{dncnn_forward.6} parent=97 // loop_header
                %s2529 = sphi 0, %s2533
                %p2530 = scmp.ge.s32.totalorder %s2529, 1
                %s2534 = sphi %s2494, %s2494
                %s2535 = sphi %s2520, %s2520
              $region101: #{dncnn_forward.6} parent=97 // loop_header_branch
                %2532 = sbr.rel (%p2530) target = $region105
              $region102: #{dncnn_forward.6} parent=97 // loop_body
                %v2536 = vld [vmem:[%s2534] sm:$0xff]
                %2537 = vst [vmem:[%s2535] sm:$0xff] %v2536
                %v2538 = vld [vmem:[%s2534 + $0x8] sm:$0xff]
                %2539 = vst [vmem:[%s2535 + $0x10] sm:$0xff] %v2538
                %v2540 = vld [vmem:[%s2534 + $0x10] sm:$0xff]
                %2541 = vst [vmem:[%s2535 + $0x20] sm:$0xff] %v2540
                %v2542 = vld [vmem:[%s2534 + $0x18] sm:$0xff]
                %2543 = vst [vmem:[%s2535 + $0x30] sm:$0xff] %v2542
                %v2544 = vld [vmem:[%s2534 + $0x20] sm:$0xff]
                %2545 = vst [vmem:[%s2535 + $0x40] sm:$0xff] %v2544
                %v2546 = vld [vmem:[%s2534 + $0x28] sm:$0xff]
                %2547 = vst [vmem:[%s2535 + $0x50] sm:$0xff] %v2546
                %v2548 = vld [vmem:[%s2534 + $0x30] sm:$0xff]
                %2549 = vst [vmem:[%s2535 + $0x60] sm:$0xff] %v2548
                %v2550 = vld [vmem:[%s2534 + $0x38] sm:$0xff]
                %2551 = vst [vmem:[%s2535 + $0x70] sm:$0xff] %v2550
              $region103: #{dncnn_forward.6} parent=97 // loop_footer
                %s2533 = sadd.s32 1, %s2529
              $region104: #{dncnn_forward.6} parent=97 // loop_footer_branch
                %2528 = sbr.rel target = $region100
              $region105: #{dncnn_forward.6} parent=97 // loop_exit
                _
            $region98: #{dncnn_forward.6} parent=89 // pred_fallthru
              _
          $region90: #{dncnn_forward.6} parent=85 // pred_fallthru
            _
          %2580 = vnop
        $region86: #{dncnn_forward.6} parent=77 // pred_fallthru
          _
        // Predicated region
        $region121: #{dncnn_forward.6} parent=77 // pred_check
          %p2581 = pneg %p243
        $region122: #{dncnn_forward.6} parent=77 // pred_check_branch
          %2583 = sbr.rel (%p2581) target = $region124
        $region123: #{dncnn_forward.6} parent=77 // pred_region
          %s2584 = smul.u32 2, %s25
        $region124: #{dncnn_forward.6} parent=77 // pred_fallthru
          _
        // Predicated region
        $region125: #{dncnn_forward.6} parent=77 // pred_check
          %p2585 = pneg %p271
        $region126: #{dncnn_forward.6} parent=77 // pred_check_branch
          %2587 = sbr.rel (%p2585) target = $region128
        $region127: #{dncnn_forward.6} parent=77 // pred_region
          _
        $region128: #{dncnn_forward.6} parent=77 // pred_fallthru
          _
      $region78: #{dncnn_forward.6} parent=5 // pred_fallthru
        _
      %p2588 = scmp.le.s32.totalorder 2, %s15
      // Predicated region
      $region129: #{dncnn_forward.6} parent=5 // pred_check
        %p2589 = pneg %p2588
      $region130: #{dncnn_forward.6} parent=5 // pred_check_branch
        %2591 = sbr.rel (%p2589) target = $region132
      $region131: #{dncnn_forward.6} parent=5 // pred_region
        %s2592 = ssub.s32 %s15, 2
        // Predicated region
        $region133: #{dncnn_forward.6} parent=131 // pred_check
          %p2593 = pneg %p221
        $region134: #{dncnn_forward.6} parent=131 // pred_check_branch
          %2595 = sbr.rel (%p2593) target = $region136
        $region135: #{dncnn_forward.6} parent=131 // pred_region
          %s2596 = sand.u32 %s206, 1
          %s2597 = sand.u32 %s206, 1
          %s2598 = smul.addr %s2597, 64
          %s2599 = scalar_lea.vmem [#allocation3], %s2598
        $region136: #{dncnn_forward.6} parent=131 // pred_fallthru
          _
        // Predicated region
        $region137: #{dncnn_forward.6} parent=131 // pred_check
          %p2600 = pneg %p249
        $region138: #{dncnn_forward.6} parent=131 // pred_check_branch
          %2602 = sbr.rel (%p2600) target = $region140
        $region139: #{dncnn_forward.6} parent=131 // pred_region
          %s2603 = smul.u32 2, %s27
          %p2604 = scmp.lt.s32.totalorder %s26, 1
          %s2605 = scalar_select %p2604, %s26, 1
          %p2606 = scmp.lt.s32.totalorder %s2603, 3
          %s2607 = scalar_select %p2606, %s2603, 3
          %s2608 = smul.addr %s2607, 8
          %s2609 = smul.addr %s2605, 32
          %s2610 = sadd.s32 %s2608, %s2609
          %s2611 = smul.addr %s2610, 8
          %s2612 = scalar_lea.vmem %s7, %s2611
        $region140: #{dncnn_forward.6} parent=131 // pred_fallthru
          _
        // Predicated region
        $region141: #{dncnn_forward.6} parent=131 // pred_check
          %p2613 = pneg %p277
        $region142: #{dncnn_forward.6} parent=131 // pred_check_branch
          %2615 = sbr.rel (%p2613) target = $region144
        $region143: #{dncnn_forward.6} parent=131 // pred_region
          %p2616 = scmp.lt.s32.totalorder %s26, 1
          %s2617 = scalar_select %p2616, %s26, 1
          %p2618 = scmp.lt.s32.totalorder %s27, 1
          %s2619 = scalar_select %p2618, %s27, 1
          %s2620 = smul.addr %s2619, 8
          %s2621 = smul.addr %s2617, 16
          %s2622 = sadd.s32 %s2620, %s2621
          %s2623 = smul.addr %s2622, 8
          %s2624 = scalar_lea.vmem %s8, %s2623
        $region144: #{dncnn_forward.6} parent=131 // pred_fallthru
          _
      $region132: #{dncnn_forward.6} parent=5 // pred_fallthru
        _
    $region6: #{dncnn_forward.6} parent=1 // loop_footer
      %s19 = sadd.s32 1, %s15
    $region7: #{dncnn_forward.6} parent=1 // loop_footer_branch
      %14 = sbr.rel target = $region3
    $region8: #{dncnn_forward.6} parent=1 // loop_exit
      _

</llo_original>
